<compile_context>
chip_gen: v7x
topology: tpu7x:2x2x1
jax: 0.10.0
libtpu: 0.0.40
codegen_flags: <defaults>
</compile_context>

<pallas_src>
import functools
import numpy as np

import jax
import jax.numpy as jnp
from jax.experimental import pallas as pl
from jax.experimental.pallas import tpu as pltpu

LANE = 128  # TPU lane width


def _round_up(x, m):
    return (x + m - 1) // m * m


def _vmem_budget_bytes():
    cap = 64 * 1024 * 1024            # v7x-safe fallback (64 MiB physical VMEM)
    try:
        cap = int(pltpu.get_tpu_info().vmem_capacity_bytes)
    except Exception:
        pass
    # 70% of physical, clamped to [32 MiB, 100 MiB] (v5e/v6e have 128 MiB).
    return max(32 * 1024 * 1024, min(int(cap * 0.70), 100 * 1024 * 1024))


def _footprint_bytes(TH, H, W, Cpi, Cpo, has_ds):
    bf2, f4 = 2, 4
    b = 0
    b += 2 * (H + 4) * (W + 4) * Cpi * bf2      # padded-input block (double-buffered)
    b += 2 * 9 * Cpi * Cpo * bf2                # w1 (double-buffered allocation)
    b += 2 * 9 * Cpo * Cpo * bf2                # w2
    if has_ds:
        b += 2 * Cpi * Cpo * bf2                # 1x1 downsample weight
    b += 2 * TH * W * Cpo * f4                  # output block (double-buffered)
    b += (TH + 2) * (W + 2) * Cpo * bf2         # bf16 staging scratch
    # in-kernel temporaries (patch, patch2, y1, y2, ident)
    b += (TH + 2) * W * 9 * Cpi * bf2
    b += TH * W * 9 * Cpo * bf2
    b += (TH + 2) * W * Cpo * f4
    b += TH * W * Cpo * f4
    b += TH * W * max(Cpi, Cpo) * f4
    return b


def _pick_tile_h(H, W, Cpi, Cpo, has_ds, budget):
    # Largest divisor of H whose estimated footprint (with margin) fits the budget.
    for th in range(H, 0, -1):
        if H % th != 0:
            continue
        if int(1.25 * _footprint_bytes(th, H, W, Cpi, Cpo, has_ds)) <= budget:
            return th
    return 1


# ----------------------------------------------------------------------------
# Fused BasicBlock kernel.
#   refs (no downsample): xp, w1, b1, w2, b2, out, scratch
#   refs (downsample)   : xp, w1, b1, w2, b2, dw, dsh, out, scratch
# BN scales are folded into w1 / w2 / dw in the wrapper; b* are the shifts.
# ----------------------------------------------------------------------------
def _basic_block_kernel(*refs, W, TH, has_downsample):
    if has_downsample:
        (xp_ref, w1_ref, b1_ref, w2_ref, b2_ref,
         dw_ref, dsh_ref, o_ref, scr_ref) = refs
    else:
        (xp_ref, w1_ref, b1_ref, w2_ref, b2_ref, o_ref, scr_ref) = refs

    Cpi = xp_ref.shape[-1]
    Cpo = o_ref.shape[-1]

    r = pl.program_id(1)
    rb = pl.multiple_of(r * TH, TH)     # first output row of this tile

    # ---- conv1 (3x3, stride 1, pad 1) over TH+2 rows (+/-1 halo) -------------
    # Input is zero-padded by 2 in H/W in the wrapper (bf16), so halo rows are
    # always in-bounds.  im2col: one MXU matmul with K = 9*Cpi.
    taps = []
    for kh in range(3):
        for kw in range(3):
            taps.append(xp_ref[0, pl.ds(rb + kh, TH + 2), 1 + kw:1 + kw + W, :])
    patch = jnp.concatenate(taps, axis=-1).reshape((TH + 2) * W, 9 * Cpi)
    y1 = jnp.dot(patch, w1_ref[...], preferred_element_type=jnp.float32)
    y1 = jnp.maximum(y1 + b1_ref[...], 0.0)                    # BN1 shift + ReLU
    y1 = y1.reshape(TH + 2, W, Cpo).astype(jnp.bfloat16)

    # Stage the conv1 tile in bf16 VMEM scratch.  Only the two border columns
    # need explicit zeroing (the rest is fully overwritten every step).
    scr_ref[:, 1:W + 1, :] = y1
    zcol = jnp.zeros((TH + 2, 1, Cpo), jnp.bfloat16)
    scr_ref[:, 0:1, :] = zcol
    scr_ref[:, W + 1:W + 2, :] = zcol

    # Zero the halo rows that fall outside the image so conv2 sees the correct
    # zero padding at the top/bottom image borders (only first/last row tiles).
    zrow = jnp.zeros((1, W + 2, Cpo), jnp.bfloat16)

    @pl.when(r == 0)
    def _():
        scr_ref[0:1, :, :] = zrow

    @pl.when(r == pl.num_programs(1) - 1)
    def _():
        scr_ref[TH + 1:TH + 2, :, :] = zrow

    # ---- conv2 (3x3, stride 1, pad 1) ----------------------------------------
    taps2 = [scr_ref[kh:kh + TH, kw:kw + W, :]
             for kh in range(3) for kw in range(3)]
    patch2 = jnp.concatenate(taps2, axis=-1).reshape(TH * W, 9 * Cpo)
    y2 = jnp.dot(patch2, w2_ref[...], preferred_element_type=jnp.float32)
    y2 = y2 + b2_ref[...]                                      # BN2 shift

    # ---- residual branch ------------------------------------------------------
    ident = xp_ref[0, pl.ds(rb + 2, TH), 2:2 + W, :].reshape(TH * W, Cpi)
    if has_downsample:
        ident = jnp.dot(ident, dw_ref[...], preferred_element_type=jnp.float32)
        ident = ident + dsh_ref[...]                           # downsample BN shift
    y2 = jnp.maximum(y2 + ident, 0.0)                          # add + ReLU
    o_ref[0] = y2.reshape(TH, W, Cpo).astype(o_ref.dtype)


# ----------------------------------------------------------------------------
# Wrapper: NCHW in, NCHW out.  BatchNorm is eval-mode (folded scale/shift).
# ----------------------------------------------------------------------------
def basic_block_forward(x_nchw, params, *, stride=1, tile_h=None):
    if stride != 1:
        # TODO(synk): stride > 1 (strided conv1 + strided 1x1 downsample) not
        # implemented in this Pallas port; only the stride=1 BasicBlock path is.
        raise NotImplementedError("stride > 1 not implemented in Pallas port")

    has_ds = "dw" in params
    N, Cin, H, W = x_nchw.shape
    planes = params["w1"].shape[-1]
    if not has_ds:
        assert Cin == planes, "identity residual requires inplanes == planes"

    Cpi = _round_up(Cin, LANE)
    Cpo = _round_up(planes, LANE)

    budget = _vmem_budget_bytes()
    TH = tile_h or _pick_tile_h(H, W, Cpi, Cpo, has_ds, budget)
    assert H % TH == 0

    # Single bf16 input pad: spatial halo of 2 + channel pad to lane width.
    x = jnp.transpose(x_nchw, (0, 2, 3, 1)).astype(jnp.bfloat16)   # NCHW -> NHWC
    xp = jnp.pad(x, ((0, 0), (2, 2), (2, 2), (0, Cpi - Cin)))

    def fold_w(w, scale, ci, co, cpi, cpo):
        # Fold BN scale into output-channel columns, pad, pack to (9*cpi, cpo) bf16.
        w = w.astype(jnp.float32) * scale.astype(jnp.float32)       # (3,3,ci,co)*(co,)
        w = jnp.pad(w, ((0, 0), (0, 0), (0, cpi - ci), (0, cpo - co)))
        return w.reshape(9 * cpi, cpo).astype(jnp.bfloat16)

    def pack_v(v, c, cp):                                           # (c,) -> (1, cp) f32
        return jnp.pad(v.astype(jnp.float32), (0, cp - c)).reshape(1, cp)

    w1 = fold_w(params["w1"], params["s1"], Cin, planes, Cpi, Cpo)
    w2 = fold_w(params["w2"], params["s2"], planes, planes, Cpo, Cpo)
    b1 = pack_v(params["b1"], planes, Cpo)
    b2 = pack_v(params["b2"], planes, Cpo)

    inputs = [xp, w1, b1, w2, b2]
    in_specs = [
        pl.BlockSpec((1, H + 4, W + 4, Cpi), lambda n, r: (n, 0, 0, 0)),
        pl.BlockSpec((9 * Cpi, Cpo), lambda n, r: (0, 0)),
        pl.BlockSpec((1, Cpo), lambda n, r: (0, 0)),
        pl.BlockSpec((9 * Cpo, Cpo), lambda n, r: (0, 0)),
        pl.BlockSpec((1, Cpo), lambda n, r: (0, 0)),
    ]
    if has_ds:
        dw = params["dw"].astype(jnp.float32) * params["dsc"].astype(jnp.float32)
        dw = jnp.pad(dw, ((0, Cpi - Cin), (0, Cpo - planes))).astype(jnp.bfloat16)
        inputs += [dw, pack_v(params["dsh"], planes, Cpo)]
        in_specs += [
            pl.BlockSpec((Cpi, Cpo), lambda n, r: (0, 0)),
            pl.BlockSpec((1, Cpo), lambda n, r: (0, 0)),
        ]

    kern = functools.partial(_basic_block_kernel, W=W, TH=TH, has_downsample=has_ds)
    out = pl.pallas_call(
        kern,
        out_shape=jax.ShapeDtypeStruct((N, H, W, Cpo), jnp.float32),
        grid_spec=pltpu.PrefetchScalarGridSpec(
            num_scalar_prefetch=0,
            grid=(N, H // TH),
            in_specs=in_specs,
            out_specs=pl.BlockSpec((1, TH, W, Cpo), lambda n, r: (n, r, 0, 0)),
            scratch_shapes=[pltpu.VMEM((TH + 2, W + 2, Cpo), jnp.bfloat16)],
        ),
        compiler_params=pltpu.CompilerParams(
            dimension_semantics=("parallel", "parallel"),
            vmem_limit_bytes=budget,
        ),
    )(*inputs)

    out = out[..., :planes]                              # drop channel padding
    return jnp.transpose(out, (0, 3, 1, 2))              # NHWC -> NCHW


# ----------------------------------------------------------------------------
# Pure-JAX reference (f32, HIGHEST precision) for validation
# ----------------------------------------------------------------------------
def basic_block_reference(x_nchw, params):
    x = jnp.transpose(x_nchw, (0, 2, 3, 1)).astype(jnp.float32)

    def conv(t, w):
        return jax.lax.conv_general_dilated(
            t, w, window_strides=(1, 1), padding=[(1, 1), (1, 1)],
            dimension_numbers=("NHWC", "HWIO", "NHWC"),
            precision=jax.lax.Precision.HIGHEST)

    y = jnp.maximum(conv(x, params["w1"]) * params["s1"] + params["b1"], 0.0)
    y = conv(y, params["w2"]) * params["s2"] + params["b2"]
    if "dw" in params:
        ident = jnp.einsum("nhwc,cf->nhwf", x, params["dw"],
                           precision=jax.lax.Precision.HIGHEST)
        ident = ident * params["dsc"] + params["dsh"]
    else:
        ident = x
    y = jnp.maximum(y + ident, 0.0)
    return jnp.transpose(y, (0, 3, 1, 2))


# ----------------------------------------------------------------------------
# Deterministic parameter init (folded eval-mode BatchNorm)
# ----------------------------------------------------------------------------
def _bn_fold(key, c, eps=1e-5):
    kg, kb, km, kv = jax.random.split(key, 4)
    gamma = 1.0 + 0.1 * jax.random.normal(kg, (c,), jnp.float32)
    beta = 0.1 * jax.random.normal(kb, (c,), jnp.float32)
    mean = 0.1 * jax.random.normal(km, (c,), jnp.float32)
    var = 1.0 + 0.1 * jax.random.uniform(kv, (c,), jnp.float32)
    scale = gamma / jnp.sqrt(var + eps)
    shift = beta - mean * scale
    return scale, shift


def init_basic_block_params(key, inplanes, planes, with_downsample=False):
    ks = jax.random.split(key, 6)
    p = {}
    p["w1"] = jax.random.normal(ks[0], (3, 3, inplanes, planes), jnp.float32) / np.sqrt(9 * inplanes)
    p["s1"], p["b1"] = _bn_fold(ks[1], planes)
    p["w2"] = jax.random.normal(ks[2], (3, 3, planes, planes), jnp.float32) / np.sqrt(9 * planes)
    p["s2"], p["b2"] = _bn_fold(ks[3], planes)
    if with_downsample:
        p["dw"] = jax.random.normal(ks[4], (inplanes, planes), jnp.float32) / np.sqrt(inplanes)
        p["dsc"], p["dsh"] = _bn_fold(ks[5], planes)
    return p


if __name__ == "__main__":
    key = jax.random.PRNGKey(0)
    k1, k2, k3, k4 = jax.random.split(key, 4)

    # Case 1: identity residual (inplanes == planes, stride=1, no downsample).
    N, C, H, W = 2, 8, 16, 16
    x = jax.random.normal(k1, (N, C, H, W), jnp.float32)
    params = init_basic_block_params(k2, C, C, with_downsample=False)
    out = jax.block_until_ready(basic_block_forward(x, params))
    assert out.shape == (N, C, H, W), out.shape
    ref = basic_block_reference(x, params)
    np.testing.assert_allclose(np.asarray(out), np.asarray(ref), rtol=2e-2, atol=3e-2)

    # Case 1b: force multiple row tiles to exercise halo / pl.when masking.
    out_t = jax.block_until_ready(basic_block_forward(x, params, tile_h=8))
    np.testing.assert_allclose(np.asarray(out_t), np.asarray(ref), rtol=2e-2, atol=3e-2)

    # Case 2: downsample branch (1x1 conv + BN) for a channel change, stride=1.
    planes = 16
    x2 = jax.random.normal(k3, (N, C, H, W), jnp.float32)
    params2 = init_basic_block_params(k4, C, planes, with_downsample=True)
    out2 = jax.block_until_ready(basic_block_forward(x2, params2))
    assert out2.shape == (N, planes, H, W), out2.shape
    ref2 = basic_block_reference(x2, params2)
    np.testing.assert_allclose(np.asarray(out2), np.asarray(ref2), rtol=2e-2, atol=3e-2)

    print("KERNEL_OK")
</pallas_src>

<mosaic_0001>
module attributes {stable_mosaic.version = 11 : i64} {
  func.func @_basic_block_kernel(%arg0: i32, %arg1: i32, %arg2: memref<1x20x20x128xbf16, #tpu.memory_space<vmem>>, %arg3: memref<1152x128xbf16, #tpu.memory_space<vmem>>, %arg4: memref<1x128xf32, #tpu.memory_space<vmem>>, %arg5: memref<1152x128xbf16, #tpu.memory_space<vmem>>, %arg6: memref<1x128xf32, #tpu.memory_space<vmem>>, %arg7: memref<1x16x16x128xf32, #tpu.memory_space<vmem>>, %arg8: memref<18x18x128xbf16, #tpu.memory_space<vmem>>) attributes {dimension_semantics = [#tpu.dimension_semantics<parallel>, #tpu.dimension_semantics<parallel>], iteration_bounds = array<i64: 2, 1>, scalar_prefetch = 0 : i64, scratch_operands = 1 : i64, tpu.core_type = #tpu.core_type<tc>, window_params = [{transform_indices = @transform_0, window_bounds = array<i64: 1, 20, 20, 128>}, {pipeline_mode = #tpu.pipeline_mode<synchronous>, transform_indices = @transform_1, window_bounds = array<i64: 1152, 128>}, {pipeline_mode = #tpu.pipeline_mode<synchronous>, transform_indices = @transform_2, window_bounds = array<i64: 1, 128>}, {pipeline_mode = #tpu.pipeline_mode<synchronous>, transform_indices = @transform_3, window_bounds = array<i64: 1152, 128>}, {pipeline_mode = #tpu.pipeline_mode<synchronous>, transform_indices = @transform_4, window_bounds = array<i64: 1, 128>}, {transform_indices = @transform_5, window_bounds = array<i64: 1, 16, 16, 128>}]} {
    %c16_i32 = arith.constant 16 : i32
    %0 = arith.muli %arg1, %c16_i32 : i32
    %1 = tpu.assume_multiple %0, 16 : i32
    %c0_i32 = arith.constant 0 : i32
    %2 = arith.addi %1, %c0_i32 : i32
    %c0 = arith.constant 0 : index
    %3 = arith.index_cast %2 : i32 to index
    %c1 = arith.constant 1 : index
    %c0_0 = arith.constant 0 : index
    %4 = vector.load %arg2[%c0, %3, %c1, %c0_0] : memref<1x20x20x128xbf16, #tpu.memory_space<vmem>>, vector<1x18x16x128xbf16>
    %5 = vector.shape_cast %4 : vector<1x18x16x128xbf16> to vector<18x16x128xbf16>
    %c0_i32_1 = arith.constant 0 : i32
    %6 = arith.addi %1, %c0_i32_1 : i32
    %c0_2 = arith.constant 0 : index
    %7 = arith.index_cast %6 : i32 to index
    %c2 = arith.constant 2 : index
    %c0_3 = arith.constant 0 : index
    %8 = vector.load %arg2[%c0_2, %7, %c2, %c0_3] : memref<1x20x20x128xbf16, #tpu.memory_space<vmem>>, vector<1x18x16x128xbf16>
    %9 = vector.shape_cast %8 : vector<1x18x16x128xbf16> to vector<18x16x128xbf16>
    %c0_i32_4 = arith.constant 0 : i32
    %10 = arith.addi %1, %c0_i32_4 : i32
    %c0_5 = arith.constant 0 : index
    %11 = arith.index_cast %10 : i32 to index
    %c3 = arith.constant 3 : index
    %c0_6 = arith.constant 0 : index
    %12 = vector.load %arg2[%c0_5, %11, %c3, %c0_6] : memref<1x20x20x128xbf16, #tpu.memory_space<vmem>>, vector<1x18x16x128xbf16>
    %13 = vector.shape_cast %12 : vector<1x18x16x128xbf16> to vector<18x16x128xbf16>
    %c1_i32 = arith.constant 1 : i32
    %14 = arith.addi %1, %c1_i32 : i32
    %c0_7 = arith.constant 0 : index
    %15 = arith.index_cast %14 : i32 to index
    %c1_8 = arith.constant 1 : index
    %c0_9 = arith.constant 0 : index
    %16 = vector.load %arg2[%c0_7, %15, %c1_8, %c0_9] : memref<1x20x20x128xbf16, #tpu.memory_space<vmem>>, vector<1x18x16x128xbf16>
    %17 = vector.shape_cast %16 : vector<1x18x16x128xbf16> to vector<18x16x128xbf16>
    %c1_i32_10 = arith.constant 1 : i32
    %18 = arith.addi %1, %c1_i32_10 : i32
    %c0_11 = arith.constant 0 : index
    %19 = arith.index_cast %18 : i32 to index
    %c2_12 = arith.constant 2 : index
    %c0_13 = arith.constant 0 : index
    %20 = vector.load %arg2[%c0_11, %19, %c2_12, %c0_13] : memref<1x20x20x128xbf16, #tpu.memory_space<vmem>>, vector<1x18x16x128xbf16>
    %21 = vector.shape_cast %20 : vector<1x18x16x128xbf16> to vector<18x16x128xbf16>
    %c1_i32_14 = arith.constant 1 : i32
    %22 = arith.addi %1, %c1_i32_14 : i32
    %c0_15 = arith.constant 0 : index
    %23 = arith.index_cast %22 : i32 to index
    %c3_16 = arith.constant 3 : index
    %c0_17 = arith.constant 0 : index
    %24 = vector.load %arg2[%c0_15, %23, %c3_16, %c0_17] : memref<1x20x20x128xbf16, #tpu.memory_space<vmem>>, vector<1x18x16x128xbf16>
    %25 = vector.shape_cast %24 : vector<1x18x16x128xbf16> to vector<18x16x128xbf16>
    %c2_i32 = arith.constant 2 : i32
    %26 = arith.addi %1, %c2_i32 : i32
    %c0_18 = arith.constant 0 : index
    %27 = arith.index_cast %26 : i32 to index
    %c1_19 = arith.constant 1 : index
    %c0_20 = arith.constant 0 : index
    %28 = vector.load %arg2[%c0_18, %27, %c1_19, %c0_20] : memref<1x20x20x128xbf16, #tpu.memory_space<vmem>>, vector<1x18x16x128xbf16>
    %29 = vector.shape_cast %28 : vector<1x18x16x128xbf16> to vector<18x16x128xbf16>
    %c2_i32_21 = arith.constant 2 : i32
    %30 = arith.addi %1, %c2_i32_21 : i32
    %c0_22 = arith.constant 0 : index
    %31 = arith.index_cast %30 : i32 to index
    %c2_23 = arith.constant 2 : index
    %c0_24 = arith.constant 0 : index
    %32 = vector.load %arg2[%c0_22, %31, %c2_23, %c0_24] : memref<1x20x20x128xbf16, #tpu.memory_space<vmem>>, vector<1x18x16x128xbf16>
    %33 = vector.shape_cast %32 : vector<1x18x16x128xbf16> to vector<18x16x128xbf16>
    %c2_i32_25 = arith.constant 2 : i32
    %34 = arith.addi %1, %c2_i32_25 : i32
    %c0_26 = arith.constant 0 : index
    %35 = arith.index_cast %34 : i32 to index
    %c3_27 = arith.constant 3 : index
    %c0_28 = arith.constant 0 : index
    %36 = vector.load %arg2[%c0_26, %35, %c3_27, %c0_28] : memref<1x20x20x128xbf16, #tpu.memory_space<vmem>>, vector<1x18x16x128xbf16>
    %37 = vector.shape_cast %36 : vector<1x18x16x128xbf16> to vector<18x16x128xbf16>
    %38 = tpu.concatenate %5, %9, %13, %17, %21, %25, %29, %33, %37 in 2 : vector<18x16x128xbf16>, vector<18x16x128xbf16>, vector<18x16x128xbf16>, vector<18x16x128xbf16>, vector<18x16x128xbf16>, vector<18x16x128xbf16>, vector<18x16x128xbf16>, vector<18x16x128xbf16>, vector<18x16x128xbf16> -> vector<18x16x1152xbf16>
    %39 = vector.shape_cast %38 : vector<18x16x1152xbf16> to vector<288x1152xbf16>
    %c0_29 = arith.constant 0 : index
    %c0_30 = arith.constant 0 : index
    %40 = vector.load %arg3[%c0_29, %c0_30] : memref<1152x128xbf16, #tpu.memory_space<vmem>>, vector<1152x128xbf16>
    %cst = arith.constant dense<0.000000e+00> : vector<288x128xf32>
    %41 = tpu.matmul %39, %40, %cst {dimension_numbers = #tpu.dot_dimension_numbers<[1], [0], [0], [1], [0, 0, 1, 1], [], []>} : vector<288x1152xbf16>, vector<1152x128xbf16>, vector<288x128xf32> -> vector<288x128xf32>
    %c0_31 = arith.constant 0 : index
    %c0_32 = arith.constant 0 : index
    %42 = vector.load %arg4[%c0_31, %c0_32] : memref<1x128xf32, #tpu.memory_space<vmem>>, vector<1x128xf32>
    %43 = vector.broadcast %42 : vector<1x128xf32> to vector<288x128xf32>
    %44 = arith.addf %41, %43 : vector<288x128xf32>
    %cst_33 = arith.constant 0.000000e+00 : f32
    %45 = vector.broadcast %cst_33 : f32 to vector<288x128xf32>
    %46 = arith.maximumf %44, %45 : vector<288x128xf32>
    %47 = vector.shape_cast %46 : vector<288x128xf32> to vector<18x16x128xf32>
    %48 = arith.truncf %47 : vector<18x16x128xf32> to vector<18x16x128xbf16>
    %c0_34 = arith.constant 0 : index
    %c1_35 = arith.constant 1 : index
    %c0_36 = arith.constant 0 : index
    %49 = vector.load %arg8[%c0_34, %c1_35, %c0_36] : memref<18x18x128xbf16, #tpu.memory_space<vmem>>, vector<18x16x128xbf16>
    tpu.vector_store %arg8[%c0_34, %c1_35, %c0_36], %48 {strides = array<i32>} : memref<18x18x128xbf16, #tpu.memory_space<vmem>>, vector<18x16x128xbf16>,
    %cst_37 = arith.constant 0.000000e+00 : bf16
    %50 = vector.broadcast %cst_37 : bf16 to vector<18x1x128xbf16>
    %c0_38 = arith.constant 0 : index
    %c0_39 = arith.constant 0 : index
    %c0_40 = arith.constant 0 : index
    %51 = vector.load %arg8[%c0_38, %c0_39, %c0_40] : memref<18x18x128xbf16, #tpu.memory_space<vmem>>, vector<18x1x128xbf16>
    tpu.vector_store %arg8[%c0_38, %c0_39, %c0_40], %50 {strides = array<i32>} : memref<18x18x128xbf16, #tpu.memory_space<vmem>>, vector<18x1x128xbf16>,
    %c0_41 = arith.constant 0 : index
    %c17 = arith.constant 17 : index
    %c0_42 = arith.constant 0 : index
    %52 = vector.load %arg8[%c0_41, %c17, %c0_42] : memref<18x18x128xbf16, #tpu.memory_space<vmem>>, vector<18x1x128xbf16>
    tpu.vector_store %arg8[%c0_41, %c17, %c0_42], %50 {strides = array<i32>} : memref<18x18x128xbf16, #tpu.memory_space<vmem>>, vector<18x1x128xbf16>,
    %cst_43 = arith.constant 0.000000e+00 : bf16
    %53 = vector.broadcast %cst_43 : bf16 to vector<1x18x128xbf16>
    %c0_i32_44 = arith.constant 0 : i32
    %54 = arith.cmpi eq, %arg1, %c0_i32_44 : i32
    %55 = arith.extui %54 : i1 to i32
    %c0_i32_45 = arith.constant 0 : i32
    %56 = arith.cmpi ne, %55, %c0_i32_45 : i32
    scf.if %56 {
      %c0_89 = arith.constant 0 : index
      %c0_90 = arith.constant 0 : index
      %c0_91 = arith.constant 0 : index
      %89 = vector.load %arg8[%c0_89, %c0_90, %c0_91] : memref<18x18x128xbf16, #tpu.memory_space<vmem>>, vector<1x18x128xbf16>
      tpu.vector_store %arg8[%c0_89, %c0_90, %c0_91], %53 {strides = array<i32>} : memref<18x18x128xbf16, #tpu.memory_space<vmem>>, vector<1x18x128xbf16>,
    } else {
    }
    %c0_i32_46 = arith.constant 0 : i32
    %57 = arith.cmpi eq, %arg1, %c0_i32_46 : i32
    %58 = arith.extui %57 : i1 to i32
    %c0_i32_47 = arith.constant 0 : i32
    %59 = arith.cmpi ne, %58, %c0_i32_47 : i32
    scf.if %59 {
      %c17_89 = arith.constant 17 : index
      %c0_90 = arith.constant 0 : index
      %c0_91 = arith.constant 0 : index
      %89 = vector.load %arg8[%c17_89, %c0_90, %c0_91] : memref<18x18x128xbf16, #tpu.memory_space<vmem>>, vector<1x18x128xbf16>
      tpu.vector_store %arg8[%c17_89, %c0_90, %c0_91], %53 {strides = array<i32>} : memref<18x18x128xbf16, #tpu.memory_space<vmem>>, vector<1x18x128xbf16>,
    } else {
    }
    %c0_48 = arith.constant 0 : index
    %c0_49 = arith.constant 0 : index
    %c0_50 = arith.constant 0 : index
    %60 = vector.load %arg8[%c0_48, %c0_49, %c0_50] : memref<18x18x128xbf16, #tpu.memory_space<vmem>>, vector<16x16x128xbf16>
    %c0_51 = arith.constant 0 : index
    %c1_52 = arith.constant 1 : index
    %c0_53 = arith.constant 0 : index
    %61 = vector.load %arg8[%c0_51, %c1_52, %c0_53] : memref<18x18x128xbf16, #tpu.memory_space<vmem>>, vector<16x16x128xbf16>
    %c0_54 = arith.constant 0 : index
    %c2_55 = arith.constant 2 : index
    %c0_56 = arith.constant 0 : index
    %62 = vector.load %arg8[%c0_54, %c2_55, %c0_56] : memref<18x18x128xbf16, #tpu.memory_space<vmem>>, vector<16x16x128xbf16>
    %c1_57 = arith.constant 1 : index
    %c0_58 = arith.constant 0 : index
    %c0_59 = arith.constant 0 : index
    %63 = vector.load %arg8[%c1_57, %c0_58, %c0_59] : memref<18x18x128xbf16, #tpu.memory_space<vmem>>, vector<16x16x128xbf16>
    %c1_60 = arith.constant 1 : index
    %c1_61 = arith.constant 1 : index
    %c0_62 = arith.constant 0 : index
    %64 = vector.load %arg8[%c1_60, %c1_61, %c0_62] : memref<18x18x128xbf16, #tpu.memory_space<vmem>>, vector<16x16x128xbf16>
    %c1_63 = arith.constant 1 : index
    %c2_64 = arith.constant 2 : index
    %c0_65 = arith.constant 0 : index
    %65 = vector.load %arg8[%c1_63, %c2_64, %c0_65] : memref<18x18x128xbf16, #tpu.memory_space<vmem>>, vector<16x16x128xbf16>
    %c2_66 = arith.constant 2 : index
    %c0_67 = arith.constant 0 : index
    %c0_68 = arith.constant 0 : index
    %66 = vector.load %arg8[%c2_66, %c0_67, %c0_68] : memref<18x18x128xbf16, #tpu.memory_space<vmem>>, vector<16x16x128xbf16>
    %c2_69 = arith.constant 2 : index
    %c1_70 = arith.constant 1 : index
    %c0_71 = arith.constant 0 : index
    %67 = vector.load %arg8[%c2_69, %c1_70, %c0_71] : memref<18x18x128xbf16, #tpu.memory_space<vmem>>, vector<16x16x128xbf16>
    %c2_72 = arith.constant 2 : index
    %c2_73 = arith.constant 2 : index
    %c0_74 = arith.constant 0 : index
    %68 = vector.load %arg8[%c2_72, %c2_73, %c0_74] : memref<18x18x128xbf16, #tpu.memory_space<vmem>>, vector<16x16x128xbf16>
    %69 = tpu.concatenate %60, %61, %62, %63, %64, %65, %66, %67, %68 in 2 : vector<16x16x128xbf16>, vector<16x16x128xbf16>, vector<16x16x128xbf16>, vector<16x16x128xbf16>, vector<16x16x128xbf16>, vector<16x16x128xbf16>, vector<16x16x128xbf16>, vector<16x16x128xbf16>, vector<16x16x128xbf16> -> vector<16x16x1152xbf16>
    %70 = vector.shape_cast %69 : vector<16x16x1152xbf16> to vector<256x1152xbf16>
    %c0_75 = arith.constant 0 : index
    %c0_76 = arith.constant 0 : index
    %71 = vector.load %arg5[%c0_75, %c0_76] : memref<1152x128xbf16, #tpu.memory_space<vmem>>, vector<1152x128xbf16>
    %cst_77 = arith.constant dense<0.000000e+00> : vector<256x128xf32>
    %72 = tpu.matmul %70, %71, %cst_77 {dimension_numbers = #tpu.dot_dimension_numbers<[1], [0], [0], [1], [0, 0, 1, 1], [], []>} : vector<256x1152xbf16>, vector<1152x128xbf16>, vector<256x128xf32> -> vector<256x128xf32>
    %c0_78 = arith.constant 0 : index
    %c0_79 = arith.constant 0 : index
    %73 = vector.load %arg6[%c0_78, %c0_79] : memref<1x128xf32, #tpu.memory_space<vmem>>, vector<1x128xf32>
    %74 = vector.broadcast %73 : vector<1x128xf32> to vector<256x128xf32>
    %75 = arith.addf %72, %74 : vector<256x128xf32>
    %c2_i32_80 = arith.constant 2 : i32
    %76 = arith.addi %1, %c2_i32_80 : i32
    %c0_81 = arith.constant 0 : index
    %77 = arith.index_cast %76 : i32 to index
    %c2_82 = arith.constant 2 : index
    %c0_83 = arith.constant 0 : index
    %78 = vector.load %arg2[%c0_81, %77, %c2_82, %c0_83] : memref<1x20x20x128xbf16, #tpu.memory_space<vmem>>, vector<1x16x16x128xbf16>
    %79 = vector.shape_cast %78 : vector<1x16x16x128xbf16> to vector<16x16x128xbf16>
    %80 = vector.shape_cast %79 : vector<16x16x128xbf16> to vector<256x128xbf16>
    %81 = arith.extf %80 : vector<256x128xbf16> to vector<256x128xf32>
    %82 = arith.addf %75, %81 : vector<256x128xf32>
    %cst_84 = arith.constant 0.000000e+00 : f32
    %83 = vector.broadcast %cst_84 : f32 to vector<256x128xf32>
    %84 = arith.maximumf %82, %83 : vector<256x128xf32>
    %85 = vector.shape_cast %84 : vector<256x128xf32> to vector<16x16x128xf32>
    %c0_85 = arith.constant 0 : index
    %c0_86 = arith.constant 0 : index
    %c0_87 = arith.constant 0 : index
    %c0_88 = arith.constant 0 : index
    %86 = vector.load %arg7[%c0_85, %c0_86, %c0_87, %c0_88] : memref<1x16x16x128xf32, #tpu.memory_space<vmem>>, vector<1x16x16x128xf32>
    %87 = vector.shape_cast %86 : vector<1x16x16x128xf32> to vector<16x16x128xf32>
    %88 = vector.shape_cast %85 : vector<16x16x128xf32> to vector<1x16x16x128xf32>
    tpu.vector_store %arg7[%c0_85, %c0_86, %c0_87, %c0_88], %88 {strides = array<i32>} : memref<1x16x16x128xf32, #tpu.memory_space<vmem>>, vector<1x16x16x128xf32>,
    return
  }
  func.func @transform_0(%arg0: i32, %arg1: i32) -> (i32, i32, i32, i32) {
    %c0_i32 = arith.constant 0 : i32
    %c0_i32_0 = arith.constant 0 : i32
    %c0_i32_1 = arith.constant 0 : i32
    %c0_i32_2 = arith.constant 0 : i32
    return %arg0, %c0_i32, %c0_i32_0, %c0_i32_1 : i32, i32, i32, i32
  }
  func.func @transform_1(%arg0: i32, %arg1: i32) -> (i32, i32) {
    %c0_i32 = arith.constant 0 : i32
    %c0_i32_0 = arith.constant 0 : i32
    %c0_i32_1 = arith.constant 0 : i32
    return %c0_i32, %c0_i32_0 : i32, i32
  }
  func.func @transform_2(%arg0: i32, %arg1: i32) -> (i32, i32) {
    %c0_i32 = arith.constant 0 : i32
    %c0_i32_0 = arith.constant 0 : i32
    %c0_i32_1 = arith.constant 0 : i32
    return %c0_i32, %c0_i32_0 : i32, i32
  }
  func.func @transform_3(%arg0: i32, %arg1: i32) -> (i32, i32) {
    %c0_i32 = arith.constant 0 : i32
    %c0_i32_0 = arith.constant 0 : i32
    %c0_i32_1 = arith.constant 0 : i32
    return %c0_i32, %c0_i32_0 : i32, i32
  }
  func.func @transform_4(%arg0: i32, %arg1: i32) -> (i32, i32) {
    %c0_i32 = arith.constant 0 : i32
    %c0_i32_0 = arith.constant 0 : i32
    %c0_i32_1 = arith.constant 0 : i32
    return %c0_i32, %c0_i32_0 : i32, i32
  }
  func.func @transform_5(%arg0: i32, %arg1: i32) -> (i32, i32, i32, i32) {
    %c0_i32 = arith.constant 0 : i32
    %c0_i32_0 = arith.constant 0 : i32
    %c0_i32_1 = arith.constant 0 : i32
    return %arg0, %arg1, %c0_i32, %c0_i32_0 : i32, i32, i32, i32
  }
}

</mosaic_0001>

<llo_original>
// kernel: tpu_custom_call.1
$region0: #{tpu_custom_call.1}
  #allocation0 [shape = 'u32[]', space=smem, size = 0x4, offset = 0x4, fixed_abs, tag = 'smem constant byte address 0x4 - core index']
  #allocation1 [shape = 'u32[144,128]{1,0:T(1,128)}', space=vmem, size = 0x12000, scoped, tag = 'internal scratch']
  #allocation2 [shape = 'bf16[18,18,128]{2,1,0:T(8,128)(2,1)}', space=vmem, size = 0x1b000, scoped, tag = 'scratch operand']
  %s0 = inlined_call_operand.vmem [shape: bf16[2,20,20,128], index: 0, kind: input, shape index: {}]
  %s1 = inlined_call_operand.vmem [shape: bf16[1152,128], index: 1, kind: input, shape index: {}]
  %s2 = inlined_call_operand.vmem [shape: f32[1,128], index: 2, kind: input, shape index: {}]
  %s3 = inlined_call_operand.hbm [shape: bf16[1152,128], index: 3, kind: input, shape index: {}]
  %s4 = inlined_call_operand.vmem [shape: f32[1,128], index: 4, kind: input, shape index: {}]
  %s5 = inlined_call_operand.hbm [shape: f32[2,16,16,128], index: 5, kind: output, shape index: {}]
  %s6 = sld [smem:[#allocation0]]
  $region61: #{tpu_custom_call.1} parent=0
    _
  %s8 = ssub.s32 1, %s6
  %s9 = scalar_select 0, %s8, %s6
  $region1: #{tpu_custom_call.1} parent=0
    #allocation3 [shape = 'u8[294912]{0}', space=vmem, size = 0x48000, scoped, tag = 'input window, operand 3, single buffered']
    #allocation4 [shape = 's32[2]{0}', space=sflag, size = 0x8, scoped, tag = 'scoped memory for tpu_custom_call.1']
    #allocation5 [shape = 's32[2]{0}', space=sflag, size = 0x8, scoped, tag = 'scoped memory for tpu_custom_call.1']
    #allocation6 [shape = 'u8[262144]{0}', space=vmem, size = 0x40000, scoped, tag = 'output window, operand 0']
    %10 = vsyncpa [#allocation4], 0
    %11 = vsyncpa [#allocation5], 0
    %s12 = scalar_lea.sflag [#allocation5], 1
    %13 = vsyncpa %s12, 0
    loop: start=0, step=1, limit=4
    $region2: #{tpu_custom_call.1} parent=1 // loop_pre_header
      _
    $region3: #{tpu_custom_call.1} parent=1 // loop_header
      %s15 = sphi 0, %s19
      %p16 = scmp.ge.s32.totalorder %s15, 4
      %s22 = sphi 0, %s34
      %s23 = sphi 0, %s30
      %s24 = sphi 0, %s22
      %s25 = sphi 0, %s23
      %s26 = sphi 0, %s24
      %s27 = sphi 0, %s25
      %s37 = sphi 0, %s39
      %s40 = sphi 0, %s37
      %s41 = sphi 0, %s40
      %s57 = sphi 0, %s41
      %s61 = sphi 0, %s61
      %s63 = sphi 0, %s61
      %s64 = sphi 0, %s63
      %s78 = sphi 0, %s64
      %s82 = sphi 0, %s82
      %s84 = sphi 0, %s82
      %s85 = sphi 0, %s84
      %s99 = sphi 0, %s85
      %s103 = sphi 0, %s103
      %s105 = sphi 0, %s103
      %s106 = sphi 0, %s105
      %s120 = sphi 0, %s106
      %s124 = sphi 0, %s124
      %s126 = sphi 0, %s124
      %s127 = sphi 0, %s126
      %s141 = sphi 0, %s127
      %s149 = sphi 0, %s151
      %s152 = sphi 0, %s149
      %s153 = sphi 0, %s152
      %s169 = sphi 0, %s153
    $region4: #{tpu_custom_call.1} parent=1 // loop_header_branch
      %18 = sbr.rel (%p16) target = $region8
    $region5: #{tpu_custom_call.1} parent=1 // loop_body
      %s20 = ssub.s32 %s15, 1
      %s21 = ssub.s32 %s15, 2
      %s28 = sadd.s32 1, %s23
      %p29 = scmp.ge.s32.totalorder %s28, 1
      %s30 = scalar_select %p29, 0, %s28
      %s31 = sadd.s32 1, %s22
      %s32 = scalar_select %p29, %s31, %s22
      %p33 = scmp.ge.s32.totalorder %s32, 2
      %s34 = scalar_select %p33, 0, %s32
      %s35 = ssub.s32 %s22, %s34
      %p36 = scmp.eq.s32.totalorder %s35, 0
      %s38 = sadd.s32 %s37, 1
      %s39 = scalar_select %p36, %s37, %s38
      %p42 = pneg %p36
      %p43 = scmp.eq.s32.totalorder %s15, 1
      %p44 = por %p42, %p43
      %p45 = scmp.ne.s32.totalorder %s37, %s40
      %p46 = scmp.eq.s32.totalorder %s15, 0
      %p47 = por %p45, %p46
      %p48 = scmp.ne.s32.totalorder %s37, %s40
      %p49 = scmp.eq.s32.totalorder %s20, 1
      %p50 = por %p48, %p49
      %p51 = scmp.ne.s32.totalorder %s40, %s41
      %p52 = scmp.eq.s32.totalorder %s20, 0
      %p53 = por %p51, %p52
      %p54 = scmp.ne.s32.totalorder %s40, %s41
      %p55 = scmp.eq.s32.totalorder %s21, 1
      %p56 = por %p54, %p55
      %p58 = scmp.ne.s32.totalorder %s41, %s57
      %p59 = scmp.eq.s32.totalorder %s21, 0
      %p60 = por %p58, %p59
      %s62 = sadd.s32 %s61, 1
      %p65 = scmp.eq.s32.totalorder %s15, 1
      %p66 = scmp.ne.s32.totalorder %s61, %s63
      %p67 = scmp.eq.s32.totalorder %s15, 0
      %p68 = por %p66, %p67
      %p69 = scmp.ne.s32.totalorder %s61, %s63
      %p70 = scmp.eq.s32.totalorder %s20, 1
      %p71 = por %p69, %p70
      %p72 = scmp.ne.s32.totalorder %s63, %s64
      %p73 = scmp.eq.s32.totalorder %s20, 0
      %p74 = por %p72, %p73
      %p75 = scmp.ne.s32.totalorder %s63, %s64
      %p76 = scmp.eq.s32.totalorder %s21, 1
      %p77 = por %p75, %p76
      %p79 = scmp.ne.s32.totalorder %s64, %s78
      %p80 = scmp.eq.s32.totalorder %s21, 0
      %p81 = por %p79, %p80
      %s83 = sadd.s32 %s82, 1
      %p86 = scmp.eq.s32.totalorder %s15, 1
      %p87 = scmp.ne.s32.totalorder %s82, %s84
      %p88 = scmp.eq.s32.totalorder %s15, 0
      %p89 = por %p87, %p88
      %p90 = scmp.ne.s32.totalorder %s82, %s84
      %p91 = scmp.eq.s32.totalorder %s20, 1
      %p92 = por %p90, %p91
      %p93 = scmp.ne.s32.totalorder %s84, %s85
      %p94 = scmp.eq.s32.totalorder %s20, 0
      %p95 = por %p93, %p94
      %p96 = scmp.ne.s32.totalorder %s84, %s85
      %p97 = scmp.eq.s32.totalorder %s21, 1
      %p98 = por %p96, %p97
      %p100 = scmp.ne.s32.totalorder %s85, %s99
      %p101 = scmp.eq.s32.totalorder %s21, 0
      %p102 = por %p100, %p101
      %s104 = sadd.s32 %s103, 1
      %p107 = scmp.eq.s32.totalorder %s15, 1
      %p108 = scmp.ne.s32.totalorder %s103, %s105
      %p109 = scmp.eq.s32.totalorder %s15, 0
      %p110 = por %p108, %p109
      %p111 = scmp.ne.s32.totalorder %s103, %s105
      %p112 = scmp.eq.s32.totalorder %s20, 1
      %p113 = por %p111, %p112
      %p114 = scmp.ne.s32.totalorder %s105, %s106
      %p115 = scmp.eq.s32.totalorder %s20, 0
      %p116 = por %p114, %p115
      %p117 = scmp.ne.s32.totalorder %s105, %s106
      %p118 = scmp.eq.s32.totalorder %s21, 1
      %p119 = por %p117, %p118
      %p121 = scmp.ne.s32.totalorder %s106, %s120
      %p122 = scmp.eq.s32.totalorder %s21, 0
      %p123 = por %p121, %p122
      %s125 = sadd.s32 %s124, 1
      %p128 = scmp.eq.s32.totalorder %s15, 1
      %p129 = scmp.ne.s32.totalorder %s124, %s126
      %p130 = scmp.eq.s32.totalorder %s15, 0
      %p131 = por %p129, %p130
      %p132 = scmp.ne.s32.totalorder %s124, %s126
      %p133 = scmp.eq.s32.totalorder %s20, 1
      %p134 = por %p132, %p133
      %p135 = scmp.ne.s32.totalorder %s126, %s127
      %p136 = scmp.eq.s32.totalorder %s20, 0
      %p137 = por %p135, %p136
      %p138 = scmp.ne.s32.totalorder %s126, %s127
      %p139 = scmp.eq.s32.totalorder %s21, 1
      %p140 = por %p138, %p139
      %p142 = scmp.ne.s32.totalorder %s127, %s141
      %p143 = scmp.eq.s32.totalorder %s21, 0
      %p144 = por %p142, %p143
      %s145 = ssub.s32 %s22, %s34
      %s146 = ssub.s32 %s23, %s30
      %s147 = sor.u32 %s145, %s146
      %p148 = scmp.eq.s32.totalorder %s147, 0
      %s150 = sadd.s32 %s149, 1
      %s151 = scalar_select %p148, %s149, %s150
      %p154 = pneg %p148
      %p155 = scmp.eq.s32.totalorder %s15, 1
      %p156 = por %p154, %p155
      %p157 = scmp.ne.s32.totalorder %s149, %s152
      %p158 = scmp.eq.s32.totalorder %s15, 0
      %p159 = por %p157, %p158
      %p160 = scmp.ne.s32.totalorder %s149, %s152
      %p161 = scmp.eq.s32.totalorder %s20, 1
      %p162 = por %p160, %p161
      %p163 = scmp.ne.s32.totalorder %s152, %s153
      %p164 = scmp.eq.s32.totalorder %s20, 0
      %p165 = por %p163, %p164
      %p166 = scmp.ne.s32.totalorder %s152, %s153
      %p167 = scmp.eq.s32.totalorder %s21, 1
      %p168 = por %p166, %p167
      %p170 = scmp.ne.s32.totalorder %s153, %s169
      %p171 = scmp.eq.s32.totalorder %s21, 0
      %p172 = por %p170, %p171
      %p173 = scmp.le.s32.totalorder 1, %s15
      %p174 = scmp.lt.s32.totalorder %s15, 3
      %p175 = pnand %p173, %p174
      %p176 = pneg %p175
      // Predicated region
      $region9: #{tpu_custom_call.1} parent=5 // pred_check
        _
      $region10: #{tpu_custom_call.1} parent=5 // pred_check_branch
        %178 = sbr.rel (%p175) target = $region12
      $region11: #{tpu_custom_call.1} parent=5 // pred_region
        %s179 = ssub.s32 %s15, 1
        // Predicated region
        $region13: #{tpu_custom_call.1} parent=11 // pred_check
          %p180 = pneg %p74
        $region14: #{tpu_custom_call.1} parent=11 // pred_check_branch
          %182 = sbr.rel (%p180) target = $region16
        $region15: #{tpu_custom_call.1} parent=11 // pred_region
          _
        $region16: #{tpu_custom_call.1} parent=11 // pred_fallthru
          _
        // Predicated region
        $region17: #{tpu_custom_call.1} parent=11 // pred_check
          %p183 = pneg %p95
        $region18: #{tpu_custom_call.1} parent=11 // pred_check_branch
          %185 = sbr.rel (%p183) target = $region20
        $region19: #{tpu_custom_call.1} parent=11 // pred_region
          _
        $region20: #{tpu_custom_call.1} parent=11 // pred_fallthru
          _
        // Predicated region
        $region21: #{tpu_custom_call.1} parent=11 // pred_check
          %p186 = pneg %p116
        $region22: #{tpu_custom_call.1} parent=11 // pred_check_branch
          %188 = sbr.rel (%p186) target = $region24
        $region23: #{tpu_custom_call.1} parent=11 // pred_region
          %s190 = ssub.s32 9216, 9216
          %191 = vsyncadd [#allocation4], %s190
          %s192 = sshll.u32 [#allocation3], 4
          %s193 = int_to_ptr.vmem [resolvable:$true] %s192
          %198 = dma.hbm_to_vmem [thread:$0]  %s3, 9216, %s193, [#allocation4], 64, 64, 4
        $region24: #{tpu_custom_call.1} parent=11 // pred_fallthru
          _
        // Predicated region
        $region25: #{tpu_custom_call.1} parent=11 // pred_check
          %p199 = pneg %p137
        $region26: #{tpu_custom_call.1} parent=11 // pred_check_branch
          %201 = sbr.rel (%p199) target = $region28
        $region27: #{tpu_custom_call.1} parent=11 // pred_region
          _
        $region28: #{tpu_custom_call.1} parent=11 // pred_fallthru
          _
      $region12: #{tpu_custom_call.1} parent=5 // pred_fallthru
        _
      %p202 = scmp.lt.s32.totalorder %s15, 2
      // Predicated region
      $region29: #{tpu_custom_call.1} parent=5 // pred_check
        %p203 = pneg %p202
      $region30: #{tpu_custom_call.1} parent=5 // pred_check_branch
        %205 = sbr.rel (%p203) target = $region32
      $region31: #{tpu_custom_call.1} parent=5 // pred_region
        // Predicated region
        $region33: #{tpu_custom_call.1} parent=31 // pred_check
          %p206 = pneg %p47
        $region34: #{tpu_custom_call.1} parent=31 // pred_check_branch
          %208 = sbr.rel (%p206) target = $region36
        $region35: #{tpu_custom_call.1} parent=31 // pred_region
          %p209 = scmp.lt.s32.totalorder %s22, 1
          %s210 = scalar_select %p209, %s22, 1
          %s211 = smul.addr %s210, 60
          %s212 = smul.addr %s211, 4
          %s213 = scalar_lea.vmem %s0, %s212
        $region36: #{tpu_custom_call.1} parent=31 // pred_fallthru
          _
      $region32: #{tpu_custom_call.1} parent=5 // pred_fallthru
        _
      %p214 = scmp.le.s32.totalorder 1, %s15
      %p215 = scmp.lt.s32.totalorder %s15, 3
      %p216 = pnand %p214, %p215
      %p217 = pneg %p216
      // Predicated region
      $region37: #{tpu_custom_call.1} parent=5 // pred_check
        _
      $region38: #{tpu_custom_call.1} parent=5 // pred_check_branch
        %219 = sbr.rel (%p216) target = $region40
      $region39: #{tpu_custom_call.1} parent=5 // pred_region
        %s220 = ssub.s32 %s15, 1
        // Predicated region
        $region41: #{tpu_custom_call.1} parent=39 // pred_check
          %p221 = pneg %p116
        $region42: #{tpu_custom_call.1} parent=39 // pred_check_branch
          %223 = sbr.rel (%p221) target = $region44
        $region43: #{tpu_custom_call.1} parent=39 // pred_region
          %224 = dma.done [#allocation4], 9216
        $region44: #{tpu_custom_call.1} parent=39 // pred_fallthru
          _
        %p225 = scmp.lt.s32.totalorder %s24, 1
        %s226 = scalar_select %p225, %s24, 1
        %s227 = smul.addr %s226, 60
        %s228 = smul.addr %s227, 4
        %s229 = scalar_lea.vmem %s0, %s228
        %p230 = pneg %p53
        %p231 = pneg %p50
        %p232 = pneg %p74
        %p233 = pneg %p71
        %p234 = pneg %p95
        %p235 = pneg %p92
        %p236 = pneg %p116
        %p237 = pneg %p113
        %p238 = pneg %p137
        %p239 = pneg %p134
        %p240 = pneg %p165
        %p241 = pneg %p162
        %s242 = sand.u32 %s152, 1
        %s243 = scalar_lea.sflag [#allocation5], %s242
        %s244 = sand.u32 %s152, 1
        %s245 = smul.addr %s244, 256
        %s246 = scalar_lea.vmem [#allocation6], %s245
        %p247 = scmp.lt.s32.totalorder %s24, 1
        %s248 = scalar_select %p247, %s24, 1
        %s249 = smul.addr %s248, 60
        %s250 = smul.addr %s249, 4
        %s251 = scalar_lea.vmem %s0, %s250
        %s252 = smul.u32 16, %s25
        %s254 = smul.u32 %s25, 16
        %s255 = smul.u32 %s254, 3
        %s256 = smul.addr %s255, 4
        %s257 = scalar_lea.vmem %s251, %s256
        %v258 = vld [vmem:[%s257] sm:$0xf]
        %v259 = vld [vmem:[%s257 + $0x4] sm:$0xf]
        %v260 = vld [vmem:[%s257 + $0x8] sm:$0x1]
        %v261 = vld [vmem:[%s257 + $0xc] sm:$0xf]
        %v262 = vld [vmem:[%s257 + $0x10] sm:$0xf]
        %v263 = vld [vmem:[%s257 + $0x14] sm:$0x1]
        %v264 = vld [vmem:[%s257 + $0x18] sm:$0xf]
        %v265 = vld [vmem:[%s257 + $0x1c] sm:$0xf]
        %v266 = vld [vmem:[%s257 + $0x20] sm:$0x1]
        %v267 = vld [vmem:[%s257 + $0x24] sm:$0xf]
        %v268 = vld [vmem:[%s257 + $0x28] sm:$0xf]
        %v269 = vld [vmem:[%s257 + $0x2c] sm:$0x1]
        %v270 = vld [vmem:[%s257 + $0x30] sm:$0xf]
        %v271 = vld [vmem:[%s257 + $0x34] sm:$0xf]
        %v272 = vld [vmem:[%s257 + $0x38] sm:$0x1]
        %v273 = vld [vmem:[%s257 + $0x3c] sm:$0xf]
        %v274 = vld [vmem:[%s257 + $0x40] sm:$0xf]
        %v275 = vld [vmem:[%s257 + $0x44] sm:$0x1]
        %v276 = vld [vmem:[%s257 + $0x48] sm:$0xf]
        %v277 = vld [vmem:[%s257 + $0x4c] sm:$0xf]
        %v278 = vld [vmem:[%s257 + $0x50] sm:$0x1]
        %v279 = vld [vmem:[%s257 + $0x54] sm:$0xf]
        %v280 = vld [vmem:[%s257 + $0x58] sm:$0xf]
        %v281 = vld [vmem:[%s257 + $0x5c] sm:$0x1]
        %v282 = vld [vmem:[%s257 + $0x60] sm:$0xf]
        %v283 = vld [vmem:[%s257 + $0x64] sm:$0xf]
        %v284 = vld [vmem:[%s257 + $0x68] sm:$0x1]
        %v285 = vld [vmem:[%s257 + $0x6c] sm:$0xf]
        %v286 = vld [vmem:[%s257 + $0x70] sm:$0xf]
        %v287 = vld [vmem:[%s257 + $0x74] sm:$0x1]
        %v288 = vld [vmem:[%s257 + $0x78] sm:$0xf]
        %v289 = vld [vmem:[%s257 + $0x7c] sm:$0xf]
        %v290 = vld [vmem:[%s257 + $0x80] sm:$0x1]
        %v291 = vld [vmem:[%s257 + $0x84] sm:$0xf]
        %v292 = vld [vmem:[%s257 + $0x88] sm:$0xf]
        %v293 = vld [vmem:[%s257 + $0x8c] sm:$0x1]
        %v294 = vld [vmem:[%s257 + $0x90] sm:$0xf]
        %v295 = vld [vmem:[%s257 + $0x94] sm:$0xf]
        %v296 = vld [vmem:[%s257 + $0x98] sm:$0x1]
        %v297 = vld [vmem:[%s257 + $0x9c] sm:$0xf]
        %v298 = vld [vmem:[%s257 + $0xa0] sm:$0xf]
        %v299 = vld [vmem:[%s257 + $0xa4] sm:$0x1]
        %v300 = vld [vmem:[%s257 + $0xa8] sm:$0xf]
        %v301 = vld [vmem:[%s257 + $0xac] sm:$0xf]
        %v302 = vld [vmem:[%s257 + $0xb0] sm:$0x1]
        %v303 = vld [vmem:[%s257 + $0xb4] sm:$0xf]
        %v304 = vld [vmem:[%s257 + $0xb8] sm:$0xf]
        %v305 = vld [vmem:[%s257 + $0xbc] sm:$0x1]
        %v306 = vld [vmem:[%s257 + $0xc0] sm:$0xf]
        %v307 = vld [vmem:[%s257 + $0xc4] sm:$0xf]
        %v308 = vld [vmem:[%s257 + $0xc8] sm:$0x1]
        %v309 = vld [vmem:[%s257 + $0xcc] sm:$0xf]
        %v310 = vld [vmem:[%s257 + $0xd0] sm:$0xf]
        %v311 = vld [vmem:[%s257 + $0xd4] sm:$0x1]
        %v312 = vld [vmem:[%s257] sm:$0xe]
        %v313 = vld [vmem:[%s257 + $0xc] sm:$0xe]
        %v314 = vld [vmem:[%s257 + $0x18] sm:$0xe]
        %v315 = vld [vmem:[%s257 + $0x24] sm:$0xe]
        %v316 = vld [vmem:[%s257 + $0x30] sm:$0xe]
        %v317 = vld [vmem:[%s257 + $0x3c] sm:$0xe]
        %v318 = vld [vmem:[%s257 + $0x48] sm:$0xe]
        %v319 = vld [vmem:[%s257 + $0x54] sm:$0xe]
        %v320 = vld [vmem:[%s257 + $0x60] sm:$0xe]
        %v321 = vld [vmem:[%s257 + $0x6c] sm:$0xe]
        %v322 = vld [vmem:[%s257 + $0x78] sm:$0xe]
        %v323 = vld [vmem:[%s257 + $0x84] sm:$0xe]
        %v324 = vld [vmem:[%s257 + $0x90] sm:$0xe]
        %v325 = vld [vmem:[%s257 + $0x9c] sm:$0xe]
        %v326 = vld [vmem:[%s257 + $0xa8] sm:$0xe]
        %v327 = vld [vmem:[%s257 + $0xb4] sm:$0xe]
        %v328 = vld [vmem:[%s257 + $0xc0] sm:$0xe]
        %v329 = vld [vmem:[%s257 + $0xcc] sm:$0xe]
        %v330 = vld [vmem:[%s257 + $0x8] sm:$0x3]
        %v331 = vld [vmem:[%s257 + $0x14] sm:$0x3]
        %v332 = vld [vmem:[%s257 + $0x20] sm:$0x3]
        %v333 = vld [vmem:[%s257 + $0x2c] sm:$0x3]
        %v334 = vld [vmem:[%s257 + $0x38] sm:$0x3]
        %v335 = vld [vmem:[%s257 + $0x44] sm:$0x3]
        %v336 = vld [vmem:[%s257 + $0x50] sm:$0x3]
        %v337 = vld [vmem:[%s257 + $0x5c] sm:$0x3]
        %v338 = vld [vmem:[%s257 + $0x68] sm:$0x3]
        %v339 = vld [vmem:[%s257 + $0x74] sm:$0x3]
        %v340 = vld [vmem:[%s257 + $0x80] sm:$0x3]
        %v341 = vld [vmem:[%s257 + $0x8c] sm:$0x3]
        %v342 = vld [vmem:[%s257 + $0x98] sm:$0x3]
        %v343 = vld [vmem:[%s257 + $0xa4] sm:$0x3]
        %v344 = vld [vmem:[%s257 + $0xb0] sm:$0x3]
        %v345 = vld [vmem:[%s257 + $0xbc] sm:$0x3]
        %v346 = vld [vmem:[%s257 + $0xc8] sm:$0x3]
        %v347 = vld [vmem:[%s257 + $0xd4] sm:$0x3]
        %s348 = sadd.s32 %s254, 1
        %s349 = smul.u32 %s348, 3
        %s350 = smul.addr %s349, 4
        %s351 = scalar_lea.vmem %s251, %s350
        %v352 = vld [vmem:[%s351] sm:$0xf]
        %v353 = vld [vmem:[%s351 + $0x4] sm:$0xf]
        %v354 = vld [vmem:[%s351 + $0x8] sm:$0x1]
        %v355 = vld [vmem:[%s351 + $0xc] sm:$0xf]
        %v356 = vld [vmem:[%s351 + $0x10] sm:$0xf]
        %v357 = vld [vmem:[%s351 + $0x14] sm:$0x1]
        %v358 = vld [vmem:[%s351 + $0x18] sm:$0xf]
        %v359 = vld [vmem:[%s351 + $0x1c] sm:$0xf]
        %v360 = vld [vmem:[%s351 + $0x20] sm:$0x1]
        %v361 = vld [vmem:[%s351 + $0x24] sm:$0xf]
        %v362 = vld [vmem:[%s351 + $0x28] sm:$0xf]
        %v363 = vld [vmem:[%s351 + $0x2c] sm:$0x1]
        %v364 = vld [vmem:[%s351 + $0x30] sm:$0xf]
        %v365 = vld [vmem:[%s351 + $0x34] sm:$0xf]
        %v366 = vld [vmem:[%s351 + $0x38] sm:$0x1]
        %v367 = vld [vmem:[%s351 + $0x3c] sm:$0xf]
        %v368 = vld [vmem:[%s351 + $0x40] sm:$0xf]
        %v369 = vld [vmem:[%s351 + $0x44] sm:$0x1]
        %v370 = vld [vmem:[%s351 + $0x48] sm:$0xf]
        %v371 = vld [vmem:[%s351 + $0x4c] sm:$0xf]
        %v372 = vld [vmem:[%s351 + $0x50] sm:$0x1]
        %v373 = vld [vmem:[%s351 + $0x54] sm:$0xf]
        %v374 = vld [vmem:[%s351 + $0x58] sm:$0xf]
        %v375 = vld [vmem:[%s351 + $0x5c] sm:$0x1]
        %v376 = vld [vmem:[%s351 + $0x60] sm:$0xf]
        %v377 = vld [vmem:[%s351 + $0x64] sm:$0xf]
        %v378 = vld [vmem:[%s351 + $0x68] sm:$0x1]
        %v379 = vld [vmem:[%s351 + $0x6c] sm:$0xf]
        %v380 = vld [vmem:[%s351 + $0x70] sm:$0xf]
        %v381 = vld [vmem:[%s351 + $0x74] sm:$0x1]
        %v382 = vld [vmem:[%s351 + $0x78] sm:$0xf]
        %v383 = vld [vmem:[%s351 + $0x7c] sm:$0xf]
        %v384 = vld [vmem:[%s351 + $0x80] sm:$0x1]
        %v385 = vld [vmem:[%s351 + $0x84] sm:$0xf]
        %v386 = vld [vmem:[%s351 + $0x88] sm:$0xf]
        %v387 = vld [vmem:[%s351 + $0x8c] sm:$0x1]
        %v388 = vld [vmem:[%s351 + $0x90] sm:$0xf]
        %v389 = vld [vmem:[%s351 + $0x94] sm:$0xf]
        %v390 = vld [vmem:[%s351 + $0x98] sm:$0x1]
        %v391 = vld [vmem:[%s351 + $0x9c] sm:$0xf]
        %v392 = vld [vmem:[%s351 + $0xa0] sm:$0xf]
        %v393 = vld [vmem:[%s351 + $0xa4] sm:$0x1]
        %v394 = vld [vmem:[%s351 + $0xa8] sm:$0xf]
        %v395 = vld [vmem:[%s351 + $0xac] sm:$0xf]
        %v396 = vld [vmem:[%s351 + $0xb0] sm:$0x1]
        %v397 = vld [vmem:[%s351 + $0xb4] sm:$0xf]
        %v398 = vld [vmem:[%s351 + $0xb8] sm:$0xf]
        %v399 = vld [vmem:[%s351 + $0xbc] sm:$0x1]
        %v400 = vld [vmem:[%s351 + $0xc0] sm:$0xf]
        %v401 = vld [vmem:[%s351 + $0xc4] sm:$0xf]
        %v402 = vld [vmem:[%s351 + $0xc8] sm:$0x1]
        %v403 = vld [vmem:[%s351 + $0xcc] sm:$0xf]
        %v404 = vld [vmem:[%s351 + $0xd0] sm:$0xf]
        %v405 = vld [vmem:[%s351 + $0xd4] sm:$0x1]
        %v406 = vld [vmem:[%s351] sm:$0xe]
        %v407 = vld [vmem:[%s351 + $0xc] sm:$0xe]
        %v408 = vld [vmem:[%s351 + $0x18] sm:$0xe]
        %v409 = vld [vmem:[%s351 + $0x24] sm:$0xe]
        %v410 = vld [vmem:[%s351 + $0x30] sm:$0xe]
        %v411 = vld [vmem:[%s351 + $0x3c] sm:$0xe]
        %v412 = vld [vmem:[%s351 + $0x48] sm:$0xe]
        %v413 = vld [vmem:[%s351 + $0x54] sm:$0xe]
        %v414 = vld [vmem:[%s351 + $0x60] sm:$0xe]
        %v415 = vld [vmem:[%s351 + $0x6c] sm:$0xe]
        %v416 = vld [vmem:[%s351 + $0x78] sm:$0xe]
        %v417 = vld [vmem:[%s351 + $0x84] sm:$0xe]
        %v418 = vld [vmem:[%s351 + $0x90] sm:$0xe]
        %v419 = vld [vmem:[%s351 + $0x9c] sm:$0xe]
        %v420 = vld [vmem:[%s351 + $0xa8] sm:$0xe]
        %v421 = vld [vmem:[%s351 + $0xb4] sm:$0xe]
        %v422 = vld [vmem:[%s351 + $0xc0] sm:$0xe]
        %v423 = vld [vmem:[%s351 + $0xcc] sm:$0xe]
        %v424 = vld [vmem:[%s351 + $0x8] sm:$0x3]
        %v425 = vld [vmem:[%s351 + $0x14] sm:$0x3]
        %v426 = vld [vmem:[%s351 + $0x20] sm:$0x3]
        %v427 = vld [vmem:[%s351 + $0x2c] sm:$0x3]
        %v428 = vld [vmem:[%s351 + $0x38] sm:$0x3]
        %v429 = vld [vmem:[%s351 + $0x44] sm:$0x3]
        %v430 = vld [vmem:[%s351 + $0x50] sm:$0x3]
        %v431 = vld [vmem:[%s351 + $0x5c] sm:$0x3]
        %v432 = vld [vmem:[%s351 + $0x68] sm:$0x3]
        %v433 = vld [vmem:[%s351 + $0x74] sm:$0x3]
        %v434 = vld [vmem:[%s351 + $0x80] sm:$0x3]
        %v435 = vld [vmem:[%s351 + $0x8c] sm:$0x3]
        %v436 = vld [vmem:[%s351 + $0x98] sm:$0x3]
        %v437 = vld [vmem:[%s351 + $0xa4] sm:$0x3]
        %v438 = vld [vmem:[%s351 + $0xb0] sm:$0x3]
        %v439 = vld [vmem:[%s351 + $0xbc] sm:$0x3]
        %v440 = vld [vmem:[%s351 + $0xc8] sm:$0x3]
        %v441 = vld [vmem:[%s351 + $0xd4] sm:$0x3]
        %s442 = sadd.s32 %s254, 2
        %s443 = smul.u32 %s442, 3
        %s444 = smul.addr %s443, 4
        %s445 = scalar_lea.vmem %s251, %s444
        %v446 = vld [vmem:[%s445] sm:$0xf]
        %v447 = vld [vmem:[%s445 + $0x4] sm:$0xf]
        %v448 = vld [vmem:[%s445 + $0x8] sm:$0x1]
        %v449 = vld [vmem:[%s445 + $0xc] sm:$0xf]
        %v450 = vld [vmem:[%s445 + $0x10] sm:$0xf]
        %v451 = vld [vmem:[%s445 + $0x14] sm:$0x1]
        %v452 = vld [vmem:[%s445 + $0x18] sm:$0xf]
        %v453 = vld [vmem:[%s445 + $0x1c] sm:$0xf]
        %v454 = vld [vmem:[%s445 + $0x20] sm:$0x1]
        %v455 = vld [vmem:[%s445 + $0x24] sm:$0xf]
        %v456 = vld [vmem:[%s445 + $0x28] sm:$0xf]
        %v457 = vld [vmem:[%s445 + $0x2c] sm:$0x1]
        %v458 = vld [vmem:[%s445 + $0x30] sm:$0xf]
        %v459 = vld [vmem:[%s445 + $0x34] sm:$0xf]
        %v460 = vld [vmem:[%s445 + $0x38] sm:$0x1]
        %v461 = vld [vmem:[%s445 + $0x3c] sm:$0xf]
        %v462 = vld [vmem:[%s445 + $0x40] sm:$0xf]
        %v463 = vld [vmem:[%s445 + $0x44] sm:$0x1]
        %v464 = vld [vmem:[%s445 + $0x48] sm:$0xf]
        %v465 = vld [vmem:[%s445 + $0x4c] sm:$0xf]
        %v466 = vld [vmem:[%s445 + $0x50] sm:$0x1]
        %v467 = vld [vmem:[%s445 + $0x54] sm:$0xf]
        %v468 = vld [vmem:[%s445 + $0x58] sm:$0xf]
        %v469 = vld [vmem:[%s445 + $0x5c] sm:$0x1]
        %v470 = vld [vmem:[%s445 + $0x60] sm:$0xf]
        %v471 = vld [vmem:[%s445 + $0x64] sm:$0xf]
        %v472 = vld [vmem:[%s445 + $0x68] sm:$0x1]
        %v473 = vld [vmem:[%s445 + $0x6c] sm:$0xf]
        %v474 = vld [vmem:[%s445 + $0x70] sm:$0xf]
        %v475 = vld [vmem:[%s445 + $0x74] sm:$0x1]
        %v476 = vld [vmem:[%s445 + $0x78] sm:$0xf]
        %v477 = vld [vmem:[%s445 + $0x7c] sm:$0xf]
        %v478 = vld [vmem:[%s445 + $0x80] sm:$0x1]
        %v479 = vld [vmem:[%s445 + $0x84] sm:$0xf]
        %v480 = vld [vmem:[%s445 + $0x88] sm:$0xf]
        %v481 = vld [vmem:[%s445 + $0x8c] sm:$0x1]
        %v482 = vld [vmem:[%s445 + $0x90] sm:$0xf]
        %v483 = vld [vmem:[%s445 + $0x94] sm:$0xf]
        %v484 = vld [vmem:[%s445 + $0x98] sm:$0x1]
        %v485 = vld [vmem:[%s445 + $0x9c] sm:$0xf]
        %v486 = vld [vmem:[%s445 + $0xa0] sm:$0xf]
        %v487 = vld [vmem:[%s445 + $0xa4] sm:$0x1]
        %v488 = vld [vmem:[%s445 + $0xa8] sm:$0xf]
        %v489 = vld [vmem:[%s445 + $0xac] sm:$0xf]
        %v490 = vld [vmem:[%s445 + $0xb0] sm:$0x1]
        %v491 = vld [vmem:[%s445 + $0xb4] sm:$0xf]
        %v492 = vld [vmem:[%s445 + $0xb8] sm:$0xf]
        %v493 = vld [vmem:[%s445 + $0xbc] sm:$0x1]
        %v494 = vld [vmem:[%s445 + $0xc0] sm:$0xf]
        %v495 = vld [vmem:[%s445 + $0xc4] sm:$0xf]
        %v496 = vld [vmem:[%s445 + $0xc8] sm:$0x1]
        %v497 = vld [vmem:[%s445 + $0xcc] sm:$0xf]
        %v498 = vld [vmem:[%s445 + $0xd0] sm:$0xf]
        %v499 = vld [vmem:[%s445 + $0xd4] sm:$0x1]
        %v500 = vld [vmem:[%s445] sm:$0xe]
        %v501 = vld [vmem:[%s445 + $0xc] sm:$0xe]
        %v502 = vld [vmem:[%s445 + $0x18] sm:$0xe]
        %v503 = vld [vmem:[%s445 + $0x24] sm:$0xe]
        %v504 = vld [vmem:[%s445 + $0x30] sm:$0xe]
        %v505 = vld [vmem:[%s445 + $0x3c] sm:$0xe]
        %v506 = vld [vmem:[%s445 + $0x48] sm:$0xe]
        %v507 = vld [vmem:[%s445 + $0x54] sm:$0xe]
        %v508 = vld [vmem:[%s445 + $0x60] sm:$0xe]
        %v509 = vld [vmem:[%s445 + $0x6c] sm:$0xe]
        %v510 = vld [vmem:[%s445 + $0x78] sm:$0xe]
        %v511 = vld [vmem:[%s445 + $0x84] sm:$0xe]
        %v512 = vld [vmem:[%s445 + $0x90] sm:$0xe]
        %v513 = vld [vmem:[%s445 + $0x9c] sm:$0xe]
        %v514 = vld [vmem:[%s445 + $0xa8] sm:$0xe]
        %v515 = vld [vmem:[%s445 + $0xb4] sm:$0xe]
        %v516 = vld [vmem:[%s445 + $0xc0] sm:$0xe]
        %v517 = vld [vmem:[%s445 + $0xcc] sm:$0xe]
        %v518 = vld [vmem:[%s445 + $0x8] sm:$0x3]
        %v519 = vld [vmem:[%s445 + $0x14] sm:$0x3]
        %v520 = vld [vmem:[%s445 + $0x20] sm:$0x3]
        %v521 = vld [vmem:[%s445 + $0x2c] sm:$0x3]
        %v522 = vld [vmem:[%s445 + $0x38] sm:$0x3]
        %v523 = vld [vmem:[%s445 + $0x44] sm:$0x3]
        %v524 = vld [vmem:[%s445 + $0x50] sm:$0x3]
        %v525 = vld [vmem:[%s445 + $0x5c] sm:$0x3]
        %v526 = vld [vmem:[%s445 + $0x68] sm:$0x3]
        %v527 = vld [vmem:[%s445 + $0x74] sm:$0x3]
        %v528 = vld [vmem:[%s445 + $0x80] sm:$0x3]
        %v529 = vld [vmem:[%s445 + $0x8c] sm:$0x3]
        %v530 = vld [vmem:[%s445 + $0x98] sm:$0x3]
        %v531 = vld [vmem:[%s445 + $0xa4] sm:$0x3]
        %v532 = vld [vmem:[%s445 + $0xb0] sm:$0x3]
        %v533 = vld [vmem:[%s445 + $0xbc] sm:$0x3]
        %v534 = vld [vmem:[%s445 + $0xc8] sm:$0x3]
        %v535 = vld [vmem:[%s445 + $0xd4] sm:$0x3]
        %v590 = vunpack.c.l.b16 %v258
        %v591 = vunpack.c.l.b16 %v259
        %v592 = vunpack.c.l.b16 %v260
        %v593 = vunpack.c.l.b16 %v261
        %v594 = vunpack.c.l.b16 %v262
        %v595 = vunpack.c.l.b16 %v263
        %v596 = vunpack.c.l.b16 %v264
        %v597 = vunpack.c.l.b16 %v265
        %v598 = vunpack.c.l.b16 %v266
        %v599 = vunpack.c.l.b16 %v267
        %v600 = vunpack.c.l.b16 %v268
        %v601 = vunpack.c.l.b16 %v269
        %v602 = vunpack.c.l.b16 %v270
        %v603 = vunpack.c.l.b16 %v271
        %v604 = vunpack.c.l.b16 %v272
        %v605 = vunpack.c.l.b16 %v273
        %v606 = vunpack.c.l.b16 %v274
        %v607 = vunpack.c.l.b16 %v275
        %v608 = vunpack.c.l.b16 %v276
        %v609 = vunpack.c.l.b16 %v277
        %v610 = vunpack.c.l.b16 %v278
        %v611 = vunpack.c.l.b16 %v279
        %v612 = vunpack.c.l.b16 %v280
        %v613 = vunpack.c.l.b16 %v281
        %v614 = vunpack.c.l.b16 %v282
        %v615 = vunpack.c.l.b16 %v283
        %v616 = vunpack.c.l.b16 %v284
        %v617 = vunpack.c.l.b16 %v285
        %v618 = vunpack.c.l.b16 %v286
        %v619 = vunpack.c.l.b16 %v287
        %v620 = vunpack.c.l.b16 %v288
        %v621 = vunpack.c.l.b16 %v289
        %v622 = vunpack.c.l.b16 %v290
        %v623 = vunpack.c.l.b16 %v291
        %v624 = vunpack.c.l.b16 %v292
        %v625 = vunpack.c.l.b16 %v293
        %v626 = vunpack.c.l.b16 %v294
        %v627 = vunpack.c.l.b16 %v295
        %v628 = vunpack.c.l.b16 %v296
        %v629 = vunpack.c.l.b16 %v297
        %v630 = vunpack.c.l.b16 %v298
        %v631 = vunpack.c.l.b16 %v299
        %v632 = vunpack.c.l.b16 %v300
        %v633 = vunpack.c.l.b16 %v301
        %v634 = vunpack.c.l.b16 %v302
        %v635 = vunpack.c.l.b16 %v303
        %v636 = vunpack.c.l.b16 %v304
        %v637 = vunpack.c.l.b16 %v305
        %v638 = vunpack.c.l.b16 %v306
        %v639 = vunpack.c.l.b16 %v307
        %v640 = vunpack.c.l.b16 %v308
        %v641 = vunpack.c.l.b16 %v309
        %v642 = vunpack.c.l.b16 %v310
        %v643 = vunpack.c.l.b16 %v311
        %v644 = vpack.c.b16 %v591, %v590
        %v645 = vpack.c.b16 %v592, %v592
        %v646 = vpack.c.b16 %v594, %v593
        %v647 = vpack.c.b16 %v595, %v595
        %v648 = vpack.c.b16 %v597, %v596
        %v649 = vpack.c.b16 %v598, %v598
        %v650 = vpack.c.b16 %v600, %v599
        %v651 = vpack.c.b16 %v601, %v601
        %v652 = vpack.c.b16 %v603, %v602
        %v653 = vpack.c.b16 %v604, %v604
        %v654 = vpack.c.b16 %v606, %v605
        %v655 = vpack.c.b16 %v607, %v607
        %v656 = vpack.c.b16 %v609, %v608
        %v657 = vpack.c.b16 %v610, %v610
        %v658 = vpack.c.b16 %v612, %v611
        %v659 = vpack.c.b16 %v613, %v613
        %v660 = vpack.c.b16 %v615, %v614
        %v661 = vpack.c.b16 %v616, %v616
        %v662 = vpack.c.b16 %v618, %v617
        %v663 = vpack.c.b16 %v619, %v619
        %v664 = vpack.c.b16 %v621, %v620
        %v665 = vpack.c.b16 %v622, %v622
        %v666 = vpack.c.b16 %v624, %v623
        %v667 = vpack.c.b16 %v625, %v625
        %v668 = vpack.c.b16 %v627, %v626
        %v669 = vpack.c.b16 %v628, %v628
        %v670 = vpack.c.b16 %v630, %v629
        %v671 = vpack.c.b16 %v631, %v631
        %v672 = vpack.c.b16 %v633, %v632
        %v673 = vpack.c.b16 %v634, %v634
        %v674 = vpack.c.b16 %v636, %v635
        %v675 = vpack.c.b16 %v637, %v637
        %v676 = vpack.c.b16 %v639, %v638
        %v677 = vpack.c.b16 %v640, %v640
        %v678 = vpack.c.b16 %v642, %v641
        %v679 = vpack.c.b16 %v643, %v643
        %v698 = vunpack.c.l.b16 %v312
        %v699 = vunpack.c.l.b16 %v313
        %v700 = vunpack.c.l.b16 %v314
        %v701 = vunpack.c.l.b16 %v315
        %v702 = vunpack.c.l.b16 %v316
        %v703 = vunpack.c.l.b16 %v317
        %v704 = vunpack.c.l.b16 %v318
        %v705 = vunpack.c.l.b16 %v319
        %v706 = vunpack.c.l.b16 %v320
        %v707 = vunpack.c.l.b16 %v321
        %v708 = vunpack.c.l.b16 %v322
        %v709 = vunpack.c.l.b16 %v323
        %v710 = vunpack.c.l.b16 %v324
        %v711 = vunpack.c.l.b16 %v325
        %v712 = vunpack.c.l.b16 %v326
        %v713 = vunpack.c.l.b16 %v327
        %v714 = vunpack.c.l.b16 %v328
        %v715 = vunpack.c.l.b16 %v329
        %v716 = vpack.c.b16 %v591, %v698
        %v717 = vpack.c.b16 %v594, %v699
        %v718 = vpack.c.b16 %v597, %v700
        %v719 = vpack.c.b16 %v600, %v701
        %v720 = vpack.c.b16 %v603, %v702
        %v721 = vpack.c.b16 %v606, %v703
        %v722 = vpack.c.b16 %v609, %v704
        %v723 = vpack.c.b16 %v612, %v705
        %v724 = vpack.c.b16 %v615, %v706
        %v725 = vpack.c.b16 %v618, %v707
        %v726 = vpack.c.b16 %v621, %v708
        %v727 = vpack.c.b16 %v624, %v709
        %v728 = vpack.c.b16 %v627, %v710
        %v729 = vpack.c.b16 %v630, %v711
        %v730 = vpack.c.b16 %v633, %v712
        %v731 = vpack.c.b16 %v636, %v713
        %v732 = vpack.c.b16 %v639, %v714
        %v733 = vpack.c.b16 %v642, %v715
        %vm734 = vsmask.f32 7424
        %v736 = vshrl.u32 %v716, 16
        %v738 = vshll.u32 %v716, 16
        %v740 = vrot.slane %v738, 1
        %v741 = vor.u32 %v736, %v740
        %v743 = vshll.u32 %v645, 16
        %v745 = vrot.slane %v743, 1
        %v746 = vsel %vm734, %v741, %v745
        %v747 = vshrl.u32 %v645, 16
        %v750 = vshrl.u32 %v717, 16
        %v752 = vshll.u32 %v717, 16
        %v754 = vrot.slane %v752, 1
        %v755 = vor.u32 %v750, %v754
        %v757 = vshll.u32 %v647, 16
        %v759 = vrot.slane %v757, 1
        %v760 = vsel %vm734, %v755, %v759
        %v761 = vshrl.u32 %v647, 16
        %v764 = vshrl.u32 %v718, 16
        %v766 = vshll.u32 %v718, 16
        %v768 = vrot.slane %v766, 1
        %v769 = vor.u32 %v764, %v768
        %v771 = vshll.u32 %v649, 16
        %v773 = vrot.slane %v771, 1
        %v774 = vsel %vm734, %v769, %v773
        %v775 = vshrl.u32 %v649, 16
        %v778 = vshrl.u32 %v719, 16
        %v780 = vshll.u32 %v719, 16
        %v782 = vrot.slane %v780, 1
        %v783 = vor.u32 %v778, %v782
        %v785 = vshll.u32 %v651, 16
        %v787 = vrot.slane %v785, 1
        %v788 = vsel %vm734, %v783, %v787
        %v789 = vshrl.u32 %v651, 16
        %v792 = vshrl.u32 %v720, 16
        %v794 = vshll.u32 %v720, 16
        %v796 = vrot.slane %v794, 1
        %v797 = vor.u32 %v792, %v796
        %v799 = vshll.u32 %v653, 16
        %v801 = vrot.slane %v799, 1
        %v802 = vsel %vm734, %v797, %v801
        %v803 = vshrl.u32 %v653, 16
        %v806 = vshrl.u32 %v721, 16
        %v808 = vshll.u32 %v721, 16
        %v810 = vrot.slane %v808, 1
        %v811 = vor.u32 %v806, %v810
        %v813 = vshll.u32 %v655, 16
        %v815 = vrot.slane %v813, 1
        %v816 = vsel %vm734, %v811, %v815
        %v817 = vshrl.u32 %v655, 16
        %v820 = vshrl.u32 %v722, 16
        %v822 = vshll.u32 %v722, 16
        %v824 = vrot.slane %v822, 1
        %v825 = vor.u32 %v820, %v824
        %v827 = vshll.u32 %v657, 16
        %v829 = vrot.slane %v827, 1
        %v830 = vsel %vm734, %v825, %v829
        %v831 = vshrl.u32 %v657, 16
        %v834 = vshrl.u32 %v723, 16
        %v836 = vshll.u32 %v723, 16
        %v838 = vrot.slane %v836, 1
        %v839 = vor.u32 %v834, %v838
        %v841 = vshll.u32 %v659, 16
        %v843 = vrot.slane %v841, 1
        %v844 = vsel %vm734, %v839, %v843
        %v845 = vshrl.u32 %v659, 16
        %v848 = vshrl.u32 %v724, 16
        %v850 = vshll.u32 %v724, 16
        %v852 = vrot.slane %v850, 1
        %v853 = vor.u32 %v848, %v852
        %v855 = vshll.u32 %v661, 16
        %v857 = vrot.slane %v855, 1
        %v858 = vsel %vm734, %v853, %v857
        %v859 = vshrl.u32 %v661, 16
        %v862 = vshrl.u32 %v725, 16
        %v864 = vshll.u32 %v725, 16
        %v866 = vrot.slane %v864, 1
        %v867 = vor.u32 %v862, %v866
        %v869 = vshll.u32 %v663, 16
        %v871 = vrot.slane %v869, 1
        %v872 = vsel %vm734, %v867, %v871
        %v873 = vshrl.u32 %v663, 16
        %v876 = vshrl.u32 %v726, 16
        %v878 = vshll.u32 %v726, 16
        %v880 = vrot.slane %v878, 1
        %v881 = vor.u32 %v876, %v880
        %v883 = vshll.u32 %v665, 16
        %v885 = vrot.slane %v883, 1
        %v886 = vsel %vm734, %v881, %v885
        %v887 = vshrl.u32 %v665, 16
        %v890 = vshrl.u32 %v727, 16
        %v892 = vshll.u32 %v727, 16
        %v894 = vrot.slane %v892, 1
        %v895 = vor.u32 %v890, %v894
        %v897 = vshll.u32 %v667, 16
        %v899 = vrot.slane %v897, 1
        %v900 = vsel %vm734, %v895, %v899
        %v901 = vshrl.u32 %v667, 16
        %v904 = vshrl.u32 %v728, 16
        %v906 = vshll.u32 %v728, 16
        %v908 = vrot.slane %v906, 1
        %v909 = vor.u32 %v904, %v908
        %v911 = vshll.u32 %v669, 16
        %v913 = vrot.slane %v911, 1
        %v914 = vsel %vm734, %v909, %v913
        %v915 = vshrl.u32 %v669, 16
        %v918 = vshrl.u32 %v729, 16
        %v920 = vshll.u32 %v729, 16
        %v922 = vrot.slane %v920, 1
        %v923 = vor.u32 %v918, %v922
        %v925 = vshll.u32 %v671, 16
        %v927 = vrot.slane %v925, 1
        %v928 = vsel %vm734, %v923, %v927
        %v929 = vshrl.u32 %v671, 16
        %v932 = vshrl.u32 %v730, 16
        %v934 = vshll.u32 %v730, 16
        %v936 = vrot.slane %v934, 1
        %v937 = vor.u32 %v932, %v936
        %v939 = vshll.u32 %v673, 16
        %v941 = vrot.slane %v939, 1
        %v942 = vsel %vm734, %v937, %v941
        %v943 = vshrl.u32 %v673, 16
        %v946 = vshrl.u32 %v731, 16
        %v948 = vshll.u32 %v731, 16
        %v950 = vrot.slane %v948, 1
        %v951 = vor.u32 %v946, %v950
        %v953 = vshll.u32 %v675, 16
        %v955 = vrot.slane %v953, 1
        %v956 = vsel %vm734, %v951, %v955
        %v957 = vshrl.u32 %v675, 16
        %v960 = vshrl.u32 %v732, 16
        %v962 = vshll.u32 %v732, 16
        %v964 = vrot.slane %v962, 1
        %v965 = vor.u32 %v960, %v964
        %v967 = vshll.u32 %v677, 16
        %v969 = vrot.slane %v967, 1
        %v970 = vsel %vm734, %v965, %v969
        %v971 = vshrl.u32 %v677, 16
        %v974 = vshrl.u32 %v733, 16
        %v976 = vshll.u32 %v733, 16
        %v978 = vrot.slane %v976, 1
        %v979 = vor.u32 %v974, %v978
        %v981 = vshll.u32 %v679, 16
        %v983 = vrot.slane %v981, 1
        %v984 = vsel %vm734, %v979, %v983
        %v985 = vshrl.u32 %v679, 16
        %v1005 = vunpack.c.l.b16 %v330
        %v1006 = vunpack.c.l.b16 %v331
        %v1007 = vunpack.c.l.b16 %v332
        %v1008 = vunpack.c.l.b16 %v333
        %v1009 = vunpack.c.l.b16 %v334
        %v1010 = vunpack.c.l.b16 %v335
        %v1011 = vunpack.c.l.b16 %v336
        %v1012 = vunpack.c.l.b16 %v337
        %v1013 = vunpack.c.l.b16 %v338
        %v1014 = vunpack.c.l.b16 %v339
        %v1015 = vunpack.c.l.b16 %v340
        %v1016 = vunpack.c.l.b16 %v341
        %v1017 = vunpack.c.l.b16 %v342
        %v1018 = vunpack.c.l.b16 %v343
        %v1019 = vunpack.c.l.b16 %v344
        %v1020 = vunpack.c.l.b16 %v345
        %v1021 = vunpack.c.l.b16 %v346
        %v1022 = vunpack.c.l.b16 %v347
        %v1023 = vpack.c.b16 %v1005, %v1005
        %v1024 = vpack.c.b16 %v1006, %v1006
        %v1025 = vpack.c.b16 %v1007, %v1007
        %v1026 = vpack.c.b16 %v1008, %v1008
        %v1027 = vpack.c.b16 %v1009, %v1009
        %v1028 = vpack.c.b16 %v1010, %v1010
        %v1029 = vpack.c.b16 %v1011, %v1011
        %v1030 = vpack.c.b16 %v1012, %v1012
        %v1031 = vpack.c.b16 %v1013, %v1013
        %v1032 = vpack.c.b16 %v1014, %v1014
        %v1033 = vpack.c.b16 %v1015, %v1015
        %v1034 = vpack.c.b16 %v1016, %v1016
        %v1035 = vpack.c.b16 %v1017, %v1017
        %v1036 = vpack.c.b16 %v1018, %v1018
        %v1037 = vpack.c.b16 %v1019, %v1019
        %v1038 = vpack.c.b16 %v1020, %v1020
        %v1039 = vpack.c.b16 %v1021, %v1021
        %v1040 = vpack.c.b16 %v1022, %v1022
        %vm1041 = vcmask 1046528
        %v1042 = vrot.slane %v716, 1
        %v1043 = vrot.slane %v1023, 1
        %v1044 = vsel %vm1041, %v1042, %v1043
        %v1045 = vrot.slane %v717, 1
        %v1046 = vrot.slane %v1024, 1
        %v1047 = vsel %vm1041, %v1045, %v1046
        %v1048 = vrot.slane %v718, 1
        %v1049 = vrot.slane %v1025, 1
        %v1050 = vsel %vm1041, %v1048, %v1049
        %v1051 = vrot.slane %v719, 1
        %v1052 = vrot.slane %v1026, 1
        %v1053 = vsel %vm1041, %v1051, %v1052
        %v1054 = vrot.slane %v720, 1
        %v1055 = vrot.slane %v1027, 1
        %v1056 = vsel %vm1041, %v1054, %v1055
        %v1057 = vrot.slane %v721, 1
        %v1058 = vrot.slane %v1028, 1
        %v1059 = vsel %vm1041, %v1057, %v1058
        %v1060 = vrot.slane %v722, 1
        %v1061 = vrot.slane %v1029, 1
        %v1062 = vsel %vm1041, %v1060, %v1061
        %v1063 = vrot.slane %v723, 1
        %v1064 = vrot.slane %v1030, 1
        %v1065 = vsel %vm1041, %v1063, %v1064
        %v1066 = vrot.slane %v724, 1
        %v1067 = vrot.slane %v1031, 1
        %v1068 = vsel %vm1041, %v1066, %v1067
        %v1069 = vrot.slane %v725, 1
        %v1070 = vrot.slane %v1032, 1
        %v1071 = vsel %vm1041, %v1069, %v1070
        %v1072 = vrot.slane %v726, 1
        %v1073 = vrot.slane %v1033, 1
        %v1074 = vsel %vm1041, %v1072, %v1073
        %v1075 = vrot.slane %v727, 1
        %v1076 = vrot.slane %v1034, 1
        %v1077 = vsel %vm1041, %v1075, %v1076
        %v1078 = vrot.slane %v728, 1
        %v1079 = vrot.slane %v1035, 1
        %v1080 = vsel %vm1041, %v1078, %v1079
        %v1081 = vrot.slane %v729, 1
        %v1082 = vrot.slane %v1036, 1
        %v1083 = vsel %vm1041, %v1081, %v1082
        %v1084 = vrot.slane %v730, 1
        %v1085 = vrot.slane %v1037, 1
        %v1086 = vsel %vm1041, %v1084, %v1085
        %v1087 = vrot.slane %v731, 1
        %v1088 = vrot.slane %v1038, 1
        %v1089 = vsel %vm1041, %v1087, %v1088
        %v1090 = vrot.slane %v732, 1
        %v1091 = vrot.slane %v1039, 1
        %v1092 = vsel %vm1041, %v1090, %v1091
        %v1093 = vrot.slane %v733, 1
        %v1094 = vrot.slane %v1040, 1
        %v1095 = vsel %vm1041, %v1093, %v1094
        %v1150 = vunpack.c.l.b16 %v352
        %v1151 = vunpack.c.l.b16 %v353
        %v1152 = vunpack.c.l.b16 %v354
        %v1153 = vunpack.c.l.b16 %v355
        %v1154 = vunpack.c.l.b16 %v356
        %v1155 = vunpack.c.l.b16 %v357
        %v1156 = vunpack.c.l.b16 %v358
        %v1157 = vunpack.c.l.b16 %v359
        %v1158 = vunpack.c.l.b16 %v360
        %v1159 = vunpack.c.l.b16 %v361
        %v1160 = vunpack.c.l.b16 %v362
        %v1161 = vunpack.c.l.b16 %v363
        %v1162 = vunpack.c.l.b16 %v364
        %v1163 = vunpack.c.l.b16 %v365
        %v1164 = vunpack.c.l.b16 %v366
        %v1165 = vunpack.c.l.b16 %v367
        %v1166 = vunpack.c.l.b16 %v368
        %v1167 = vunpack.c.l.b16 %v369
        %v1168 = vunpack.c.l.b16 %v370
        %v1169 = vunpack.c.l.b16 %v371
        %v1170 = vunpack.c.l.b16 %v372
        %v1171 = vunpack.c.l.b16 %v373
        %v1172 = vunpack.c.l.b16 %v374
        %v1173 = vunpack.c.l.b16 %v375
        %v1174 = vunpack.c.l.b16 %v376
        %v1175 = vunpack.c.l.b16 %v377
        %v1176 = vunpack.c.l.b16 %v378
        %v1177 = vunpack.c.l.b16 %v379
        %v1178 = vunpack.c.l.b16 %v380
        %v1179 = vunpack.c.l.b16 %v381
        %v1180 = vunpack.c.l.b16 %v382
        %v1181 = vunpack.c.l.b16 %v383
        %v1182 = vunpack.c.l.b16 %v384
        %v1183 = vunpack.c.l.b16 %v385
        %v1184 = vunpack.c.l.b16 %v386
        %v1185 = vunpack.c.l.b16 %v387
        %v1186 = vunpack.c.l.b16 %v388
        %v1187 = vunpack.c.l.b16 %v389
        %v1188 = vunpack.c.l.b16 %v390
        %v1189 = vunpack.c.l.b16 %v391
        %v1190 = vunpack.c.l.b16 %v392
        %v1191 = vunpack.c.l.b16 %v393
        %v1192 = vunpack.c.l.b16 %v394
        %v1193 = vunpack.c.l.b16 %v395
        %v1194 = vunpack.c.l.b16 %v396
        %v1195 = vunpack.c.l.b16 %v397
        %v1196 = vunpack.c.l.b16 %v398
        %v1197 = vunpack.c.l.b16 %v399
        %v1198 = vunpack.c.l.b16 %v400
        %v1199 = vunpack.c.l.b16 %v401
        %v1200 = vunpack.c.l.b16 %v402
        %v1201 = vunpack.c.l.b16 %v403
        %v1202 = vunpack.c.l.b16 %v404
        %v1203 = vunpack.c.l.b16 %v405
        %v1204 = vpack.c.b16 %v1151, %v1150
        %v1205 = vpack.c.b16 %v1152, %v1152
        %v1206 = vpack.c.b16 %v1154, %v1153
        %v1207 = vpack.c.b16 %v1155, %v1155
        %v1208 = vpack.c.b16 %v1157, %v1156
        %v1209 = vpack.c.b16 %v1158, %v1158
        %v1210 = vpack.c.b16 %v1160, %v1159
        %v1211 = vpack.c.b16 %v1161, %v1161
        %v1212 = vpack.c.b16 %v1163, %v1162
        %v1213 = vpack.c.b16 %v1164, %v1164
        %v1214 = vpack.c.b16 %v1166, %v1165
        %v1215 = vpack.c.b16 %v1167, %v1167
        %v1216 = vpack.c.b16 %v1169, %v1168
        %v1217 = vpack.c.b16 %v1170, %v1170
        %v1218 = vpack.c.b16 %v1172, %v1171
        %v1219 = vpack.c.b16 %v1173, %v1173
        %v1220 = vpack.c.b16 %v1175, %v1174
        %v1221 = vpack.c.b16 %v1176, %v1176
        %v1222 = vpack.c.b16 %v1178, %v1177
        %v1223 = vpack.c.b16 %v1179, %v1179
        %v1224 = vpack.c.b16 %v1181, %v1180
        %v1225 = vpack.c.b16 %v1182, %v1182
        %v1226 = vpack.c.b16 %v1184, %v1183
        %v1227 = vpack.c.b16 %v1185, %v1185
        %v1228 = vpack.c.b16 %v1187, %v1186
        %v1229 = vpack.c.b16 %v1188, %v1188
        %v1230 = vpack.c.b16 %v1190, %v1189
        %v1231 = vpack.c.b16 %v1191, %v1191
        %v1232 = vpack.c.b16 %v1193, %v1192
        %v1233 = vpack.c.b16 %v1194, %v1194
        %v1234 = vpack.c.b16 %v1196, %v1195
        %v1235 = vpack.c.b16 %v1197, %v1197
        %v1236 = vpack.c.b16 %v1199, %v1198
        %v1237 = vpack.c.b16 %v1200, %v1200
        %v1238 = vpack.c.b16 %v1202, %v1201
        %v1239 = vpack.c.b16 %v1203, %v1203
        %v1258 = vunpack.c.l.b16 %v406
        %v1259 = vunpack.c.l.b16 %v407
        %v1260 = vunpack.c.l.b16 %v408
        %v1261 = vunpack.c.l.b16 %v409
        %v1262 = vunpack.c.l.b16 %v410
        %v1263 = vunpack.c.l.b16 %v411
        %v1264 = vunpack.c.l.b16 %v412
        %v1265 = vunpack.c.l.b16 %v413
        %v1266 = vunpack.c.l.b16 %v414
        %v1267 = vunpack.c.l.b16 %v415
        %v1268 = vunpack.c.l.b16 %v416
        %v1269 = vunpack.c.l.b16 %v417
        %v1270 = vunpack.c.l.b16 %v418
        %v1271 = vunpack.c.l.b16 %v419
        %v1272 = vunpack.c.l.b16 %v420
        %v1273 = vunpack.c.l.b16 %v421
        %v1274 = vunpack.c.l.b16 %v422
        %v1275 = vunpack.c.l.b16 %v423
        %v1276 = vpack.c.b16 %v1151, %v1258
        %v1277 = vpack.c.b16 %v1154, %v1259
        %v1278 = vpack.c.b16 %v1157, %v1260
        %v1279 = vpack.c.b16 %v1160, %v1261
        %v1280 = vpack.c.b16 %v1163, %v1262
        %v1281 = vpack.c.b16 %v1166, %v1263
        %v1282 = vpack.c.b16 %v1169, %v1264
        %v1283 = vpack.c.b16 %v1172, %v1265
        %v1284 = vpack.c.b16 %v1175, %v1266
        %v1285 = vpack.c.b16 %v1178, %v1267
        %v1286 = vpack.c.b16 %v1181, %v1268
        %v1287 = vpack.c.b16 %v1184, %v1269
        %v1288 = vpack.c.b16 %v1187, %v1270
        %v1289 = vpack.c.b16 %v1190, %v1271
        %v1290 = vpack.c.b16 %v1193, %v1272
        %v1291 = vpack.c.b16 %v1196, %v1273
        %v1292 = vpack.c.b16 %v1199, %v1274
        %v1293 = vpack.c.b16 %v1202, %v1275
        %v1295 = vshrl.u32 %v1276, 16
        %v1297 = vshll.u32 %v1276, 16
        %v1299 = vrot.slane %v1297, 1
        %v1300 = vor.u32 %v1295, %v1299
        %v1302 = vshll.u32 %v1205, 16
        %v1304 = vrot.slane %v1302, 1
        %v1305 = vsel %vm734, %v1300, %v1304
        %v1306 = vshrl.u32 %v1205, 16
        %v1309 = vshrl.u32 %v1277, 16
        %v1311 = vshll.u32 %v1277, 16
        %v1313 = vrot.slane %v1311, 1
        %v1314 = vor.u32 %v1309, %v1313
        %v1316 = vshll.u32 %v1207, 16
        %v1318 = vrot.slane %v1316, 1
        %v1319 = vsel %vm734, %v1314, %v1318
        %v1320 = vshrl.u32 %v1207, 16
        %v1323 = vshrl.u32 %v1278, 16
        %v1325 = vshll.u32 %v1278, 16
        %v1327 = vrot.slane %v1325, 1
        %v1328 = vor.u32 %v1323, %v1327
        %v1330 = vshll.u32 %v1209, 16
        %v1332 = vrot.slane %v1330, 1
        %v1333 = vsel %vm734, %v1328, %v1332
        %v1334 = vshrl.u32 %v1209, 16
        %v1337 = vshrl.u32 %v1279, 16
        %v1339 = vshll.u32 %v1279, 16
        %v1341 = vrot.slane %v1339, 1
        %v1342 = vor.u32 %v1337, %v1341
        %v1344 = vshll.u32 %v1211, 16
        %v1346 = vrot.slane %v1344, 1
        %v1347 = vsel %vm734, %v1342, %v1346
        %v1348 = vshrl.u32 %v1211, 16
        %v1351 = vshrl.u32 %v1280, 16
        %v1353 = vshll.u32 %v1280, 16
        %v1355 = vrot.slane %v1353, 1
        %v1356 = vor.u32 %v1351, %v1355
        %v1358 = vshll.u32 %v1213, 16
        %v1360 = vrot.slane %v1358, 1
        %v1361 = vsel %vm734, %v1356, %v1360
        %v1362 = vshrl.u32 %v1213, 16
        %v1365 = vshrl.u32 %v1281, 16
        %v1367 = vshll.u32 %v1281, 16
        %v1369 = vrot.slane %v1367, 1
        %v1370 = vor.u32 %v1365, %v1369
        %v1372 = vshll.u32 %v1215, 16
        %v1374 = vrot.slane %v1372, 1
        %v1375 = vsel %vm734, %v1370, %v1374
        %v1376 = vshrl.u32 %v1215, 16
        %v1379 = vshrl.u32 %v1282, 16
        %v1381 = vshll.u32 %v1282, 16
        %v1383 = vrot.slane %v1381, 1
        %v1384 = vor.u32 %v1379, %v1383
        %v1386 = vshll.u32 %v1217, 16
        %v1388 = vrot.slane %v1386, 1
        %v1389 = vsel %vm734, %v1384, %v1388
        %v1390 = vshrl.u32 %v1217, 16
        %v1393 = vshrl.u32 %v1283, 16
        %v1395 = vshll.u32 %v1283, 16
        %v1397 = vrot.slane %v1395, 1
        %v1398 = vor.u32 %v1393, %v1397
        %v1400 = vshll.u32 %v1219, 16
        %v1402 = vrot.slane %v1400, 1
        %v1403 = vsel %vm734, %v1398, %v1402
        %v1404 = vshrl.u32 %v1219, 16
        %v1407 = vshrl.u32 %v1284, 16
        %v1409 = vshll.u32 %v1284, 16
        %v1411 = vrot.slane %v1409, 1
        %v1412 = vor.u32 %v1407, %v1411
        %v1414 = vshll.u32 %v1221, 16
        %v1416 = vrot.slane %v1414, 1
        %v1417 = vsel %vm734, %v1412, %v1416
        %v1418 = vshrl.u32 %v1221, 16
        %v1421 = vshrl.u32 %v1285, 16
        %v1423 = vshll.u32 %v1285, 16
        %v1425 = vrot.slane %v1423, 1
        %v1426 = vor.u32 %v1421, %v1425
        %v1428 = vshll.u32 %v1223, 16
        %v1430 = vrot.slane %v1428, 1
        %v1431 = vsel %vm734, %v1426, %v1430
        %v1432 = vshrl.u32 %v1223, 16
        %v1435 = vshrl.u32 %v1286, 16
        %v1437 = vshll.u32 %v1286, 16
        %v1439 = vrot.slane %v1437, 1
        %v1440 = vor.u32 %v1435, %v1439
        %v1442 = vshll.u32 %v1225, 16
        %v1444 = vrot.slane %v1442, 1
        %v1445 = vsel %vm734, %v1440, %v1444
        %v1446 = vshrl.u32 %v1225, 16
        %v1449 = vshrl.u32 %v1287, 16
        %v1451 = vshll.u32 %v1287, 16
        %v1453 = vrot.slane %v1451, 1
        %v1454 = vor.u32 %v1449, %v1453
        %v1456 = vshll.u32 %v1227, 16
        %v1458 = vrot.slane %v1456, 1
        %v1459 = vsel %vm734, %v1454, %v1458
        %v1460 = vshrl.u32 %v1227, 16
        %v1463 = vshrl.u32 %v1288, 16
        %v1465 = vshll.u32 %v1288, 16
        %v1467 = vrot.slane %v1465, 1
        %v1468 = vor.u32 %v1463, %v1467
        %v1470 = vshll.u32 %v1229, 16
        %v1472 = vrot.slane %v1470, 1
        %v1473 = vsel %vm734, %v1468, %v1472
        %v1474 = vshrl.u32 %v1229, 16
        %v1477 = vshrl.u32 %v1289, 16
        %v1479 = vshll.u32 %v1289, 16
        %v1481 = vrot.slane %v1479, 1
        %v1482 = vor.u32 %v1477, %v1481
        %v1484 = vshll.u32 %v1231, 16
        %v1486 = vrot.slane %v1484, 1
        %v1487 = vsel %vm734, %v1482, %v1486
        %v1488 = vshrl.u32 %v1231, 16
        %v1491 = vshrl.u32 %v1290, 16
        %v1493 = vshll.u32 %v1290, 16
        %v1495 = vrot.slane %v1493, 1
        %v1496 = vor.u32 %v1491, %v1495
        %v1498 = vshll.u32 %v1233, 16
        %v1500 = vrot.slane %v1498, 1
        %v1501 = vsel %vm734, %v1496, %v1500
        %v1502 = vshrl.u32 %v1233, 16
        %v1505 = vshrl.u32 %v1291, 16
        %v1507 = vshll.u32 %v1291, 16
        %v1509 = vrot.slane %v1507, 1
        %v1510 = vor.u32 %v1505, %v1509
        %v1512 = vshll.u32 %v1235, 16
        %v1514 = vrot.slane %v1512, 1
        %v1515 = vsel %vm734, %v1510, %v1514
        %v1516 = vshrl.u32 %v1235, 16
        %v1519 = vshrl.u32 %v1292, 16
        %v1521 = vshll.u32 %v1292, 16
        %v1523 = vrot.slane %v1521, 1
        %v1524 = vor.u32 %v1519, %v1523
        %v1526 = vshll.u32 %v1237, 16
        %v1528 = vrot.slane %v1526, 1
        %v1529 = vsel %vm734, %v1524, %v1528
        %v1530 = vshrl.u32 %v1237, 16
        %v1533 = vshrl.u32 %v1293, 16
        %v1535 = vshll.u32 %v1293, 16
        %v1537 = vrot.slane %v1535, 1
        %v1538 = vor.u32 %v1533, %v1537
        %v1540 = vshll.u32 %v1239, 16
        %v1542 = vrot.slane %v1540, 1
        %v1543 = vsel %vm734, %v1538, %v1542
        %v1544 = vshrl.u32 %v1239, 16
        %v1564 = vunpack.c.l.b16 %v424
        %v1565 = vunpack.c.l.b16 %v425
        %v1566 = vunpack.c.l.b16 %v426
        %v1567 = vunpack.c.l.b16 %v427
        %v1568 = vunpack.c.l.b16 %v428
        %v1569 = vunpack.c.l.b16 %v429
        %v1570 = vunpack.c.l.b16 %v430
        %v1571 = vunpack.c.l.b16 %v431
        %v1572 = vunpack.c.l.b16 %v432
        %v1573 = vunpack.c.l.b16 %v433
        %v1574 = vunpack.c.l.b16 %v434
        %v1575 = vunpack.c.l.b16 %v435
        %v1576 = vunpack.c.l.b16 %v436
        %v1577 = vunpack.c.l.b16 %v437
        %v1578 = vunpack.c.l.b16 %v438
        %v1579 = vunpack.c.l.b16 %v439
        %v1580 = vunpack.c.l.b16 %v440
        %v1581 = vunpack.c.l.b16 %v441
        %v1582 = vpack.c.b16 %v1564, %v1564
        %v1583 = vpack.c.b16 %v1565, %v1565
        %v1584 = vpack.c.b16 %v1566, %v1566
        %v1585 = vpack.c.b16 %v1567, %v1567
        %v1586 = vpack.c.b16 %v1568, %v1568
        %v1587 = vpack.c.b16 %v1569, %v1569
        %v1588 = vpack.c.b16 %v1570, %v1570
        %v1589 = vpack.c.b16 %v1571, %v1571
        %v1590 = vpack.c.b16 %v1572, %v1572
        %v1591 = vpack.c.b16 %v1573, %v1573
        %v1592 = vpack.c.b16 %v1574, %v1574
        %v1593 = vpack.c.b16 %v1575, %v1575
        %v1594 = vpack.c.b16 %v1576, %v1576
        %v1595 = vpack.c.b16 %v1577, %v1577
        %v1596 = vpack.c.b16 %v1578, %v1578
        %v1597 = vpack.c.b16 %v1579, %v1579
        %v1598 = vpack.c.b16 %v1580, %v1580
        %v1599 = vpack.c.b16 %v1581, %v1581
        %v1600 = vrot.slane %v1276, 1
        %v1601 = vrot.slane %v1582, 1
        %v1602 = vsel %vm1041, %v1600, %v1601
        %v1603 = vrot.slane %v1277, 1
        %v1604 = vrot.slane %v1583, 1
        %v1605 = vsel %vm1041, %v1603, %v1604
        %v1606 = vrot.slane %v1278, 1
        %v1607 = vrot.slane %v1584, 1
        %v1608 = vsel %vm1041, %v1606, %v1607
        %v1609 = vrot.slane %v1279, 1
        %v1610 = vrot.slane %v1585, 1
        %v1611 = vsel %vm1041, %v1609, %v1610
        %v1612 = vrot.slane %v1280, 1
        %v1613 = vrot.slane %v1586, 1
        %v1614 = vsel %vm1041, %v1612, %v1613
        %v1615 = vrot.slane %v1281, 1
        %v1616 = vrot.slane %v1587, 1
        %v1617 = vsel %vm1041, %v1615, %v1616
        %v1618 = vrot.slane %v1282, 1
        %v1619 = vrot.slane %v1588, 1
        %v1620 = vsel %vm1041, %v1618, %v1619
        %v1621 = vrot.slane %v1283, 1
        %v1622 = vrot.slane %v1589, 1
        %v1623 = vsel %vm1041, %v1621, %v1622
        %v1624 = vrot.slane %v1284, 1
        %v1625 = vrot.slane %v1590, 1
        %v1626 = vsel %vm1041, %v1624, %v1625
        %v1627 = vrot.slane %v1285, 1
        %v1628 = vrot.slane %v1591, 1
        %v1629 = vsel %vm1041, %v1627, %v1628
        %v1630 = vrot.slane %v1286, 1
        %v1631 = vrot.slane %v1592, 1
        %v1632 = vsel %vm1041, %v1630, %v1631
        %v1633 = vrot.slane %v1287, 1
        %v1634 = vrot.slane %v1593, 1
        %v1635 = vsel %vm1041, %v1633, %v1634
        %v1636 = vrot.slane %v1288, 1
        %v1637 = vrot.slane %v1594, 1
        %v1638 = vsel %vm1041, %v1636, %v1637
        %v1639 = vrot.slane %v1289, 1
        %v1640 = vrot.slane %v1595, 1
        %v1641 = vsel %vm1041, %v1639, %v1640
        %v1642 = vrot.slane %v1290, 1
        %v1643 = vrot.slane %v1596, 1
        %v1644 = vsel %vm1041, %v1642, %v1643
        %v1645 = vrot.slane %v1291, 1
        %v1646 = vrot.slane %v1597, 1
        %v1647 = vsel %vm1041, %v1645, %v1646
        %v1648 = vrot.slane %v1292, 1
        %v1649 = vrot.slane %v1598, 1
        %v1650 = vsel %vm1041, %v1648, %v1649
        %v1651 = vrot.slane %v1293, 1
        %v1652 = vrot.slane %v1599, 1
        %v1653 = vsel %vm1041, %v1651, %v1652
        %v1708 = vunpack.c.l.b16 %v446
        %v1709 = vunpack.c.l.b16 %v447
        %v1710 = vunpack.c.l.b16 %v448
        %v1711 = vunpack.c.l.b16 %v449
        %v1712 = vunpack.c.l.b16 %v450
        %v1713 = vunpack.c.l.b16 %v451
        %v1714 = vunpack.c.l.b16 %v452
        %v1715 = vunpack.c.l.b16 %v453
        %v1716 = vunpack.c.l.b16 %v454
        %v1717 = vunpack.c.l.b16 %v455
        %v1718 = vunpack.c.l.b16 %v456
        %v1719 = vunpack.c.l.b16 %v457
        %v1720 = vunpack.c.l.b16 %v458
        %v1721 = vunpack.c.l.b16 %v459
        %v1722 = vunpack.c.l.b16 %v460
        %v1723 = vunpack.c.l.b16 %v461
        %v1724 = vunpack.c.l.b16 %v462
        %v1725 = vunpack.c.l.b16 %v463
        %v1726 = vunpack.c.l.b16 %v464
        %v1727 = vunpack.c.l.b16 %v465
        %v1728 = vunpack.c.l.b16 %v466
        %v1729 = vunpack.c.l.b16 %v467
        %v1730 = vunpack.c.l.b16 %v468
        %v1731 = vunpack.c.l.b16 %v469
        %v1732 = vunpack.c.l.b16 %v470
        %v1733 = vunpack.c.l.b16 %v471
        %v1734 = vunpack.c.l.b16 %v472
        %v1735 = vunpack.c.l.b16 %v473
        %v1736 = vunpack.c.l.b16 %v474
        %v1737 = vunpack.c.l.b16 %v475
        %v1738 = vunpack.c.l.b16 %v476
        %v1739 = vunpack.c.l.b16 %v477
        %v1740 = vunpack.c.l.b16 %v478
        %v1741 = vunpack.c.l.b16 %v479
        %v1742 = vunpack.c.l.b16 %v480
        %v1743 = vunpack.c.l.b16 %v481
        %v1744 = vunpack.c.l.b16 %v482
        %v1745 = vunpack.c.l.b16 %v483
        %v1746 = vunpack.c.l.b16 %v484
        %v1747 = vunpack.c.l.b16 %v485
        %v1748 = vunpack.c.l.b16 %v486
        %v1749 = vunpack.c.l.b16 %v487
        %v1750 = vunpack.c.l.b16 %v488
        %v1751 = vunpack.c.l.b16 %v489
        %v1752 = vunpack.c.l.b16 %v490
        %v1753 = vunpack.c.l.b16 %v491
        %v1754 = vunpack.c.l.b16 %v492
        %v1755 = vunpack.c.l.b16 %v493
        %v1756 = vunpack.c.l.b16 %v494
        %v1757 = vunpack.c.l.b16 %v495
        %v1758 = vunpack.c.l.b16 %v496
        %v1759 = vunpack.c.l.b16 %v497
        %v1760 = vunpack.c.l.b16 %v498
        %v1761 = vunpack.c.l.b16 %v499
        %v1762 = vpack.c.b16 %v1709, %v1708
        %v1763 = vpack.c.b16 %v1710, %v1710
        %v1764 = vpack.c.b16 %v1712, %v1711
        %v1765 = vpack.c.b16 %v1713, %v1713
        %v1766 = vpack.c.b16 %v1715, %v1714
        %v1767 = vpack.c.b16 %v1716, %v1716
        %v1768 = vpack.c.b16 %v1718, %v1717
        %v1769 = vpack.c.b16 %v1719, %v1719
        %v1770 = vpack.c.b16 %v1721, %v1720
        %v1771 = vpack.c.b16 %v1722, %v1722
        %v1772 = vpack.c.b16 %v1724, %v1723
        %v1773 = vpack.c.b16 %v1725, %v1725
        %v1774 = vpack.c.b16 %v1727, %v1726
        %v1775 = vpack.c.b16 %v1728, %v1728
        %v1776 = vpack.c.b16 %v1730, %v1729
        %v1777 = vpack.c.b16 %v1731, %v1731
        %v1778 = vpack.c.b16 %v1733, %v1732
        %v1779 = vpack.c.b16 %v1734, %v1734
        %v1780 = vpack.c.b16 %v1736, %v1735
        %v1781 = vpack.c.b16 %v1737, %v1737
        %v1782 = vpack.c.b16 %v1739, %v1738
        %v1783 = vpack.c.b16 %v1740, %v1740
        %v1784 = vpack.c.b16 %v1742, %v1741
        %v1785 = vpack.c.b16 %v1743, %v1743
        %v1786 = vpack.c.b16 %v1745, %v1744
        %v1787 = vpack.c.b16 %v1746, %v1746
        %v1788 = vpack.c.b16 %v1748, %v1747
        %v1789 = vpack.c.b16 %v1749, %v1749
        %v1790 = vpack.c.b16 %v1751, %v1750
        %v1791 = vpack.c.b16 %v1752, %v1752
        %v1792 = vpack.c.b16 %v1754, %v1753
        %v1793 = vpack.c.b16 %v1755, %v1755
        %v1794 = vpack.c.b16 %v1757, %v1756
        %v1795 = vpack.c.b16 %v1758, %v1758
        %v1796 = vpack.c.b16 %v1760, %v1759
        %v1797 = vpack.c.b16 %v1761, %v1761
        %v1816 = vunpack.c.l.b16 %v500
        %v1817 = vunpack.c.l.b16 %v501
        %v1818 = vunpack.c.l.b16 %v502
        %v1819 = vunpack.c.l.b16 %v503
        %v1820 = vunpack.c.l.b16 %v504
        %v1821 = vunpack.c.l.b16 %v505
        %v1822 = vunpack.c.l.b16 %v506
        %v1823 = vunpack.c.l.b16 %v507
        %v1824 = vunpack.c.l.b16 %v508
        %v1825 = vunpack.c.l.b16 %v509
        %v1826 = vunpack.c.l.b16 %v510
        %v1827 = vunpack.c.l.b16 %v511
        %v1828 = vunpack.c.l.b16 %v512
        %v1829 = vunpack.c.l.b16 %v513
        %v1830 = vunpack.c.l.b16 %v514
        %v1831 = vunpack.c.l.b16 %v515
        %v1832 = vunpack.c.l.b16 %v516
        %v1833 = vunpack.c.l.b16 %v517
        %v1834 = vpack.c.b16 %v1709, %v1816
        %v1835 = vpack.c.b16 %v1712, %v1817
        %v1836 = vpack.c.b16 %v1715, %v1818
        %v1837 = vpack.c.b16 %v1718, %v1819
        %v1838 = vpack.c.b16 %v1721, %v1820
        %v1839 = vpack.c.b16 %v1724, %v1821
        %v1840 = vpack.c.b16 %v1727, %v1822
        %v1841 = vpack.c.b16 %v1730, %v1823
        %v1842 = vpack.c.b16 %v1733, %v1824
        %v1843 = vpack.c.b16 %v1736, %v1825
        %v1844 = vpack.c.b16 %v1739, %v1826
        %v1845 = vpack.c.b16 %v1742, %v1827
        %v1846 = vpack.c.b16 %v1745, %v1828
        %v1847 = vpack.c.b16 %v1748, %v1829
        %v1848 = vpack.c.b16 %v1751, %v1830
        %v1849 = vpack.c.b16 %v1754, %v1831
        %v1850 = vpack.c.b16 %v1757, %v1832
        %v1851 = vpack.c.b16 %v1760, %v1833
        %v1853 = vshrl.u32 %v1834, 16
        %v1855 = vshll.u32 %v1834, 16
        %v1857 = vrot.slane %v1855, 1
        %v1858 = vor.u32 %v1853, %v1857
        %v1860 = vshll.u32 %v1763, 16
        %v1862 = vrot.slane %v1860, 1
        %v1863 = vsel %vm734, %v1858, %v1862
        %v1864 = vshrl.u32 %v1763, 16
        %v1867 = vshrl.u32 %v1835, 16
        %v1869 = vshll.u32 %v1835, 16
        %v1871 = vrot.slane %v1869, 1
        %v1872 = vor.u32 %v1867, %v1871
        %v1874 = vshll.u32 %v1765, 16
        %v1876 = vrot.slane %v1874, 1
        %v1877 = vsel %vm734, %v1872, %v1876
        %v1878 = vshrl.u32 %v1765, 16
        %v1881 = vshrl.u32 %v1836, 16
        %v1883 = vshll.u32 %v1836, 16
        %v1885 = vrot.slane %v1883, 1
        %v1886 = vor.u32 %v1881, %v1885
        %v1888 = vshll.u32 %v1767, 16
        %v1890 = vrot.slane %v1888, 1
        %v1891 = vsel %vm734, %v1886, %v1890
        %v1892 = vshrl.u32 %v1767, 16
        %v1895 = vshrl.u32 %v1837, 16
        %v1897 = vshll.u32 %v1837, 16
        %v1899 = vrot.slane %v1897, 1
        %v1900 = vor.u32 %v1895, %v1899
        %v1902 = vshll.u32 %v1769, 16
        %v1904 = vrot.slane %v1902, 1
        %v1905 = vsel %vm734, %v1900, %v1904
        %v1906 = vshrl.u32 %v1769, 16
        %v1909 = vshrl.u32 %v1838, 16
        %v1911 = vshll.u32 %v1838, 16
        %v1913 = vrot.slane %v1911, 1
        %v1914 = vor.u32 %v1909, %v1913
        %v1916 = vshll.u32 %v1771, 16
        %v1918 = vrot.slane %v1916, 1
        %v1919 = vsel %vm734, %v1914, %v1918
        %v1920 = vshrl.u32 %v1771, 16
        %v1923 = vshrl.u32 %v1839, 16
        %v1925 = vshll.u32 %v1839, 16
        %v1927 = vrot.slane %v1925, 1
        %v1928 = vor.u32 %v1923, %v1927
        %v1930 = vshll.u32 %v1773, 16
        %v1932 = vrot.slane %v1930, 1
        %v1933 = vsel %vm734, %v1928, %v1932
        %v1934 = vshrl.u32 %v1773, 16
        %v1937 = vshrl.u32 %v1840, 16
        %v1939 = vshll.u32 %v1840, 16
        %v1941 = vrot.slane %v1939, 1
        %v1942 = vor.u32 %v1937, %v1941
        %v1944 = vshll.u32 %v1775, 16
        %v1946 = vrot.slane %v1944, 1
        %v1947 = vsel %vm734, %v1942, %v1946
        %v1948 = vshrl.u32 %v1775, 16
        %v1951 = vshrl.u32 %v1841, 16
        %v1953 = vshll.u32 %v1841, 16
        %v1955 = vrot.slane %v1953, 1
        %v1956 = vor.u32 %v1951, %v1955
        %v1958 = vshll.u32 %v1777, 16
        %v1960 = vrot.slane %v1958, 1
        %v1961 = vsel %vm734, %v1956, %v1960
        %v1962 = vshrl.u32 %v1777, 16
        %v1965 = vshrl.u32 %v1842, 16
        %v1967 = vshll.u32 %v1842, 16
        %v1969 = vrot.slane %v1967, 1
        %v1970 = vor.u32 %v1965, %v1969
        %v1972 = vshll.u32 %v1779, 16
        %v1974 = vrot.slane %v1972, 1
        %v1975 = vsel %vm734, %v1970, %v1974
        %v1976 = vshrl.u32 %v1779, 16
        %v1979 = vshrl.u32 %v1843, 16
        %v1981 = vshll.u32 %v1843, 16
        %v1983 = vrot.slane %v1981, 1
        %v1984 = vor.u32 %v1979, %v1983
        %v1986 = vshll.u32 %v1781, 16
        %v1988 = vrot.slane %v1986, 1
        %v1989 = vsel %vm734, %v1984, %v1988
        %v1990 = vshrl.u32 %v1781, 16
        %v1993 = vshrl.u32 %v1844, 16
        %v1995 = vshll.u32 %v1844, 16
        %v1997 = vrot.slane %v1995, 1
        %v1998 = vor.u32 %v1993, %v1997
        %v2000 = vshll.u32 %v1783, 16
        %v2002 = vrot.slane %v2000, 1
        %v2003 = vsel %vm734, %v1998, %v2002
        %v2004 = vshrl.u32 %v1783, 16
        %v2007 = vshrl.u32 %v1845, 16
        %v2009 = vshll.u32 %v1845, 16
        %v2011 = vrot.slane %v2009, 1
        %v2012 = vor.u32 %v2007, %v2011
        %v2014 = vshll.u32 %v1785, 16
        %v2016 = vrot.slane %v2014, 1
        %v2017 = vsel %vm734, %v2012, %v2016
        %v2018 = vshrl.u32 %v1785, 16
        %v2021 = vshrl.u32 %v1846, 16
        %v2023 = vshll.u32 %v1846, 16
        %v2025 = vrot.slane %v2023, 1
        %v2026 = vor.u32 %v2021, %v2025
        %v2028 = vshll.u32 %v1787, 16
        %v2030 = vrot.slane %v2028, 1
        %v2031 = vsel %vm734, %v2026, %v2030
        %v2032 = vshrl.u32 %v1787, 16
        %v2035 = vshrl.u32 %v1847, 16
        %v2037 = vshll.u32 %v1847, 16
        %v2039 = vrot.slane %v2037, 1
        %v2040 = vor.u32 %v2035, %v2039
        %v2042 = vshll.u32 %v1789, 16
        %v2044 = vrot.slane %v2042, 1
        %v2045 = vsel %vm734, %v2040, %v2044
        %v2046 = vshrl.u32 %v1789, 16
        %v2049 = vshrl.u32 %v1848, 16
        %v2051 = vshll.u32 %v1848, 16
        %v2053 = vrot.slane %v2051, 1
        %v2054 = vor.u32 %v2049, %v2053
        %v2056 = vshll.u32 %v1791, 16
        %v2058 = vrot.slane %v2056, 1
        %v2059 = vsel %vm734, %v2054, %v2058
        %v2060 = vshrl.u32 %v1791, 16
        %v2063 = vshrl.u32 %v1849, 16
        %v2065 = vshll.u32 %v1849, 16
        %v2067 = vrot.slane %v2065, 1
        %v2068 = vor.u32 %v2063, %v2067
        %v2070 = vshll.u32 %v1793, 16
        %v2072 = vrot.slane %v2070, 1
        %v2073 = vsel %vm734, %v2068, %v2072
        %v2074 = vshrl.u32 %v1793, 16
        %v2077 = vshrl.u32 %v1850, 16
        %v2079 = vshll.u32 %v1850, 16
        %v2081 = vrot.slane %v2079, 1
        %v2082 = vor.u32 %v2077, %v2081
        %v2084 = vshll.u32 %v1795, 16
        %v2086 = vrot.slane %v2084, 1
        %v2087 = vsel %vm734, %v2082, %v2086
        %v2088 = vshrl.u32 %v1795, 16
        %v2091 = vshrl.u32 %v1851, 16
        %v2093 = vshll.u32 %v1851, 16
        %v2095 = vrot.slane %v2093, 1
        %v2096 = vor.u32 %v2091, %v2095
        %v2098 = vshll.u32 %v1797, 16
        %v2100 = vrot.slane %v2098, 1
        %v2101 = vsel %vm734, %v2096, %v2100
        %v2102 = vshrl.u32 %v1797, 16
        %v2122 = vunpack.c.l.b16 %v518
        %v2123 = vunpack.c.l.b16 %v519
        %v2124 = vunpack.c.l.b16 %v520
        %v2125 = vunpack.c.l.b16 %v521
        %v2126 = vunpack.c.l.b16 %v522
        %v2127 = vunpack.c.l.b16 %v523
        %v2128 = vunpack.c.l.b16 %v524
        %v2129 = vunpack.c.l.b16 %v525
        %v2130 = vunpack.c.l.b16 %v526
        %v2131 = vunpack.c.l.b16 %v527
        %v2132 = vunpack.c.l.b16 %v528
        %v2133 = vunpack.c.l.b16 %v529
        %v2134 = vunpack.c.l.b16 %v530
        %v2135 = vunpack.c.l.b16 %v531
        %v2136 = vunpack.c.l.b16 %v532
        %v2137 = vunpack.c.l.b16 %v533
        %v2138 = vunpack.c.l.b16 %v534
        %v2139 = vunpack.c.l.b16 %v535
        %v2140 = vpack.c.b16 %v2122, %v2122
        %v2141 = vpack.c.b16 %v2123, %v2123
        %v2142 = vpack.c.b16 %v2124, %v2124
        %v2143 = vpack.c.b16 %v2125, %v2125
        %v2144 = vpack.c.b16 %v2126, %v2126
        %v2145 = vpack.c.b16 %v2127, %v2127
        %v2146 = vpack.c.b16 %v2128, %v2128
        %v2147 = vpack.c.b16 %v2129, %v2129
        %v2148 = vpack.c.b16 %v2130, %v2130
        %v2149 = vpack.c.b16 %v2131, %v2131
        %v2150 = vpack.c.b16 %v2132, %v2132
        %v2151 = vpack.c.b16 %v2133, %v2133
        %v2152 = vpack.c.b16 %v2134, %v2134
        %v2153 = vpack.c.b16 %v2135, %v2135
        %v2154 = vpack.c.b16 %v2136, %v2136
        %v2155 = vpack.c.b16 %v2137, %v2137
        %v2156 = vpack.c.b16 %v2138, %v2138
        %v2157 = vpack.c.b16 %v2139, %v2139
        %v2158 = vrot.slane %v1834, 1
        %v2159 = vrot.slane %v2140, 1
        %v2160 = vsel %vm1041, %v2158, %v2159
        %v2161 = vrot.slane %v1835, 1
        %v2162 = vrot.slane %v2141, 1
        %v2163 = vsel %vm1041, %v2161, %v2162
        %v2164 = vrot.slane %v1836, 1
        %v2165 = vrot.slane %v2142, 1
        %v2166 = vsel %vm1041, %v2164, %v2165
        %v2167 = vrot.slane %v1837, 1
        %v2168 = vrot.slane %v2143, 1
        %v2169 = vsel %vm1041, %v2167, %v2168
        %v2170 = vrot.slane %v1838, 1
        %v2171 = vrot.slane %v2144, 1
        %v2172 = vsel %vm1041, %v2170, %v2171
        %v2173 = vrot.slane %v1839, 1
        %v2174 = vrot.slane %v2145, 1
        %v2175 = vsel %vm1041, %v2173, %v2174
        %v2176 = vrot.slane %v1840, 1
        %v2177 = vrot.slane %v2146, 1
        %v2178 = vsel %vm1041, %v2176, %v2177
        %v2179 = vrot.slane %v1841, 1
        %v2180 = vrot.slane %v2147, 1
        %v2181 = vsel %vm1041, %v2179, %v2180
        %v2182 = vrot.slane %v1842, 1
        %v2183 = vrot.slane %v2148, 1
        %v2184 = vsel %vm1041, %v2182, %v2183
        %v2185 = vrot.slane %v1843, 1
        %v2186 = vrot.slane %v2149, 1
        %v2187 = vsel %vm1041, %v2185, %v2186
        %v2188 = vrot.slane %v1844, 1
        %v2189 = vrot.slane %v2150, 1
        %v2190 = vsel %vm1041, %v2188, %v2189
        %v2191 = vrot.slane %v1845, 1
        %v2192 = vrot.slane %v2151, 1
        %v2193 = vsel %vm1041, %v2191, %v2192
        %v2194 = vrot.slane %v1846, 1
        %v2195 = vrot.slane %v2152, 1
        %v2196 = vsel %vm1041, %v2194, %v2195
        %v2197 = vrot.slane %v1847, 1
        %v2198 = vrot.slane %v2153, 1
        %v2199 = vsel %vm1041, %v2197, %v2198
        %v2200 = vrot.slane %v1848, 1
        %v2201 = vrot.slane %v2154, 1
        %v2202 = vsel %vm1041, %v2200, %v2201
        %v2203 = vrot.slane %v1849, 1
        %v2204 = vrot.slane %v2155, 1
        %v2205 = vsel %vm1041, %v2203, %v2204
        %v2206 = vrot.slane %v1850, 1
        %v2207 = vrot.slane %v2156, 1
        %v2208 = vsel %vm1041, %v2206, %v2207
        %v2209 = vrot.slane %v1851, 1
        %v2210 = vrot.slane %v2157, 1
        %v2211 = vsel %vm1041, %v2209, %v2210
        %v2213 = vshrl.u32 %v644, 16
        %v2215 = vshll.u32 %v644, 16
        %v2217 = vrot.slane %v2215, 1
        %v2218 = vor.u32 %v2213, %v2217
        %v2219 = vsel %vm734, %v2218, %v745
        %v2221 = vshrl.u32 %v746, 16
        %v2223 = vshll.u32 %v746, 16
        %v2225 = vrot.slane %v2223, 1
        %v2226 = vor.u32 %v2221, %v2225
        %v2228 = vshll.u32 %v747, 16
        %v2230 = vrot.slane %v2228, 1
        %v2231 = vsel %vm734, %v2226, %v2230
        %v2233 = vshrl.u32 %v1044, 16
        %v2235 = vshll.u32 %v1044, 16
        %v2237 = vrot.slane %v2235, 1
        %v2238 = vor.u32 %v2233, %v2237
        %v2240 = vshll.u32 %v1043, 16
        %v2242 = vrot.slane %v2240, 1
        %v2243 = vsel %vm734, %v2238, %v2242
        %v2245 = vshrl.u32 %v1204, 16
        %v2247 = vshll.u32 %v1204, 16
        %v2249 = vrot.slane %v2247, 1
        %v2250 = vor.u32 %v2245, %v2249
        %v2251 = vsel %vm734, %v2250, %v1304
        %v2253 = vshrl.u32 %v1305, 16
        %v2255 = vshll.u32 %v1305, 16
        %v2257 = vrot.slane %v2255, 1
        %v2258 = vor.u32 %v2253, %v2257
        %v2260 = vshll.u32 %v1306, 16
        %v2262 = vrot.slane %v2260, 1
        %v2263 = vsel %vm734, %v2258, %v2262
        %v2265 = vshrl.u32 %v1602, 16
        %v2267 = vshll.u32 %v1602, 16
        %v2269 = vrot.slane %v2267, 1
        %v2270 = vor.u32 %v2265, %v2269
        %v2272 = vshll.u32 %v1601, 16
        %v2274 = vrot.slane %v2272, 1
        %v2275 = vsel %vm734, %v2270, %v2274
        %v2277 = vshrl.u32 %v1762, 16
        %v2279 = vshll.u32 %v1762, 16
        %v2281 = vrot.slane %v2279, 1
        %v2282 = vor.u32 %v2277, %v2281
        %v2283 = vsel %vm734, %v2282, %v1862
        %v2285 = vshrl.u32 %v1863, 16
        %v2287 = vshll.u32 %v1863, 16
        %v2289 = vrot.slane %v2287, 1
        %v2290 = vor.u32 %v2285, %v2289
        %v2292 = vshll.u32 %v1864, 16
        %v2294 = vrot.slane %v2292, 1
        %v2295 = vsel %vm734, %v2290, %v2294
        %v2297 = vshrl.u32 %v2160, 16
        %v2299 = vshll.u32 %v2160, 16
        %v2301 = vrot.slane %v2299, 1
        %v2302 = vor.u32 %v2297, %v2301
        %v2304 = vshll.u32 %v2159, 16
        %v2306 = vrot.slane %v2304, 1
        %v2307 = vsel %vm734, %v2302, %v2306
        %v2309 = vshrl.u32 %v646, 16
        %v2311 = vshll.u32 %v646, 16
        %v2313 = vrot.slane %v2311, 1
        %v2314 = vor.u32 %v2309, %v2313
        %v2315 = vsel %vm734, %v2314, %v759
        %v2317 = vshrl.u32 %v760, 16
        %v2319 = vshll.u32 %v760, 16
        %v2321 = vrot.slane %v2319, 1
        %v2322 = vor.u32 %v2317, %v2321
        %v2324 = vshll.u32 %v761, 16
        %v2326 = vrot.slane %v2324, 1
        %v2327 = vsel %vm734, %v2322, %v2326
        %v2329 = vshrl.u32 %v1047, 16
        %v2331 = vshll.u32 %v1047, 16
        %v2333 = vrot.slane %v2331, 1
        %v2334 = vor.u32 %v2329, %v2333
        %v2336 = vshll.u32 %v1046, 16
        %v2338 = vrot.slane %v2336, 1
        %v2339 = vsel %vm734, %v2334, %v2338
        %v2341 = vshrl.u32 %v1206, 16
        %v2343 = vshll.u32 %v1206, 16
        %v2345 = vrot.slane %v2343, 1
        %v2346 = vor.u32 %v2341, %v2345
        %v2347 = vsel %vm734, %v2346, %v1318
        %v2349 = vshrl.u32 %v1319, 16
        %v2351 = vshll.u32 %v1319, 16
        %v2353 = vrot.slane %v2351, 1
        %v2354 = vor.u32 %v2349, %v2353
        %v2356 = vshll.u32 %v1320, 16
        %v2358 = vrot.slane %v2356, 1
        %v2359 = vsel %vm734, %v2354, %v2358
        %v2361 = vshrl.u32 %v1605, 16
        %v2363 = vshll.u32 %v1605, 16
        %v2365 = vrot.slane %v2363, 1
        %v2366 = vor.u32 %v2361, %v2365
        %v2368 = vshll.u32 %v1604, 16
        %v2370 = vrot.slane %v2368, 1
        %v2371 = vsel %vm734, %v2366, %v2370
        %v2373 = vshrl.u32 %v1764, 16
        %v2375 = vshll.u32 %v1764, 16
        %v2377 = vrot.slane %v2375, 1
        %v2378 = vor.u32 %v2373, %v2377
        %v2379 = vsel %vm734, %v2378, %v1876
        %v2381 = vshrl.u32 %v1877, 16
        %v2383 = vshll.u32 %v1877, 16
        %v2385 = vrot.slane %v2383, 1
        %v2386 = vor.u32 %v2381, %v2385
        %v2388 = vshll.u32 %v1878, 16
        %v2390 = vrot.slane %v2388, 1
        %v2391 = vsel %vm734, %v2386, %v2390
        %v2393 = vshrl.u32 %v2163, 16
        %v2395 = vshll.u32 %v2163, 16
        %v2397 = vrot.slane %v2395, 1
        %v2398 = vor.u32 %v2393, %v2397
        %v2400 = vshll.u32 %v2162, 16
        %v2402 = vrot.slane %v2400, 1
        %v2403 = vsel %vm734, %v2398, %v2402
        %v2405 = vshrl.u32 %v648, 16
        %v2407 = vshll.u32 %v648, 16
        %v2409 = vrot.slane %v2407, 1
        %v2410 = vor.u32 %v2405, %v2409
        %v2411 = vsel %vm734, %v2410, %v773
        %v2413 = vshrl.u32 %v774, 16
        %v2415 = vshll.u32 %v774, 16
        %v2417 = vrot.slane %v2415, 1
        %v2418 = vor.u32 %v2413, %v2417
        %v2420 = vshll.u32 %v775, 16
        %v2422 = vrot.slane %v2420, 1
        %v2423 = vsel %vm734, %v2418, %v2422
        %v2425 = vshrl.u32 %v1050, 16
        %v2427 = vshll.u32 %v1050, 16
        %v2429 = vrot.slane %v2427, 1
        %v2430 = vor.u32 %v2425, %v2429
        %v2432 = vshll.u32 %v1049, 16
        %v2434 = vrot.slane %v2432, 1
        %v2435 = vsel %vm734, %v2430, %v2434
        %v2437 = vshrl.u32 %v1208, 16
        %v2439 = vshll.u32 %v1208, 16
        %v2441 = vrot.slane %v2439, 1
        %v2442 = vor.u32 %v2437, %v2441
        %v2443 = vsel %vm734, %v2442, %v1332
        %v2445 = vshrl.u32 %v1333, 16
        %v2447 = vshll.u32 %v1333, 16
        %v2449 = vrot.slane %v2447, 1
        %v2450 = vor.u32 %v2445, %v2449
        %v2452 = vshll.u32 %v1334, 16
        %v2454 = vrot.slane %v2452, 1
        %v2455 = vsel %vm734, %v2450, %v2454
        %v2457 = vshrl.u32 %v1608, 16
        %v2459 = vshll.u32 %v1608, 16
        %v2461 = vrot.slane %v2459, 1
        %v2462 = vor.u32 %v2457, %v2461
        %v2464 = vshll.u32 %v1607, 16
        %v2466 = vrot.slane %v2464, 1
        %v2467 = vsel %vm734, %v2462, %v2466
        %v2469 = vshrl.u32 %v1766, 16
        %v2471 = vshll.u32 %v1766, 16
        %v2473 = vrot.slane %v2471, 1
        %v2474 = vor.u32 %v2469, %v2473
        %v2475 = vsel %vm734, %v2474, %v1890
        %v2477 = vshrl.u32 %v1891, 16
        %v2479 = vshll.u32 %v1891, 16
        %v2481 = vrot.slane %v2479, 1
        %v2482 = vor.u32 %v2477, %v2481
        %v2484 = vshll.u32 %v1892, 16
        %v2486 = vrot.slane %v2484, 1
        %v2487 = vsel %vm734, %v2482, %v2486
        %v2489 = vshrl.u32 %v2166, 16
        %v2491 = vshll.u32 %v2166, 16
        %v2493 = vrot.slane %v2491, 1
        %v2494 = vor.u32 %v2489, %v2493
        %v2496 = vshll.u32 %v2165, 16
        %v2498 = vrot.slane %v2496, 1
        %v2499 = vsel %vm734, %v2494, %v2498
        %v2501 = vshrl.u32 %v650, 16
        %v2503 = vshll.u32 %v650, 16
        %v2505 = vrot.slane %v2503, 1
        %v2506 = vor.u32 %v2501, %v2505
        %v2507 = vsel %vm734, %v2506, %v787
        %v2509 = vshrl.u32 %v788, 16
        %v2511 = vshll.u32 %v788, 16
        %v2513 = vrot.slane %v2511, 1
        %v2514 = vor.u32 %v2509, %v2513
        %v2516 = vshll.u32 %v789, 16
        %v2518 = vrot.slane %v2516, 1
        %v2519 = vsel %vm734, %v2514, %v2518
        %v2521 = vshrl.u32 %v1053, 16
        %v2523 = vshll.u32 %v1053, 16
        %v2525 = vrot.slane %v2523, 1
        %v2526 = vor.u32 %v2521, %v2525
        %v2528 = vshll.u32 %v1052, 16
        %v2530 = vrot.slane %v2528, 1
        %v2531 = vsel %vm734, %v2526, %v2530
        %v2533 = vshrl.u32 %v1210, 16
        %v2535 = vshll.u32 %v1210, 16
        %v2537 = vrot.slane %v2535, 1
        %v2538 = vor.u32 %v2533, %v2537
        %v2539 = vsel %vm734, %v2538, %v1346
        %v2541 = vshrl.u32 %v1347, 16
        %v2543 = vshll.u32 %v1347, 16
        %v2545 = vrot.slane %v2543, 1
        %v2546 = vor.u32 %v2541, %v2545
        %v2548 = vshll.u32 %v1348, 16
        %v2550 = vrot.slane %v2548, 1
        %v2551 = vsel %vm734, %v2546, %v2550
        %v2553 = vshrl.u32 %v1611, 16
        %v2555 = vshll.u32 %v1611, 16
        %v2557 = vrot.slane %v2555, 1
        %v2558 = vor.u32 %v2553, %v2557
        %v2560 = vshll.u32 %v1610, 16
        %v2562 = vrot.slane %v2560, 1
        %v2563 = vsel %vm734, %v2558, %v2562
        %v2565 = vshrl.u32 %v1768, 16
        %v2567 = vshll.u32 %v1768, 16
        %v2569 = vrot.slane %v2567, 1
        %v2570 = vor.u32 %v2565, %v2569
        %v2571 = vsel %vm734, %v2570, %v1904
        %v2573 = vshrl.u32 %v1905, 16
        %v2575 = vshll.u32 %v1905, 16
        %v2577 = vrot.slane %v2575, 1
        %v2578 = vor.u32 %v2573, %v2577
        %v2580 = vshll.u32 %v1906, 16
        %v2582 = vrot.slane %v2580, 1
        %v2583 = vsel %vm734, %v2578, %v2582
        %v2585 = vshrl.u32 %v2169, 16
        %v2587 = vshll.u32 %v2169, 16
        %v2589 = vrot.slane %v2587, 1
        %v2590 = vor.u32 %v2585, %v2589
        %v2592 = vshll.u32 %v2168, 16
        %v2594 = vrot.slane %v2592, 1
        %v2595 = vsel %vm734, %v2590, %v2594
        %v2597 = vshrl.u32 %v652, 16
        %v2599 = vshll.u32 %v652, 16
        %v2601 = vrot.slane %v2599, 1
        %v2602 = vor.u32 %v2597, %v2601
        %v2603 = vsel %vm734, %v2602, %v801
        %v2605 = vshrl.u32 %v802, 16
        %v2607 = vshll.u32 %v802, 16
        %v2609 = vrot.slane %v2607, 1
        %v2610 = vor.u32 %v2605, %v2609
        %v2612 = vshll.u32 %v803, 16
        %v2614 = vrot.slane %v2612, 1
        %v2615 = vsel %vm734, %v2610, %v2614
        %v2617 = vshrl.u32 %v1056, 16
        %v2619 = vshll.u32 %v1056, 16
        %v2621 = vrot.slane %v2619, 1
        %v2622 = vor.u32 %v2617, %v2621
        %v2624 = vshll.u32 %v1055, 16
        %v2626 = vrot.slane %v2624, 1
        %v2627 = vsel %vm734, %v2622, %v2626
        %v2629 = vshrl.u32 %v1212, 16
        %v2631 = vshll.u32 %v1212, 16
        %v2633 = vrot.slane %v2631, 1
        %v2634 = vor.u32 %v2629, %v2633
        %v2635 = vsel %vm734, %v2634, %v1360
        %v2637 = vshrl.u32 %v1361, 16
        %v2639 = vshll.u32 %v1361, 16
        %v2641 = vrot.slane %v2639, 1
        %v2642 = vor.u32 %v2637, %v2641
        %v2644 = vshll.u32 %v1362, 16
        %v2646 = vrot.slane %v2644, 1
        %v2647 = vsel %vm734, %v2642, %v2646
        %v2649 = vshrl.u32 %v1614, 16
        %v2651 = vshll.u32 %v1614, 16
        %v2653 = vrot.slane %v2651, 1
        %v2654 = vor.u32 %v2649, %v2653
        %v2656 = vshll.u32 %v1613, 16
        %v2658 = vrot.slane %v2656, 1
        %v2659 = vsel %vm734, %v2654, %v2658
        %v2661 = vshrl.u32 %v1770, 16
        %v2663 = vshll.u32 %v1770, 16
        %v2665 = vrot.slane %v2663, 1
        %v2666 = vor.u32 %v2661, %v2665
        %v2667 = vsel %vm734, %v2666, %v1918
        %v2669 = vshrl.u32 %v1919, 16
        %v2671 = vshll.u32 %v1919, 16
        %v2673 = vrot.slane %v2671, 1
        %v2674 = vor.u32 %v2669, %v2673
        %v2676 = vshll.u32 %v1920, 16
        %v2678 = vrot.slane %v2676, 1
        %v2679 = vsel %vm734, %v2674, %v2678
        %v2681 = vshrl.u32 %v2172, 16
        %v2683 = vshll.u32 %v2172, 16
        %v2685 = vrot.slane %v2683, 1
        %v2686 = vor.u32 %v2681, %v2685
        %v2688 = vshll.u32 %v2171, 16
        %v2690 = vrot.slane %v2688, 1
        %v2691 = vsel %vm734, %v2686, %v2690
        %v2693 = vshrl.u32 %v654, 16
        %v2695 = vshll.u32 %v654, 16
        %v2697 = vrot.slane %v2695, 1
        %v2698 = vor.u32 %v2693, %v2697
        %v2699 = vsel %vm734, %v2698, %v815
        %v2701 = vshrl.u32 %v816, 16
        %v2703 = vshll.u32 %v816, 16
        %v2705 = vrot.slane %v2703, 1
        %v2706 = vor.u32 %v2701, %v2705
        %v2708 = vshll.u32 %v817, 16
        %v2710 = vrot.slane %v2708, 1
        %v2711 = vsel %vm734, %v2706, %v2710
        %v2713 = vshrl.u32 %v1059, 16
        %v2715 = vshll.u32 %v1059, 16
        %v2717 = vrot.slane %v2715, 1
        %v2718 = vor.u32 %v2713, %v2717
        %v2720 = vshll.u32 %v1058, 16
        %v2722 = vrot.slane %v2720, 1
        %v2723 = vsel %vm734, %v2718, %v2722
        %v2725 = vshrl.u32 %v1214, 16
        %v2727 = vshll.u32 %v1214, 16
        %v2729 = vrot.slane %v2727, 1
        %v2730 = vor.u32 %v2725, %v2729
        %v2731 = vsel %vm734, %v2730, %v1374
        %v2733 = vshrl.u32 %v1375, 16
        %v2735 = vshll.u32 %v1375, 16
        %v2737 = vrot.slane %v2735, 1
        %v2738 = vor.u32 %v2733, %v2737
        %v2740 = vshll.u32 %v1376, 16
        %v2742 = vrot.slane %v2740, 1
        %v2743 = vsel %vm734, %v2738, %v2742
        %v2745 = vshrl.u32 %v1617, 16
        %v2747 = vshll.u32 %v1617, 16
        %v2749 = vrot.slane %v2747, 1
        %v2750 = vor.u32 %v2745, %v2749
        %v2752 = vshll.u32 %v1616, 16
        %v2754 = vrot.slane %v2752, 1
        %v2755 = vsel %vm734, %v2750, %v2754
        %v2757 = vshrl.u32 %v1772, 16
        %v2759 = vshll.u32 %v1772, 16
        %v2761 = vrot.slane %v2759, 1
        %v2762 = vor.u32 %v2757, %v2761
        %v2763 = vsel %vm734, %v2762, %v1932
        %v2765 = vshrl.u32 %v1933, 16
        %v2767 = vshll.u32 %v1933, 16
        %v2769 = vrot.slane %v2767, 1
        %v2770 = vor.u32 %v2765, %v2769
        %v2772 = vshll.u32 %v1934, 16
        %v2774 = vrot.slane %v2772, 1
        %v2775 = vsel %vm734, %v2770, %v2774
        %v2777 = vshrl.u32 %v2175, 16
        %v2779 = vshll.u32 %v2175, 16
        %v2781 = vrot.slane %v2779, 1
        %v2782 = vor.u32 %v2777, %v2781
        %v2784 = vshll.u32 %v2174, 16
        %v2786 = vrot.slane %v2784, 1
        %v2787 = vsel %vm734, %v2782, %v2786
        %v2789 = vshrl.u32 %v656, 16
        %v2791 = vshll.u32 %v656, 16
        %v2793 = vrot.slane %v2791, 1
        %v2794 = vor.u32 %v2789, %v2793
        %v2795 = vsel %vm734, %v2794, %v829
        %v2797 = vshrl.u32 %v830, 16
        %v2799 = vshll.u32 %v830, 16
        %v2801 = vrot.slane %v2799, 1
        %v2802 = vor.u32 %v2797, %v2801
        %v2804 = vshll.u32 %v831, 16
        %v2806 = vrot.slane %v2804, 1
        %v2807 = vsel %vm734, %v2802, %v2806
        %v2809 = vshrl.u32 %v1062, 16
        %v2811 = vshll.u32 %v1062, 16
        %v2813 = vrot.slane %v2811, 1
        %v2814 = vor.u32 %v2809, %v2813
        %v2816 = vshll.u32 %v1061, 16
        %v2818 = vrot.slane %v2816, 1
        %v2819 = vsel %vm734, %v2814, %v2818
        %v2821 = vshrl.u32 %v1216, 16
        %v2823 = vshll.u32 %v1216, 16
        %v2825 = vrot.slane %v2823, 1
        %v2826 = vor.u32 %v2821, %v2825
        %v2827 = vsel %vm734, %v2826, %v1388
        %v2829 = vshrl.u32 %v1389, 16
        %v2831 = vshll.u32 %v1389, 16
        %v2833 = vrot.slane %v2831, 1
        %v2834 = vor.u32 %v2829, %v2833
        %v2836 = vshll.u32 %v1390, 16
        %v2838 = vrot.slane %v2836, 1
        %v2839 = vsel %vm734, %v2834, %v2838
        %v2841 = vshrl.u32 %v1620, 16
        %v2843 = vshll.u32 %v1620, 16
        %v2845 = vrot.slane %v2843, 1
        %v2846 = vor.u32 %v2841, %v2845
        %v2848 = vshll.u32 %v1619, 16
        %v2850 = vrot.slane %v2848, 1
        %v2851 = vsel %vm734, %v2846, %v2850
        %v2853 = vshrl.u32 %v1774, 16
        %v2855 = vshll.u32 %v1774, 16
        %v2857 = vrot.slane %v2855, 1
        %v2858 = vor.u32 %v2853, %v2857
        %v2859 = vsel %vm734, %v2858, %v1946
        %v2861 = vshrl.u32 %v1947, 16
        %v2863 = vshll.u32 %v1947, 16
        %v2865 = vrot.slane %v2863, 1
        %v2866 = vor.u32 %v2861, %v2865
        %v2868 = vshll.u32 %v1948, 16
        %v2870 = vrot.slane %v2868, 1
        %v2871 = vsel %vm734, %v2866, %v2870
        %v2873 = vshrl.u32 %v2178, 16
        %v2875 = vshll.u32 %v2178, 16
        %v2877 = vrot.slane %v2875, 1
        %v2878 = vor.u32 %v2873, %v2877
        %v2880 = vshll.u32 %v2177, 16
        %v2882 = vrot.slane %v2880, 1
        %v2883 = vsel %vm734, %v2878, %v2882
        %v2885 = vshrl.u32 %v658, 16
        %v2887 = vshll.u32 %v658, 16
        %v2889 = vrot.slane %v2887, 1
        %v2890 = vor.u32 %v2885, %v2889
        %v2891 = vsel %vm734, %v2890, %v843
        %v2893 = vshrl.u32 %v844, 16
        %v2895 = vshll.u32 %v844, 16
        %v2897 = vrot.slane %v2895, 1
        %v2898 = vor.u32 %v2893, %v2897
        %v2900 = vshll.u32 %v845, 16
        %v2902 = vrot.slane %v2900, 1
        %v2903 = vsel %vm734, %v2898, %v2902
        %v2905 = vshrl.u32 %v1065, 16
        %v2907 = vshll.u32 %v1065, 16
        %v2909 = vrot.slane %v2907, 1
        %v2910 = vor.u32 %v2905, %v2909
        %v2912 = vshll.u32 %v1064, 16
        %v2914 = vrot.slane %v2912, 1
        %v2915 = vsel %vm734, %v2910, %v2914
        %v2917 = vshrl.u32 %v1218, 16
        %v2919 = vshll.u32 %v1218, 16
        %v2921 = vrot.slane %v2919, 1
        %v2922 = vor.u32 %v2917, %v2921
        %v2923 = vsel %vm734, %v2922, %v1402
        %v2925 = vshrl.u32 %v1403, 16
        %v2927 = vshll.u32 %v1403, 16
        %v2929 = vrot.slane %v2927, 1
        %v2930 = vor.u32 %v2925, %v2929
        %v2932 = vshll.u32 %v1404, 16
        %v2934 = vrot.slane %v2932, 1
        %v2935 = vsel %vm734, %v2930, %v2934
        %v2937 = vshrl.u32 %v1623, 16
        %v2939 = vshll.u32 %v1623, 16
        %v2941 = vrot.slane %v2939, 1
        %v2942 = vor.u32 %v2937, %v2941
        %v2944 = vshll.u32 %v1622, 16
        %v2946 = vrot.slane %v2944, 1
        %v2947 = vsel %vm734, %v2942, %v2946
        %v2949 = vshrl.u32 %v1776, 16
        %v2951 = vshll.u32 %v1776, 16
        %v2953 = vrot.slane %v2951, 1
        %v2954 = vor.u32 %v2949, %v2953
        %v2955 = vsel %vm734, %v2954, %v1960
        %v2957 = vshrl.u32 %v1961, 16
        %v2959 = vshll.u32 %v1961, 16
        %v2961 = vrot.slane %v2959, 1
        %v2962 = vor.u32 %v2957, %v2961
        %v2964 = vshll.u32 %v1962, 16
        %v2966 = vrot.slane %v2964, 1
        %v2967 = vsel %vm734, %v2962, %v2966
        %v2969 = vshrl.u32 %v2181, 16
        %v2971 = vshll.u32 %v2181, 16
        %v2973 = vrot.slane %v2971, 1
        %v2974 = vor.u32 %v2969, %v2973
        %v2976 = vshll.u32 %v2180, 16
        %v2978 = vrot.slane %v2976, 1
        %v2979 = vsel %vm734, %v2974, %v2978
        %v2981 = vshrl.u32 %v660, 16
        %v2983 = vshll.u32 %v660, 16
        %v2985 = vrot.slane %v2983, 1
        %v2986 = vor.u32 %v2981, %v2985
        %v2987 = vsel %vm734, %v2986, %v857
        %v2989 = vshrl.u32 %v858, 16
        %v2991 = vshll.u32 %v858, 16
        %v2993 = vrot.slane %v2991, 1
        %v2994 = vor.u32 %v2989, %v2993
        %v2996 = vshll.u32 %v859, 16
        %v2998 = vrot.slane %v2996, 1
        %v2999 = vsel %vm734, %v2994, %v2998
        %v3001 = vshrl.u32 %v1068, 16
        %v3003 = vshll.u32 %v1068, 16
        %v3005 = vrot.slane %v3003, 1
        %v3006 = vor.u32 %v3001, %v3005
        %v3008 = vshll.u32 %v1067, 16
        %v3010 = vrot.slane %v3008, 1
        %v3011 = vsel %vm734, %v3006, %v3010
        %v3013 = vshrl.u32 %v1220, 16
        %v3015 = vshll.u32 %v1220, 16
        %v3017 = vrot.slane %v3015, 1
        %v3018 = vor.u32 %v3013, %v3017
        %v3019 = vsel %vm734, %v3018, %v1416
        %v3021 = vshrl.u32 %v1417, 16
        %v3023 = vshll.u32 %v1417, 16
        %v3025 = vrot.slane %v3023, 1
        %v3026 = vor.u32 %v3021, %v3025
        %v3028 = vshll.u32 %v1418, 16
        %v3030 = vrot.slane %v3028, 1
        %v3031 = vsel %vm734, %v3026, %v3030
        %v3033 = vshrl.u32 %v1626, 16
        %v3035 = vshll.u32 %v1626, 16
        %v3037 = vrot.slane %v3035, 1
        %v3038 = vor.u32 %v3033, %v3037
        %v3040 = vshll.u32 %v1625, 16
        %v3042 = vrot.slane %v3040, 1
        %v3043 = vsel %vm734, %v3038, %v3042
        %v3045 = vshrl.u32 %v1778, 16
        %v3047 = vshll.u32 %v1778, 16
        %v3049 = vrot.slane %v3047, 1
        %v3050 = vor.u32 %v3045, %v3049
        %v3051 = vsel %vm734, %v3050, %v1974
        %v3053 = vshrl.u32 %v1975, 16
        %v3055 = vshll.u32 %v1975, 16
        %v3057 = vrot.slane %v3055, 1
        %v3058 = vor.u32 %v3053, %v3057
        %v3060 = vshll.u32 %v1976, 16
        %v3062 = vrot.slane %v3060, 1
        %v3063 = vsel %vm734, %v3058, %v3062
        %v3065 = vshrl.u32 %v2184, 16
        %v3067 = vshll.u32 %v2184, 16
        %v3069 = vrot.slane %v3067, 1
        %v3070 = vor.u32 %v3065, %v3069
        %v3072 = vshll.u32 %v2183, 16
        %v3074 = vrot.slane %v3072, 1
        %v3075 = vsel %vm734, %v3070, %v3074
        %v3077 = vshrl.u32 %v662, 16
        %v3079 = vshll.u32 %v662, 16
        %v3081 = vrot.slane %v3079, 1
        %v3082 = vor.u32 %v3077, %v3081
        %v3083 = vsel %vm734, %v3082, %v871
        %v3085 = vshrl.u32 %v872, 16
        %v3087 = vshll.u32 %v872, 16
        %v3089 = vrot.slane %v3087, 1
        %v3090 = vor.u32 %v3085, %v3089
        %v3092 = vshll.u32 %v873, 16
        %v3094 = vrot.slane %v3092, 1
        %v3095 = vsel %vm734, %v3090, %v3094
        %v3097 = vshrl.u32 %v1071, 16
        %v3099 = vshll.u32 %v1071, 16
        %v3101 = vrot.slane %v3099, 1
        %v3102 = vor.u32 %v3097, %v3101
        %v3104 = vshll.u32 %v1070, 16
        %v3106 = vrot.slane %v3104, 1
        %v3107 = vsel %vm734, %v3102, %v3106
        %v3109 = vshrl.u32 %v1222, 16
        %v3111 = vshll.u32 %v1222, 16
        %v3113 = vrot.slane %v3111, 1
        %v3114 = vor.u32 %v3109, %v3113
        %v3115 = vsel %vm734, %v3114, %v1430
        %v3117 = vshrl.u32 %v1431, 16
        %v3119 = vshll.u32 %v1431, 16
        %v3121 = vrot.slane %v3119, 1
        %v3122 = vor.u32 %v3117, %v3121
        %v3124 = vshll.u32 %v1432, 16
        %v3126 = vrot.slane %v3124, 1
        %v3127 = vsel %vm734, %v3122, %v3126
        %v3129 = vshrl.u32 %v1629, 16
        %v3131 = vshll.u32 %v1629, 16
        %v3133 = vrot.slane %v3131, 1
        %v3134 = vor.u32 %v3129, %v3133
        %v3136 = vshll.u32 %v1628, 16
        %v3138 = vrot.slane %v3136, 1
        %v3139 = vsel %vm734, %v3134, %v3138
        %v3141 = vshrl.u32 %v1780, 16
        %v3143 = vshll.u32 %v1780, 16
        %v3145 = vrot.slane %v3143, 1
        %v3146 = vor.u32 %v3141, %v3145
        %v3147 = vsel %vm734, %v3146, %v1988
        %v3149 = vshrl.u32 %v1989, 16
        %v3151 = vshll.u32 %v1989, 16
        %v3153 = vrot.slane %v3151, 1
        %v3154 = vor.u32 %v3149, %v3153
        %v3156 = vshll.u32 %v1990, 16
        %v3158 = vrot.slane %v3156, 1
        %v3159 = vsel %vm734, %v3154, %v3158
        %v3161 = vshrl.u32 %v2187, 16
        %v3163 = vshll.u32 %v2187, 16
        %v3165 = vrot.slane %v3163, 1
        %v3166 = vor.u32 %v3161, %v3165
        %v3168 = vshll.u32 %v2186, 16
        %v3170 = vrot.slane %v3168, 1
        %v3171 = vsel %vm734, %v3166, %v3170
        %v3173 = vshrl.u32 %v664, 16
        %v3175 = vshll.u32 %v664, 16
        %v3177 = vrot.slane %v3175, 1
        %v3178 = vor.u32 %v3173, %v3177
        %v3179 = vsel %vm734, %v3178, %v885
        %v3181 = vshrl.u32 %v886, 16
        %v3183 = vshll.u32 %v886, 16
        %v3185 = vrot.slane %v3183, 1
        %v3186 = vor.u32 %v3181, %v3185
        %v3188 = vshll.u32 %v887, 16
        %v3190 = vrot.slane %v3188, 1
        %v3191 = vsel %vm734, %v3186, %v3190
        %v3193 = vshrl.u32 %v1074, 16
        %v3195 = vshll.u32 %v1074, 16
        %v3197 = vrot.slane %v3195, 1
        %v3198 = vor.u32 %v3193, %v3197
        %v3200 = vshll.u32 %v1073, 16
        %v3202 = vrot.slane %v3200, 1
        %v3203 = vsel %vm734, %v3198, %v3202
        %v3205 = vshrl.u32 %v1224, 16
        %v3207 = vshll.u32 %v1224, 16
        %v3209 = vrot.slane %v3207, 1
        %v3210 = vor.u32 %v3205, %v3209
        %v3211 = vsel %vm734, %v3210, %v1444
        %v3213 = vshrl.u32 %v1445, 16
        %v3215 = vshll.u32 %v1445, 16
        %v3217 = vrot.slane %v3215, 1
        %v3218 = vor.u32 %v3213, %v3217
        %v3220 = vshll.u32 %v1446, 16
        %v3222 = vrot.slane %v3220, 1
        %v3223 = vsel %vm734, %v3218, %v3222
        %v3225 = vshrl.u32 %v1632, 16
        %v3227 = vshll.u32 %v1632, 16
        %v3229 = vrot.slane %v3227, 1
        %v3230 = vor.u32 %v3225, %v3229
        %v3232 = vshll.u32 %v1631, 16
        %v3234 = vrot.slane %v3232, 1
        %v3235 = vsel %vm734, %v3230, %v3234
        %v3237 = vshrl.u32 %v1782, 16
        %v3239 = vshll.u32 %v1782, 16
        %v3241 = vrot.slane %v3239, 1
        %v3242 = vor.u32 %v3237, %v3241
        %v3243 = vsel %vm734, %v3242, %v2002
        %v3245 = vshrl.u32 %v2003, 16
        %v3247 = vshll.u32 %v2003, 16
        %v3249 = vrot.slane %v3247, 1
        %v3250 = vor.u32 %v3245, %v3249
        %v3252 = vshll.u32 %v2004, 16
        %v3254 = vrot.slane %v3252, 1
        %v3255 = vsel %vm734, %v3250, %v3254
        %v3257 = vshrl.u32 %v2190, 16
        %v3259 = vshll.u32 %v2190, 16
        %v3261 = vrot.slane %v3259, 1
        %v3262 = vor.u32 %v3257, %v3261
        %v3264 = vshll.u32 %v2189, 16
        %v3266 = vrot.slane %v3264, 1
        %v3267 = vsel %vm734, %v3262, %v3266
        %v3269 = vshrl.u32 %v666, 16
        %v3271 = vshll.u32 %v666, 16
        %v3273 = vrot.slane %v3271, 1
        %v3274 = vor.u32 %v3269, %v3273
        %v3275 = vsel %vm734, %v3274, %v899
        %v3277 = vshrl.u32 %v900, 16
        %v3279 = vshll.u32 %v900, 16
        %v3281 = vrot.slane %v3279, 1
        %v3282 = vor.u32 %v3277, %v3281
        %v3284 = vshll.u32 %v901, 16
        %v3286 = vrot.slane %v3284, 1
        %v3287 = vsel %vm734, %v3282, %v3286
        %v3289 = vshrl.u32 %v1077, 16
        %v3291 = vshll.u32 %v1077, 16
        %v3293 = vrot.slane %v3291, 1
        %v3294 = vor.u32 %v3289, %v3293
        %v3296 = vshll.u32 %v1076, 16
        %v3298 = vrot.slane %v3296, 1
        %v3299 = vsel %vm734, %v3294, %v3298
        %v3301 = vshrl.u32 %v1226, 16
        %v3303 = vshll.u32 %v1226, 16
        %v3305 = vrot.slane %v3303, 1
        %v3306 = vor.u32 %v3301, %v3305
        %v3307 = vsel %vm734, %v3306, %v1458
        %v3309 = vshrl.u32 %v1459, 16
        %v3311 = vshll.u32 %v1459, 16
        %v3313 = vrot.slane %v3311, 1
        %v3314 = vor.u32 %v3309, %v3313
        %v3316 = vshll.u32 %v1460, 16
        %v3318 = vrot.slane %v3316, 1
        %v3319 = vsel %vm734, %v3314, %v3318
        %v3321 = vshrl.u32 %v1635, 16
        %v3323 = vshll.u32 %v1635, 16
        %v3325 = vrot.slane %v3323, 1
        %v3326 = vor.u32 %v3321, %v3325
        %v3328 = vshll.u32 %v1634, 16
        %v3330 = vrot.slane %v3328, 1
        %v3331 = vsel %vm734, %v3326, %v3330
        %v3333 = vshrl.u32 %v1784, 16
        %v3335 = vshll.u32 %v1784, 16
        %v3337 = vrot.slane %v3335, 1
        %v3338 = vor.u32 %v3333, %v3337
        %v3339 = vsel %vm734, %v3338, %v2016
        %v3341 = vshrl.u32 %v2017, 16
        %v3343 = vshll.u32 %v2017, 16
        %v3345 = vrot.slane %v3343, 1
        %v3346 = vor.u32 %v3341, %v3345
        %v3348 = vshll.u32 %v2018, 16
        %v3350 = vrot.slane %v3348, 1
        %v3351 = vsel %vm734, %v3346, %v3350
        %v3353 = vshrl.u32 %v2193, 16
        %v3355 = vshll.u32 %v2193, 16
        %v3357 = vrot.slane %v3355, 1
        %v3358 = vor.u32 %v3353, %v3357
        %v3360 = vshll.u32 %v2192, 16
        %v3362 = vrot.slane %v3360, 1
        %v3363 = vsel %vm734, %v3358, %v3362
        %v3365 = vshrl.u32 %v668, 16
        %v3367 = vshll.u32 %v668, 16
        %v3369 = vrot.slane %v3367, 1
        %v3370 = vor.u32 %v3365, %v3369
        %v3371 = vsel %vm734, %v3370, %v913
        %v3373 = vshrl.u32 %v914, 16
        %v3375 = vshll.u32 %v914, 16
        %v3377 = vrot.slane %v3375, 1
        %v3378 = vor.u32 %v3373, %v3377
        %v3380 = vshll.u32 %v915, 16
        %v3382 = vrot.slane %v3380, 1
        %v3383 = vsel %vm734, %v3378, %v3382
        %v3385 = vshrl.u32 %v1080, 16
        %v3387 = vshll.u32 %v1080, 16
        %v3389 = vrot.slane %v3387, 1
        %v3390 = vor.u32 %v3385, %v3389
        %v3392 = vshll.u32 %v1079, 16
        %v3394 = vrot.slane %v3392, 1
        %v3395 = vsel %vm734, %v3390, %v3394
        %v3397 = vshrl.u32 %v1228, 16
        %v3399 = vshll.u32 %v1228, 16
        %v3401 = vrot.slane %v3399, 1
        %v3402 = vor.u32 %v3397, %v3401
        %v3403 = vsel %vm734, %v3402, %v1472
        %v3405 = vshrl.u32 %v1473, 16
        %v3407 = vshll.u32 %v1473, 16
        %v3409 = vrot.slane %v3407, 1
        %v3410 = vor.u32 %v3405, %v3409
        %v3412 = vshll.u32 %v1474, 16
        %v3414 = vrot.slane %v3412, 1
        %v3415 = vsel %vm734, %v3410, %v3414
        %v3417 = vshrl.u32 %v1638, 16
        %v3419 = vshll.u32 %v1638, 16
        %v3421 = vrot.slane %v3419, 1
        %v3422 = vor.u32 %v3417, %v3421
        %v3424 = vshll.u32 %v1637, 16
        %v3426 = vrot.slane %v3424, 1
        %v3427 = vsel %vm734, %v3422, %v3426
        %v3429 = vshrl.u32 %v1786, 16
        %v3431 = vshll.u32 %v1786, 16
        %v3433 = vrot.slane %v3431, 1
        %v3434 = vor.u32 %v3429, %v3433
        %v3435 = vsel %vm734, %v3434, %v2030
        %v3437 = vshrl.u32 %v2031, 16
        %v3439 = vshll.u32 %v2031, 16
        %v3441 = vrot.slane %v3439, 1
        %v3442 = vor.u32 %v3437, %v3441
        %v3444 = vshll.u32 %v2032, 16
        %v3446 = vrot.slane %v3444, 1
        %v3447 = vsel %vm734, %v3442, %v3446
        %v3449 = vshrl.u32 %v2196, 16
        %v3451 = vshll.u32 %v2196, 16
        %v3453 = vrot.slane %v3451, 1
        %v3454 = vor.u32 %v3449, %v3453
        %v3456 = vshll.u32 %v2195, 16
        %v3458 = vrot.slane %v3456, 1
        %v3459 = vsel %vm734, %v3454, %v3458
        %v3461 = vshrl.u32 %v670, 16
        %v3463 = vshll.u32 %v670, 16
        %v3465 = vrot.slane %v3463, 1
        %v3466 = vor.u32 %v3461, %v3465
        %v3467 = vsel %vm734, %v3466, %v927
        %v3469 = vshrl.u32 %v928, 16
        %v3471 = vshll.u32 %v928, 16
        %v3473 = vrot.slane %v3471, 1
        %v3474 = vor.u32 %v3469, %v3473
        %v3476 = vshll.u32 %v929, 16
        %v3478 = vrot.slane %v3476, 1
        %v3479 = vsel %vm734, %v3474, %v3478
        %v3481 = vshrl.u32 %v1083, 16
        %v3483 = vshll.u32 %v1083, 16
        %v3485 = vrot.slane %v3483, 1
        %v3486 = vor.u32 %v3481, %v3485
        %v3488 = vshll.u32 %v1082, 16
        %v3490 = vrot.slane %v3488, 1
        %v3491 = vsel %vm734, %v3486, %v3490
        %v3493 = vshrl.u32 %v1230, 16
        %v3495 = vshll.u32 %v1230, 16
        %v3497 = vrot.slane %v3495, 1
        %v3498 = vor.u32 %v3493, %v3497
        %v3499 = vsel %vm734, %v3498, %v1486
        %v3501 = vshrl.u32 %v1487, 16
        %v3503 = vshll.u32 %v1487, 16
        %v3505 = vrot.slane %v3503, 1
        %v3506 = vor.u32 %v3501, %v3505
        %v3508 = vshll.u32 %v1488, 16
        %v3510 = vrot.slane %v3508, 1
        %v3511 = vsel %vm734, %v3506, %v3510
        %v3513 = vshrl.u32 %v1641, 16
        %v3515 = vshll.u32 %v1641, 16
        %v3517 = vrot.slane %v3515, 1
        %v3518 = vor.u32 %v3513, %v3517
        %v3520 = vshll.u32 %v1640, 16
        %v3522 = vrot.slane %v3520, 1
        %v3523 = vsel %vm734, %v3518, %v3522
        %v3525 = vshrl.u32 %v1788, 16
        %v3527 = vshll.u32 %v1788, 16
        %v3529 = vrot.slane %v3527, 1
        %v3530 = vor.u32 %v3525, %v3529
        %v3531 = vsel %vm734, %v3530, %v2044
        %v3533 = vshrl.u32 %v2045, 16
        %v3535 = vshll.u32 %v2045, 16
        %v3537 = vrot.slane %v3535, 1
        %v3538 = vor.u32 %v3533, %v3537
        %v3540 = vshll.u32 %v2046, 16
        %v3542 = vrot.slane %v3540, 1
        %v3543 = vsel %vm734, %v3538, %v3542
        %v3545 = vshrl.u32 %v2199, 16
        %v3547 = vshll.u32 %v2199, 16
        %v3549 = vrot.slane %v3547, 1
        %v3550 = vor.u32 %v3545, %v3549
        %v3552 = vshll.u32 %v2198, 16
        %v3554 = vrot.slane %v3552, 1
        %v3555 = vsel %vm734, %v3550, %v3554
        %v3557 = vshrl.u32 %v672, 16
        %v3559 = vshll.u32 %v672, 16
        %v3561 = vrot.slane %v3559, 1
        %v3562 = vor.u32 %v3557, %v3561
        %v3563 = vsel %vm734, %v3562, %v941
        %v3565 = vshrl.u32 %v942, 16
        %v3567 = vshll.u32 %v942, 16
        %v3569 = vrot.slane %v3567, 1
        %v3570 = vor.u32 %v3565, %v3569
        %v3572 = vshll.u32 %v943, 16
        %v3574 = vrot.slane %v3572, 1
        %v3575 = vsel %vm734, %v3570, %v3574
        %v3577 = vshrl.u32 %v1086, 16
        %v3579 = vshll.u32 %v1086, 16
        %v3581 = vrot.slane %v3579, 1
        %v3582 = vor.u32 %v3577, %v3581
        %v3584 = vshll.u32 %v1085, 16
        %v3586 = vrot.slane %v3584, 1
        %v3587 = vsel %vm734, %v3582, %v3586
        %v3589 = vshrl.u32 %v1232, 16
        %v3591 = vshll.u32 %v1232, 16
        %v3593 = vrot.slane %v3591, 1
        %v3594 = vor.u32 %v3589, %v3593
        %v3595 = vsel %vm734, %v3594, %v1500
        %v3597 = vshrl.u32 %v1501, 16
        %v3599 = vshll.u32 %v1501, 16
        %v3601 = vrot.slane %v3599, 1
        %v3602 = vor.u32 %v3597, %v3601
        %v3604 = vshll.u32 %v1502, 16
        %v3606 = vrot.slane %v3604, 1
        %v3607 = vsel %vm734, %v3602, %v3606
        %v3609 = vshrl.u32 %v1644, 16
        %v3611 = vshll.u32 %v1644, 16
        %v3613 = vrot.slane %v3611, 1
        %v3614 = vor.u32 %v3609, %v3613
        %v3616 = vshll.u32 %v1643, 16
        %v3618 = vrot.slane %v3616, 1
        %v3619 = vsel %vm734, %v3614, %v3618
        %v3621 = vshrl.u32 %v1790, 16
        %v3623 = vshll.u32 %v1790, 16
        %v3625 = vrot.slane %v3623, 1
        %v3626 = vor.u32 %v3621, %v3625
        %v3627 = vsel %vm734, %v3626, %v2058
        %v3629 = vshrl.u32 %v2059, 16
        %v3631 = vshll.u32 %v2059, 16
        %v3633 = vrot.slane %v3631, 1
        %v3634 = vor.u32 %v3629, %v3633
        %v3636 = vshll.u32 %v2060, 16
        %v3638 = vrot.slane %v3636, 1
        %v3639 = vsel %vm734, %v3634, %v3638
        %v3641 = vshrl.u32 %v2202, 16
        %v3643 = vshll.u32 %v2202, 16
        %v3645 = vrot.slane %v3643, 1
        %v3646 = vor.u32 %v3641, %v3645
        %v3648 = vshll.u32 %v2201, 16
        %v3650 = vrot.slane %v3648, 1
        %v3651 = vsel %vm734, %v3646, %v3650
        %v3653 = vshrl.u32 %v674, 16
        %v3655 = vshll.u32 %v674, 16
        %v3657 = vrot.slane %v3655, 1
        %v3658 = vor.u32 %v3653, %v3657
        %v3659 = vsel %vm734, %v3658, %v955
        %v3661 = vshrl.u32 %v956, 16
        %v3663 = vshll.u32 %v956, 16
        %v3665 = vrot.slane %v3663, 1
        %v3666 = vor.u32 %v3661, %v3665
        %v3668 = vshll.u32 %v957, 16
        %v3670 = vrot.slane %v3668, 1
        %v3671 = vsel %vm734, %v3666, %v3670
        %v3673 = vshrl.u32 %v1089, 16
        %v3675 = vshll.u32 %v1089, 16
        %v3677 = vrot.slane %v3675, 1
        %v3678 = vor.u32 %v3673, %v3677
        %v3680 = vshll.u32 %v1088, 16
        %v3682 = vrot.slane %v3680, 1
        %v3683 = vsel %vm734, %v3678, %v3682
        %v3685 = vshrl.u32 %v1234, 16
        %v3687 = vshll.u32 %v1234, 16
        %v3689 = vrot.slane %v3687, 1
        %v3690 = vor.u32 %v3685, %v3689
        %v3691 = vsel %vm734, %v3690, %v1514
        %v3693 = vshrl.u32 %v1515, 16
        %v3695 = vshll.u32 %v1515, 16
        %v3697 = vrot.slane %v3695, 1
        %v3698 = vor.u32 %v3693, %v3697
        %v3700 = vshll.u32 %v1516, 16
        %v3702 = vrot.slane %v3700, 1
        %v3703 = vsel %vm734, %v3698, %v3702
        %v3705 = vshrl.u32 %v1647, 16
        %v3707 = vshll.u32 %v1647, 16
        %v3709 = vrot.slane %v3707, 1
        %v3710 = vor.u32 %v3705, %v3709
        %v3712 = vshll.u32 %v1646, 16
        %v3714 = vrot.slane %v3712, 1
        %v3715 = vsel %vm734, %v3710, %v3714
        %v3717 = vshrl.u32 %v1792, 16
        %v3719 = vshll.u32 %v1792, 16
        %v3721 = vrot.slane %v3719, 1
        %v3722 = vor.u32 %v3717, %v3721
        %v3723 = vsel %vm734, %v3722, %v2072
        %v3725 = vshrl.u32 %v2073, 16
        %v3727 = vshll.u32 %v2073, 16
        %v3729 = vrot.slane %v3727, 1
        %v3730 = vor.u32 %v3725, %v3729
        %v3732 = vshll.u32 %v2074, 16
        %v3734 = vrot.slane %v3732, 1
        %v3735 = vsel %vm734, %v3730, %v3734
        %v3737 = vshrl.u32 %v2205, 16
        %v3739 = vshll.u32 %v2205, 16
        %v3741 = vrot.slane %v3739, 1
        %v3742 = vor.u32 %v3737, %v3741
        %v3744 = vshll.u32 %v2204, 16
        %v3746 = vrot.slane %v3744, 1
        %v3747 = vsel %vm734, %v3742, %v3746
        %v3749 = vshrl.u32 %v676, 16
        %v3751 = vshll.u32 %v676, 16
        %v3753 = vrot.slane %v3751, 1
        %v3754 = vor.u32 %v3749, %v3753
        %v3755 = vsel %vm734, %v3754, %v969
        %v3757 = vshrl.u32 %v970, 16
        %v3759 = vshll.u32 %v970, 16
        %v3761 = vrot.slane %v3759, 1
        %v3762 = vor.u32 %v3757, %v3761
        %v3764 = vshll.u32 %v971, 16
        %v3766 = vrot.slane %v3764, 1
        %v3767 = vsel %vm734, %v3762, %v3766
        %v3769 = vshrl.u32 %v1092, 16
        %v3771 = vshll.u32 %v1092, 16
        %v3773 = vrot.slane %v3771, 1
        %v3774 = vor.u32 %v3769, %v3773
        %v3776 = vshll.u32 %v1091, 16
        %v3778 = vrot.slane %v3776, 1
        %v3779 = vsel %vm734, %v3774, %v3778
        %v3781 = vshrl.u32 %v1236, 16
        %v3783 = vshll.u32 %v1236, 16
        %v3785 = vrot.slane %v3783, 1
        %v3786 = vor.u32 %v3781, %v3785
        %v3787 = vsel %vm734, %v3786, %v1528
        %v3789 = vshrl.u32 %v1529, 16
        %v3791 = vshll.u32 %v1529, 16
        %v3793 = vrot.slane %v3791, 1
        %v3794 = vor.u32 %v3789, %v3793
        %v3796 = vshll.u32 %v1530, 16
        %v3798 = vrot.slane %v3796, 1
        %v3799 = vsel %vm734, %v3794, %v3798
        %v3801 = vshrl.u32 %v1650, 16
        %v3803 = vshll.u32 %v1650, 16
        %v3805 = vrot.slane %v3803, 1
        %v3806 = vor.u32 %v3801, %v3805
        %v3808 = vshll.u32 %v1649, 16
        %v3810 = vrot.slane %v3808, 1
        %v3811 = vsel %vm734, %v3806, %v3810
        %v3813 = vshrl.u32 %v1794, 16
        %v3815 = vshll.u32 %v1794, 16
        %v3817 = vrot.slane %v3815, 1
        %v3818 = vor.u32 %v3813, %v3817
        %v3819 = vsel %vm734, %v3818, %v2086
        %v3821 = vshrl.u32 %v2087, 16
        %v3823 = vshll.u32 %v2087, 16
        %v3825 = vrot.slane %v3823, 1
        %v3826 = vor.u32 %v3821, %v3825
        %v3828 = vshll.u32 %v2088, 16
        %v3830 = vrot.slane %v3828, 1
        %v3831 = vsel %vm734, %v3826, %v3830
        %v3833 = vshrl.u32 %v2208, 16
        %v3835 = vshll.u32 %v2208, 16
        %v3837 = vrot.slane %v3835, 1
        %v3838 = vor.u32 %v3833, %v3837
        %v3840 = vshll.u32 %v2207, 16
        %v3842 = vrot.slane %v3840, 1
        %v3843 = vsel %vm734, %v3838, %v3842
        %v3845 = vshrl.u32 %v678, 16
        %v3847 = vshll.u32 %v678, 16
        %v3849 = vrot.slane %v3847, 1
        %v3850 = vor.u32 %v3845, %v3849
        %v3851 = vsel %vm734, %v3850, %v983
        %v3853 = vshrl.u32 %v984, 16
        %v3855 = vshll.u32 %v984, 16
        %v3857 = vrot.slane %v3855, 1
        %v3858 = vor.u32 %v3853, %v3857
        %v3860 = vshll.u32 %v985, 16
        %v3862 = vrot.slane %v3860, 1
        %v3863 = vsel %vm734, %v3858, %v3862
        %v3865 = vshrl.u32 %v1095, 16
        %v3867 = vshll.u32 %v1095, 16
        %v3869 = vrot.slane %v3867, 1
        %v3870 = vor.u32 %v3865, %v3869
        %v3872 = vshll.u32 %v1094, 16
        %v3874 = vrot.slane %v3872, 1
        %v3875 = vsel %vm734, %v3870, %v3874
        %v3877 = vshrl.u32 %v1238, 16
        %v3879 = vshll.u32 %v1238, 16
        %v3881 = vrot.slane %v3879, 1
        %v3882 = vor.u32 %v3877, %v3881
        %v3883 = vsel %vm734, %v3882, %v1542
        %v3885 = vshrl.u32 %v1543, 16
        %v3887 = vshll.u32 %v1543, 16
        %v3889 = vrot.slane %v3887, 1
        %v3890 = vor.u32 %v3885, %v3889
        %v3892 = vshll.u32 %v1544, 16
        %v3894 = vrot.slane %v3892, 1
        %v3895 = vsel %vm734, %v3890, %v3894
        %v3897 = vshrl.u32 %v1653, 16
        %v3899 = vshll.u32 %v1653, 16
        %v3901 = vrot.slane %v3899, 1
        %v3902 = vor.u32 %v3897, %v3901
        %v3904 = vshll.u32 %v1652, 16
        %v3906 = vrot.slane %v3904, 1
        %v3907 = vsel %vm734, %v3902, %v3906
        %v3909 = vshrl.u32 %v1796, 16
        %v3911 = vshll.u32 %v1796, 16
        %v3913 = vrot.slane %v3911, 1
        %v3914 = vor.u32 %v3909, %v3913
        %v3915 = vsel %vm734, %v3914, %v2100
        %v3917 = vshrl.u32 %v2101, 16
        %v3919 = vshll.u32 %v2101, 16
        %v3921 = vrot.slane %v3919, 1
        %v3922 = vor.u32 %v3917, %v3921
        %v3924 = vshll.u32 %v2102, 16
        %v3926 = vrot.slane %v3924, 1
        %v3927 = vsel %vm734, %v3922, %v3926
        %v3929 = vshrl.u32 %v2211, 16
        %v3931 = vshll.u32 %v2211, 16
        %v3933 = vrot.slane %v3931, 1
        %v3934 = vor.u32 %v3929, %v3933
        %v3936 = vshll.u32 %v2210, 16
        %v3938 = vrot.slane %v3936, 1
        %v3939 = vsel %vm734, %v3934, %v3938
        %v4102 = vld [vmem:[%s1] sm:$0xf]
        %v4103 = vld [vmem:[%s1 + $0x4] sm:$0xf]
        %v4104 = vld [vmem:[%s1 + $0x8] sm:$0xf]
        %v4105 = vld [vmem:[%s1 + $0xc] sm:$0xf]
        %v4106 = vld [vmem:[%s1 + $0x10] sm:$0xf]
        %v4107 = vld [vmem:[%s1 + $0x14] sm:$0xf]
        %v4108 = vld [vmem:[%s1 + $0x18] sm:$0xf]
        %v4109 = vld [vmem:[%s1 + $0x1c] sm:$0xf]
        %v4110 = vld [vmem:[%s1 + $0x20] sm:$0xf]
        %v4111 = vld [vmem:[%s1 + $0x24] sm:$0xf]
        %v4112 = vld [vmem:[%s1 + $0x28] sm:$0xf]
        %v4113 = vld [vmem:[%s1 + $0x2c] sm:$0xf]
        %v4114 = vld [vmem:[%s1 + $0x30] sm:$0xf]
        %v4115 = vld [vmem:[%s1 + $0x34] sm:$0xf]
        %v4116 = vld [vmem:[%s1 + $0x38] sm:$0xf]
        %v4117 = vld [vmem:[%s1 + $0x3c] sm:$0xf]
        %v4118 = vld [vmem:[%s1 + $0x40] sm:$0xf]
        %v4119 = vld [vmem:[%s1 + $0x44] sm:$0xf]
        %v4120 = vld [vmem:[%s1 + $0x48] sm:$0xf]
        %v4121 = vld [vmem:[%s1 + $0x4c] sm:$0xf]
        %v4122 = vld [vmem:[%s1 + $0x50] sm:$0xf]
        %v4123 = vld [vmem:[%s1 + $0x54] sm:$0xf]
        %v4124 = vld [vmem:[%s1 + $0x58] sm:$0xf]
        %v4125 = vld [vmem:[%s1 + $0x5c] sm:$0xf]
        %v4126 = vld [vmem:[%s1 + $0x60] sm:$0xf]
        %v4127 = vld [vmem:[%s1 + $0x64] sm:$0xf]
        %v4128 = vld [vmem:[%s1 + $0x68] sm:$0xf]
        %v4129 = vld [vmem:[%s1 + $0x6c] sm:$0xf]
        %v4130 = vld [vmem:[%s1 + $0x70] sm:$0xf]
        %v4131 = vld [vmem:[%s1 + $0x74] sm:$0xf]
        %v4132 = vld [vmem:[%s1 + $0x78] sm:$0xf]
        %v4133 = vld [vmem:[%s1 + $0x7c] sm:$0xf]
        %v4134 = vld [vmem:[%s1 + $0x80] sm:$0xf]
        %v4135 = vld [vmem:[%s1 + $0x84] sm:$0xf]
        %v4136 = vld [vmem:[%s1 + $0x88] sm:$0xf]
        %v4137 = vld [vmem:[%s1 + $0x8c] sm:$0xf]
        %v4138 = vld [vmem:[%s1 + $0x90] sm:$0xf]
        %v4139 = vld [vmem:[%s1 + $0x94] sm:$0xf]
        %v4140 = vld [vmem:[%s1 + $0x98] sm:$0xf]
        %v4141 = vld [vmem:[%s1 + $0x9c] sm:$0xf]
        %v4142 = vld [vmem:[%s1 + $0xa0] sm:$0xf]
        %v4143 = vld [vmem:[%s1 + $0xa4] sm:$0xf]
        %v4144 = vld [vmem:[%s1 + $0xa8] sm:$0xf]
        %v4145 = vld [vmem:[%s1 + $0xac] sm:$0xf]
        %v4146 = vld [vmem:[%s1 + $0xb0] sm:$0xf]
        %v4147 = vld [vmem:[%s1 + $0xb4] sm:$0xf]
        %v4148 = vld [vmem:[%s1 + $0xb8] sm:$0xf]
        %v4149 = vld [vmem:[%s1 + $0xbc] sm:$0xf]
        %v4150 = vld [vmem:[%s1 + $0xc0] sm:$0xf]
        %v4151 = vld [vmem:[%s1 + $0xc4] sm:$0xf]
        %v4152 = vld [vmem:[%s1 + $0xc8] sm:$0xf]
        %v4153 = vld [vmem:[%s1 + $0xcc] sm:$0xf]
        %v4154 = vld [vmem:[%s1 + $0xd0] sm:$0xf]
        %v4155 = vld [vmem:[%s1 + $0xd4] sm:$0xf]
        %v4156 = vld [vmem:[%s1 + $0xd8] sm:$0xf]
        %v4157 = vld [vmem:[%s1 + $0xdc] sm:$0xf]
        %v4158 = vld [vmem:[%s1 + $0xe0] sm:$0xf]
        %v4159 = vld [vmem:[%s1 + $0xe4] sm:$0xf]
        %v4160 = vld [vmem:[%s1 + $0xe8] sm:$0xf]
        %v4161 = vld [vmem:[%s1 + $0xec] sm:$0xf]
        %v4162 = vld [vmem:[%s1 + $0xf0] sm:$0xf]
        %v4163 = vld [vmem:[%s1 + $0xf4] sm:$0xf]
        %v4164 = vld [vmem:[%s1 + $0xf8] sm:$0xf]
        %v4165 = vld [vmem:[%s1 + $0xfc] sm:$0xf]
        %v4166 = vld [vmem:[%s1 + $0x100] sm:$0xf]
        %v4167 = vld [vmem:[%s1 + $0x104] sm:$0xf]
        %v4168 = vld [vmem:[%s1 + $0x108] sm:$0xf]
        %v4169 = vld [vmem:[%s1 + $0x10c] sm:$0xf]
        %v4170 = vld [vmem:[%s1 + $0x110] sm:$0xf]
        %v4171 = vld [vmem:[%s1 + $0x114] sm:$0xf]
        %v4172 = vld [vmem:[%s1 + $0x118] sm:$0xf]
        %v4173 = vld [vmem:[%s1 + $0x11c] sm:$0xf]
        %v4174 = vld [vmem:[%s1 + $0x120] sm:$0xf]
        %v4175 = vld [vmem:[%s1 + $0x124] sm:$0xf]
        %v4176 = vld [vmem:[%s1 + $0x128] sm:$0xf]
        %v4177 = vld [vmem:[%s1 + $0x12c] sm:$0xf]
        %v4178 = vld [vmem:[%s1 + $0x130] sm:$0xf]
        %v4179 = vld [vmem:[%s1 + $0x134] sm:$0xf]
        %v4180 = vld [vmem:[%s1 + $0x138] sm:$0xf]
        %v4181 = vld [vmem:[%s1 + $0x13c] sm:$0xf]
        %v4182 = vld [vmem:[%s1 + $0x140] sm:$0xf]
        %v4183 = vld [vmem:[%s1 + $0x144] sm:$0xf]
        %v4184 = vld [vmem:[%s1 + $0x148] sm:$0xf]
        %v4185 = vld [vmem:[%s1 + $0x14c] sm:$0xf]
        %v4186 = vld [vmem:[%s1 + $0x150] sm:$0xf]
        %v4187 = vld [vmem:[%s1 + $0x154] sm:$0xf]
        %v4188 = vld [vmem:[%s1 + $0x158] sm:$0xf]
        %v4189 = vld [vmem:[%s1 + $0x15c] sm:$0xf]
        %v4190 = vld [vmem:[%s1 + $0x160] sm:$0xf]
        %v4191 = vld [vmem:[%s1 + $0x164] sm:$0xf]
        %v4192 = vld [vmem:[%s1 + $0x168] sm:$0xf]
        %v4193 = vld [vmem:[%s1 + $0x16c] sm:$0xf]
        %v4194 = vld [vmem:[%s1 + $0x170] sm:$0xf]
        %v4195 = vld [vmem:[%s1 + $0x174] sm:$0xf]
        %v4196 = vld [vmem:[%s1 + $0x178] sm:$0xf]
        %v4197 = vld [vmem:[%s1 + $0x17c] sm:$0xf]
        %v4198 = vld [vmem:[%s1 + $0x180] sm:$0xf]
        %v4199 = vld [vmem:[%s1 + $0x184] sm:$0xf]
        %v4200 = vld [vmem:[%s1 + $0x188] sm:$0xf]
        %v4201 = vld [vmem:[%s1 + $0x18c] sm:$0xf]
        %v4202 = vld [vmem:[%s1 + $0x190] sm:$0xf]
        %v4203 = vld [vmem:[%s1 + $0x194] sm:$0xf]
        %v4204 = vld [vmem:[%s1 + $0x198] sm:$0xf]
        %v4205 = vld [vmem:[%s1 + $0x19c] sm:$0xf]
        %v4206 = vld [vmem:[%s1 + $0x1a0] sm:$0xf]
        %v4207 = vld [vmem:[%s1 + $0x1a4] sm:$0xf]
        %v4208 = vld [vmem:[%s1 + $0x1a8] sm:$0xf]
        %v4209 = vld [vmem:[%s1 + $0x1ac] sm:$0xf]
        %v4210 = vld [vmem:[%s1 + $0x1b0] sm:$0xf]
        %v4211 = vld [vmem:[%s1 + $0x1b4] sm:$0xf]
        %v4212 = vld [vmem:[%s1 + $0x1b8] sm:$0xf]
        %v4213 = vld [vmem:[%s1 + $0x1bc] sm:$0xf]
        %v4214 = vld [vmem:[%s1 + $0x1c0] sm:$0xf]
        %v4215 = vld [vmem:[%s1 + $0x1c4] sm:$0xf]
        %v4216 = vld [vmem:[%s1 + $0x1c8] sm:$0xf]
        %v4217 = vld [vmem:[%s1 + $0x1cc] sm:$0xf]
        %v4218 = vld [vmem:[%s1 + $0x1d0] sm:$0xf]
        %v4219 = vld [vmem:[%s1 + $0x1d4] sm:$0xf]
        %v4220 = vld [vmem:[%s1 + $0x1d8] sm:$0xf]
        %v4221 = vld [vmem:[%s1 + $0x1dc] sm:$0xf]
        %v4222 = vld [vmem:[%s1 + $0x1e0] sm:$0xf]
        %v4223 = vld [vmem:[%s1 + $0x1e4] sm:$0xf]
        %v4224 = vld [vmem:[%s1 + $0x1e8] sm:$0xf]
        %v4225 = vld [vmem:[%s1 + $0x1ec] sm:$0xf]
        %v4226 = vld [vmem:[%s1 + $0x1f0] sm:$0xf]
        %v4227 = vld [vmem:[%s1 + $0x1f4] sm:$0xf]
        %v4228 = vld [vmem:[%s1 + $0x1f8] sm:$0xf]
        %v4229 = vld [vmem:[%s1 + $0x1fc] sm:$0xf]
        %v4230 = vld [vmem:[%s1 + $0x200] sm:$0xf]
        %v4231 = vld [vmem:[%s1 + $0x204] sm:$0xf]
        %v4232 = vld [vmem:[%s1 + $0x208] sm:$0xf]
        %v4233 = vld [vmem:[%s1 + $0x20c] sm:$0xf]
        %v4234 = vld [vmem:[%s1 + $0x210] sm:$0xf]
        %v4235 = vld [vmem:[%s1 + $0x214] sm:$0xf]
        %v4236 = vld [vmem:[%s1 + $0x218] sm:$0xf]
        %v4237 = vld [vmem:[%s1 + $0x21c] sm:$0xf]
        %v4238 = vld [vmem:[%s1 + $0x220] sm:$0xf]
        %v4239 = vld [vmem:[%s1 + $0x224] sm:$0xf]
        %v4240 = vld [vmem:[%s1 + $0x228] sm:$0xf]
        %v4241 = vld [vmem:[%s1 + $0x22c] sm:$0xf]
        %v4242 = vld [vmem:[%s1 + $0x230] sm:$0xf]
        %v4243 = vld [vmem:[%s1 + $0x234] sm:$0xf]
        %v4244 = vld [vmem:[%s1 + $0x238] sm:$0xf]
        %v4245 = vld [vmem:[%s1 + $0x23c] sm:$0xf]
        %v4246 = vld [vmem:[%s2] sm:$0x1]
        %v4248 = vlaneseq
        %v4249 = vshrl.u32 %v4248, 7
        %v4250 = vsub.s32 0, %v4249
        %v4251 = vrot.slane %v4246, %v4250
        %v4397 = vunpack.c.l.b16 %v4102
        %v4398 = vunpack.c.l.b16 %v4103
        %v4399 = vunpack.c.l.b16 %v4104
        %v4400 = vunpack.c.l.b16 %v4105
        %v4401 = vunpack.c.l.b16 %v4106
        %v4402 = vunpack.c.l.b16 %v4107
        %v4403 = vunpack.c.l.b16 %v4108
        %v4404 = vunpack.c.l.b16 %v4109
        %v4405 = vunpack.c.l.b16 %v4110
        %v4406 = vunpack.c.l.b16 %v4111
        %v4407 = vunpack.c.l.b16 %v4112
        %v4408 = vunpack.c.l.b16 %v4113
        %v4409 = vunpack.c.l.b16 %v4114
        %v4410 = vunpack.c.l.b16 %v4115
        %v4411 = vunpack.c.l.b16 %v4116
        %v4412 = vunpack.c.l.b16 %v4117
        %v4413 = vunpack.c.l.b16 %v4118
        %v4414 = vunpack.c.l.b16 %v4119
        %v4415 = vunpack.c.l.b16 %v4120
        %v4416 = vunpack.c.l.b16 %v4121
        %v4417 = vunpack.c.l.b16 %v4122
        %v4418 = vunpack.c.l.b16 %v4123
        %v4419 = vunpack.c.l.b16 %v4124
        %v4420 = vunpack.c.l.b16 %v4125
        %v4421 = vunpack.c.l.b16 %v4126
        %v4422 = vunpack.c.l.b16 %v4127
        %v4423 = vunpack.c.l.b16 %v4128
        %v4424 = vunpack.c.l.b16 %v4129
        %v4425 = vunpack.c.l.b16 %v4130
        %v4426 = vunpack.c.l.b16 %v4131
        %v4427 = vunpack.c.l.b16 %v4132
        %v4428 = vunpack.c.l.b16 %v4133
        %v4429 = vunpack.c.l.b16 %v4134
        %v4430 = vunpack.c.l.b16 %v4135
        %v4431 = vunpack.c.l.b16 %v4136
        %v4432 = vunpack.c.l.b16 %v4137
        %v4433 = vunpack.c.l.b16 %v4138
        %v4434 = vunpack.c.l.b16 %v4139
        %v4435 = vunpack.c.l.b16 %v4140
        %v4436 = vunpack.c.l.b16 %v4141
        %v4437 = vunpack.c.l.b16 %v4142
        %v4438 = vunpack.c.l.b16 %v4143
        %v4439 = vunpack.c.l.b16 %v4144
        %v4440 = vunpack.c.l.b16 %v4145
        %v4441 = vunpack.c.l.b16 %v4146
        %v4442 = vunpack.c.l.b16 %v4147
        %v4443 = vunpack.c.l.b16 %v4148
        %v4444 = vunpack.c.l.b16 %v4149
        %v4445 = vunpack.c.l.b16 %v4150
        %v4446 = vunpack.c.l.b16 %v4151
        %v4447 = vunpack.c.l.b16 %v4152
        %v4448 = vunpack.c.l.b16 %v4153
        %v4449 = vunpack.c.l.b16 %v4154
        %v4450 = vunpack.c.l.b16 %v4155
        %v4451 = vunpack.c.l.b16 %v4156
        %v4452 = vunpack.c.l.b16 %v4157
        %v4453 = vunpack.c.l.b16 %v4158
        %v4454 = vunpack.c.l.b16 %v4159
        %v4455 = vunpack.c.l.b16 %v4160
        %v4456 = vunpack.c.l.b16 %v4161
        %v4457 = vunpack.c.l.b16 %v4162
        %v4458 = vunpack.c.l.b16 %v4163
        %v4459 = vunpack.c.l.b16 %v4164
        %v4460 = vunpack.c.l.b16 %v4165
        %v4461 = vunpack.c.l.b16 %v4166
        %v4462 = vunpack.c.l.b16 %v4167
        %v4463 = vunpack.c.l.b16 %v4168
        %v4464 = vunpack.c.l.b16 %v4169
        %v4465 = vunpack.c.l.b16 %v4170
        %v4466 = vunpack.c.l.b16 %v4171
        %v4467 = vunpack.c.l.b16 %v4172
        %v4468 = vunpack.c.l.b16 %v4173
        %v4469 = vunpack.c.l.b16 %v4174
        %v4470 = vunpack.c.l.b16 %v4175
        %v4471 = vunpack.c.l.b16 %v4176
        %v4472 = vunpack.c.l.b16 %v4177
        %v4473 = vunpack.c.l.b16 %v4178
        %v4474 = vunpack.c.l.b16 %v4179
        %v4475 = vunpack.c.l.b16 %v4180
        %v4476 = vunpack.c.l.b16 %v4181
        %v4477 = vunpack.c.l.b16 %v4182
        %v4478 = vunpack.c.l.b16 %v4183
        %v4479 = vunpack.c.l.b16 %v4184
        %v4480 = vunpack.c.l.b16 %v4185
        %v4481 = vunpack.c.l.b16 %v4186
        %v4482 = vunpack.c.l.b16 %v4187
        %v4483 = vunpack.c.l.b16 %v4188
        %v4484 = vunpack.c.l.b16 %v4189
        %v4485 = vunpack.c.l.b16 %v4190
        %v4486 = vunpack.c.l.b16 %v4191
        %v4487 = vunpack.c.l.b16 %v4192
        %v4488 = vunpack.c.l.b16 %v4193
        %v4489 = vunpack.c.l.b16 %v4194
        %v4490 = vunpack.c.l.b16 %v4195
        %v4491 = vunpack.c.l.b16 %v4196
        %v4492 = vunpack.c.l.b16 %v4197
        %v4493 = vunpack.c.l.b16 %v4198
        %v4494 = vunpack.c.l.b16 %v4199
        %v4495 = vunpack.c.l.b16 %v4200
        %v4496 = vunpack.c.l.b16 %v4201
        %v4497 = vunpack.c.l.b16 %v4202
        %v4498 = vunpack.c.l.b16 %v4203
        %v4499 = vunpack.c.l.b16 %v4204
        %v4500 = vunpack.c.l.b16 %v4205
        %v4501 = vunpack.c.l.b16 %v4206
        %v4502 = vunpack.c.l.b16 %v4207
        %v4503 = vunpack.c.l.b16 %v4208
        %v4504 = vunpack.c.l.b16 %v4209
        %v4505 = vunpack.c.l.b16 %v4210
        %v4506 = vunpack.c.l.b16 %v4211
        %v4507 = vunpack.c.l.b16 %v4212
        %v4508 = vunpack.c.l.b16 %v4213
        %v4509 = vunpack.c.l.b16 %v4214
        %v4510 = vunpack.c.l.b16 %v4215
        %v4511 = vunpack.c.l.b16 %v4216
        %v4512 = vunpack.c.l.b16 %v4217
        %v4513 = vunpack.c.l.b16 %v4218
        %v4514 = vunpack.c.l.b16 %v4219
        %v4515 = vunpack.c.l.b16 %v4220
        %v4516 = vunpack.c.l.b16 %v4221
        %v4517 = vunpack.c.l.b16 %v4222
        %v4518 = vunpack.c.l.b16 %v4223
        %v4519 = vunpack.c.l.b16 %v4224
        %v4520 = vunpack.c.l.b16 %v4225
        %v4521 = vunpack.c.l.b16 %v4226
        %v4522 = vunpack.c.l.b16 %v4227
        %v4523 = vunpack.c.l.b16 %v4228
        %v4524 = vunpack.c.l.b16 %v4229
        %v4525 = vunpack.c.l.b16 %v4230
        %v4526 = vunpack.c.l.b16 %v4231
        %v4527 = vunpack.c.l.b16 %v4232
        %v4528 = vunpack.c.l.b16 %v4233
        %v4529 = vunpack.c.l.b16 %v4234
        %v4530 = vunpack.c.l.b16 %v4235
        %v4531 = vunpack.c.l.b16 %v4236
        %v4532 = vunpack.c.l.b16 %v4237
        %v4533 = vunpack.c.l.b16 %v4238
        %v4534 = vunpack.c.l.b16 %v4239
        %v4535 = vunpack.c.l.b16 %v4240
        %v4536 = vunpack.c.l.b16 %v4241
        %v4537 = vunpack.c.l.b16 %v4242
        %v4538 = vunpack.c.l.b16 %v4243
        %v4539 = vunpack.c.l.b16 %v4244
        %v4540 = vunpack.c.l.b16 %v4245
        %v4541 = vpack.c.b16 %v4398, %v4397
        %v4542 = vpack.c.b16 %v4400, %v4399
        %v4543 = vpack.c.b16 %v4402, %v4401
        %v4544 = vpack.c.b16 %v4404, %v4403
        %v4545 = vpack.c.b16 %v4406, %v4405
        %v4546 = vpack.c.b16 %v4408, %v4407
        %v4547 = vpack.c.b16 %v4410, %v4409
        %v4548 = vpack.c.b16 %v4412, %v4411
        %v4549 = vpack.c.b16 %v4414, %v4413
        %v4550 = vpack.c.b16 %v4416, %v4415
        %v4551 = vpack.c.b16 %v4418, %v4417
        %v4552 = vpack.c.b16 %v4420, %v4419
        %v4553 = vpack.c.b16 %v4422, %v4421
        %v4554 = vpack.c.b16 %v4424, %v4423
        %v4555 = vpack.c.b16 %v4426, %v4425
        %v4556 = vpack.c.b16 %v4428, %v4427
        %v4557 = vpack.c.b16 %v4430, %v4429
        %v4558 = vpack.c.b16 %v4432, %v4431
        %v4559 = vpack.c.b16 %v4434, %v4433
        %v4560 = vpack.c.b16 %v4436, %v4435
        %v4561 = vpack.c.b16 %v4438, %v4437
        %v4562 = vpack.c.b16 %v4440, %v4439
        %v4563 = vpack.c.b16 %v4442, %v4441
        %v4564 = vpack.c.b16 %v4444, %v4443
        %v4565 = vpack.c.b16 %v4446, %v4445
        %v4566 = vpack.c.b16 %v4448, %v4447
        %v4567 = vpack.c.b16 %v4450, %v4449
        %v4568 = vpack.c.b16 %v4452, %v4451
        %v4569 = vpack.c.b16 %v4454, %v4453
        %v4570 = vpack.c.b16 %v4456, %v4455
        %v4571 = vpack.c.b16 %v4458, %v4457
        %v4572 = vpack.c.b16 %v4460, %v4459
        %v4573 = vpack.c.b16 %v4462, %v4461
        %v4574 = vpack.c.b16 %v4464, %v4463
        %v4575 = vpack.c.b16 %v4466, %v4465
        %v4576 = vpack.c.b16 %v4468, %v4467
        %v4577 = vpack.c.b16 %v4470, %v4469
        %v4578 = vpack.c.b16 %v4472, %v4471
        %v4579 = vpack.c.b16 %v4474, %v4473
        %v4580 = vpack.c.b16 %v4476, %v4475
        %v4581 = vpack.c.b16 %v4478, %v4477
        %v4582 = vpack.c.b16 %v4480, %v4479
        %v4583 = vpack.c.b16 %v4482, %v4481
        %v4584 = vpack.c.b16 %v4484, %v4483
        %v4585 = vpack.c.b16 %v4486, %v4485
        %v4586 = vpack.c.b16 %v4488, %v4487
        %v4587 = vpack.c.b16 %v4490, %v4489
        %v4588 = vpack.c.b16 %v4492, %v4491
        %v4589 = vpack.c.b16 %v4494, %v4493
        %v4590 = vpack.c.b16 %v4496, %v4495
        %v4591 = vpack.c.b16 %v4498, %v4497
        %v4592 = vpack.c.b16 %v4500, %v4499
        %v4593 = vpack.c.b16 %v4502, %v4501
        %v4594 = vpack.c.b16 %v4504, %v4503
        %v4595 = vpack.c.b16 %v4506, %v4505
        %v4596 = vpack.c.b16 %v4508, %v4507
        %v4597 = vpack.c.b16 %v4510, %v4509
        %v4598 = vpack.c.b16 %v4512, %v4511
        %v4599 = vpack.c.b16 %v4514, %v4513
        %v4600 = vpack.c.b16 %v4516, %v4515
        %v4601 = vpack.c.b16 %v4518, %v4517
        %v4602 = vpack.c.b16 %v4520, %v4519
        %v4603 = vpack.c.b16 %v4522, %v4521
        %v4604 = vpack.c.b16 %v4524, %v4523
        %v4605 = vpack.c.b16 %v4526, %v4525
        %v4606 = vpack.c.b16 %v4528, %v4527
        %v4607 = vpack.c.b16 %v4530, %v4529
        %v4608 = vpack.c.b16 %v4532, %v4531
        %v4609 = vpack.c.b16 %v4534, %v4533
        %v4610 = vpack.c.b16 %v4536, %v4535
        %v4611 = vpack.c.b16 %v4538, %v4537
        %v4612 = vpack.c.b16 %v4540, %v4539
        %4685 = vmatprep.subr.bf16.mxu0 0
        %4686 = vmatpush1.bf16.msra.mxu0 %v4541
        %4687 = vmatprep.subr.bf16.mxu0 0
        %4688 = vmatpush1.bf16.msra.mxu0 %v4542
        %4689 = vmatprep.subr.bf16.mxu0 0
        %4690 = vmatpush1.bf16.msra.mxu0 %v4543
        %4691 = vmatprep.subr.bf16.mxu0 0
        %4692 = vmatpush1.bf16.msra.mxu0 %v4544
        %4693 = vmatprep.subr.bf16.mxu0 0
        %4694 = vmatpush1.bf16.msra.mxu0 %v4545
        %4695 = vmatprep.subr.bf16.mxu0 0
        %4696 = vmatpush1.bf16.msra.mxu0 %v4546
        %4697 = vmatprep.subr.bf16.mxu0 0
        %4698 = vmatpush1.bf16.msra.mxu0 %v4547
        %4699 = vmatprep.subr.bf16.mxu0 0
        %4700 = vmatpush1.bf16.msra.mxu0 %v4548
        %4701 = vmatprep.subr.bf16.mxu0 0
        %4702 = vmatpush1.bf16.msra.mxu0 %v4549
        %4703 = vmatprep.subr.bf16.mxu0 0
        %4704 = vmatpush1.bf16.msra.mxu0 %v4550
        %4705 = vmatprep.subr.bf16.mxu0 0
        %4706 = vmatpush1.bf16.msra.mxu0 %v4551
        %4707 = vmatprep.subr.bf16.mxu0 0
        %4708 = vmatpush1.bf16.msra.mxu0 %v4552
        %4709 = vmatprep.subr.bf16.mxu0 0
        %4710 = vmatpush1.bf16.msra.mxu0 %v4553
        %4711 = vmatprep.subr.bf16.mxu0 0
        %4712 = vmatpush1.bf16.msra.mxu0 %v4554
        %4713 = vmatprep.subr.bf16.mxu0 0
        %4714 = vmatpush1.bf16.msra.mxu0 %v4555
        %4715 = vmatprep.subr.bf16.mxu0 0
        %4716 = vmatpush1.bf16.msra.mxu0 %v4556
        %4717 = vmatprep.mubr.bf16.mxu0 %v2231
        %4718 = vmatmul.mubr.bf16.gmra.mrb[0].mxu0 %v2219
        %v4719 = vpop.f32.mrb[0].mxu0
        %v4720 = vadd.f32 %v4251, %v4719
        %v4721 = vpop.f32.mrb[0].mxu0
        %v4722 = vpop.f32.mrb[0].mxu0
        %v4723 = vadd.f32 %v4251, %v4722
        %v4724 = vpop.f32.mrb[0].mxu0
        %4725 = vmatprep.mubr.bf16.mxu0 %v2327
        %4726 = vmatmul.mubr.bf16.gmra.mrb[0].mxu0 %v2315
        %v4727 = vpop.f32.mrb[0].mxu0
        %v4728 = vadd.f32 %v4251, %v4727
        %v4729 = vpop.f32.mrb[0].mxu0
        %v4730 = vpop.f32.mrb[0].mxu0
        %v4731 = vadd.f32 %v4251, %v4730
        %v4732 = vpop.f32.mrb[0].mxu0
        %4733 = vmatprep.mubr.bf16.mxu0 %v2423
        %4734 = vmatmul.mubr.bf16.gmra.mrb[0].mxu0 %v2411
        %v4735 = vpop.f32.mrb[0].mxu0
        %v4736 = vadd.f32 %v4251, %v4735
        %v4737 = vpop.f32.mrb[0].mxu0
        %v4738 = vpop.f32.mrb[0].mxu0
        %v4739 = vadd.f32 %v4251, %v4738
        %v4740 = vpop.f32.mrb[0].mxu0
        %4741 = vmatprep.mubr.bf16.mxu0 %v2519
        %4742 = vmatmul.mubr.bf16.gmra.mrb[0].mxu0 %v2507
        %v4743 = vpop.f32.mrb[0].mxu0
        %v4744 = vadd.f32 %v4251, %v4743
        %v4745 = vpop.f32.mrb[0].mxu0
        %v4746 = vpop.f32.mrb[0].mxu0
        %v4747 = vadd.f32 %v4251, %v4746
        %v4748 = vpop.f32.mrb[0].mxu0
        %4749 = vmatprep.mubr.bf16.mxu0 %v2615
        %4750 = vmatmul.mubr.bf16.gmra.mrb[0].mxu0 %v2603
        %v4751 = vpop.f32.mrb[0].mxu0
        %v4752 = vadd.f32 %v4251, %v4751
        %v4753 = vpop.f32.mrb[0].mxu0
        %v4754 = vpop.f32.mrb[0].mxu0
        %v4755 = vadd.f32 %v4251, %v4754
        %v4756 = vpop.f32.mrb[0].mxu0
        %4757 = vmatprep.mubr.bf16.mxu0 %v2711
        %4758 = vmatmul.mubr.bf16.gmra.mrb[0].mxu0 %v2699
        %v4759 = vpop.f32.mrb[0].mxu0
        %v4760 = vadd.f32 %v4251, %v4759
        %v4761 = vpop.f32.mrb[0].mxu0
        %v4762 = vpop.f32.mrb[0].mxu0
        %v4763 = vadd.f32 %v4251, %v4762
        %v4764 = vpop.f32.mrb[0].mxu0
        %4765 = vmatprep.mubr.bf16.mxu0 %v2807
        %4766 = vmatmul.mubr.bf16.gmra.mrb[0].mxu0 %v2795
        %v4767 = vpop.f32.mrb[0].mxu0
        %v4768 = vadd.f32 %v4251, %v4767
        %v4769 = vpop.f32.mrb[0].mxu0
        %v4770 = vpop.f32.mrb[0].mxu0
        %v4771 = vadd.f32 %v4251, %v4770
        %v4772 = vpop.f32.mrb[0].mxu0
        %4773 = vmatprep.mubr.bf16.mxu0 %v2903
        %4774 = vmatmul.mubr.bf16.gmra.mrb[0].mxu0 %v2891
        %v4775 = vpop.f32.mrb[0].mxu0
        %v4776 = vadd.f32 %v4251, %v4775
        %v4777 = vpop.f32.mrb[0].mxu0
        %v4778 = vpop.f32.mrb[0].mxu0
        %v4779 = vadd.f32 %v4251, %v4778
        %v4780 = vpop.f32.mrb[0].mxu0
        %4781 = vmatprep.mubr.bf16.mxu0 %v2999
        %4782 = vmatmul.mubr.bf16.gmra.mrb[0].mxu0 %v2987
        %v4783 = vpop.f32.mrb[0].mxu0
        %v4784 = vadd.f32 %v4251, %v4783
        %v4785 = vpop.f32.mrb[0].mxu0
        %v4786 = vpop.f32.mrb[0].mxu0
        %v4787 = vadd.f32 %v4251, %v4786
        %v4788 = vpop.f32.mrb[0].mxu0
        %4789 = vmatprep.mubr.bf16.mxu0 %v3095
        %4790 = vmatmul.mubr.bf16.gmra.mrb[0].mxu0 %v3083
        %v4791 = vpop.f32.mrb[0].mxu0
        %v4792 = vadd.f32 %v4251, %v4791
        %v4793 = vpop.f32.mrb[0].mxu0
        %v4794 = vpop.f32.mrb[0].mxu0
        %v4795 = vadd.f32 %v4251, %v4794
        %v4796 = vpop.f32.mrb[0].mxu0
        %4797 = vmatprep.mubr.bf16.mxu0 %v3191
        %4798 = vmatmul.mubr.bf16.gmra.mrb[0].mxu0 %v3179
        %v4799 = vpop.f32.mrb[0].mxu0
        %v4800 = vadd.f32 %v4251, %v4799
        %v4801 = vpop.f32.mrb[0].mxu0
        %v4802 = vpop.f32.mrb[0].mxu0
        %v4803 = vadd.f32 %v4251, %v4802
        %v4804 = vpop.f32.mrb[0].mxu0
        %4805 = vmatprep.mubr.bf16.mxu0 %v3287
        %4806 = vmatmul.mubr.bf16.gmra.mrb[0].mxu0 %v3275
        %v4807 = vpop.f32.mrb[0].mxu0
        %v4808 = vadd.f32 %v4251, %v4807
        %v4809 = vpop.f32.mrb[0].mxu0
        %v4810 = vpop.f32.mrb[0].mxu0
        %v4811 = vadd.f32 %v4251, %v4810
        %v4812 = vpop.f32.mrb[0].mxu0
        %4813 = vmatprep.mubr.bf16.mxu0 %v3383
        %4814 = vmatmul.mubr.bf16.gmra.mrb[0].mxu0 %v3371
        %v4815 = vpop.f32.mrb[0].mxu0
        %v4816 = vadd.f32 %v4251, %v4815
        %v4817 = vpop.f32.mrb[0].mxu0
        %v4818 = vpop.f32.mrb[0].mxu0
        %v4819 = vadd.f32 %v4251, %v4818
        %v4820 = vpop.f32.mrb[0].mxu0
        %4821 = vmatprep.mubr.bf16.mxu0 %v3479
        %4822 = vmatmul.mubr.bf16.gmra.mrb[0].mxu0 %v3467
        %v4823 = vpop.f32.mrb[0].mxu0
        %v4824 = vadd.f32 %v4251, %v4823
        %v4825 = vpop.f32.mrb[0].mxu0
        %v4826 = vpop.f32.mrb[0].mxu0
        %v4827 = vadd.f32 %v4251, %v4826
        %v4828 = vpop.f32.mrb[0].mxu0
        %4829 = vmatprep.mubr.bf16.mxu0 %v3575
        %4830 = vmatmul.mubr.bf16.gmra.mrb[0].mxu0 %v3563
        %v4831 = vpop.f32.mrb[0].mxu0
        %v4832 = vadd.f32 %v4251, %v4831
        %v4833 = vpop.f32.mrb[0].mxu0
        %v4834 = vpop.f32.mrb[0].mxu0
        %v4835 = vadd.f32 %v4251, %v4834
        %v4836 = vpop.f32.mrb[0].mxu0
        %4837 = vmatprep.mubr.bf16.mxu0 %v3671
        %4838 = vmatmul.mubr.bf16.gmra.mrb[0].mxu0 %v3659
        %v4839 = vpop.f32.mrb[0].mxu0
        %v4840 = vadd.f32 %v4251, %v4839
        %v4841 = vpop.f32.mrb[0].mxu0
        %v4842 = vpop.f32.mrb[0].mxu0
        %v4843 = vadd.f32 %v4251, %v4842
        %v4844 = vpop.f32.mrb[0].mxu0
        %4845 = vmatprep.mubr.bf16.mxu0 %v3767
        %4846 = vmatmul.mubr.bf16.gmra.mrb[0].mxu0 %v3755
        %v4847 = vpop.f32.mrb[0].mxu0
        %v4848 = vadd.f32 %v4251, %v4847
        %v4849 = vpop.f32.mrb[0].mxu0
        %v4850 = vpop.f32.mrb[0].mxu0
        %v4851 = vadd.f32 %v4251, %v4850
        %v4852 = vpop.f32.mrb[0].mxu0
        %4853 = vmatprep.mubr.bf16.mxu0 %v3863
        %4854 = vmatmul.mubr.bf16.gmra.mrb[0].mxu0 %v3851
        %v4855 = vpop.f32.mrb[0].mxu0
        %v4856 = vadd.f32 %v4251, %v4855
        %v4857 = vpop.f32.mrb[0].mxu0
        %v4858 = vpop.f32.mrb[0].mxu0
        %v4859 = vadd.f32 %v4251, %v4858
        %v4860 = vpop.f32.mrb[0].mxu0
        %4861 = vdwg.mxu0
        %4862 = vmatprep.subr.bf16.mxu0 0
        %4863 = vmatpush1.bf16.msra.mxu0 %v4557
        %4864 = vmatprep.subr.bf16.mxu0 0
        %4865 = vmatpush1.bf16.msra.mxu0 %v4558
        %4866 = vmatprep.subr.bf16.mxu0 0
        %4867 = vmatpush1.bf16.msra.mxu0 %v4559
        %4868 = vmatprep.subr.bf16.mxu0 0
        %4869 = vmatpush1.bf16.msra.mxu0 %v4560
        %4870 = vmatprep.subr.bf16.mxu0 0
        %4871 = vmatpush1.bf16.msra.mxu0 %v4561
        %4872 = vmatprep.subr.bf16.mxu0 0
        %4873 = vmatpush1.bf16.msra.mxu0 %v4562
        %4874 = vmatprep.subr.bf16.mxu0 0
        %4875 = vmatpush1.bf16.msra.mxu0 %v4563
        %4876 = vmatprep.subr.bf16.mxu0 0
        %4877 = vmatpush1.bf16.msra.mxu0 %v4564
        %4878 = vmatprep.subr.bf16.mxu0 0
        %4879 = vmatpush1.bf16.msra.mxu0 %v4565
        %4880 = vmatprep.subr.bf16.mxu0 0
        %4881 = vmatpush1.bf16.msra.mxu0 %v4566
        %4882 = vmatprep.subr.bf16.mxu0 0
        %4883 = vmatpush1.bf16.msra.mxu0 %v4567
        %4884 = vmatprep.subr.bf16.mxu0 0
        %4885 = vmatpush1.bf16.msra.mxu0 %v4568
        %4886 = vmatprep.subr.bf16.mxu0 0
        %4887 = vmatpush1.bf16.msra.mxu0 %v4569
        %4888 = vmatprep.subr.bf16.mxu0 0
        %4889 = vmatpush1.bf16.msra.mxu0 %v4570
        %4890 = vmatprep.subr.bf16.mxu0 0
        %4891 = vmatpush1.bf16.msra.mxu0 %v4571
        %4892 = vmatprep.subr.bf16.mxu0 0
        %4893 = vmatpush1.bf16.msra.mxu0 %v4572
        %4894 = vmatprep.mubr.bf16.mxu0 %v2251
        %4895 = vmatmul.mubr.bf16.gmra.mrb[0].mxu0 %v2243
        %v4896 = vpop.f32.mrb[0].mxu0
        %v4897 = vadd.f32 %v4720, %v4896
        %v4898 = vpop.f32.mrb[0].mxu0
        %v4899 = vpop.f32.mrb[0].mxu0
        %v4900 = vadd.f32 %v4723, %v4899
        %v4901 = vpop.f32.mrb[0].mxu0
        %4902 = vmatprep.mubr.bf16.mxu0 %v2347
        %4903 = vmatmul.mubr.bf16.gmra.mrb[0].mxu0 %v2339
        %v4904 = vpop.f32.mrb[0].mxu0
        %v4905 = vadd.f32 %v4728, %v4904
        %v4906 = vpop.f32.mrb[0].mxu0
        %v4907 = vpop.f32.mrb[0].mxu0
        %v4908 = vadd.f32 %v4731, %v4907
        %v4909 = vpop.f32.mrb[0].mxu0
        %4910 = vmatprep.mubr.bf16.mxu0 %v2443
        %4911 = vmatmul.mubr.bf16.gmra.mrb[0].mxu0 %v2435
        %v4912 = vpop.f32.mrb[0].mxu0
        %v4913 = vadd.f32 %v4736, %v4912
        %v4914 = vpop.f32.mrb[0].mxu0
        %v4915 = vpop.f32.mrb[0].mxu0
        %v4916 = vadd.f32 %v4739, %v4915
        %v4917 = vpop.f32.mrb[0].mxu0
        %4918 = vmatprep.mubr.bf16.mxu0 %v2539
        %4919 = vmatmul.mubr.bf16.gmra.mrb[0].mxu0 %v2531
        %v4920 = vpop.f32.mrb[0].mxu0
        %v4921 = vadd.f32 %v4744, %v4920
        %v4922 = vpop.f32.mrb[0].mxu0
        %v4923 = vpop.f32.mrb[0].mxu0
        %v4924 = vadd.f32 %v4747, %v4923
        %v4925 = vpop.f32.mrb[0].mxu0
        %4926 = vmatprep.mubr.bf16.mxu0 %v2635
        %4927 = vmatmul.mubr.bf16.gmra.mrb[0].mxu0 %v2627
        %v4928 = vpop.f32.mrb[0].mxu0
        %v4929 = vadd.f32 %v4752, %v4928
        %v4930 = vpop.f32.mrb[0].mxu0
        %v4931 = vpop.f32.mrb[0].mxu0
        %v4932 = vadd.f32 %v4755, %v4931
        %v4933 = vpop.f32.mrb[0].mxu0
        %4934 = vmatprep.mubr.bf16.mxu0 %v2731
        %4935 = vmatmul.mubr.bf16.gmra.mrb[0].mxu0 %v2723
        %v4936 = vpop.f32.mrb[0].mxu0
        %v4937 = vadd.f32 %v4760, %v4936
        %v4938 = vpop.f32.mrb[0].mxu0
        %v4939 = vpop.f32.mrb[0].mxu0
        %v4940 = vadd.f32 %v4763, %v4939
        %v4941 = vpop.f32.mrb[0].mxu0
        %4942 = vmatprep.mubr.bf16.mxu0 %v2827
        %4943 = vmatmul.mubr.bf16.gmra.mrb[0].mxu0 %v2819
        %v4944 = vpop.f32.mrb[0].mxu0
        %v4945 = vadd.f32 %v4768, %v4944
        %v4946 = vpop.f32.mrb[0].mxu0
        %v4947 = vpop.f32.mrb[0].mxu0
        %v4948 = vadd.f32 %v4771, %v4947
        %v4949 = vpop.f32.mrb[0].mxu0
        %4950 = vmatprep.mubr.bf16.mxu0 %v2923
        %4951 = vmatmul.mubr.bf16.gmra.mrb[0].mxu0 %v2915
        %v4952 = vpop.f32.mrb[0].mxu0
        %v4953 = vadd.f32 %v4776, %v4952
        %v4954 = vpop.f32.mrb[0].mxu0
        %v4955 = vpop.f32.mrb[0].mxu0
        %v4956 = vadd.f32 %v4779, %v4955
        %v4957 = vpop.f32.mrb[0].mxu0
        %4958 = vmatprep.mubr.bf16.mxu0 %v3019
        %4959 = vmatmul.mubr.bf16.gmra.mrb[0].mxu0 %v3011
        %v4960 = vpop.f32.mrb[0].mxu0
        %v4961 = vadd.f32 %v4784, %v4960
        %v4962 = vpop.f32.mrb[0].mxu0
        %v4963 = vpop.f32.mrb[0].mxu0
        %v4964 = vadd.f32 %v4787, %v4963
        %v4965 = vpop.f32.mrb[0].mxu0
        %4966 = vmatprep.mubr.bf16.mxu0 %v3115
        %4967 = vmatmul.mubr.bf16.gmra.mrb[0].mxu0 %v3107
        %v4968 = vpop.f32.mrb[0].mxu0
        %v4969 = vadd.f32 %v4792, %v4968
        %v4970 = vpop.f32.mrb[0].mxu0
        %v4971 = vpop.f32.mrb[0].mxu0
        %v4972 = vadd.f32 %v4795, %v4971
        %v4973 = vpop.f32.mrb[0].mxu0
        %4974 = vmatprep.mubr.bf16.mxu0 %v3211
        %4975 = vmatmul.mubr.bf16.gmra.mrb[0].mxu0 %v3203
        %v4976 = vpop.f32.mrb[0].mxu0
        %v4977 = vadd.f32 %v4800, %v4976
        %v4978 = vpop.f32.mrb[0].mxu0
        %v4979 = vpop.f32.mrb[0].mxu0
        %v4980 = vadd.f32 %v4803, %v4979
        %v4981 = vpop.f32.mrb[0].mxu0
        %4982 = vmatprep.mubr.bf16.mxu0 %v3307
        %4983 = vmatmul.mubr.bf16.gmra.mrb[0].mxu0 %v3299
        %v4984 = vpop.f32.mrb[0].mxu0
        %v4985 = vadd.f32 %v4808, %v4984
        %v4986 = vpop.f32.mrb[0].mxu0
        %v4987 = vpop.f32.mrb[0].mxu0
        %v4988 = vadd.f32 %v4811, %v4987
        %v4989 = vpop.f32.mrb[0].mxu0
        %4990 = vmatprep.mubr.bf16.mxu0 %v3403
        %4991 = vmatmul.mubr.bf16.gmra.mrb[0].mxu0 %v3395
        %v4992 = vpop.f32.mrb[0].mxu0
        %v4993 = vadd.f32 %v4816, %v4992
        %v4994 = vpop.f32.mrb[0].mxu0
        %v4995 = vpop.f32.mrb[0].mxu0
        %v4996 = vadd.f32 %v4819, %v4995
        %v4997 = vpop.f32.mrb[0].mxu0
        %4998 = vmatprep.mubr.bf16.mxu0 %v3499
        %4999 = vmatmul.mubr.bf16.gmra.mrb[0].mxu0 %v3491
        %v5000 = vpop.f32.mrb[0].mxu0
        %v5001 = vadd.f32 %v4824, %v5000
        %v5002 = vpop.f32.mrb[0].mxu0
        %v5003 = vpop.f32.mrb[0].mxu0
        %v5004 = vadd.f32 %v4827, %v5003
        %v5005 = vpop.f32.mrb[0].mxu0
        %5006 = vmatprep.mubr.bf16.mxu0 %v3595
        %5007 = vmatmul.mubr.bf16.gmra.mrb[0].mxu0 %v3587
        %v5008 = vpop.f32.mrb[0].mxu0
        %v5009 = vadd.f32 %v4832, %v5008
        %v5010 = vpop.f32.mrb[0].mxu0
        %v5011 = vpop.f32.mrb[0].mxu0
        %v5012 = vadd.f32 %v4835, %v5011
        %v5013 = vpop.f32.mrb[0].mxu0
        %5014 = vmatprep.mubr.bf16.mxu0 %v3691
        %5015 = vmatmul.mubr.bf16.gmra.mrb[0].mxu0 %v3683
        %v5016 = vpop.f32.mrb[0].mxu0
        %v5017 = vadd.f32 %v4840, %v5016
        %v5018 = vpop.f32.mrb[0].mxu0
        %v5019 = vpop.f32.mrb[0].mxu0
        %v5020 = vadd.f32 %v4843, %v5019
        %v5021 = vpop.f32.mrb[0].mxu0
        %5022 = vmatprep.mubr.bf16.mxu0 %v3787
        %5023 = vmatmul.mubr.bf16.gmra.mrb[0].mxu0 %v3779
        %v5024 = vpop.f32.mrb[0].mxu0
        %v5025 = vadd.f32 %v4848, %v5024
        %v5026 = vpop.f32.mrb[0].mxu0
        %v5027 = vpop.f32.mrb[0].mxu0
        %v5028 = vadd.f32 %v4851, %v5027
        %v5029 = vpop.f32.mrb[0].mxu0
        %5030 = vmatprep.mubr.bf16.mxu0 %v3883
        %5031 = vmatmul.mubr.bf16.gmra.mrb[0].mxu0 %v3875
        %v5032 = vpop.f32.mrb[0].mxu0
        %v5033 = vadd.f32 %v4856, %v5032
        %v5034 = vpop.f32.mrb[0].mxu0
        %v5035 = vpop.f32.mrb[0].mxu0
        %v5036 = vadd.f32 %v4859, %v5035
        %v5037 = vpop.f32.mrb[0].mxu0
        %5038 = vdwg.mxu0
        %5039 = vmatprep.subr.bf16.mxu0 0
        %5040 = vmatpush1.bf16.msra.mxu0 %v4573
        %5041 = vmatprep.subr.bf16.mxu0 0
        %5042 = vmatpush1.bf16.msra.mxu0 %v4574
        %5043 = vmatprep.subr.bf16.mxu0 0
        %5044 = vmatpush1.bf16.msra.mxu0 %v4575
        %5045 = vmatprep.subr.bf16.mxu0 0
        %5046 = vmatpush1.bf16.msra.mxu0 %v4576
        %5047 = vmatprep.subr.bf16.mxu0 0
        %5048 = vmatpush1.bf16.msra.mxu0 %v4577
        %5049 = vmatprep.subr.bf16.mxu0 0
        %5050 = vmatpush1.bf16.msra.mxu0 %v4578
        %5051 = vmatprep.subr.bf16.mxu0 0
        %5052 = vmatpush1.bf16.msra.mxu0 %v4579
        %5053 = vmatprep.subr.bf16.mxu0 0
        %5054 = vmatpush1.bf16.msra.mxu0 %v4580
        %5055 = vmatprep.subr.bf16.mxu0 0
        %5056 = vmatpush1.bf16.msra.mxu0 %v4581
        %5057 = vmatprep.subr.bf16.mxu0 0
        %5058 = vmatpush1.bf16.msra.mxu0 %v4582
        %5059 = vmatprep.subr.bf16.mxu0 0
        %5060 = vmatpush1.bf16.msra.mxu0 %v4583
        %5061 = vmatprep.subr.bf16.mxu0 0
        %5062 = vmatpush1.bf16.msra.mxu0 %v4584
        %5063 = vmatprep.subr.bf16.mxu0 0
        %5064 = vmatpush1.bf16.msra.mxu0 %v4585
        %5065 = vmatprep.subr.bf16.mxu0 0
        %5066 = vmatpush1.bf16.msra.mxu0 %v4586
        %5067 = vmatprep.subr.bf16.mxu0 0
        %5068 = vmatpush1.bf16.msra.mxu0 %v4587
        %5069 = vmatprep.subr.bf16.mxu0 0
        %5070 = vmatpush1.bf16.msra.mxu0 %v4588
        %5071 = vmatprep.mubr.bf16.mxu0 %v2275
        %5072 = vmatmul.mubr.bf16.gmra.mrb[0].mxu0 %v2263
        %v5073 = vpop.f32.mrb[0].mxu0
        %v5074 = vadd.f32 %v4897, %v5073
        %v5075 = vpop.f32.mrb[0].mxu0
        %v5076 = vpop.f32.mrb[0].mxu0
        %v5077 = vadd.f32 %v4900, %v5076
        %v5078 = vpop.f32.mrb[0].mxu0
        %5079 = vmatprep.mubr.bf16.mxu0 %v2371
        %5080 = vmatmul.mubr.bf16.gmra.mrb[0].mxu0 %v2359
        %v5081 = vpop.f32.mrb[0].mxu0
        %v5082 = vadd.f32 %v4905, %v5081
        %v5083 = vpop.f32.mrb[0].mxu0
        %v5084 = vpop.f32.mrb[0].mxu0
        %v5085 = vadd.f32 %v4908, %v5084
        %v5086 = vpop.f32.mrb[0].mxu0
        %5087 = vmatprep.mubr.bf16.mxu0 %v2467
        %5088 = vmatmul.mubr.bf16.gmra.mrb[0].mxu0 %v2455
        %v5089 = vpop.f32.mrb[0].mxu0
        %v5090 = vadd.f32 %v4913, %v5089
        %v5091 = vpop.f32.mrb[0].mxu0
        %v5092 = vpop.f32.mrb[0].mxu0
        %v5093 = vadd.f32 %v4916, %v5092
        %v5094 = vpop.f32.mrb[0].mxu0
        %5095 = vmatprep.mubr.bf16.mxu0 %v2563
        %5096 = vmatmul.mubr.bf16.gmra.mrb[0].mxu0 %v2551
        %v5097 = vpop.f32.mrb[0].mxu0
        %v5098 = vadd.f32 %v4921, %v5097
        %v5099 = vpop.f32.mrb[0].mxu0
        %v5100 = vpop.f32.mrb[0].mxu0
        %v5101 = vadd.f32 %v4924, %v5100
        %v5102 = vpop.f32.mrb[0].mxu0
        %5103 = vmatprep.mubr.bf16.mxu0 %v2659
        %5104 = vmatmul.mubr.bf16.gmra.mrb[0].mxu0 %v2647
        %v5105 = vpop.f32.mrb[0].mxu0
        %v5106 = vadd.f32 %v4929, %v5105
        %v5107 = vpop.f32.mrb[0].mxu0
        %v5108 = vpop.f32.mrb[0].mxu0
        %v5109 = vadd.f32 %v4932, %v5108
        %v5110 = vpop.f32.mrb[0].mxu0
        %5111 = vmatprep.mubr.bf16.mxu0 %v2755
        %5112 = vmatmul.mubr.bf16.gmra.mrb[0].mxu0 %v2743
        %v5113 = vpop.f32.mrb[0].mxu0
        %v5114 = vadd.f32 %v4937, %v5113
        %v5115 = vpop.f32.mrb[0].mxu0
        %v5116 = vpop.f32.mrb[0].mxu0
        %v5117 = vadd.f32 %v4940, %v5116
        %v5118 = vpop.f32.mrb[0].mxu0
        %5119 = vmatprep.mubr.bf16.mxu0 %v2851
        %5120 = vmatmul.mubr.bf16.gmra.mrb[0].mxu0 %v2839
        %v5121 = vpop.f32.mrb[0].mxu0
        %v5122 = vadd.f32 %v4945, %v5121
        %v5123 = vpop.f32.mrb[0].mxu0
        %v5124 = vpop.f32.mrb[0].mxu0
        %v5125 = vadd.f32 %v4948, %v5124
        %v5126 = vpop.f32.mrb[0].mxu0
        %5127 = vmatprep.mubr.bf16.mxu0 %v2947
        %5128 = vmatmul.mubr.bf16.gmra.mrb[0].mxu0 %v2935
        %v5129 = vpop.f32.mrb[0].mxu0
        %v5130 = vadd.f32 %v4953, %v5129
        %v5131 = vpop.f32.mrb[0].mxu0
        %v5132 = vpop.f32.mrb[0].mxu0
        %v5133 = vadd.f32 %v4956, %v5132
        %v5134 = vpop.f32.mrb[0].mxu0
        %5135 = vmatprep.mubr.bf16.mxu0 %v3043
        %5136 = vmatmul.mubr.bf16.gmra.mrb[0].mxu0 %v3031
        %v5137 = vpop.f32.mrb[0].mxu0
        %v5138 = vadd.f32 %v4961, %v5137
        %v5139 = vpop.f32.mrb[0].mxu0
        %v5140 = vpop.f32.mrb[0].mxu0
        %v5141 = vadd.f32 %v4964, %v5140
        %v5142 = vpop.f32.mrb[0].mxu0
        %5143 = vmatprep.mubr.bf16.mxu0 %v3139
        %5144 = vmatmul.mubr.bf16.gmra.mrb[0].mxu0 %v3127
        %v5145 = vpop.f32.mrb[0].mxu0
        %v5146 = vadd.f32 %v4969, %v5145
        %v5147 = vpop.f32.mrb[0].mxu0
        %v5148 = vpop.f32.mrb[0].mxu0
        %v5149 = vadd.f32 %v4972, %v5148
        %v5150 = vpop.f32.mrb[0].mxu0
        %5151 = vmatprep.mubr.bf16.mxu0 %v3235
        %5152 = vmatmul.mubr.bf16.gmra.mrb[0].mxu0 %v3223
        %v5153 = vpop.f32.mrb[0].mxu0
        %v5154 = vadd.f32 %v4977, %v5153
        %v5155 = vpop.f32.mrb[0].mxu0
        %v5156 = vpop.f32.mrb[0].mxu0
        %v5157 = vadd.f32 %v4980, %v5156
        %v5158 = vpop.f32.mrb[0].mxu0
        %5159 = vmatprep.mubr.bf16.mxu0 %v3331
        %5160 = vmatmul.mubr.bf16.gmra.mrb[0].mxu0 %v3319
        %v5161 = vpop.f32.mrb[0].mxu0
        %v5162 = vadd.f32 %v4985, %v5161
        %v5163 = vpop.f32.mrb[0].mxu0
        %v5164 = vpop.f32.mrb[0].mxu0
        %v5165 = vadd.f32 %v4988, %v5164
        %v5166 = vpop.f32.mrb[0].mxu0
        %5167 = vmatprep.mubr.bf16.mxu0 %v3427
        %5168 = vmatmul.mubr.bf16.gmra.mrb[0].mxu0 %v3415
        %v5169 = vpop.f32.mrb[0].mxu0
        %v5170 = vadd.f32 %v4993, %v5169
        %v5171 = vpop.f32.mrb[0].mxu0
        %v5172 = vpop.f32.mrb[0].mxu0
        %v5173 = vadd.f32 %v4996, %v5172
        %v5174 = vpop.f32.mrb[0].mxu0
        %5175 = vmatprep.mubr.bf16.mxu0 %v3523
        %5176 = vmatmul.mubr.bf16.gmra.mrb[0].mxu0 %v3511
        %v5177 = vpop.f32.mrb[0].mxu0
        %v5178 = vadd.f32 %v5001, %v5177
        %v5179 = vpop.f32.mrb[0].mxu0
        %v5180 = vpop.f32.mrb[0].mxu0
        %v5181 = vadd.f32 %v5004, %v5180
        %v5182 = vpop.f32.mrb[0].mxu0
        %5183 = vmatprep.mubr.bf16.mxu0 %v3619
        %5184 = vmatmul.mubr.bf16.gmra.mrb[0].mxu0 %v3607
        %v5185 = vpop.f32.mrb[0].mxu0
        %v5186 = vadd.f32 %v5009, %v5185
        %v5187 = vpop.f32.mrb[0].mxu0
        %v5188 = vpop.f32.mrb[0].mxu0
        %v5189 = vadd.f32 %v5012, %v5188
        %v5190 = vpop.f32.mrb[0].mxu0
        %5191 = vmatprep.mubr.bf16.mxu0 %v3715
        %5192 = vmatmul.mubr.bf16.gmra.mrb[0].mxu0 %v3703
        %v5193 = vpop.f32.mrb[0].mxu0
        %v5194 = vadd.f32 %v5017, %v5193
        %v5195 = vpop.f32.mrb[0].mxu0
        %v5196 = vpop.f32.mrb[0].mxu0
        %v5197 = vadd.f32 %v5020, %v5196
        %v5198 = vpop.f32.mrb[0].mxu0
        %5199 = vmatprep.mubr.bf16.mxu0 %v3811
        %5200 = vmatmul.mubr.bf16.gmra.mrb[0].mxu0 %v3799
        %v5201 = vpop.f32.mrb[0].mxu0
        %v5202 = vadd.f32 %v5025, %v5201
        %v5203 = vpop.f32.mrb[0].mxu0
        %v5204 = vpop.f32.mrb[0].mxu0
        %v5205 = vadd.f32 %v5028, %v5204
        %v5206 = vpop.f32.mrb[0].mxu0
        %5207 = vmatprep.mubr.bf16.mxu0 %v3907
        %5208 = vmatmul.mubr.bf16.gmra.mrb[0].mxu0 %v3895
        %v5209 = vpop.f32.mrb[0].mxu0
        %v5210 = vadd.f32 %v5033, %v5209
        %v5211 = vpop.f32.mrb[0].mxu0
        %v5212 = vpop.f32.mrb[0].mxu0
        %v5213 = vadd.f32 %v5036, %v5212
        %v5214 = vpop.f32.mrb[0].mxu0
        %5215 = vdwg.mxu0
        %5216 = vmatprep.subr.bf16.mxu0 0
        %5217 = vmatpush1.bf16.msra.mxu0 %v4589
        %5218 = vmatprep.subr.bf16.mxu0 0
        %5219 = vmatpush1.bf16.msra.mxu0 %v4590
        %5220 = vmatprep.subr.bf16.mxu0 0
        %5221 = vmatpush1.bf16.msra.mxu0 %v4591
        %5222 = vmatprep.subr.bf16.mxu0 0
        %5223 = vmatpush1.bf16.msra.mxu0 %v4592
        %5224 = vmatprep.subr.bf16.mxu0 0
        %5225 = vmatpush1.bf16.msra.mxu0 %v4593
        %5226 = vmatprep.subr.bf16.mxu0 0
        %5227 = vmatpush1.bf16.msra.mxu0 %v4594
        %5228 = vmatprep.subr.bf16.mxu0 0
        %5229 = vmatpush1.bf16.msra.mxu0 %v4595
        %5230 = vmatprep.subr.bf16.mxu0 0
        %5231 = vmatpush1.bf16.msra.mxu0 %v4596
        %5232 = vmatprep.subr.bf16.mxu0 0
        %5233 = vmatpush1.bf16.msra.mxu0 %v4597
        %5234 = vmatprep.subr.bf16.mxu0 0
        %5235 = vmatpush1.bf16.msra.mxu0 %v4598
        %5236 = vmatprep.subr.bf16.mxu0 0
        %5237 = vmatpush1.bf16.msra.mxu0 %v4599
        %5238 = vmatprep.subr.bf16.mxu0 0
        %5239 = vmatpush1.bf16.msra.mxu0 %v4600
        %5240 = vmatprep.subr.bf16.mxu0 0
        %5241 = vmatpush1.bf16.msra.mxu0 %v4601
        %5242 = vmatprep.subr.bf16.mxu0 0
        %5243 = vmatpush1.bf16.msra.mxu0 %v4602
        %5244 = vmatprep.subr.bf16.mxu0 0
        %5245 = vmatpush1.bf16.msra.mxu0 %v4603
        %5246 = vmatprep.subr.bf16.mxu0 0
        %5247 = vmatpush1.bf16.msra.mxu0 %v4604
        %5248 = vmatprep.mubr.bf16.mxu0 %v2295
        %5249 = vmatmul.mubr.bf16.gmra.mrb[0].mxu0 %v2283
        %v5250 = vpop.f32.mrb[0].mxu0
        %v5251 = vadd.f32 %v5074, %v5250
        %v5252 = vpop.f32.mrb[0].mxu0
        %v5253 = vpop.f32.mrb[0].mxu0
        %v5254 = vadd.f32 %v5077, %v5253
        %v5255 = vpop.f32.mrb[0].mxu0
        %5256 = vmatprep.mubr.bf16.mxu0 %v2391
        %5257 = vmatmul.mubr.bf16.gmra.mrb[0].mxu0 %v2379
        %v5258 = vpop.f32.mrb[0].mxu0
        %v5259 = vadd.f32 %v5082, %v5258
        %v5260 = vpop.f32.mrb[0].mxu0
        %v5261 = vpop.f32.mrb[0].mxu0
        %v5262 = vadd.f32 %v5085, %v5261
        %v5263 = vpop.f32.mrb[0].mxu0
        %5264 = vmatprep.mubr.bf16.mxu0 %v2487
        %5265 = vmatmul.mubr.bf16.gmra.mrb[0].mxu0 %v2475
        %v5266 = vpop.f32.mrb[0].mxu0
        %v5267 = vadd.f32 %v5090, %v5266
        %v5268 = vpop.f32.mrb[0].mxu0
        %v5269 = vpop.f32.mrb[0].mxu0
        %v5270 = vadd.f32 %v5093, %v5269
        %v5271 = vpop.f32.mrb[0].mxu0
        %5272 = vmatprep.mubr.bf16.mxu0 %v2583
        %5273 = vmatmul.mubr.bf16.gmra.mrb[0].mxu0 %v2571
        %v5274 = vpop.f32.mrb[0].mxu0
        %v5275 = vadd.f32 %v5098, %v5274
        %v5276 = vpop.f32.mrb[0].mxu0
        %v5277 = vpop.f32.mrb[0].mxu0
        %v5278 = vadd.f32 %v5101, %v5277
        %v5279 = vpop.f32.mrb[0].mxu0
        %5280 = vmatprep.mubr.bf16.mxu0 %v2679
        %5281 = vmatmul.mubr.bf16.gmra.mrb[0].mxu0 %v2667
        %v5282 = vpop.f32.mrb[0].mxu0
        %v5283 = vadd.f32 %v5106, %v5282
        %v5284 = vpop.f32.mrb[0].mxu0
        %v5285 = vpop.f32.mrb[0].mxu0
        %v5286 = vadd.f32 %v5109, %v5285
        %v5287 = vpop.f32.mrb[0].mxu0
        %5288 = vmatprep.mubr.bf16.mxu0 %v2775
        %5289 = vmatmul.mubr.bf16.gmra.mrb[0].mxu0 %v2763
        %v5290 = vpop.f32.mrb[0].mxu0
        %v5291 = vadd.f32 %v5114, %v5290
        %v5292 = vpop.f32.mrb[0].mxu0
        %v5293 = vpop.f32.mrb[0].mxu0
        %v5294 = vadd.f32 %v5117, %v5293
        %v5295 = vpop.f32.mrb[0].mxu0
        %5296 = vmatprep.mubr.bf16.mxu0 %v2871
        %5297 = vmatmul.mubr.bf16.gmra.mrb[0].mxu0 %v2859
        %v5298 = vpop.f32.mrb[0].mxu0
        %v5299 = vadd.f32 %v5122, %v5298
        %v5300 = vpop.f32.mrb[0].mxu0
        %v5301 = vpop.f32.mrb[0].mxu0
        %v5302 = vadd.f32 %v5125, %v5301
        %v5303 = vpop.f32.mrb[0].mxu0
        %5304 = vmatprep.mubr.bf16.mxu0 %v2967
        %5305 = vmatmul.mubr.bf16.gmra.mrb[0].mxu0 %v2955
        %v5306 = vpop.f32.mrb[0].mxu0
        %v5307 = vadd.f32 %v5130, %v5306
        %v5308 = vpop.f32.mrb[0].mxu0
        %v5309 = vpop.f32.mrb[0].mxu0
        %v5310 = vadd.f32 %v5133, %v5309
        %v5311 = vpop.f32.mrb[0].mxu0
        %5312 = vmatprep.mubr.bf16.mxu0 %v3063
        %5313 = vmatmul.mubr.bf16.gmra.mrb[0].mxu0 %v3051
        %v5314 = vpop.f32.mrb[0].mxu0
        %v5315 = vadd.f32 %v5138, %v5314
        %v5316 = vpop.f32.mrb[0].mxu0
        %v5317 = vpop.f32.mrb[0].mxu0
        %v5318 = vadd.f32 %v5141, %v5317
        %v5319 = vpop.f32.mrb[0].mxu0
        %5320 = vmatprep.mubr.bf16.mxu0 %v3159
        %5321 = vmatmul.mubr.bf16.gmra.mrb[0].mxu0 %v3147
        %v5322 = vpop.f32.mrb[0].mxu0
        %v5323 = vadd.f32 %v5146, %v5322
        %v5324 = vpop.f32.mrb[0].mxu0
        %v5325 = vpop.f32.mrb[0].mxu0
        %v5326 = vadd.f32 %v5149, %v5325
        %v5327 = vpop.f32.mrb[0].mxu0
        %5328 = vmatprep.mubr.bf16.mxu0 %v3255
        %5329 = vmatmul.mubr.bf16.gmra.mrb[0].mxu0 %v3243
        %v5330 = vpop.f32.mrb[0].mxu0
        %v5331 = vadd.f32 %v5154, %v5330
        %v5332 = vpop.f32.mrb[0].mxu0
        %v5333 = vpop.f32.mrb[0].mxu0
        %v5334 = vadd.f32 %v5157, %v5333
        %v5335 = vpop.f32.mrb[0].mxu0
        %5336 = vmatprep.mubr.bf16.mxu0 %v3351
        %5337 = vmatmul.mubr.bf16.gmra.mrb[0].mxu0 %v3339
        %v5338 = vpop.f32.mrb[0].mxu0
        %v5339 = vadd.f32 %v5162, %v5338
        %v5340 = vpop.f32.mrb[0].mxu0
        %v5341 = vpop.f32.mrb[0].mxu0
        %v5342 = vadd.f32 %v5165, %v5341
        %v5343 = vpop.f32.mrb[0].mxu0
        %5344 = vmatprep.mubr.bf16.mxu0 %v3447
        %5345 = vmatmul.mubr.bf16.gmra.mrb[0].mxu0 %v3435
        %v5346 = vpop.f32.mrb[0].mxu0
        %v5347 = vadd.f32 %v5170, %v5346
        %v5348 = vpop.f32.mrb[0].mxu0
        %v5349 = vpop.f32.mrb[0].mxu0
        %v5350 = vadd.f32 %v5173, %v5349
        %v5351 = vpop.f32.mrb[0].mxu0
        %5352 = vmatprep.mubr.bf16.mxu0 %v3543
        %5353 = vmatmul.mubr.bf16.gmra.mrb[0].mxu0 %v3531
        %v5354 = vpop.f32.mrb[0].mxu0
        %v5355 = vadd.f32 %v5178, %v5354
        %v5356 = vpop.f32.mrb[0].mxu0
        %v5357 = vpop.f32.mrb[0].mxu0
        %v5358 = vadd.f32 %v5181, %v5357
        %v5359 = vpop.f32.mrb[0].mxu0
        %5360 = vmatprep.mubr.bf16.mxu0 %v3639
        %5361 = vmatmul.mubr.bf16.gmra.mrb[0].mxu0 %v3627
        %v5362 = vpop.f32.mrb[0].mxu0
        %v5363 = vadd.f32 %v5186, %v5362
        %v5364 = vpop.f32.mrb[0].mxu0
        %v5365 = vpop.f32.mrb[0].mxu0
        %v5366 = vadd.f32 %v5189, %v5365
        %v5367 = vpop.f32.mrb[0].mxu0
        %5368 = vmatprep.mubr.bf16.mxu0 %v3735
        %5369 = vmatmul.mubr.bf16.gmra.mrb[0].mxu0 %v3723
        %v5370 = vpop.f32.mrb[0].mxu0
        %v5371 = vadd.f32 %v5194, %v5370
        %v5372 = vpop.f32.mrb[0].mxu0
        %v5373 = vpop.f32.mrb[0].mxu0
        %v5374 = vadd.f32 %v5197, %v5373
        %v5375 = vpop.f32.mrb[0].mxu0
        %5376 = vmatprep.mubr.bf16.mxu0 %v3831
        %5377 = vmatmul.mubr.bf16.gmra.mrb[0].mxu0 %v3819
        %v5378 = vpop.f32.mrb[0].mxu0
        %v5379 = vadd.f32 %v5202, %v5378
        %v5380 = vpop.f32.mrb[0].mxu0
        %v5381 = vpop.f32.mrb[0].mxu0
        %v5382 = vadd.f32 %v5205, %v5381
        %v5383 = vpop.f32.mrb[0].mxu0
        %5384 = vmatprep.mubr.bf16.mxu0 %v3927
        %5385 = vmatmul.mubr.bf16.gmra.mrb[0].mxu0 %v3915
        %v5386 = vpop.f32.mrb[0].mxu0
        %v5387 = vadd.f32 %v5210, %v5386
        %v5388 = vpop.f32.mrb[0].mxu0
        %v5389 = vpop.f32.mrb[0].mxu0
        %v5390 = vadd.f32 %v5213, %v5389
        %v5391 = vpop.f32.mrb[0].mxu0
        %5392 = vdwg.mxu0
        %5393 = vmatprep.subr.bf16.mxu0 0
        %5394 = vmatpush1.bf16.msra.mxu0 %v4605
        %5395 = vmatprep.subr.bf16.mxu0 0
        %5396 = vmatpush1.bf16.msra.mxu0 %v4606
        %5397 = vmatprep.subr.bf16.mxu0 0
        %5398 = vmatpush1.bf16.msra.mxu0 %v4607
        %5399 = vmatprep.subr.bf16.mxu0 0
        %5400 = vmatpush1.bf16.msra.mxu0 %v4608
        %5401 = vmatprep.subr.bf16.mxu0 0
        %5402 = vmatpush1.bf16.msra.mxu0 %v4609
        %5403 = vmatprep.subr.bf16.mxu0 0
        %5404 = vmatpush1.bf16.msra.mxu0 %v4610
        %5405 = vmatprep.subr.bf16.mxu0 0
        %5406 = vmatpush1.bf16.msra.mxu0 %v4611
        %5407 = vmatprep.subr.bf16.mxu0 0
        %5408 = vmatpush1.bf16.msra.mxu0 %v4612
        %5409 = vmatprep.subr.bf16.mxu0 0
        %5410 = vmatpush1.bf16.msra.mxu0 0
        %5411 = vmatprep.subr.bf16.mxu0 0
        %5412 = vmatpush1.bf16.msra.mxu0 0
        %5413 = vmatprep.subr.bf16.mxu0 0
        %5414 = vmatpush1.bf16.msra.mxu0 0
        %5415 = vmatprep.subr.bf16.mxu0 0
        %5416 = vmatpush1.bf16.msra.mxu0 0
        %5417 = vmatprep.subr.bf16.mxu0 0
        %5418 = vmatpush1.bf16.msra.mxu0 0
        %5419 = vmatprep.subr.bf16.mxu0 0
        %5420 = vmatpush1.bf16.msra.mxu0 0
        %5421 = vmatprep.subr.bf16.mxu0 0
        %5422 = vmatpush1.bf16.msra.mxu0 0
        %5423 = vmatprep.subr.bf16.mxu0 0
        %5424 = vmatpush1.bf16.msra.mxu0 0
        %5425 = vmatprep.mubr.bf16.mxu0 0
        %5426 = vmatmul.mubr.bf16.gmra.mrb[0].mxu0 %v2307
        %v5427 = vpop.f32.mrb[0].mxu0
        %v5428 = vadd.f32 %v5251, %v5427
        %v5429 = vpop.f32.mrb[0].mxu0
        %v5430 = vpop.f32.mrb[0].mxu0
        %v5431 = vadd.f32 %v5254, %v5430
        %v5432 = vpop.f32.mrb[0].mxu0
        %5433 = vmatprep.mubr.bf16.mxu0 0
        %5434 = vmatmul.mubr.bf16.gmra.mrb[0].mxu0 %v2403
        %v5435 = vpop.f32.mrb[0].mxu0
        %v5436 = vadd.f32 %v5259, %v5435
        %v5437 = vpop.f32.mrb[0].mxu0
        %v5438 = vpop.f32.mrb[0].mxu0
        %v5439 = vadd.f32 %v5262, %v5438
        %v5440 = vpop.f32.mrb[0].mxu0
        %5441 = vmatprep.mubr.bf16.mxu0 0
        %5442 = vmatmul.mubr.bf16.gmra.mrb[0].mxu0 %v2499
        %v5443 = vpop.f32.mrb[0].mxu0
        %v5444 = vadd.f32 %v5267, %v5443
        %v5445 = vpop.f32.mrb[0].mxu0
        %v5446 = vpop.f32.mrb[0].mxu0
        %v5447 = vadd.f32 %v5270, %v5446
        %v5448 = vpop.f32.mrb[0].mxu0
        %5449 = vmatprep.mubr.bf16.mxu0 0
        %5450 = vmatmul.mubr.bf16.gmra.mrb[0].mxu0 %v2595
        %v5451 = vpop.f32.mrb[0].mxu0
        %v5452 = vadd.f32 %v5275, %v5451
        %v5453 = vpop.f32.mrb[0].mxu0
        %v5454 = vpop.f32.mrb[0].mxu0
        %v5455 = vadd.f32 %v5278, %v5454
        %v5456 = vpop.f32.mrb[0].mxu0
        %5457 = vmatprep.mubr.bf16.mxu0 0
        %5458 = vmatmul.mubr.bf16.gmra.mrb[0].mxu0 %v2691
        %v5459 = vpop.f32.mrb[0].mxu0
        %v5460 = vadd.f32 %v5283, %v5459
        %v5461 = vpop.f32.mrb[0].mxu0
        %v5462 = vpop.f32.mrb[0].mxu0
        %v5463 = vadd.f32 %v5286, %v5462
        %v5464 = vpop.f32.mrb[0].mxu0
        %5465 = vmatprep.mubr.bf16.mxu0 0
        %5466 = vmatmul.mubr.bf16.gmra.mrb[0].mxu0 %v2787
        %v5467 = vpop.f32.mrb[0].mxu0
        %v5468 = vadd.f32 %v5291, %v5467
        %v5469 = vpop.f32.mrb[0].mxu0
        %v5470 = vpop.f32.mrb[0].mxu0
        %v5471 = vadd.f32 %v5294, %v5470
        %v5472 = vpop.f32.mrb[0].mxu0
        %5473 = vmatprep.mubr.bf16.mxu0 0
        %5474 = vmatmul.mubr.bf16.gmra.mrb[0].mxu0 %v2883
        %v5475 = vpop.f32.mrb[0].mxu0
        %v5476 = vadd.f32 %v5299, %v5475
        %v5477 = vpop.f32.mrb[0].mxu0
        %v5478 = vpop.f32.mrb[0].mxu0
        %v5479 = vadd.f32 %v5302, %v5478
        %v5480 = vpop.f32.mrb[0].mxu0
        %5481 = vmatprep.mubr.bf16.mxu0 0
        %5482 = vmatmul.mubr.bf16.gmra.mrb[0].mxu0 %v2979
        %v5483 = vpop.f32.mrb[0].mxu0
        %v5484 = vadd.f32 %v5307, %v5483
        %v5485 = vpop.f32.mrb[0].mxu0
        %v5486 = vpop.f32.mrb[0].mxu0
        %v5487 = vadd.f32 %v5310, %v5486
        %v5488 = vpop.f32.mrb[0].mxu0
        %5489 = vmatprep.mubr.bf16.mxu0 0
        %5490 = vmatmul.mubr.bf16.gmra.mrb[0].mxu0 %v3075
        %v5491 = vpop.f32.mrb[0].mxu0
        %v5492 = vadd.f32 %v5315, %v5491
        %v5493 = vpop.f32.mrb[0].mxu0
        %v5494 = vpop.f32.mrb[0].mxu0
        %v5495 = vadd.f32 %v5318, %v5494
        %v5496 = vpop.f32.mrb[0].mxu0
        %5497 = vmatprep.mubr.bf16.mxu0 0
        %5498 = vmatmul.mubr.bf16.gmra.mrb[0].mxu0 %v3171
        %v5499 = vpop.f32.mrb[0].mxu0
        %v5500 = vadd.f32 %v5323, %v5499
        %v5501 = vpop.f32.mrb[0].mxu0
        %v5502 = vpop.f32.mrb[0].mxu0
        %v5503 = vadd.f32 %v5326, %v5502
        %v5504 = vpop.f32.mrb[0].mxu0
        %5505 = vmatprep.mubr.bf16.mxu0 0
        %5506 = vmatmul.mubr.bf16.gmra.mrb[0].mxu0 %v3267
        %v5507 = vpop.f32.mrb[0].mxu0
        %v5508 = vadd.f32 %v5331, %v5507
        %v5509 = vpop.f32.mrb[0].mxu0
        %v5510 = vpop.f32.mrb[0].mxu0
        %v5511 = vadd.f32 %v5334, %v5510
        %v5512 = vpop.f32.mrb[0].mxu0
        %5513 = vmatprep.mubr.bf16.mxu0 0
        %5514 = vmatmul.mubr.bf16.gmra.mrb[0].mxu0 %v3363
        %v5515 = vpop.f32.mrb[0].mxu0
        %v5516 = vadd.f32 %v5339, %v5515
        %v5517 = vpop.f32.mrb[0].mxu0
        %v5518 = vpop.f32.mrb[0].mxu0
        %v5519 = vadd.f32 %v5342, %v5518
        %v5520 = vpop.f32.mrb[0].mxu0
        %5521 = vmatprep.mubr.bf16.mxu0 0
        %5522 = vmatmul.mubr.bf16.gmra.mrb[0].mxu0 %v3459
        %v5523 = vpop.f32.mrb[0].mxu0
        %v5524 = vadd.f32 %v5347, %v5523
        %v5525 = vpop.f32.mrb[0].mxu0
        %v5526 = vpop.f32.mrb[0].mxu0
        %v5527 = vadd.f32 %v5350, %v5526
        %v5528 = vpop.f32.mrb[0].mxu0
        %5529 = vmatprep.mubr.bf16.mxu0 0
        %5530 = vmatmul.mubr.bf16.gmra.mrb[0].mxu0 %v3555
        %v5531 = vpop.f32.mrb[0].mxu0
        %v5532 = vadd.f32 %v5355, %v5531
        %v5533 = vpop.f32.mrb[0].mxu0
        %v5534 = vpop.f32.mrb[0].mxu0
        %v5535 = vadd.f32 %v5358, %v5534
        %v5536 = vpop.f32.mrb[0].mxu0
        %5537 = vmatprep.mubr.bf16.mxu0 0
        %5538 = vmatmul.mubr.bf16.gmra.mrb[0].mxu0 %v3651
        %v5539 = vpop.f32.mrb[0].mxu0
        %v5540 = vadd.f32 %v5363, %v5539
        %v5541 = vpop.f32.mrb[0].mxu0
        %v5542 = vpop.f32.mrb[0].mxu0
        %v5543 = vadd.f32 %v5366, %v5542
        %v5544 = vpop.f32.mrb[0].mxu0
        %5545 = vmatprep.mubr.bf16.mxu0 0
        %5546 = vmatmul.mubr.bf16.gmra.mrb[0].mxu0 %v3747
        %v5547 = vpop.f32.mrb[0].mxu0
        %v5548 = vadd.f32 %v5371, %v5547
        %v5549 = vpop.f32.mrb[0].mxu0
        %v5550 = vpop.f32.mrb[0].mxu0
        %v5551 = vadd.f32 %v5374, %v5550
        %v5552 = vpop.f32.mrb[0].mxu0
        %5553 = vmatprep.mubr.bf16.mxu0 0
        %5554 = vmatmul.mubr.bf16.gmra.mrb[0].mxu0 %v3843
        %v5555 = vpop.f32.mrb[0].mxu0
        %v5556 = vadd.f32 %v5379, %v5555
        %v5557 = vpop.f32.mrb[0].mxu0
        %v5558 = vpop.f32.mrb[0].mxu0
        %v5559 = vadd.f32 %v5382, %v5558
        %v5560 = vpop.f32.mrb[0].mxu0
        %5561 = vmatprep.mubr.bf16.mxu0 0
        %5562 = vmatmul.mubr.bf16.gmra.mrb[0].mxu0 %v3939
        %v5563 = vpop.f32.mrb[0].mxu0
        %v5564 = vadd.f32 %v5387, %v5563
        %v5565 = vpop.f32.mrb[0].mxu0
        %v5566 = vpop.f32.mrb[0].mxu0
        %v5567 = vadd.f32 %v5390, %v5566
        %v5568 = vpop.f32.mrb[0].mxu0
        %5569 = vdwg.mxu0
        %v5570 = vmax.f32 %v5428, 0.0
        %v5571 = vmax.f32 %v5431, 0.0
        %v5572 = vmax.f32 %v5436, 0.0
        %v5573 = vmax.f32 %v5439, 0.0
        %v5574 = vmax.f32 %v5444, 0.0
        %v5575 = vmax.f32 %v5447, 0.0
        %v5576 = vmax.f32 %v5452, 0.0
        %v5577 = vmax.f32 %v5455, 0.0
        %v5578 = vmax.f32 %v5460, 0.0
        %v5579 = vmax.f32 %v5463, 0.0
        %v5580 = vmax.f32 %v5468, 0.0
        %v5581 = vmax.f32 %v5471, 0.0
        %v5582 = vmax.f32 %v5476, 0.0
        %v5583 = vmax.f32 %v5479, 0.0
        %v5584 = vmax.f32 %v5484, 0.0
        %v5585 = vmax.f32 %v5487, 0.0
        %v5586 = vmax.f32 %v5492, 0.0
        %v5587 = vmax.f32 %v5495, 0.0
        %v5588 = vmax.f32 %v5500, 0.0
        %v5589 = vmax.f32 %v5503, 0.0
        %v5590 = vmax.f32 %v5508, 0.0
        %v5591 = vmax.f32 %v5511, 0.0
        %v5592 = vmax.f32 %v5516, 0.0
        %v5593 = vmax.f32 %v5519, 0.0
        %v5594 = vmax.f32 %v5524, 0.0
        %v5595 = vmax.f32 %v5527, 0.0
        %v5596 = vmax.f32 %v5532, 0.0
        %v5597 = vmax.f32 %v5535, 0.0
        %v5598 = vmax.f32 %v5540, 0.0
        %v5599 = vmax.f32 %v5543, 0.0
        %v5600 = vmax.f32 %v5548, 0.0
        %v5601 = vmax.f32 %v5551, 0.0
        %v5602 = vmax.f32 %v5556, 0.0
        %v5603 = vmax.f32 %v5559, 0.0
        %v5604 = vmax.f32 %v5564, 0.0
        %v5605 = vmax.f32 %v5567, 0.0
        %v5606 = vpack.c.bf16 %v5571, %v5570
        %v5607 = vpack.c.bf16 %v5573, %v5572
        %v5608 = vpack.c.bf16 %v5575, %v5574
        %v5609 = vpack.c.bf16 %v5577, %v5576
        %v5610 = vpack.c.bf16 %v5579, %v5578
        %v5611 = vpack.c.bf16 %v5581, %v5580
        %v5612 = vpack.c.bf16 %v5583, %v5582
        %v5613 = vpack.c.bf16 %v5585, %v5584
        %v5614 = vpack.c.bf16 %v5587, %v5586
        %v5615 = vpack.c.bf16 %v5589, %v5588
        %v5616 = vpack.c.bf16 %v5591, %v5590
        %v5617 = vpack.c.bf16 %v5593, %v5592
        %v5618 = vpack.c.bf16 %v5595, %v5594
        %v5619 = vpack.c.bf16 %v5597, %v5596
        %v5620 = vpack.c.bf16 %v5599, %v5598
        %v5621 = vpack.c.bf16 %v5601, %v5600
        %v5622 = vpack.c.bf16 %v5603, %v5602
        %v5623 = vpack.c.bf16 %v5605, %v5604
        %v5642 = vunpack.c.l.b16 %v5606
        %v5643 = vunpack.c.h.b16 %v5606
        %v5644 = vunpack.c.l.b16 %v5607
        %v5645 = vunpack.c.h.b16 %v5607
        %v5646 = vunpack.c.l.b16 %v5608
        %v5647 = vunpack.c.h.b16 %v5608
        %v5648 = vunpack.c.l.b16 %v5609
        %v5649 = vunpack.c.h.b16 %v5609
        %v5650 = vunpack.c.l.b16 %v5610
        %v5651 = vunpack.c.h.b16 %v5610
        %v5652 = vunpack.c.l.b16 %v5611
        %v5653 = vunpack.c.h.b16 %v5611
        %v5654 = vunpack.c.l.b16 %v5612
        %v5655 = vunpack.c.h.b16 %v5612
        %v5656 = vunpack.c.l.b16 %v5613
        %v5657 = vunpack.c.h.b16 %v5613
        %v5658 = vunpack.c.l.b16 %v5614
        %v5659 = vunpack.c.h.b16 %v5614
        %v5660 = vunpack.c.l.b16 %v5615
        %v5661 = vunpack.c.h.b16 %v5615
        %v5662 = vunpack.c.l.b16 %v5616
        %v5663 = vunpack.c.h.b16 %v5616
        %v5664 = vunpack.c.l.b16 %v5617
        %v5665 = vunpack.c.h.b16 %v5617
        %v5666 = vunpack.c.l.b16 %v5618
        %v5667 = vunpack.c.h.b16 %v5618
        %v5668 = vunpack.c.l.b16 %v5619
        %v5669 = vunpack.c.h.b16 %v5619
        %v5670 = vunpack.c.l.b16 %v5620
        %v5671 = vunpack.c.h.b16 %v5620
        %v5672 = vunpack.c.l.b16 %v5621
        %v5673 = vunpack.c.h.b16 %v5621
        %v5674 = vunpack.c.l.b16 %v5622
        %v5675 = vunpack.c.h.b16 %v5622
        %v5676 = vunpack.c.l.b16 %v5623
        %v5677 = vunpack.c.h.b16 %v5623
        %v5678 = vpack.c.b16 %v5642, %v5642
        %v5679 = vpack.c.b16 %v5643, %v5643
        %v5680 = vpack.c.b16 %v5644, %v5644
        %v5681 = vpack.c.b16 %v5645, %v5645
        %v5682 = vpack.c.b16 %v5646, %v5646
        %v5683 = vpack.c.b16 %v5647, %v5647
        %v5684 = vpack.c.b16 %v5648, %v5648
        %v5685 = vpack.c.b16 %v5649, %v5649
        %v5686 = vpack.c.b16 %v5650, %v5650
        %v5687 = vpack.c.b16 %v5651, %v5651
        %v5688 = vpack.c.b16 %v5652, %v5652
        %v5689 = vpack.c.b16 %v5653, %v5653
        %v5690 = vpack.c.b16 %v5654, %v5654
        %v5691 = vpack.c.b16 %v5655, %v5655
        %v5692 = vpack.c.b16 %v5656, %v5656
        %v5693 = vpack.c.b16 %v5657, %v5657
        %v5694 = vpack.c.b16 %v5658, %v5658
        %v5695 = vpack.c.b16 %v5659, %v5659
        %v5696 = vpack.c.b16 %v5660, %v5660
        %v5697 = vpack.c.b16 %v5661, %v5661
        %v5698 = vpack.c.b16 %v5662, %v5662
        %v5699 = vpack.c.b16 %v5663, %v5663
        %v5700 = vpack.c.b16 %v5664, %v5664
        %v5701 = vpack.c.b16 %v5665, %v5665
        %v5702 = vpack.c.b16 %v5666, %v5666
        %v5703 = vpack.c.b16 %v5667, %v5667
        %v5704 = vpack.c.b16 %v5668, %v5668
        %v5705 = vpack.c.b16 %v5669, %v5669
        %v5706 = vpack.c.b16 %v5670, %v5670
        %v5707 = vpack.c.b16 %v5671, %v5671
        %v5708 = vpack.c.b16 %v5672, %v5672
        %v5709 = vpack.c.b16 %v5673, %v5673
        %v5710 = vpack.c.b16 %v5674, %v5674
        %v5711 = vpack.c.b16 %v5675, %v5675
        %v5712 = vpack.c.b16 %v5676, %v5676
        %v5713 = vpack.c.b16 %v5677, %v5677
        %vm5714 = vsmask.f32 256
        %vm5715 = vsmask.f32 4368
        %vm5716 = vmor %vm5714, %vm5715
        %v5718 = vshrl.u32 %v5678, 16
        %v5720 = vrot.slane %v5718, 7
        %v5721 = vshll.u32 %v5678, 16
        %v5723 = vor.u32 %v5720, %v5721
        %v5724 = vrot.slane %v5720, 4
        %v5726 = vshrl.u32 %v5679, 16
        %v5728 = vrot.slane %v5726, 7
        %v5729 = vshll.u32 %v5679, 16
        %v5731 = vor.u32 %v5728, %v5729
        %v5732 = vsel %vm5716, %v5724, %v5731
        %v5733 = vrot.slane %v5728, 4
        %v5735 = vshrl.u32 %v5680, 16
        %v5737 = vrot.slane %v5735, 7
        %v5738 = vshll.u32 %v5680, 16
        %v5740 = vor.u32 %v5737, %v5738
        %v5741 = vrot.slane %v5737, 4
        %v5743 = vshrl.u32 %v5681, 16
        %v5745 = vrot.slane %v5743, 7
        %v5746 = vshll.u32 %v5681, 16
        %v5748 = vor.u32 %v5745, %v5746
        %v5749 = vsel %vm5716, %v5741, %v5748
        %v5750 = vrot.slane %v5745, 4
        %v5752 = vshrl.u32 %v5682, 16
        %v5754 = vrot.slane %v5752, 7
        %v5755 = vshll.u32 %v5682, 16
        %v5757 = vor.u32 %v5754, %v5755
        %v5758 = vrot.slane %v5754, 4
        %v5760 = vshrl.u32 %v5683, 16
        %v5762 = vrot.slane %v5760, 7
        %v5763 = vshll.u32 %v5683, 16
        %v5765 = vor.u32 %v5762, %v5763
        %v5766 = vsel %vm5716, %v5758, %v5765
        %v5767 = vrot.slane %v5762, 4
        %v5769 = vshrl.u32 %v5684, 16
        %v5771 = vrot.slane %v5769, 7
        %v5772 = vshll.u32 %v5684, 16
        %v5774 = vor.u32 %v5771, %v5772
        %v5775 = vrot.slane %v5771, 4
        %v5777 = vshrl.u32 %v5685, 16
        %v5779 = vrot.slane %v5777, 7
        %v5780 = vshll.u32 %v5685, 16
        %v5782 = vor.u32 %v5779, %v5780
        %v5783 = vsel %vm5716, %v5775, %v5782
        %v5784 = vrot.slane %v5779, 4
        %v5786 = vshrl.u32 %v5686, 16
        %v5788 = vrot.slane %v5786, 7
        %v5789 = vshll.u32 %v5686, 16
        %v5791 = vor.u32 %v5788, %v5789
        %v5792 = vrot.slane %v5788, 4
        %v5794 = vshrl.u32 %v5687, 16
        %v5796 = vrot.slane %v5794, 7
        %v5797 = vshll.u32 %v5687, 16
        %v5799 = vor.u32 %v5796, %v5797
        %v5800 = vsel %vm5716, %v5792, %v5799
        %v5801 = vrot.slane %v5796, 4
        %v5803 = vshrl.u32 %v5688, 16
        %v5805 = vrot.slane %v5803, 7
        %v5806 = vshll.u32 %v5688, 16
        %v5808 = vor.u32 %v5805, %v5806
        %v5809 = vrot.slane %v5805, 4
        %v5811 = vshrl.u32 %v5689, 16
        %v5813 = vrot.slane %v5811, 7
        %v5814 = vshll.u32 %v5689, 16
        %v5816 = vor.u32 %v5813, %v5814
        %v5817 = vsel %vm5716, %v5809, %v5816
        %v5818 = vrot.slane %v5813, 4
        %v5820 = vshrl.u32 %v5690, 16
        %v5822 = vrot.slane %v5820, 7
        %v5823 = vshll.u32 %v5690, 16
        %v5825 = vor.u32 %v5822, %v5823
        %v5826 = vrot.slane %v5822, 4
        %v5828 = vshrl.u32 %v5691, 16
        %v5830 = vrot.slane %v5828, 7
        %v5831 = vshll.u32 %v5691, 16
        %v5833 = vor.u32 %v5830, %v5831
        %v5834 = vsel %vm5716, %v5826, %v5833
        %v5835 = vrot.slane %v5830, 4
        %v5837 = vshrl.u32 %v5692, 16
        %v5839 = vrot.slane %v5837, 7
        %v5840 = vshll.u32 %v5692, 16
        %v5842 = vor.u32 %v5839, %v5840
        %v5843 = vrot.slane %v5839, 4
        %v5845 = vshrl.u32 %v5693, 16
        %v5847 = vrot.slane %v5845, 7
        %v5848 = vshll.u32 %v5693, 16
        %v5850 = vor.u32 %v5847, %v5848
        %v5851 = vsel %vm5716, %v5843, %v5850
        %v5852 = vrot.slane %v5847, 4
        %v5854 = vshrl.u32 %v5694, 16
        %v5856 = vrot.slane %v5854, 7
        %v5857 = vshll.u32 %v5694, 16
        %v5859 = vor.u32 %v5856, %v5857
        %v5860 = vrot.slane %v5856, 4
        %v5862 = vshrl.u32 %v5695, 16
        %v5864 = vrot.slane %v5862, 7
        %v5865 = vshll.u32 %v5695, 16
        %v5867 = vor.u32 %v5864, %v5865
        %v5868 = vsel %vm5716, %v5860, %v5867
        %v5869 = vrot.slane %v5864, 4
        %v5871 = vshrl.u32 %v5696, 16
        %v5873 = vrot.slane %v5871, 7
        %v5874 = vshll.u32 %v5696, 16
        %v5876 = vor.u32 %v5873, %v5874
        %v5877 = vrot.slane %v5873, 4
        %v5879 = vshrl.u32 %v5697, 16
        %v5881 = vrot.slane %v5879, 7
        %v5882 = vshll.u32 %v5697, 16
        %v5884 = vor.u32 %v5881, %v5882
        %v5885 = vsel %vm5716, %v5877, %v5884
        %v5886 = vrot.slane %v5881, 4
        %v5888 = vshrl.u32 %v5698, 16
        %v5890 = vrot.slane %v5888, 7
        %v5891 = vshll.u32 %v5698, 16
        %v5893 = vor.u32 %v5890, %v5891
        %v5894 = vrot.slane %v5890, 4
        %v5896 = vshrl.u32 %v5699, 16
        %v5898 = vrot.slane %v5896, 7
        %v5899 = vshll.u32 %v5699, 16
        %v5901 = vor.u32 %v5898, %v5899
        %v5902 = vsel %vm5716, %v5894, %v5901
        %v5903 = vrot.slane %v5898, 4
        %v5905 = vshrl.u32 %v5700, 16
        %v5907 = vrot.slane %v5905, 7
        %v5908 = vshll.u32 %v5700, 16
        %v5910 = vor.u32 %v5907, %v5908
        %v5911 = vrot.slane %v5907, 4
        %v5913 = vshrl.u32 %v5701, 16
        %v5915 = vrot.slane %v5913, 7
        %v5916 = vshll.u32 %v5701, 16
        %v5918 = vor.u32 %v5915, %v5916
        %v5919 = vsel %vm5716, %v5911, %v5918
        %v5920 = vrot.slane %v5915, 4
        %v5922 = vshrl.u32 %v5702, 16
        %v5924 = vrot.slane %v5922, 7
        %v5925 = vshll.u32 %v5702, 16
        %v5927 = vor.u32 %v5924, %v5925
        %v5928 = vrot.slane %v5924, 4
        %v5930 = vshrl.u32 %v5703, 16
        %v5932 = vrot.slane %v5930, 7
        %v5933 = vshll.u32 %v5703, 16
        %v5935 = vor.u32 %v5932, %v5933
        %v5936 = vsel %vm5716, %v5928, %v5935
        %v5937 = vrot.slane %v5932, 4
        %v5939 = vshrl.u32 %v5704, 16
        %v5941 = vrot.slane %v5939, 7
        %v5942 = vshll.u32 %v5704, 16
        %v5944 = vor.u32 %v5941, %v5942
        %v5945 = vrot.slane %v5941, 4
        %v5947 = vshrl.u32 %v5705, 16
        %v5949 = vrot.slane %v5947, 7
        %v5950 = vshll.u32 %v5705, 16
        %v5952 = vor.u32 %v5949, %v5950
        %v5953 = vsel %vm5716, %v5945, %v5952
        %v5954 = vrot.slane %v5949, 4
        %v5956 = vshrl.u32 %v5706, 16
        %v5958 = vrot.slane %v5956, 7
        %v5959 = vshll.u32 %v5706, 16
        %v5961 = vor.u32 %v5958, %v5959
        %v5962 = vrot.slane %v5958, 4
        %v5964 = vshrl.u32 %v5707, 16
        %v5966 = vrot.slane %v5964, 7
        %v5967 = vshll.u32 %v5707, 16
        %v5969 = vor.u32 %v5966, %v5967
        %v5970 = vsel %vm5716, %v5962, %v5969
        %v5971 = vrot.slane %v5966, 4
        %v5973 = vshrl.u32 %v5708, 16
        %v5975 = vrot.slane %v5973, 7
        %v5976 = vshll.u32 %v5708, 16
        %v5978 = vor.u32 %v5975, %v5976
        %v5979 = vrot.slane %v5975, 4
        %v5981 = vshrl.u32 %v5709, 16
        %v5983 = vrot.slane %v5981, 7
        %v5984 = vshll.u32 %v5709, 16
        %v5986 = vor.u32 %v5983, %v5984
        %v5987 = vsel %vm5716, %v5979, %v5986
        %v5988 = vrot.slane %v5983, 4
        %v5990 = vshrl.u32 %v5710, 16
        %v5992 = vrot.slane %v5990, 7
        %v5993 = vshll.u32 %v5710, 16
        %v5995 = vor.u32 %v5992, %v5993
        %v5996 = vrot.slane %v5992, 4
        %v5998 = vshrl.u32 %v5711, 16
        %v6000 = vrot.slane %v5998, 7
        %v6001 = vshll.u32 %v5711, 16
        %v6003 = vor.u32 %v6000, %v6001
        %v6004 = vsel %vm5716, %v5996, %v6003
        %v6005 = vrot.slane %v6000, 4
        %v6007 = vshrl.u32 %v5712, 16
        %v6009 = vrot.slane %v6007, 7
        %v6010 = vshll.u32 %v5712, 16
        %v6012 = vor.u32 %v6009, %v6010
        %v6013 = vrot.slane %v6009, 4
        %v6015 = vshrl.u32 %v5713, 16
        %v6017 = vrot.slane %v6015, 7
        %v6018 = vshll.u32 %v5713, 16
        %v6020 = vor.u32 %v6017, %v6018
        %v6021 = vsel %vm5716, %v6013, %v6020
        %v6022 = vrot.slane %v6017, 4
        %vm6077 = vcmask 1043456
        %vm6078 = vsmask.f32 7938
        %vm6079 = vmand %vm6077, %vm6078
        %v6080 = vld [vmem:[#allocation2] sm:$0xf]
        %v6081 = vsel %vm6079, %v5723, %v6080
        %6082 = vst [vmem:[#allocation2] sm:$0xf] %v6081
        %6083 = vst [vmem:[#allocation2 + $0x4] sm:$0xf] %v5732
        %vm6084 = vcmask 1040384
        %vm6085 = vmand %vm6084, %vm5714
        %v6086 = vld [vmem:[#allocation2 + $0x8] sm:$0x1]
        %v6087 = vsel %vm6085, %v5733, %v6086
        %6088 = vst [vmem:[#allocation2 + $0x8] sm:$0x1] %v6087
        %v6089 = vld [vmem:[#allocation2 + $0xc] sm:$0xf]
        %v6090 = vsel %vm6079, %v5740, %v6089
        %6091 = vst [vmem:[#allocation2 + $0xc] sm:$0xf] %v6090
        %6092 = vst [vmem:[#allocation2 + $0x10] sm:$0xf] %v5749
        %v6093 = vld [vmem:[#allocation2 + $0x14] sm:$0x1]
        %v6094 = vsel %vm6085, %v5750, %v6093
        %6095 = vst [vmem:[#allocation2 + $0x14] sm:$0x1] %v6094
        %v6096 = vld [vmem:[#allocation2 + $0x18] sm:$0xf]
        %v6097 = vsel %vm6079, %v5757, %v6096
        %6098 = vst [vmem:[#allocation2 + $0x18] sm:$0xf] %v6097
        %6099 = vst [vmem:[#allocation2 + $0x1c] sm:$0xf] %v5766
        %v6100 = vld [vmem:[#allocation2 + $0x20] sm:$0x1]
        %v6101 = vsel %vm6085, %v5767, %v6100
        %6102 = vst [vmem:[#allocation2 + $0x20] sm:$0x1] %v6101
        %v6103 = vld [vmem:[#allocation2 + $0x24] sm:$0xf]
        %v6104 = vsel %vm6079, %v5774, %v6103
        %6105 = vst [vmem:[#allocation2 + $0x24] sm:$0xf] %v6104
        %6106 = vst [vmem:[#allocation2 + $0x28] sm:$0xf] %v5783
        %v6107 = vld [vmem:[#allocation2 + $0x2c] sm:$0x1]
        %v6108 = vsel %vm6085, %v5784, %v6107
        %6109 = vst [vmem:[#allocation2 + $0x2c] sm:$0x1] %v6108
        %v6110 = vld [vmem:[#allocation2 + $0x30] sm:$0xf]
        %v6111 = vsel %vm6079, %v5791, %v6110
        %6112 = vst [vmem:[#allocation2 + $0x30] sm:$0xf] %v6111
        %6113 = vst [vmem:[#allocation2 + $0x34] sm:$0xf] %v5800
        %v6114 = vld [vmem:[#allocation2 + $0x38] sm:$0x1]
        %v6115 = vsel %vm6085, %v5801, %v6114
        %6116 = vst [vmem:[#allocation2 + $0x38] sm:$0x1] %v6115
        %v6117 = vld [vmem:[#allocation2 + $0x3c] sm:$0xf]
        %v6118 = vsel %vm6079, %v5808, %v6117
        %6119 = vst [vmem:[#allocation2 + $0x3c] sm:$0xf] %v6118
        %6120 = vst [vmem:[#allocation2 + $0x40] sm:$0xf] %v5817
        %v6121 = vld [vmem:[#allocation2 + $0x44] sm:$0x1]
        %v6122 = vsel %vm6085, %v5818, %v6121
        %6123 = vst [vmem:[#allocation2 + $0x44] sm:$0x1] %v6122
        %v6124 = vld [vmem:[#allocation2 + $0x48] sm:$0xf]
        %v6125 = vsel %vm6079, %v5825, %v6124
        %6126 = vst [vmem:[#allocation2 + $0x48] sm:$0xf] %v6125
        %6127 = vst [vmem:[#allocation2 + $0x4c] sm:$0xf] %v5834
        %v6128 = vld [vmem:[#allocation2 + $0x50] sm:$0x1]
        %v6129 = vsel %vm6085, %v5835, %v6128
        %6130 = vst [vmem:[#allocation2 + $0x50] sm:$0x1] %v6129
        %v6131 = vld [vmem:[#allocation2 + $0x54] sm:$0xf]
        %v6132 = vsel %vm6079, %v5842, %v6131
        %6133 = vst [vmem:[#allocation2 + $0x54] sm:$0xf] %v6132
        %6134 = vst [vmem:[#allocation2 + $0x58] sm:$0xf] %v5851
        %v6135 = vld [vmem:[#allocation2 + $0x5c] sm:$0x1]
        %v6136 = vsel %vm6085, %v5852, %v6135
        %6137 = vst [vmem:[#allocation2 + $0x5c] sm:$0x1] %v6136
        %v6138 = vld [vmem:[#allocation2 + $0x60] sm:$0xf]
        %v6139 = vsel %vm6079, %v5859, %v6138
        %6140 = vst [vmem:[#allocation2 + $0x60] sm:$0xf] %v6139
        %6141 = vst [vmem:[#allocation2 + $0x64] sm:$0xf] %v5868
        %v6142 = vld [vmem:[#allocation2 + $0x68] sm:$0x1]
        %v6143 = vsel %vm6085, %v5869, %v6142
        %6144 = vst [vmem:[#allocation2 + $0x68] sm:$0x1] %v6143
        %v6145 = vld [vmem:[#allocation2 + $0x6c] sm:$0xf]
        %v6146 = vsel %vm6079, %v5876, %v6145
        %6147 = vst [vmem:[#allocation2 + $0x6c] sm:$0xf] %v6146
        %6148 = vst [vmem:[#allocation2 + $0x70] sm:$0xf] %v5885
        %v6149 = vld [vmem:[#allocation2 + $0x74] sm:$0x1]
        %v6150 = vsel %vm6085, %v5886, %v6149
        %6151 = vst [vmem:[#allocation2 + $0x74] sm:$0x1] %v6150
        %v6152 = vld [vmem:[#allocation2 + $0x78] sm:$0xf]
        %v6153 = vsel %vm6079, %v5893, %v6152
        %6154 = vst [vmem:[#allocation2 + $0x78] sm:$0xf] %v6153
        %6155 = vst [vmem:[#allocation2 + $0x7c] sm:$0xf] %v5902
        %v6156 = vld [vmem:[#allocation2 + $0x80] sm:$0x1]
        %v6157 = vsel %vm6085, %v5903, %v6156
        %6158 = vst [vmem:[#allocation2 + $0x80] sm:$0x1] %v6157
        %v6159 = vld [vmem:[#allocation2 + $0x84] sm:$0xf]
        %v6160 = vsel %vm6079, %v5910, %v6159
        %6161 = vst [vmem:[#allocation2 + $0x84] sm:$0xf] %v6160
        %6162 = vst [vmem:[#allocation2 + $0x88] sm:$0xf] %v5919
        %v6163 = vld [vmem:[#allocation2 + $0x8c] sm:$0x1]
        %v6164 = vsel %vm6085, %v5920, %v6163
        %6165 = vst [vmem:[#allocation2 + $0x8c] sm:$0x1] %v6164
        %v6166 = vld [vmem:[#allocation2 + $0x90] sm:$0xf]
        %v6167 = vsel %vm6079, %v5927, %v6166
        %6168 = vst [vmem:[#allocation2 + $0x90] sm:$0xf] %v6167
        %6169 = vst [vmem:[#allocation2 + $0x94] sm:$0xf] %v5936
        %v6170 = vld [vmem:[#allocation2 + $0x98] sm:$0x1]
        %v6171 = vsel %vm6085, %v5937, %v6170
        %6172 = vst [vmem:[#allocation2 + $0x98] sm:$0x1] %v6171
        %v6173 = vld [vmem:[#allocation2 + $0x9c] sm:$0xf]
        %v6174 = vsel %vm6079, %v5944, %v6173
        %6175 = vst [vmem:[#allocation2 + $0x9c] sm:$0xf] %v6174
        %6176 = vst [vmem:[#allocation2 + $0xa0] sm:$0xf] %v5953
        %v6177 = vld [vmem:[#allocation2 + $0xa4] sm:$0x1]
        %v6178 = vsel %vm6085, %v5954, %v6177
        %6179 = vst [vmem:[#allocation2 + $0xa4] sm:$0x1] %v6178
        %v6180 = vld [vmem:[#allocation2 + $0xa8] sm:$0xf]
        %v6181 = vsel %vm6079, %v5961, %v6180
        %6182 = vst [vmem:[#allocation2 + $0xa8] sm:$0xf] %v6181
        %6183 = vst [vmem:[#allocation2 + $0xac] sm:$0xf] %v5970
        %v6184 = vld [vmem:[#allocation2 + $0xb0] sm:$0x1]
        %v6185 = vsel %vm6085, %v5971, %v6184
        %6186 = vst [vmem:[#allocation2 + $0xb0] sm:$0x1] %v6185
        %v6187 = vld [vmem:[#allocation2 + $0xb4] sm:$0xf]
        %v6188 = vsel %vm6079, %v5978, %v6187
        %6189 = vst [vmem:[#allocation2 + $0xb4] sm:$0xf] %v6188
        %6190 = vst [vmem:[#allocation2 + $0xb8] sm:$0xf] %v5987
        %v6191 = vld [vmem:[#allocation2 + $0xbc] sm:$0x1]
        %v6192 = vsel %vm6085, %v5988, %v6191
        %6193 = vst [vmem:[#allocation2 + $0xbc] sm:$0x1] %v6192
        %v6194 = vld [vmem:[#allocation2 + $0xc0] sm:$0xf]
        %v6195 = vsel %vm6079, %v5995, %v6194
        %6196 = vst [vmem:[#allocation2 + $0xc0] sm:$0xf] %v6195
        %6197 = vst [vmem:[#allocation2 + $0xc4] sm:$0xf] %v6004
        %v6198 = vld [vmem:[#allocation2 + $0xc8] sm:$0x1]
        %v6199 = vsel %vm6085, %v6005, %v6198
        %6200 = vst [vmem:[#allocation2 + $0xc8] sm:$0x1] %v6199
        %v6201 = vld [vmem:[#allocation2 + $0xcc] sm:$0xf]
        %v6202 = vsel %vm6079, %v6012, %v6201
        %6203 = vst [vmem:[#allocation2 + $0xcc] sm:$0xf] %v6202
        %6204 = vst [vmem:[#allocation2 + $0xd0] sm:$0xf] %v6021
        %v6205 = vld [vmem:[#allocation2 + $0xd4] sm:$0x1]
        %v6206 = vsel %vm6085, %v6022, %v6205
        %6207 = vst [vmem:[#allocation2 + $0xd4] sm:$0x1] %v6206
        %v6208 = vld [vmem:[#allocation2] sm:$0x1]
        %v6209 = vsel %vm6085, 0, %v6208
        %6210 = vst [vmem:[#allocation2] sm:$0x1] %v6209
        %v6211 = vld [vmem:[#allocation2 + $0xc] sm:$0x1]
        %v6212 = vsel %vm6085, 0, %v6211
        %6213 = vst [vmem:[#allocation2 + $0xc] sm:$0x1] %v6212
        %v6214 = vld [vmem:[#allocation2 + $0x18] sm:$0x1]
        %v6215 = vsel %vm6085, 0, %v6214
        %6216 = vst [vmem:[#allocation2 + $0x18] sm:$0x1] %v6215
        %v6217 = vld [vmem:[#allocation2 + $0x24] sm:$0x1]
        %v6218 = vsel %vm6085, 0, %v6217
        %6219 = vst [vmem:[#allocation2 + $0x24] sm:$0x1] %v6218
        %v6220 = vld [vmem:[#allocation2 + $0x30] sm:$0x1]
        %v6221 = vsel %vm6085, 0, %v6220
        %6222 = vst [vmem:[#allocation2 + $0x30] sm:$0x1] %v6221
        %v6223 = vld [vmem:[#allocation2 + $0x3c] sm:$0x1]
        %v6224 = vsel %vm6085, 0, %v6223
        %6225 = vst [vmem:[#allocation2 + $0x3c] sm:$0x1] %v6224
        %v6226 = vld [vmem:[#allocation2 + $0x48] sm:$0x1]
        %v6227 = vsel %vm6085, 0, %v6226
        %6228 = vst [vmem:[#allocation2 + $0x48] sm:$0x1] %v6227
        %v6229 = vld [vmem:[#allocation2 + $0x54] sm:$0x1]
        %v6230 = vsel %vm6085, 0, %v6229
        %6231 = vst [vmem:[#allocation2 + $0x54] sm:$0x1] %v6230
        %v6232 = vld [vmem:[#allocation2 + $0x60] sm:$0x1]
        %v6233 = vsel %vm6085, 0, %v6232
        %6234 = vst [vmem:[#allocation2 + $0x60] sm:$0x1] %v6233
        %v6235 = vld [vmem:[#allocation2 + $0x6c] sm:$0x1]
        %v6236 = vsel %vm6085, 0, %v6235
        %6237 = vst [vmem:[#allocation2 + $0x6c] sm:$0x1] %v6236
        %v6238 = vld [vmem:[#allocation2 + $0x78] sm:$0x1]
        %v6239 = vsel %vm6085, 0, %v6238
        %6240 = vst [vmem:[#allocation2 + $0x78] sm:$0x1] %v6239
        %v6241 = vld [vmem:[#allocation2 + $0x84] sm:$0x1]
        %v6242 = vsel %vm6085, 0, %v6241
        %6243 = vst [vmem:[#allocation2 + $0x84] sm:$0x1] %v6242
        %v6244 = vld [vmem:[#allocation2 + $0x90] sm:$0x1]
        %v6245 = vsel %vm6085, 0, %v6244
        %6246 = vst [vmem:[#allocation2 + $0x90] sm:$0x1] %v6245
        %v6247 = vld [vmem:[#allocation2 + $0x9c] sm:$0x1]
        %v6248 = vsel %vm6085, 0, %v6247
        %6249 = vst [vmem:[#allocation2 + $0x9c] sm:$0x1] %v6248
        %v6250 = vld [vmem:[#allocation2 + $0xa8] sm:$0x1]
        %v6251 = vsel %vm6085, 0, %v6250
        %6252 = vst [vmem:[#allocation2 + $0xa8] sm:$0x1] %v6251
        %v6253 = vld [vmem:[#allocation2 + $0xb4] sm:$0x1]
        %v6254 = vsel %vm6085, 0, %v6253
        %6255 = vst [vmem:[#allocation2 + $0xb4] sm:$0x1] %v6254
        %v6256 = vld [vmem:[#allocation2 + $0xc0] sm:$0x1]
        %v6257 = vsel %vm6085, 0, %v6256
        %6258 = vst [vmem:[#allocation2 + $0xc0] sm:$0x1] %v6257
        %v6259 = vld [vmem:[#allocation2 + $0xcc] sm:$0x1]
        %v6260 = vsel %vm6085, 0, %v6259
        %6261 = vst [vmem:[#allocation2 + $0xcc] sm:$0x1] %v6260
        %vm6262 = vmand %vm6084, %vm6078
        %v6263 = vld [vmem:[#allocation2 + $0x8] sm:$0x1]
        %v6264 = vsel %vm6262, 0, %v6263
        %6265 = vst [vmem:[#allocation2 + $0x8] sm:$0x1] %v6264
        %v6266 = vld [vmem:[#allocation2 + $0x14] sm:$0x1]
        %v6267 = vsel %vm6262, 0, %v6266
        %6268 = vst [vmem:[#allocation2 + $0x14] sm:$0x1] %v6267
        %v6269 = vld [vmem:[#allocation2 + $0x20] sm:$0x1]
        %v6270 = vsel %vm6262, 0, %v6269
        %6271 = vst [vmem:[#allocation2 + $0x20] sm:$0x1] %v6270
        %v6272 = vld [vmem:[#allocation2 + $0x2c] sm:$0x1]
        %v6273 = vsel %vm6262, 0, %v6272
        %6274 = vst [vmem:[#allocation2 + $0x2c] sm:$0x1] %v6273
        %v6275 = vld [vmem:[#allocation2 + $0x38] sm:$0x1]
        %v6276 = vsel %vm6262, 0, %v6275
        %6277 = vst [vmem:[#allocation2 + $0x38] sm:$0x1] %v6276
        %v6278 = vld [vmem:[#allocation2 + $0x44] sm:$0x1]
        %v6279 = vsel %vm6262, 0, %v6278
        %6280 = vst [vmem:[#allocation2 + $0x44] sm:$0x1] %v6279
        %v6281 = vld [vmem:[#allocation2 + $0x50] sm:$0x1]
        %v6282 = vsel %vm6262, 0, %v6281
        %6283 = vst [vmem:[#allocation2 + $0x50] sm:$0x1] %v6282
        %v6284 = vld [vmem:[#allocation2 + $0x5c] sm:$0x1]
        %v6285 = vsel %vm6262, 0, %v6284
        %6286 = vst [vmem:[#allocation2 + $0x5c] sm:$0x1] %v6285
        %v6287 = vld [vmem:[#allocation2 + $0x68] sm:$0x1]
        %v6288 = vsel %vm6262, 0, %v6287
        %6289 = vst [vmem:[#allocation2 + $0x68] sm:$0x1] %v6288
        %v6290 = vld [vmem:[#allocation2 + $0x74] sm:$0x1]
        %v6291 = vsel %vm6262, 0, %v6290
        %6292 = vst [vmem:[#allocation2 + $0x74] sm:$0x1] %v6291
        %v6293 = vld [vmem:[#allocation2 + $0x80] sm:$0x1]
        %v6294 = vsel %vm6262, 0, %v6293
        %6295 = vst [vmem:[#allocation2 + $0x80] sm:$0x1] %v6294
        %v6296 = vld [vmem:[#allocation2 + $0x8c] sm:$0x1]
        %v6297 = vsel %vm6262, 0, %v6296
        %6298 = vst [vmem:[#allocation2 + $0x8c] sm:$0x1] %v6297
        %v6299 = vld [vmem:[#allocation2 + $0x98] sm:$0x1]
        %v6300 = vsel %vm6262, 0, %v6299
        %6301 = vst [vmem:[#allocation2 + $0x98] sm:$0x1] %v6300
        %v6302 = vld [vmem:[#allocation2 + $0xa4] sm:$0x1]
        %v6303 = vsel %vm6262, 0, %v6302
        %6304 = vst [vmem:[#allocation2 + $0xa4] sm:$0x1] %v6303
        %v6305 = vld [vmem:[#allocation2 + $0xb0] sm:$0x1]
        %v6306 = vsel %vm6262, 0, %v6305
        %6307 = vst [vmem:[#allocation2 + $0xb0] sm:$0x1] %v6306
        %v6308 = vld [vmem:[#allocation2 + $0xbc] sm:$0x1]
        %v6309 = vsel %vm6262, 0, %v6308
        %6310 = vst [vmem:[#allocation2 + $0xbc] sm:$0x1] %v6309
        %v6311 = vld [vmem:[#allocation2 + $0xc8] sm:$0x1]
        %v6312 = vsel %vm6262, 0, %v6311
        %6313 = vst [vmem:[#allocation2 + $0xc8] sm:$0x1] %v6312
        %v6314 = vld [vmem:[#allocation2 + $0xd4] sm:$0x1]
        %v6315 = vsel %vm6262, 0, %v6314
        %6316 = vst [vmem:[#allocation2 + $0xd4] sm:$0x1] %v6315
        %p6317 = scmp.eq.s32.totalorder %s25, 0
        // Predicated region
        $region45: #{tpu_custom_call.1} parent=39 // pred_check
          %p6318 = pneg %p6317
        $region46: #{tpu_custom_call.1} parent=39 // pred_check_branch
          %6320 = sbr.rel (%p6318) target = $region48
        $region47: #{tpu_custom_call.1} parent=39 // pred_region
          %6321 = vst [vmem:[#allocation2] sm:$0xf] 0
          %6322 = vst [vmem:[#allocation2 + $0x4] sm:$0xf] 0
          %6323 = vst [vmem:[#allocation2 + $0x8] sm:$0x1] 0
          %s6324 = scalar_lea.vmem [#allocation2], 204
          %6325 = vst [vmem:[%s6324] sm:$0xf] 0
          %6326 = vst [vmem:[%s6324 + $0x4] sm:$0xf] 0
          %6327 = vst [vmem:[%s6324 + $0x8] sm:$0x1] 0
        $region48: #{tpu_custom_call.1} parent=39 // pred_fallthru
          _
        %v6328 = vld [vmem:[#allocation2] sm:$0xf]
        %v6329 = vld [vmem:[#allocation2 + $0x4] sm:$0xf]
        %v6330 = vld [vmem:[#allocation2 + $0xc] sm:$0xf]
        %v6331 = vld [vmem:[#allocation2 + $0x10] sm:$0xf]
        %v6332 = vld [vmem:[#allocation2 + $0x18] sm:$0xf]
        %v6333 = vld [vmem:[#allocation2 + $0x1c] sm:$0xf]
        %v6334 = vld [vmem:[#allocation2 + $0x24] sm:$0xf]
        %v6335 = vld [vmem:[#allocation2 + $0x28] sm:$0xf]
        %v6336 = vld [vmem:[#allocation2 + $0x30] sm:$0xf]
        %v6337 = vld [vmem:[#allocation2 + $0x34] sm:$0xf]
        %v6338 = vld [vmem:[#allocation2 + $0x3c] sm:$0xf]
        %v6339 = vld [vmem:[#allocation2 + $0x40] sm:$0xf]
        %v6340 = vld [vmem:[#allocation2 + $0x48] sm:$0xf]
        %v6341 = vld [vmem:[#allocation2 + $0x4c] sm:$0xf]
        %v6342 = vld [vmem:[#allocation2 + $0x54] sm:$0xf]
        %v6343 = vld [vmem:[#allocation2 + $0x58] sm:$0xf]
        %v6344 = vld [vmem:[#allocation2 + $0x60] sm:$0xf]
        %v6345 = vld [vmem:[#allocation2 + $0x64] sm:$0xf]
        %v6346 = vld [vmem:[#allocation2 + $0x6c] sm:$0xf]
        %v6347 = vld [vmem:[#allocation2 + $0x70] sm:$0xf]
        %v6348 = vld [vmem:[#allocation2 + $0x78] sm:$0xf]
        %v6349 = vld [vmem:[#allocation2 + $0x7c] sm:$0xf]
        %v6350 = vld [vmem:[#allocation2 + $0x84] sm:$0xf]
        %v6351 = vld [vmem:[#allocation2 + $0x88] sm:$0xf]
        %v6352 = vld [vmem:[#allocation2 + $0x90] sm:$0xf]
        %v6353 = vld [vmem:[#allocation2 + $0x94] sm:$0xf]
        %v6354 = vld [vmem:[#allocation2 + $0x9c] sm:$0xf]
        %v6355 = vld [vmem:[#allocation2 + $0xa0] sm:$0xf]
        %v6356 = vld [vmem:[#allocation2 + $0xa8] sm:$0xf]
        %v6357 = vld [vmem:[#allocation2 + $0xac] sm:$0xf]
        %v6358 = vld [vmem:[#allocation2 + $0xb4] sm:$0xf]
        %v6359 = vld [vmem:[#allocation2 + $0xb8] sm:$0xf]
        %v6360 = vld [vmem:[#allocation2 + $0x8] sm:$0x1]
        %v6361 = vld [vmem:[#allocation2 + $0x14] sm:$0x1]
        %v6362 = vld [vmem:[#allocation2 + $0x20] sm:$0x1]
        %v6363 = vld [vmem:[#allocation2 + $0x2c] sm:$0x1]
        %v6364 = vld [vmem:[#allocation2 + $0x38] sm:$0x1]
        %v6365 = vld [vmem:[#allocation2 + $0x44] sm:$0x1]
        %v6366 = vld [vmem:[#allocation2 + $0x50] sm:$0x1]
        %v6367 = vld [vmem:[#allocation2 + $0x5c] sm:$0x1]
        %v6368 = vld [vmem:[#allocation2 + $0x68] sm:$0x1]
        %v6369 = vld [vmem:[#allocation2 + $0x74] sm:$0x1]
        %v6370 = vld [vmem:[#allocation2 + $0x80] sm:$0x1]
        %v6371 = vld [vmem:[#allocation2 + $0x8c] sm:$0x1]
        %v6372 = vld [vmem:[#allocation2 + $0x98] sm:$0x1]
        %v6373 = vld [vmem:[#allocation2 + $0xa4] sm:$0x1]
        %v6374 = vld [vmem:[#allocation2 + $0xb0] sm:$0x1]
        %v6375 = vld [vmem:[#allocation2 + $0xbc] sm:$0x1]
        %v6376 = vld [vmem:[#allocation2] sm:$0xe]
        %v6377 = vld [vmem:[#allocation2 + $0xc] sm:$0xe]
        %v6378 = vld [vmem:[#allocation2 + $0x18] sm:$0xe]
        %v6379 = vld [vmem:[#allocation2 + $0x24] sm:$0xe]
        %v6380 = vld [vmem:[#allocation2 + $0x30] sm:$0xe]
        %v6381 = vld [vmem:[#allocation2 + $0x3c] sm:$0xe]
        %v6382 = vld [vmem:[#allocation2 + $0x48] sm:$0xe]
        %v6383 = vld [vmem:[#allocation2 + $0x54] sm:$0xe]
        %v6384 = vld [vmem:[#allocation2 + $0x60] sm:$0xe]
        %v6385 = vld [vmem:[#allocation2 + $0x6c] sm:$0xe]
        %v6386 = vld [vmem:[#allocation2 + $0x78] sm:$0xe]
        %v6387 = vld [vmem:[#allocation2 + $0x84] sm:$0xe]
        %v6388 = vld [vmem:[#allocation2 + $0x90] sm:$0xe]
        %v6389 = vld [vmem:[#allocation2 + $0x9c] sm:$0xe]
        %v6390 = vld [vmem:[#allocation2 + $0xa8] sm:$0xe]
        %v6391 = vld [vmem:[#allocation2 + $0xb4] sm:$0xe]
        %s6392 = scalar_lea.vmem [#allocation2], 12
        %v6393 = vld [vmem:[%s6392] sm:$0xf]
        %v6394 = vld [vmem:[%s6392 + $0x4] sm:$0xf]
        %v6395 = vld [vmem:[%s6392 + $0xc] sm:$0xf]
        %v6396 = vld [vmem:[%s6392 + $0x10] sm:$0xf]
        %v6397 = vld [vmem:[%s6392 + $0x18] sm:$0xf]
        %v6398 = vld [vmem:[%s6392 + $0x1c] sm:$0xf]
        %v6399 = vld [vmem:[%s6392 + $0x24] sm:$0xf]
        %v6400 = vld [vmem:[%s6392 + $0x28] sm:$0xf]
        %v6401 = vld [vmem:[%s6392 + $0x30] sm:$0xf]
        %v6402 = vld [vmem:[%s6392 + $0x34] sm:$0xf]
        %v6403 = vld [vmem:[%s6392 + $0x3c] sm:$0xf]
        %v6404 = vld [vmem:[%s6392 + $0x40] sm:$0xf]
        %v6405 = vld [vmem:[%s6392 + $0x48] sm:$0xf]
        %v6406 = vld [vmem:[%s6392 + $0x4c] sm:$0xf]
        %v6407 = vld [vmem:[%s6392 + $0x54] sm:$0xf]
        %v6408 = vld [vmem:[%s6392 + $0x58] sm:$0xf]
        %v6409 = vld [vmem:[%s6392 + $0x60] sm:$0xf]
        %v6410 = vld [vmem:[%s6392 + $0x64] sm:$0xf]
        %v6411 = vld [vmem:[%s6392 + $0x6c] sm:$0xf]
        %v6412 = vld [vmem:[%s6392 + $0x70] sm:$0xf]
        %v6413 = vld [vmem:[%s6392 + $0x78] sm:$0xf]
        %v6414 = vld [vmem:[%s6392 + $0x7c] sm:$0xf]
        %v6415 = vld [vmem:[%s6392 + $0x84] sm:$0xf]
        %v6416 = vld [vmem:[%s6392 + $0x88] sm:$0xf]
        %v6417 = vld [vmem:[%s6392 + $0x90] sm:$0xf]
        %v6418 = vld [vmem:[%s6392 + $0x94] sm:$0xf]
        %v6419 = vld [vmem:[%s6392 + $0x9c] sm:$0xf]
        %v6420 = vld [vmem:[%s6392 + $0xa0] sm:$0xf]
        %v6421 = vld [vmem:[%s6392 + $0xa8] sm:$0xf]
        %v6422 = vld [vmem:[%s6392 + $0xac] sm:$0xf]
        %v6423 = vld [vmem:[%s6392 + $0xb4] sm:$0xf]
        %v6424 = vld [vmem:[%s6392 + $0xb8] sm:$0xf]
        %v6425 = vld [vmem:[%s6392 + $0x8] sm:$0x1]
        %v6426 = vld [vmem:[%s6392 + $0x14] sm:$0x1]
        %v6427 = vld [vmem:[%s6392 + $0x20] sm:$0x1]
        %v6428 = vld [vmem:[%s6392 + $0x2c] sm:$0x1]
        %v6429 = vld [vmem:[%s6392 + $0x38] sm:$0x1]
        %v6430 = vld [vmem:[%s6392 + $0x44] sm:$0x1]
        %v6431 = vld [vmem:[%s6392 + $0x50] sm:$0x1]
        %v6432 = vld [vmem:[%s6392 + $0x5c] sm:$0x1]
        %v6433 = vld [vmem:[%s6392 + $0x68] sm:$0x1]
        %v6434 = vld [vmem:[%s6392 + $0x74] sm:$0x1]
        %v6435 = vld [vmem:[%s6392 + $0x80] sm:$0x1]
        %v6436 = vld [vmem:[%s6392 + $0x8c] sm:$0x1]
        %v6437 = vld [vmem:[%s6392 + $0x98] sm:$0x1]
        %v6438 = vld [vmem:[%s6392 + $0xa4] sm:$0x1]
        %v6439 = vld [vmem:[%s6392 + $0xb0] sm:$0x1]
        %v6440 = vld [vmem:[%s6392 + $0xbc] sm:$0x1]
        %v6441 = vld [vmem:[%s6392] sm:$0xe]
        %v6442 = vld [vmem:[%s6392 + $0xc] sm:$0xe]
        %v6443 = vld [vmem:[%s6392 + $0x18] sm:$0xe]
        %v6444 = vld [vmem:[%s6392 + $0x24] sm:$0xe]
        %v6445 = vld [vmem:[%s6392 + $0x30] sm:$0xe]
        %v6446 = vld [vmem:[%s6392 + $0x3c] sm:$0xe]
        %v6447 = vld [vmem:[%s6392 + $0x48] sm:$0xe]
        %v6448 = vld [vmem:[%s6392 + $0x54] sm:$0xe]
        %v6449 = vld [vmem:[%s6392 + $0x60] sm:$0xe]
        %v6450 = vld [vmem:[%s6392 + $0x6c] sm:$0xe]
        %v6451 = vld [vmem:[%s6392 + $0x78] sm:$0xe]
        %v6452 = vld [vmem:[%s6392 + $0x84] sm:$0xe]
        %v6453 = vld [vmem:[%s6392 + $0x90] sm:$0xe]
        %v6454 = vld [vmem:[%s6392 + $0x9c] sm:$0xe]
        %v6455 = vld [vmem:[%s6392 + $0xa8] sm:$0xe]
        %v6456 = vld [vmem:[%s6392 + $0xb4] sm:$0xe]
        %s6457 = scalar_lea.vmem [#allocation2], 24
        %v6458 = vld [vmem:[%s6457] sm:$0xf]
        %v6459 = vld [vmem:[%s6457 + $0x4] sm:$0xf]
        %v6460 = vld [vmem:[%s6457 + $0xc] sm:$0xf]
        %v6461 = vld [vmem:[%s6457 + $0x10] sm:$0xf]
        %v6462 = vld [vmem:[%s6457 + $0x18] sm:$0xf]
        %v6463 = vld [vmem:[%s6457 + $0x1c] sm:$0xf]
        %v6464 = vld [vmem:[%s6457 + $0x24] sm:$0xf]
        %v6465 = vld [vmem:[%s6457 + $0x28] sm:$0xf]
        %v6466 = vld [vmem:[%s6457 + $0x30] sm:$0xf]
        %v6467 = vld [vmem:[%s6457 + $0x34] sm:$0xf]
        %v6468 = vld [vmem:[%s6457 + $0x3c] sm:$0xf]
        %v6469 = vld [vmem:[%s6457 + $0x40] sm:$0xf]
        %v6470 = vld [vmem:[%s6457 + $0x48] sm:$0xf]
        %v6471 = vld [vmem:[%s6457 + $0x4c] sm:$0xf]
        %v6472 = vld [vmem:[%s6457 + $0x54] sm:$0xf]
        %v6473 = vld [vmem:[%s6457 + $0x58] sm:$0xf]
        %v6474 = vld [vmem:[%s6457 + $0x60] sm:$0xf]
        %v6475 = vld [vmem:[%s6457 + $0x64] sm:$0xf]
        %v6476 = vld [vmem:[%s6457 + $0x6c] sm:$0xf]
        %v6477 = vld [vmem:[%s6457 + $0x70] sm:$0xf]
        %v6478 = vld [vmem:[%s6457 + $0x78] sm:$0xf]
        %v6479 = vld [vmem:[%s6457 + $0x7c] sm:$0xf]
        %v6480 = vld [vmem:[%s6457 + $0x84] sm:$0xf]
        %v6481 = vld [vmem:[%s6457 + $0x88] sm:$0xf]
        %v6482 = vld [vmem:[%s6457 + $0x90] sm:$0xf]
        %v6483 = vld [vmem:[%s6457 + $0x94] sm:$0xf]
        %v6484 = vld [vmem:[%s6457 + $0x9c] sm:$0xf]
        %v6485 = vld [vmem:[%s6457 + $0xa0] sm:$0xf]
        %v6486 = vld [vmem:[%s6457 + $0xa8] sm:$0xf]
        %v6487 = vld [vmem:[%s6457 + $0xac] sm:$0xf]
        %v6488 = vld [vmem:[%s6457 + $0xb4] sm:$0xf]
        %v6489 = vld [vmem:[%s6457 + $0xb8] sm:$0xf]
        %v6490 = vld [vmem:[%s6457 + $0x8] sm:$0x1]
        %v6491 = vld [vmem:[%s6457 + $0x14] sm:$0x1]
        %v6492 = vld [vmem:[%s6457 + $0x20] sm:$0x1]
        %v6493 = vld [vmem:[%s6457 + $0x2c] sm:$0x1]
        %v6494 = vld [vmem:[%s6457 + $0x38] sm:$0x1]
        %v6495 = vld [vmem:[%s6457 + $0x44] sm:$0x1]
        %v6496 = vld [vmem:[%s6457 + $0x50] sm:$0x1]
        %v6497 = vld [vmem:[%s6457 + $0x5c] sm:$0x1]
        %v6498 = vld [vmem:[%s6457 + $0x68] sm:$0x1]
        %v6499 = vld [vmem:[%s6457 + $0x74] sm:$0x1]
        %v6500 = vld [vmem:[%s6457 + $0x80] sm:$0x1]
        %v6501 = vld [vmem:[%s6457 + $0x8c] sm:$0x1]
        %v6502 = vld [vmem:[%s6457 + $0x98] sm:$0x1]
        %v6503 = vld [vmem:[%s6457 + $0xa4] sm:$0x1]
        %v6504 = vld [vmem:[%s6457 + $0xb0] sm:$0x1]
        %v6505 = vld [vmem:[%s6457 + $0xbc] sm:$0x1]
        %v6506 = vld [vmem:[%s6457] sm:$0xe]
        %v6507 = vld [vmem:[%s6457 + $0xc] sm:$0xe]
        %v6508 = vld [vmem:[%s6457 + $0x18] sm:$0xe]
        %v6509 = vld [vmem:[%s6457 + $0x24] sm:$0xe]
        %v6510 = vld [vmem:[%s6457 + $0x30] sm:$0xe]
        %v6511 = vld [vmem:[%s6457 + $0x3c] sm:$0xe]
        %v6512 = vld [vmem:[%s6457 + $0x48] sm:$0xe]
        %v6513 = vld [vmem:[%s6457 + $0x54] sm:$0xe]
        %v6514 = vld [vmem:[%s6457 + $0x60] sm:$0xe]
        %v6515 = vld [vmem:[%s6457 + $0x6c] sm:$0xe]
        %v6516 = vld [vmem:[%s6457 + $0x78] sm:$0xe]
        %v6517 = vld [vmem:[%s6457 + $0x84] sm:$0xe]
        %v6518 = vld [vmem:[%s6457 + $0x90] sm:$0xe]
        %v6519 = vld [vmem:[%s6457 + $0x9c] sm:$0xe]
        %v6520 = vld [vmem:[%s6457 + $0xa8] sm:$0xe]
        %v6521 = vld [vmem:[%s6457 + $0xb4] sm:$0xe]
        %v6554 = vunpack.c.l.b16 %v6328
        %v6555 = vunpack.c.l.b16 %v6329
        %v6556 = vunpack.c.l.b16 %v6330
        %v6557 = vunpack.c.l.b16 %v6331
        %v6558 = vunpack.c.l.b16 %v6332
        %v6559 = vunpack.c.l.b16 %v6333
        %v6560 = vunpack.c.l.b16 %v6334
        %v6561 = vunpack.c.l.b16 %v6335
        %v6562 = vunpack.c.l.b16 %v6336
        %v6563 = vunpack.c.l.b16 %v6337
        %v6564 = vunpack.c.l.b16 %v6338
        %v6565 = vunpack.c.l.b16 %v6339
        %v6566 = vunpack.c.l.b16 %v6340
        %v6567 = vunpack.c.l.b16 %v6341
        %v6568 = vunpack.c.l.b16 %v6342
        %v6569 = vunpack.c.l.b16 %v6343
        %v6570 = vunpack.c.l.b16 %v6344
        %v6571 = vunpack.c.l.b16 %v6345
        %v6572 = vunpack.c.l.b16 %v6346
        %v6573 = vunpack.c.l.b16 %v6347
        %v6574 = vunpack.c.l.b16 %v6348
        %v6575 = vunpack.c.l.b16 %v6349
        %v6576 = vunpack.c.l.b16 %v6350
        %v6577 = vunpack.c.l.b16 %v6351
        %v6578 = vunpack.c.l.b16 %v6352
        %v6579 = vunpack.c.l.b16 %v6353
        %v6580 = vunpack.c.l.b16 %v6354
        %v6581 = vunpack.c.l.b16 %v6355
        %v6582 = vunpack.c.l.b16 %v6356
        %v6583 = vunpack.c.l.b16 %v6357
        %v6584 = vunpack.c.l.b16 %v6358
        %v6585 = vunpack.c.l.b16 %v6359
        %v6586 = vpack.c.b16 %v6555, %v6554
        %v6587 = vpack.c.b16 %v6557, %v6556
        %v6588 = vpack.c.b16 %v6559, %v6558
        %v6589 = vpack.c.b16 %v6561, %v6560
        %v6590 = vpack.c.b16 %v6563, %v6562
        %v6591 = vpack.c.b16 %v6565, %v6564
        %v6592 = vpack.c.b16 %v6567, %v6566
        %v6593 = vpack.c.b16 %v6569, %v6568
        %v6594 = vpack.c.b16 %v6571, %v6570
        %v6595 = vpack.c.b16 %v6573, %v6572
        %v6596 = vpack.c.b16 %v6575, %v6574
        %v6597 = vpack.c.b16 %v6577, %v6576
        %v6598 = vpack.c.b16 %v6579, %v6578
        %v6599 = vpack.c.b16 %v6581, %v6580
        %v6600 = vpack.c.b16 %v6583, %v6582
        %v6601 = vpack.c.b16 %v6585, %v6584
        %v6634 = vunpack.c.l.b16 %v6360
        %v6635 = vunpack.c.l.b16 %v6361
        %v6636 = vunpack.c.l.b16 %v6362
        %v6637 = vunpack.c.l.b16 %v6363
        %v6638 = vunpack.c.l.b16 %v6364
        %v6639 = vunpack.c.l.b16 %v6365
        %v6640 = vunpack.c.l.b16 %v6366
        %v6641 = vunpack.c.l.b16 %v6367
        %v6642 = vunpack.c.l.b16 %v6368
        %v6643 = vunpack.c.l.b16 %v6369
        %v6644 = vunpack.c.l.b16 %v6370
        %v6645 = vunpack.c.l.b16 %v6371
        %v6646 = vunpack.c.l.b16 %v6372
        %v6647 = vunpack.c.l.b16 %v6373
        %v6648 = vunpack.c.l.b16 %v6374
        %v6649 = vunpack.c.l.b16 %v6375
        %v6650 = vpack.c.b16 %v6634, %v6634
        %v6651 = vpack.c.b16 %v6635, %v6635
        %v6652 = vpack.c.b16 %v6636, %v6636
        %v6653 = vpack.c.b16 %v6637, %v6637
        %v6654 = vpack.c.b16 %v6638, %v6638
        %v6655 = vpack.c.b16 %v6639, %v6639
        %v6656 = vpack.c.b16 %v6640, %v6640
        %v6657 = vpack.c.b16 %v6641, %v6641
        %v6658 = vpack.c.b16 %v6642, %v6642
        %v6659 = vpack.c.b16 %v6643, %v6643
        %v6660 = vpack.c.b16 %v6644, %v6644
        %v6661 = vpack.c.b16 %v6645, %v6645
        %v6662 = vpack.c.b16 %v6646, %v6646
        %v6663 = vpack.c.b16 %v6647, %v6647
        %v6664 = vpack.c.b16 %v6648, %v6648
        %v6665 = vpack.c.b16 %v6649, %v6649
        %v6667 = vshrl.u32 %v6586, 16
        %v6669 = vshll.u32 %v6586, 16
        %v6671 = vrot.slane %v6669, 1
        %v6672 = vor.u32 %v6667, %v6671
        %v6674 = vshll.u32 %v6650, 16
        %v6676 = vrot.slane %v6674, 1
        %v6677 = vsel %vm734, %v6672, %v6676
        %v6679 = vshrl.u32 %v6587, 16
        %v6681 = vshll.u32 %v6587, 16
        %v6683 = vrot.slane %v6681, 1
        %v6684 = vor.u32 %v6679, %v6683
        %v6686 = vshll.u32 %v6651, 16
        %v6688 = vrot.slane %v6686, 1
        %v6689 = vsel %vm734, %v6684, %v6688
        %v6691 = vshrl.u32 %v6588, 16
        %v6693 = vshll.u32 %v6588, 16
        %v6695 = vrot.slane %v6693, 1
        %v6696 = vor.u32 %v6691, %v6695
        %v6698 = vshll.u32 %v6652, 16
        %v6700 = vrot.slane %v6698, 1
        %v6701 = vsel %vm734, %v6696, %v6700
        %v6703 = vshrl.u32 %v6589, 16
        %v6705 = vshll.u32 %v6589, 16
        %v6707 = vrot.slane %v6705, 1
        %v6708 = vor.u32 %v6703, %v6707
        %v6710 = vshll.u32 %v6653, 16
        %v6712 = vrot.slane %v6710, 1
        %v6713 = vsel %vm734, %v6708, %v6712
        %v6715 = vshrl.u32 %v6590, 16
        %v6717 = vshll.u32 %v6590, 16
        %v6719 = vrot.slane %v6717, 1
        %v6720 = vor.u32 %v6715, %v6719
        %v6722 = vshll.u32 %v6654, 16
        %v6724 = vrot.slane %v6722, 1
        %v6725 = vsel %vm734, %v6720, %v6724
        %v6727 = vshrl.u32 %v6591, 16
        %v6729 = vshll.u32 %v6591, 16
        %v6731 = vrot.slane %v6729, 1
        %v6732 = vor.u32 %v6727, %v6731
        %v6734 = vshll.u32 %v6655, 16
        %v6736 = vrot.slane %v6734, 1
        %v6737 = vsel %vm734, %v6732, %v6736
        %v6739 = vshrl.u32 %v6592, 16
        %v6741 = vshll.u32 %v6592, 16
        %v6743 = vrot.slane %v6741, 1
        %v6744 = vor.u32 %v6739, %v6743
        %v6746 = vshll.u32 %v6656, 16
        %v6748 = vrot.slane %v6746, 1
        %v6749 = vsel %vm734, %v6744, %v6748
        %v6751 = vshrl.u32 %v6593, 16
        %v6753 = vshll.u32 %v6593, 16
        %v6755 = vrot.slane %v6753, 1
        %v6756 = vor.u32 %v6751, %v6755
        %v6758 = vshll.u32 %v6657, 16
        %v6760 = vrot.slane %v6758, 1
        %v6761 = vsel %vm734, %v6756, %v6760
        %v6763 = vshrl.u32 %v6594, 16
        %v6765 = vshll.u32 %v6594, 16
        %v6767 = vrot.slane %v6765, 1
        %v6768 = vor.u32 %v6763, %v6767
        %v6770 = vshll.u32 %v6658, 16
        %v6772 = vrot.slane %v6770, 1
        %v6773 = vsel %vm734, %v6768, %v6772
        %v6775 = vshrl.u32 %v6595, 16
        %v6777 = vshll.u32 %v6595, 16
        %v6779 = vrot.slane %v6777, 1
        %v6780 = vor.u32 %v6775, %v6779
        %v6782 = vshll.u32 %v6659, 16
        %v6784 = vrot.slane %v6782, 1
        %v6785 = vsel %vm734, %v6780, %v6784
        %v6787 = vshrl.u32 %v6596, 16
        %v6789 = vshll.u32 %v6596, 16
        %v6791 = vrot.slane %v6789, 1
        %v6792 = vor.u32 %v6787, %v6791
        %v6794 = vshll.u32 %v6660, 16
        %v6796 = vrot.slane %v6794, 1
        %v6797 = vsel %vm734, %v6792, %v6796
        %v6799 = vshrl.u32 %v6597, 16
        %v6801 = vshll.u32 %v6597, 16
        %v6803 = vrot.slane %v6801, 1
        %v6804 = vor.u32 %v6799, %v6803
        %v6806 = vshll.u32 %v6661, 16
        %v6808 = vrot.slane %v6806, 1
        %v6809 = vsel %vm734, %v6804, %v6808
        %v6811 = vshrl.u32 %v6598, 16
        %v6813 = vshll.u32 %v6598, 16
        %v6815 = vrot.slane %v6813, 1
        %v6816 = vor.u32 %v6811, %v6815
        %v6818 = vshll.u32 %v6662, 16
        %v6820 = vrot.slane %v6818, 1
        %v6821 = vsel %vm734, %v6816, %v6820
        %v6823 = vshrl.u32 %v6599, 16
        %v6825 = vshll.u32 %v6599, 16
        %v6827 = vrot.slane %v6825, 1
        %v6828 = vor.u32 %v6823, %v6827
        %v6830 = vshll.u32 %v6663, 16
        %v6832 = vrot.slane %v6830, 1
        %v6833 = vsel %vm734, %v6828, %v6832
        %v6835 = vshrl.u32 %v6600, 16
        %v6837 = vshll.u32 %v6600, 16
        %v6839 = vrot.slane %v6837, 1
        %v6840 = vor.u32 %v6835, %v6839
        %v6842 = vshll.u32 %v6664, 16
        %v6844 = vrot.slane %v6842, 1
        %v6845 = vsel %vm734, %v6840, %v6844
        %v6847 = vshrl.u32 %v6601, 16
        %v6849 = vshll.u32 %v6601, 16
        %v6851 = vrot.slane %v6849, 1
        %v6852 = vor.u32 %v6847, %v6851
        %v6854 = vshll.u32 %v6665, 16
        %v6856 = vrot.slane %v6854, 1
        %v6857 = vsel %vm734, %v6852, %v6856
        %v6890 = vunpack.c.l.b16 %v6376
        %v6891 = vunpack.c.l.b16 %v6377
        %v6892 = vunpack.c.l.b16 %v6378
        %v6893 = vunpack.c.l.b16 %v6379
        %v6894 = vunpack.c.l.b16 %v6380
        %v6895 = vunpack.c.l.b16 %v6381
        %v6896 = vunpack.c.l.b16 %v6382
        %v6897 = vunpack.c.l.b16 %v6383
        %v6898 = vunpack.c.l.b16 %v6384
        %v6899 = vunpack.c.l.b16 %v6385
        %v6900 = vunpack.c.l.b16 %v6386
        %v6901 = vunpack.c.l.b16 %v6387
        %v6902 = vunpack.c.l.b16 %v6388
        %v6903 = vunpack.c.l.b16 %v6389
        %v6904 = vunpack.c.l.b16 %v6390
        %v6905 = vunpack.c.l.b16 %v6391
        %v6906 = vpack.c.b16 %v6555, %v6890
        %v6907 = vpack.c.b16 %v6557, %v6891
        %v6908 = vpack.c.b16 %v6559, %v6892
        %v6909 = vpack.c.b16 %v6561, %v6893
        %v6910 = vpack.c.b16 %v6563, %v6894
        %v6911 = vpack.c.b16 %v6565, %v6895
        %v6912 = vpack.c.b16 %v6567, %v6896
        %v6913 = vpack.c.b16 %v6569, %v6897
        %v6914 = vpack.c.b16 %v6571, %v6898
        %v6915 = vpack.c.b16 %v6573, %v6899
        %v6916 = vpack.c.b16 %v6575, %v6900
        %v6917 = vpack.c.b16 %v6577, %v6901
        %v6918 = vpack.c.b16 %v6579, %v6902
        %v6919 = vpack.c.b16 %v6581, %v6903
        %v6920 = vpack.c.b16 %v6583, %v6904
        %v6921 = vpack.c.b16 %v6585, %v6905
        %v6922 = vrot.slane %v6906, 1
        %v6923 = vrot.slane %v6650, 1
        %v6924 = vsel %vm1041, %v6922, %v6923
        %v6925 = vrot.slane %v6907, 1
        %v6926 = vrot.slane %v6651, 1
        %v6927 = vsel %vm1041, %v6925, %v6926
        %v6928 = vrot.slane %v6908, 1
        %v6929 = vrot.slane %v6652, 1
        %v6930 = vsel %vm1041, %v6928, %v6929
        %v6931 = vrot.slane %v6909, 1
        %v6932 = vrot.slane %v6653, 1
        %v6933 = vsel %vm1041, %v6931, %v6932
        %v6934 = vrot.slane %v6910, 1
        %v6935 = vrot.slane %v6654, 1
        %v6936 = vsel %vm1041, %v6934, %v6935
        %v6937 = vrot.slane %v6911, 1
        %v6938 = vrot.slane %v6655, 1
        %v6939 = vsel %vm1041, %v6937, %v6938
        %v6940 = vrot.slane %v6912, 1
        %v6941 = vrot.slane %v6656, 1
        %v6942 = vsel %vm1041, %v6940, %v6941
        %v6943 = vrot.slane %v6913, 1
        %v6944 = vrot.slane %v6657, 1
        %v6945 = vsel %vm1041, %v6943, %v6944
        %v6946 = vrot.slane %v6914, 1
        %v6947 = vrot.slane %v6658, 1
        %v6948 = vsel %vm1041, %v6946, %v6947
        %v6949 = vrot.slane %v6915, 1
        %v6950 = vrot.slane %v6659, 1
        %v6951 = vsel %vm1041, %v6949, %v6950
        %v6952 = vrot.slane %v6916, 1
        %v6953 = vrot.slane %v6660, 1
        %v6954 = vsel %vm1041, %v6952, %v6953
        %v6955 = vrot.slane %v6917, 1
        %v6956 = vrot.slane %v6661, 1
        %v6957 = vsel %vm1041, %v6955, %v6956
        %v6958 = vrot.slane %v6918, 1
        %v6959 = vrot.slane %v6662, 1
        %v6960 = vsel %vm1041, %v6958, %v6959
        %v6961 = vrot.slane %v6919, 1
        %v6962 = vrot.slane %v6663, 1
        %v6963 = vsel %vm1041, %v6961, %v6962
        %v6964 = vrot.slane %v6920, 1
        %v6965 = vrot.slane %v6664, 1
        %v6966 = vsel %vm1041, %v6964, %v6965
        %v6967 = vrot.slane %v6921, 1
        %v6968 = vrot.slane %v6665, 1
        %v6969 = vsel %vm1041, %v6967, %v6968
        %v7018 = vunpack.c.l.b16 %v6393
        %v7019 = vunpack.c.l.b16 %v6394
        %v7020 = vunpack.c.l.b16 %v6395
        %v7021 = vunpack.c.l.b16 %v6396
        %v7022 = vunpack.c.l.b16 %v6397
        %v7023 = vunpack.c.l.b16 %v6398
        %v7024 = vunpack.c.l.b16 %v6399
        %v7025 = vunpack.c.l.b16 %v6400
        %v7026 = vunpack.c.l.b16 %v6401
        %v7027 = vunpack.c.l.b16 %v6402
        %v7028 = vunpack.c.l.b16 %v6403
        %v7029 = vunpack.c.l.b16 %v6404
        %v7030 = vunpack.c.l.b16 %v6405
        %v7031 = vunpack.c.l.b16 %v6406
        %v7032 = vunpack.c.l.b16 %v6407
        %v7033 = vunpack.c.l.b16 %v6408
        %v7034 = vunpack.c.l.b16 %v6409
        %v7035 = vunpack.c.l.b16 %v6410
        %v7036 = vunpack.c.l.b16 %v6411
        %v7037 = vunpack.c.l.b16 %v6412
        %v7038 = vunpack.c.l.b16 %v6413
        %v7039 = vunpack.c.l.b16 %v6414
        %v7040 = vunpack.c.l.b16 %v6415
        %v7041 = vunpack.c.l.b16 %v6416
        %v7042 = vunpack.c.l.b16 %v6417
        %v7043 = vunpack.c.l.b16 %v6418
        %v7044 = vunpack.c.l.b16 %v6419
        %v7045 = vunpack.c.l.b16 %v6420
        %v7046 = vunpack.c.l.b16 %v6421
        %v7047 = vunpack.c.l.b16 %v6422
        %v7048 = vunpack.c.l.b16 %v6423
        %v7049 = vunpack.c.l.b16 %v6424
        %v7050 = vpack.c.b16 %v7019, %v7018
        %v7051 = vpack.c.b16 %v7021, %v7020
        %v7052 = vpack.c.b16 %v7023, %v7022
        %v7053 = vpack.c.b16 %v7025, %v7024
        %v7054 = vpack.c.b16 %v7027, %v7026
        %v7055 = vpack.c.b16 %v7029, %v7028
        %v7056 = vpack.c.b16 %v7031, %v7030
        %v7057 = vpack.c.b16 %v7033, %v7032
        %v7058 = vpack.c.b16 %v7035, %v7034
        %v7059 = vpack.c.b16 %v7037, %v7036
        %v7060 = vpack.c.b16 %v7039, %v7038
        %v7061 = vpack.c.b16 %v7041, %v7040
        %v7062 = vpack.c.b16 %v7043, %v7042
        %v7063 = vpack.c.b16 %v7045, %v7044
        %v7064 = vpack.c.b16 %v7047, %v7046
        %v7065 = vpack.c.b16 %v7049, %v7048
        %v7098 = vunpack.c.l.b16 %v6425
        %v7099 = vunpack.c.l.b16 %v6426
        %v7100 = vunpack.c.l.b16 %v6427
        %v7101 = vunpack.c.l.b16 %v6428
        %v7102 = vunpack.c.l.b16 %v6429
        %v7103 = vunpack.c.l.b16 %v6430
        %v7104 = vunpack.c.l.b16 %v6431
        %v7105 = vunpack.c.l.b16 %v6432
        %v7106 = vunpack.c.l.b16 %v6433
        %v7107 = vunpack.c.l.b16 %v6434
        %v7108 = vunpack.c.l.b16 %v6435
        %v7109 = vunpack.c.l.b16 %v6436
        %v7110 = vunpack.c.l.b16 %v6437
        %v7111 = vunpack.c.l.b16 %v6438
        %v7112 = vunpack.c.l.b16 %v6439
        %v7113 = vunpack.c.l.b16 %v6440
        %v7114 = vpack.c.b16 %v7098, %v7098
        %v7115 = vpack.c.b16 %v7099, %v7099
        %v7116 = vpack.c.b16 %v7100, %v7100
        %v7117 = vpack.c.b16 %v7101, %v7101
        %v7118 = vpack.c.b16 %v7102, %v7102
        %v7119 = vpack.c.b16 %v7103, %v7103
        %v7120 = vpack.c.b16 %v7104, %v7104
        %v7121 = vpack.c.b16 %v7105, %v7105
        %v7122 = vpack.c.b16 %v7106, %v7106
        %v7123 = vpack.c.b16 %v7107, %v7107
        %v7124 = vpack.c.b16 %v7108, %v7108
        %v7125 = vpack.c.b16 %v7109, %v7109
        %v7126 = vpack.c.b16 %v7110, %v7110
        %v7127 = vpack.c.b16 %v7111, %v7111
        %v7128 = vpack.c.b16 %v7112, %v7112
        %v7129 = vpack.c.b16 %v7113, %v7113
        %v7131 = vshrl.u32 %v7050, 16
        %v7133 = vshll.u32 %v7050, 16
        %v7135 = vrot.slane %v7133, 1
        %v7136 = vor.u32 %v7131, %v7135
        %v7138 = vshll.u32 %v7114, 16
        %v7140 = vrot.slane %v7138, 1
        %v7141 = vsel %vm734, %v7136, %v7140
        %v7143 = vshrl.u32 %v7051, 16
        %v7145 = vshll.u32 %v7051, 16
        %v7147 = vrot.slane %v7145, 1
        %v7148 = vor.u32 %v7143, %v7147
        %v7150 = vshll.u32 %v7115, 16
        %v7152 = vrot.slane %v7150, 1
        %v7153 = vsel %vm734, %v7148, %v7152
        %v7155 = vshrl.u32 %v7052, 16
        %v7157 = vshll.u32 %v7052, 16
        %v7159 = vrot.slane %v7157, 1
        %v7160 = vor.u32 %v7155, %v7159
        %v7162 = vshll.u32 %v7116, 16
        %v7164 = vrot.slane %v7162, 1
        %v7165 = vsel %vm734, %v7160, %v7164
        %v7167 = vshrl.u32 %v7053, 16
        %v7169 = vshll.u32 %v7053, 16
        %v7171 = vrot.slane %v7169, 1
        %v7172 = vor.u32 %v7167, %v7171
        %v7174 = vshll.u32 %v7117, 16
        %v7176 = vrot.slane %v7174, 1
        %v7177 = vsel %vm734, %v7172, %v7176
        %v7179 = vshrl.u32 %v7054, 16
        %v7181 = vshll.u32 %v7054, 16
        %v7183 = vrot.slane %v7181, 1
        %v7184 = vor.u32 %v7179, %v7183
        %v7186 = vshll.u32 %v7118, 16
        %v7188 = vrot.slane %v7186, 1
        %v7189 = vsel %vm734, %v7184, %v7188
        %v7191 = vshrl.u32 %v7055, 16
        %v7193 = vshll.u32 %v7055, 16
        %v7195 = vrot.slane %v7193, 1
        %v7196 = vor.u32 %v7191, %v7195
        %v7198 = vshll.u32 %v7119, 16
        %v7200 = vrot.slane %v7198, 1
        %v7201 = vsel %vm734, %v7196, %v7200
        %v7203 = vshrl.u32 %v7056, 16
        %v7205 = vshll.u32 %v7056, 16
        %v7207 = vrot.slane %v7205, 1
        %v7208 = vor.u32 %v7203, %v7207
        %v7210 = vshll.u32 %v7120, 16
        %v7212 = vrot.slane %v7210, 1
        %v7213 = vsel %vm734, %v7208, %v7212
        %v7215 = vshrl.u32 %v7057, 16
        %v7217 = vshll.u32 %v7057, 16
        %v7219 = vrot.slane %v7217, 1
        %v7220 = vor.u32 %v7215, %v7219
        %v7222 = vshll.u32 %v7121, 16
        %v7224 = vrot.slane %v7222, 1
        %v7225 = vsel %vm734, %v7220, %v7224
        %v7227 = vshrl.u32 %v7058, 16
        %v7229 = vshll.u32 %v7058, 16
        %v7231 = vrot.slane %v7229, 1
        %v7232 = vor.u32 %v7227, %v7231
        %v7234 = vshll.u32 %v7122, 16
        %v7236 = vrot.slane %v7234, 1
        %v7237 = vsel %vm734, %v7232, %v7236
        %v7239 = vshrl.u32 %v7059, 16
        %v7241 = vshll.u32 %v7059, 16
        %v7243 = vrot.slane %v7241, 1
        %v7244 = vor.u32 %v7239, %v7243
        %v7246 = vshll.u32 %v7123, 16
        %v7248 = vrot.slane %v7246, 1
        %v7249 = vsel %vm734, %v7244, %v7248
        %v7251 = vshrl.u32 %v7060, 16
        %v7253 = vshll.u32 %v7060, 16
        %v7255 = vrot.slane %v7253, 1
        %v7256 = vor.u32 %v7251, %v7255
        %v7258 = vshll.u32 %v7124, 16
        %v7260 = vrot.slane %v7258, 1
        %v7261 = vsel %vm734, %v7256, %v7260
        %v7263 = vshrl.u32 %v7061, 16
        %v7265 = vshll.u32 %v7061, 16
        %v7267 = vrot.slane %v7265, 1
        %v7268 = vor.u32 %v7263, %v7267
        %v7270 = vshll.u32 %v7125, 16
        %v7272 = vrot.slane %v7270, 1
        %v7273 = vsel %vm734, %v7268, %v7272
        %v7275 = vshrl.u32 %v7062, 16
        %v7277 = vshll.u32 %v7062, 16
        %v7279 = vrot.slane %v7277, 1
        %v7280 = vor.u32 %v7275, %v7279
        %v7282 = vshll.u32 %v7126, 16
        %v7284 = vrot.slane %v7282, 1
        %v7285 = vsel %vm734, %v7280, %v7284
        %v7287 = vshrl.u32 %v7063, 16
        %v7289 = vshll.u32 %v7063, 16
        %v7291 = vrot.slane %v7289, 1
        %v7292 = vor.u32 %v7287, %v7291
        %v7294 = vshll.u32 %v7127, 16
        %v7296 = vrot.slane %v7294, 1
        %v7297 = vsel %vm734, %v7292, %v7296
        %v7299 = vshrl.u32 %v7064, 16
        %v7301 = vshll.u32 %v7064, 16
        %v7303 = vrot.slane %v7301, 1
        %v7304 = vor.u32 %v7299, %v7303
        %v7306 = vshll.u32 %v7128, 16
        %v7308 = vrot.slane %v7306, 1
        %v7309 = vsel %vm734, %v7304, %v7308
        %v7311 = vshrl.u32 %v7065, 16
        %v7313 = vshll.u32 %v7065, 16
        %v7315 = vrot.slane %v7313, 1
        %v7316 = vor.u32 %v7311, %v7315
        %v7318 = vshll.u32 %v7129, 16
        %v7320 = vrot.slane %v7318, 1
        %v7321 = vsel %vm734, %v7316, %v7320
        %v7354 = vunpack.c.l.b16 %v6441
        %v7355 = vunpack.c.l.b16 %v6442
        %v7356 = vunpack.c.l.b16 %v6443
        %v7357 = vunpack.c.l.b16 %v6444
        %v7358 = vunpack.c.l.b16 %v6445
        %v7359 = vunpack.c.l.b16 %v6446
        %v7360 = vunpack.c.l.b16 %v6447
        %v7361 = vunpack.c.l.b16 %v6448
        %v7362 = vunpack.c.l.b16 %v6449
        %v7363 = vunpack.c.l.b16 %v6450
        %v7364 = vunpack.c.l.b16 %v6451
        %v7365 = vunpack.c.l.b16 %v6452
        %v7366 = vunpack.c.l.b16 %v6453
        %v7367 = vunpack.c.l.b16 %v6454
        %v7368 = vunpack.c.l.b16 %v6455
        %v7369 = vunpack.c.l.b16 %v6456
        %v7370 = vpack.c.b16 %v7019, %v7354
        %v7371 = vpack.c.b16 %v7021, %v7355
        %v7372 = vpack.c.b16 %v7023, %v7356
        %v7373 = vpack.c.b16 %v7025, %v7357
        %v7374 = vpack.c.b16 %v7027, %v7358
        %v7375 = vpack.c.b16 %v7029, %v7359
        %v7376 = vpack.c.b16 %v7031, %v7360
        %v7377 = vpack.c.b16 %v7033, %v7361
        %v7378 = vpack.c.b16 %v7035, %v7362
        %v7379 = vpack.c.b16 %v7037, %v7363
        %v7380 = vpack.c.b16 %v7039, %v7364
        %v7381 = vpack.c.b16 %v7041, %v7365
        %v7382 = vpack.c.b16 %v7043, %v7366
        %v7383 = vpack.c.b16 %v7045, %v7367
        %v7384 = vpack.c.b16 %v7047, %v7368
        %v7385 = vpack.c.b16 %v7049, %v7369
        %v7386 = vrot.slane %v7370, 1
        %v7387 = vrot.slane %v7114, 1
        %v7388 = vsel %vm1041, %v7386, %v7387
        %v7389 = vrot.slane %v7371, 1
        %v7390 = vrot.slane %v7115, 1
        %v7391 = vsel %vm1041, %v7389, %v7390
        %v7392 = vrot.slane %v7372, 1
        %v7393 = vrot.slane %v7116, 1
        %v7394 = vsel %vm1041, %v7392, %v7393
        %v7395 = vrot.slane %v7373, 1
        %v7396 = vrot.slane %v7117, 1
        %v7397 = vsel %vm1041, %v7395, %v7396
        %v7398 = vrot.slane %v7374, 1
        %v7399 = vrot.slane %v7118, 1
        %v7400 = vsel %vm1041, %v7398, %v7399
        %v7401 = vrot.slane %v7375, 1
        %v7402 = vrot.slane %v7119, 1
        %v7403 = vsel %vm1041, %v7401, %v7402
        %v7404 = vrot.slane %v7376, 1
        %v7405 = vrot.slane %v7120, 1
        %v7406 = vsel %vm1041, %v7404, %v7405
        %v7407 = vrot.slane %v7377, 1
        %v7408 = vrot.slane %v7121, 1
        %v7409 = vsel %vm1041, %v7407, %v7408
        %v7410 = vrot.slane %v7378, 1
        %v7411 = vrot.slane %v7122, 1
        %v7412 = vsel %vm1041, %v7410, %v7411
        %v7413 = vrot.slane %v7379, 1
        %v7414 = vrot.slane %v7123, 1
        %v7415 = vsel %vm1041, %v7413, %v7414
        %v7416 = vrot.slane %v7380, 1
        %v7417 = vrot.slane %v7124, 1
        %v7418 = vsel %vm1041, %v7416, %v7417
        %v7419 = vrot.slane %v7381, 1
        %v7420 = vrot.slane %v7125, 1
        %v7421 = vsel %vm1041, %v7419, %v7420
        %v7422 = vrot.slane %v7382, 1
        %v7423 = vrot.slane %v7126, 1
        %v7424 = vsel %vm1041, %v7422, %v7423
        %v7425 = vrot.slane %v7383, 1
        %v7426 = vrot.slane %v7127, 1
        %v7427 = vsel %vm1041, %v7425, %v7426
        %v7428 = vrot.slane %v7384, 1
        %v7429 = vrot.slane %v7128, 1
        %v7430 = vsel %vm1041, %v7428, %v7429
        %v7431 = vrot.slane %v7385, 1
        %v7432 = vrot.slane %v7129, 1
        %v7433 = vsel %vm1041, %v7431, %v7432
        %v7482 = vunpack.c.l.b16 %v6458
        %v7483 = vunpack.c.l.b16 %v6459
        %v7484 = vunpack.c.l.b16 %v6460
        %v7485 = vunpack.c.l.b16 %v6461
        %v7486 = vunpack.c.l.b16 %v6462
        %v7487 = vunpack.c.l.b16 %v6463
        %v7488 = vunpack.c.l.b16 %v6464
        %v7489 = vunpack.c.l.b16 %v6465
        %v7490 = vunpack.c.l.b16 %v6466
        %v7491 = vunpack.c.l.b16 %v6467
        %v7492 = vunpack.c.l.b16 %v6468
        %v7493 = vunpack.c.l.b16 %v6469
        %v7494 = vunpack.c.l.b16 %v6470
        %v7495 = vunpack.c.l.b16 %v6471
        %v7496 = vunpack.c.l.b16 %v6472
        %v7497 = vunpack.c.l.b16 %v6473
        %v7498 = vunpack.c.l.b16 %v6474
        %v7499 = vunpack.c.l.b16 %v6475
        %v7500 = vunpack.c.l.b16 %v6476
        %v7501 = vunpack.c.l.b16 %v6477
        %v7502 = vunpack.c.l.b16 %v6478
        %v7503 = vunpack.c.l.b16 %v6479
        %v7504 = vunpack.c.l.b16 %v6480
        %v7505 = vunpack.c.l.b16 %v6481
        %v7506 = vunpack.c.l.b16 %v6482
        %v7507 = vunpack.c.l.b16 %v6483
        %v7508 = vunpack.c.l.b16 %v6484
        %v7509 = vunpack.c.l.b16 %v6485
        %v7510 = vunpack.c.l.b16 %v6486
        %v7511 = vunpack.c.l.b16 %v6487
        %v7512 = vunpack.c.l.b16 %v6488
        %v7513 = vunpack.c.l.b16 %v6489
        %v7514 = vpack.c.b16 %v7483, %v7482
        %v7515 = vpack.c.b16 %v7485, %v7484
        %v7516 = vpack.c.b16 %v7487, %v7486
        %v7517 = vpack.c.b16 %v7489, %v7488
        %v7518 = vpack.c.b16 %v7491, %v7490
        %v7519 = vpack.c.b16 %v7493, %v7492
        %v7520 = vpack.c.b16 %v7495, %v7494
        %v7521 = vpack.c.b16 %v7497, %v7496
        %v7522 = vpack.c.b16 %v7499, %v7498
        %v7523 = vpack.c.b16 %v7501, %v7500
        %v7524 = vpack.c.b16 %v7503, %v7502
        %v7525 = vpack.c.b16 %v7505, %v7504
        %v7526 = vpack.c.b16 %v7507, %v7506
        %v7527 = vpack.c.b16 %v7509, %v7508
        %v7528 = vpack.c.b16 %v7511, %v7510
        %v7529 = vpack.c.b16 %v7513, %v7512
        %v7562 = vunpack.c.l.b16 %v6490
        %v7563 = vunpack.c.l.b16 %v6491
        %v7564 = vunpack.c.l.b16 %v6492
        %v7565 = vunpack.c.l.b16 %v6493
        %v7566 = vunpack.c.l.b16 %v6494
        %v7567 = vunpack.c.l.b16 %v6495
        %v7568 = vunpack.c.l.b16 %v6496
        %v7569 = vunpack.c.l.b16 %v6497
        %v7570 = vunpack.c.l.b16 %v6498
        %v7571 = vunpack.c.l.b16 %v6499
        %v7572 = vunpack.c.l.b16 %v6500
        %v7573 = vunpack.c.l.b16 %v6501
        %v7574 = vunpack.c.l.b16 %v6502
        %v7575 = vunpack.c.l.b16 %v6503
        %v7576 = vunpack.c.l.b16 %v6504
        %v7577 = vunpack.c.l.b16 %v6505
        %v7578 = vpack.c.b16 %v7562, %v7562
        %v7579 = vpack.c.b16 %v7563, %v7563
        %v7580 = vpack.c.b16 %v7564, %v7564
        %v7581 = vpack.c.b16 %v7565, %v7565
        %v7582 = vpack.c.b16 %v7566, %v7566
        %v7583 = vpack.c.b16 %v7567, %v7567
        %v7584 = vpack.c.b16 %v7568, %v7568
        %v7585 = vpack.c.b16 %v7569, %v7569
        %v7586 = vpack.c.b16 %v7570, %v7570
        %v7587 = vpack.c.b16 %v7571, %v7571
        %v7588 = vpack.c.b16 %v7572, %v7572
        %v7589 = vpack.c.b16 %v7573, %v7573
        %v7590 = vpack.c.b16 %v7574, %v7574
        %v7591 = vpack.c.b16 %v7575, %v7575
        %v7592 = vpack.c.b16 %v7576, %v7576
        %v7593 = vpack.c.b16 %v7577, %v7577
        %v7595 = vshrl.u32 %v7514, 16
        %v7597 = vshll.u32 %v7514, 16
        %v7599 = vrot.slane %v7597, 1
        %v7600 = vor.u32 %v7595, %v7599
        %v7602 = vshll.u32 %v7578, 16
        %v7604 = vrot.slane %v7602, 1
        %v7605 = vsel %vm734, %v7600, %v7604
        %v7607 = vshrl.u32 %v7515, 16
        %v7609 = vshll.u32 %v7515, 16
        %v7611 = vrot.slane %v7609, 1
        %v7612 = vor.u32 %v7607, %v7611
        %v7614 = vshll.u32 %v7579, 16
        %v7616 = vrot.slane %v7614, 1
        %v7617 = vsel %vm734, %v7612, %v7616
        %v7619 = vshrl.u32 %v7516, 16
        %v7621 = vshll.u32 %v7516, 16
        %v7623 = vrot.slane %v7621, 1
        %v7624 = vor.u32 %v7619, %v7623
        %v7626 = vshll.u32 %v7580, 16
        %v7628 = vrot.slane %v7626, 1
        %v7629 = vsel %vm734, %v7624, %v7628
        %v7631 = vshrl.u32 %v7517, 16
        %v7633 = vshll.u32 %v7517, 16
        %v7635 = vrot.slane %v7633, 1
        %v7636 = vor.u32 %v7631, %v7635
        %v7638 = vshll.u32 %v7581, 16
        %v7640 = vrot.slane %v7638, 1
        %v7641 = vsel %vm734, %v7636, %v7640
        %v7643 = vshrl.u32 %v7518, 16
        %v7645 = vshll.u32 %v7518, 16
        %v7647 = vrot.slane %v7645, 1
        %v7648 = vor.u32 %v7643, %v7647
        %v7650 = vshll.u32 %v7582, 16
        %v7652 = vrot.slane %v7650, 1
        %v7653 = vsel %vm734, %v7648, %v7652
        %v7655 = vshrl.u32 %v7519, 16
        %v7657 = vshll.u32 %v7519, 16
        %v7659 = vrot.slane %v7657, 1
        %v7660 = vor.u32 %v7655, %v7659
        %v7662 = vshll.u32 %v7583, 16
        %v7664 = vrot.slane %v7662, 1
        %v7665 = vsel %vm734, %v7660, %v7664
        %v7667 = vshrl.u32 %v7520, 16
        %v7669 = vshll.u32 %v7520, 16
        %v7671 = vrot.slane %v7669, 1
        %v7672 = vor.u32 %v7667, %v7671
        %v7674 = vshll.u32 %v7584, 16
        %v7676 = vrot.slane %v7674, 1
        %v7677 = vsel %vm734, %v7672, %v7676
        %v7679 = vshrl.u32 %v7521, 16
        %v7681 = vshll.u32 %v7521, 16
        %v7683 = vrot.slane %v7681, 1
        %v7684 = vor.u32 %v7679, %v7683
        %v7686 = vshll.u32 %v7585, 16
        %v7688 = vrot.slane %v7686, 1
        %v7689 = vsel %vm734, %v7684, %v7688
        %v7691 = vshrl.u32 %v7522, 16
        %v7693 = vshll.u32 %v7522, 16
        %v7695 = vrot.slane %v7693, 1
        %v7696 = vor.u32 %v7691, %v7695
        %v7698 = vshll.u32 %v7586, 16
        %v7700 = vrot.slane %v7698, 1
        %v7701 = vsel %vm734, %v7696, %v7700
        %v7703 = vshrl.u32 %v7523, 16
        %v7705 = vshll.u32 %v7523, 16
        %v7707 = vrot.slane %v7705, 1
        %v7708 = vor.u32 %v7703, %v7707
        %v7710 = vshll.u32 %v7587, 16
        %v7712 = vrot.slane %v7710, 1
        %v7713 = vsel %vm734, %v7708, %v7712
        %v7715 = vshrl.u32 %v7524, 16
        %v7717 = vshll.u32 %v7524, 16
        %v7719 = vrot.slane %v7717, 1
        %v7720 = vor.u32 %v7715, %v7719
        %v7722 = vshll.u32 %v7588, 16
        %v7724 = vrot.slane %v7722, 1
        %v7725 = vsel %vm734, %v7720, %v7724
        %v7727 = vshrl.u32 %v7525, 16
        %v7729 = vshll.u32 %v7525, 16
        %v7731 = vrot.slane %v7729, 1
        %v7732 = vor.u32 %v7727, %v7731
        %v7734 = vshll.u32 %v7589, 16
        %v7736 = vrot.slane %v7734, 1
        %v7737 = vsel %vm734, %v7732, %v7736
        %v7739 = vshrl.u32 %v7526, 16
        %v7741 = vshll.u32 %v7526, 16
        %v7743 = vrot.slane %v7741, 1
        %v7744 = vor.u32 %v7739, %v7743
        %v7746 = vshll.u32 %v7590, 16
        %v7748 = vrot.slane %v7746, 1
        %v7749 = vsel %vm734, %v7744, %v7748
        %v7751 = vshrl.u32 %v7527, 16
        %v7753 = vshll.u32 %v7527, 16
        %v7755 = vrot.slane %v7753, 1
        %v7756 = vor.u32 %v7751, %v7755
        %v7758 = vshll.u32 %v7591, 16
        %v7760 = vrot.slane %v7758, 1
        %v7761 = vsel %vm734, %v7756, %v7760
        %v7763 = vshrl.u32 %v7528, 16
        %v7765 = vshll.u32 %v7528, 16
        %v7767 = vrot.slane %v7765, 1
        %v7768 = vor.u32 %v7763, %v7767
        %v7770 = vshll.u32 %v7592, 16
        %v7772 = vrot.slane %v7770, 1
        %v7773 = vsel %vm734, %v7768, %v7772
        %v7775 = vshrl.u32 %v7529, 16
        %v7777 = vshll.u32 %v7529, 16
        %v7779 = vrot.slane %v7777, 1
        %v7780 = vor.u32 %v7775, %v7779
        %v7782 = vshll.u32 %v7593, 16
        %v7784 = vrot.slane %v7782, 1
        %v7785 = vsel %vm734, %v7780, %v7784
        %v7818 = vunpack.c.l.b16 %v6506
        %v7819 = vunpack.c.l.b16 %v6507
        %v7820 = vunpack.c.l.b16 %v6508
        %v7821 = vunpack.c.l.b16 %v6509
        %v7822 = vunpack.c.l.b16 %v6510
        %v7823 = vunpack.c.l.b16 %v6511
        %v7824 = vunpack.c.l.b16 %v6512
        %v7825 = vunpack.c.l.b16 %v6513
        %v7826 = vunpack.c.l.b16 %v6514
        %v7827 = vunpack.c.l.b16 %v6515
        %v7828 = vunpack.c.l.b16 %v6516
        %v7829 = vunpack.c.l.b16 %v6517
        %v7830 = vunpack.c.l.b16 %v6518
        %v7831 = vunpack.c.l.b16 %v6519
        %v7832 = vunpack.c.l.b16 %v6520
        %v7833 = vunpack.c.l.b16 %v6521
        %v7834 = vpack.c.b16 %v7483, %v7818
        %v7835 = vpack.c.b16 %v7485, %v7819
        %v7836 = vpack.c.b16 %v7487, %v7820
        %v7837 = vpack.c.b16 %v7489, %v7821
        %v7838 = vpack.c.b16 %v7491, %v7822
        %v7839 = vpack.c.b16 %v7493, %v7823
        %v7840 = vpack.c.b16 %v7495, %v7824
        %v7841 = vpack.c.b16 %v7497, %v7825
        %v7842 = vpack.c.b16 %v7499, %v7826
        %v7843 = vpack.c.b16 %v7501, %v7827
        %v7844 = vpack.c.b16 %v7503, %v7828
        %v7845 = vpack.c.b16 %v7505, %v7829
        %v7846 = vpack.c.b16 %v7507, %v7830
        %v7847 = vpack.c.b16 %v7509, %v7831
        %v7848 = vpack.c.b16 %v7511, %v7832
        %v7849 = vpack.c.b16 %v7513, %v7833
        %v7850 = vrot.slane %v7834, 1
        %v7851 = vrot.slane %v7578, 1
        %v7852 = vsel %vm1041, %v7850, %v7851
        %v7853 = vrot.slane %v7835, 1
        %v7854 = vrot.slane %v7579, 1
        %v7855 = vsel %vm1041, %v7853, %v7854
        %v7856 = vrot.slane %v7836, 1
        %v7857 = vrot.slane %v7580, 1
        %v7858 = vsel %vm1041, %v7856, %v7857
        %v7859 = vrot.slane %v7837, 1
        %v7860 = vrot.slane %v7581, 1
        %v7861 = vsel %vm1041, %v7859, %v7860
        %v7862 = vrot.slane %v7838, 1
        %v7863 = vrot.slane %v7582, 1
        %v7864 = vsel %vm1041, %v7862, %v7863
        %v7865 = vrot.slane %v7839, 1
        %v7866 = vrot.slane %v7583, 1
        %v7867 = vsel %vm1041, %v7865, %v7866
        %v7868 = vrot.slane %v7840, 1
        %v7869 = vrot.slane %v7584, 1
        %v7870 = vsel %vm1041, %v7868, %v7869
        %v7871 = vrot.slane %v7841, 1
        %v7872 = vrot.slane %v7585, 1
        %v7873 = vsel %vm1041, %v7871, %v7872
        %v7874 = vrot.slane %v7842, 1
        %v7875 = vrot.slane %v7586, 1
        %v7876 = vsel %vm1041, %v7874, %v7875
        %v7877 = vrot.slane %v7843, 1
        %v7878 = vrot.slane %v7587, 1
        %v7879 = vsel %vm1041, %v7877, %v7878
        %v7880 = vrot.slane %v7844, 1
        %v7881 = vrot.slane %v7588, 1
        %v7882 = vsel %vm1041, %v7880, %v7881
        %v7883 = vrot.slane %v7845, 1
        %v7884 = vrot.slane %v7589, 1
        %v7885 = vsel %vm1041, %v7883, %v7884
        %v7886 = vrot.slane %v7846, 1
        %v7887 = vrot.slane %v7590, 1
        %v7888 = vsel %vm1041, %v7886, %v7887
        %v7889 = vrot.slane %v7847, 1
        %v7890 = vrot.slane %v7591, 1
        %v7891 = vsel %vm1041, %v7889, %v7890
        %v7892 = vrot.slane %v7848, 1
        %v7893 = vrot.slane %v7592, 1
        %v7894 = vsel %vm1041, %v7892, %v7893
        %v7895 = vrot.slane %v7849, 1
        %v7896 = vrot.slane %v7593, 1
        %v7897 = vsel %vm1041, %v7895, %v7896
        %v7914 = vld [vmem:[#allocation3] sm:$0xf]
        %v7915 = vld [vmem:[#allocation3 + $0x4] sm:$0xf]
        %v7916 = vld [vmem:[#allocation3 + $0x8] sm:$0xf]
        %v7917 = vld [vmem:[#allocation3 + $0xc] sm:$0xf]
        %v7918 = vld [vmem:[#allocation3 + $0x10] sm:$0xf]
        %v7919 = vld [vmem:[#allocation3 + $0x14] sm:$0xf]
        %v7920 = vld [vmem:[#allocation3 + $0x18] sm:$0xf]
        %v7921 = vld [vmem:[#allocation3 + $0x1c] sm:$0xf]
        %v7922 = vld [vmem:[#allocation3 + $0x20] sm:$0xf]
        %v7923 = vld [vmem:[#allocation3 + $0x24] sm:$0xf]
        %v7924 = vld [vmem:[#allocation3 + $0x28] sm:$0xf]
        %v7925 = vld [vmem:[#allocation3 + $0x2c] sm:$0xf]
        %v7926 = vld [vmem:[#allocation3 + $0x30] sm:$0xf]
        %v7927 = vld [vmem:[#allocation3 + $0x34] sm:$0xf]
        %v7928 = vld [vmem:[#allocation3 + $0x38] sm:$0xf]
        %v7929 = vld [vmem:[#allocation3 + $0x3c] sm:$0xf]
        %v7930 = vld [vmem:[#allocation3 + $0x40] sm:$0xf]
        %v7931 = vld [vmem:[#allocation3 + $0x44] sm:$0xf]
        %v7932 = vld [vmem:[#allocation3 + $0x48] sm:$0xf]
        %v7933 = vld [vmem:[#allocation3 + $0x4c] sm:$0xf]
        %v7934 = vld [vmem:[#allocation3 + $0x50] sm:$0xf]
        %v7935 = vld [vmem:[#allocation3 + $0x54] sm:$0xf]
        %v7936 = vld [vmem:[#allocation3 + $0x58] sm:$0xf]
        %v7937 = vld [vmem:[#allocation3 + $0x5c] sm:$0xf]
        %v7938 = vld [vmem:[#allocation3 + $0x60] sm:$0xf]
        %v7939 = vld [vmem:[#allocation3 + $0x64] sm:$0xf]
        %v7940 = vld [vmem:[#allocation3 + $0x68] sm:$0xf]
        %v7941 = vld [vmem:[#allocation3 + $0x6c] sm:$0xf]
        %v7942 = vld [vmem:[#allocation3 + $0x70] sm:$0xf]
        %v7943 = vld [vmem:[#allocation3 + $0x74] sm:$0xf]
        %v7944 = vld [vmem:[#allocation3 + $0x78] sm:$0xf]
        %v7945 = vld [vmem:[#allocation3 + $0x7c] sm:$0xf]
        %v7946 = vld [vmem:[#allocation3 + $0x80] sm:$0xf]
        %v7947 = vld [vmem:[#allocation3 + $0x84] sm:$0xf]
        %v7948 = vld [vmem:[#allocation3 + $0x88] sm:$0xf]
        %v7949 = vld [vmem:[#allocation3 + $0x8c] sm:$0xf]
        %v7950 = vld [vmem:[#allocation3 + $0x90] sm:$0xf]
        %v7951 = vld [vmem:[#allocation3 + $0x94] sm:$0xf]
        %v7952 = vld [vmem:[#allocation3 + $0x98] sm:$0xf]
        %v7953 = vld [vmem:[#allocation3 + $0x9c] sm:$0xf]
        %v7954 = vld [vmem:[#allocation3 + $0xa0] sm:$0xf]
        %v7955 = vld [vmem:[#allocation3 + $0xa4] sm:$0xf]
        %v7956 = vld [vmem:[#allocation3 + $0xa8] sm:$0xf]
        %v7957 = vld [vmem:[#allocation3 + $0xac] sm:$0xf]
        %v7958 = vld [vmem:[#allocation3 + $0xb0] sm:$0xf]
        %v7959 = vld [vmem:[#allocation3 + $0xb4] sm:$0xf]
        %v7960 = vld [vmem:[#allocation3 + $0xb8] sm:$0xf]
        %v7961 = vld [vmem:[#allocation3 + $0xbc] sm:$0xf]
        %v7962 = vld [vmem:[#allocation3 + $0xc0] sm:$0xf]
        %v7963 = vld [vmem:[#allocation3 + $0xc4] sm:$0xf]
        %v7964 = vld [vmem:[#allocation3 + $0xc8] sm:$0xf]
        %v7965 = vld [vmem:[#allocation3 + $0xcc] sm:$0xf]
        %v7966 = vld [vmem:[#allocation3 + $0xd0] sm:$0xf]
        %v7967 = vld [vmem:[#allocation3 + $0xd4] sm:$0xf]
        %v7968 = vld [vmem:[#allocation3 + $0xd8] sm:$0xf]
        %v7969 = vld [vmem:[#allocation3 + $0xdc] sm:$0xf]
        %v7970 = vld [vmem:[#allocation3 + $0xe0] sm:$0xf]
        %v7971 = vld [vmem:[#allocation3 + $0xe4] sm:$0xf]
        %v7972 = vld [vmem:[#allocation3 + $0xe8] sm:$0xf]
        %v7973 = vld [vmem:[#allocation3 + $0xec] sm:$0xf]
        %v7974 = vld [vmem:[#allocation3 + $0xf0] sm:$0xf]
        %v7975 = vld [vmem:[#allocation3 + $0xf4] sm:$0xf]
        %v7976 = vld [vmem:[#allocation3 + $0xf8] sm:$0xf]
        %v7977 = vld [vmem:[#allocation3 + $0xfc] sm:$0xf]
        %v7978 = vld [vmem:[#allocation3 + $0x100] sm:$0xf]
        %v7979 = vld [vmem:[#allocation3 + $0x104] sm:$0xf]
        %v7980 = vld [vmem:[#allocation3 + $0x108] sm:$0xf]
        %v7981 = vld [vmem:[#allocation3 + $0x10c] sm:$0xf]
        %v7982 = vld [vmem:[#allocation3 + $0x110] sm:$0xf]
        %v7983 = vld [vmem:[#allocation3 + $0x114] sm:$0xf]
        %v7984 = vld [vmem:[#allocation3 + $0x118] sm:$0xf]
        %v7985 = vld [vmem:[#allocation3 + $0x11c] sm:$0xf]
        %v7986 = vld [vmem:[#allocation3 + $0x120] sm:$0xf]
        %v7987 = vld [vmem:[#allocation3 + $0x124] sm:$0xf]
        %v7988 = vld [vmem:[#allocation3 + $0x128] sm:$0xf]
        %v7989 = vld [vmem:[#allocation3 + $0x12c] sm:$0xf]
        %v7990 = vld [vmem:[#allocation3 + $0x130] sm:$0xf]
        %v7991 = vld [vmem:[#allocation3 + $0x134] sm:$0xf]
        %v7992 = vld [vmem:[#allocation3 + $0x138] sm:$0xf]
        %v7993 = vld [vmem:[#allocation3 + $0x13c] sm:$0xf]
        %v7994 = vld [vmem:[#allocation3 + $0x140] sm:$0xf]
        %v7995 = vld [vmem:[#allocation3 + $0x144] sm:$0xf]
        %v7996 = vld [vmem:[#allocation3 + $0x148] sm:$0xf]
        %v7997 = vld [vmem:[#allocation3 + $0x14c] sm:$0xf]
        %v7998 = vld [vmem:[#allocation3 + $0x150] sm:$0xf]
        %v7999 = vld [vmem:[#allocation3 + $0x154] sm:$0xf]
        %v8000 = vld [vmem:[#allocation3 + $0x158] sm:$0xf]
        %v8001 = vld [vmem:[#allocation3 + $0x15c] sm:$0xf]
        %v8002 = vld [vmem:[#allocation3 + $0x160] sm:$0xf]
        %v8003 = vld [vmem:[#allocation3 + $0x164] sm:$0xf]
        %v8004 = vld [vmem:[#allocation3 + $0x168] sm:$0xf]
        %v8005 = vld [vmem:[#allocation3 + $0x16c] sm:$0xf]
        %v8006 = vld [vmem:[#allocation3 + $0x170] sm:$0xf]
        %v8007 = vld [vmem:[#allocation3 + $0x174] sm:$0xf]
        %v8008 = vld [vmem:[#allocation3 + $0x178] sm:$0xf]
        %v8009 = vld [vmem:[#allocation3 + $0x17c] sm:$0xf]
        %v8010 = vld [vmem:[#allocation3 + $0x180] sm:$0xf]
        %v8011 = vld [vmem:[#allocation3 + $0x184] sm:$0xf]
        %v8012 = vld [vmem:[#allocation3 + $0x188] sm:$0xf]
        %v8013 = vld [vmem:[#allocation3 + $0x18c] sm:$0xf]
        %v8014 = vld [vmem:[#allocation3 + $0x190] sm:$0xf]
        %v8015 = vld [vmem:[#allocation3 + $0x194] sm:$0xf]
        %v8016 = vld [vmem:[#allocation3 + $0x198] sm:$0xf]
        %v8017 = vld [vmem:[#allocation3 + $0x19c] sm:$0xf]
        %v8018 = vld [vmem:[#allocation3 + $0x1a0] sm:$0xf]
        %v8019 = vld [vmem:[#allocation3 + $0x1a4] sm:$0xf]
        %v8020 = vld [vmem:[#allocation3 + $0x1a8] sm:$0xf]
        %v8021 = vld [vmem:[#allocation3 + $0x1ac] sm:$0xf]
        %v8022 = vld [vmem:[#allocation3 + $0x1b0] sm:$0xf]
        %v8023 = vld [vmem:[#allocation3 + $0x1b4] sm:$0xf]
        %v8024 = vld [vmem:[#allocation3 + $0x1b8] sm:$0xf]
        %v8025 = vld [vmem:[#allocation3 + $0x1bc] sm:$0xf]
        %v8026 = vld [vmem:[#allocation3 + $0x1c0] sm:$0xf]
        %v8027 = vld [vmem:[#allocation3 + $0x1c4] sm:$0xf]
        %v8028 = vld [vmem:[#allocation3 + $0x1c8] sm:$0xf]
        %v8029 = vld [vmem:[#allocation3 + $0x1cc] sm:$0xf]
        %v8030 = vld [vmem:[#allocation3 + $0x1d0] sm:$0xf]
        %v8031 = vld [vmem:[#allocation3 + $0x1d4] sm:$0xf]
        %v8032 = vld [vmem:[#allocation3 + $0x1d8] sm:$0xf]
        %v8033 = vld [vmem:[#allocation3 + $0x1dc] sm:$0xf]
        %v8034 = vld [vmem:[#allocation3 + $0x1e0] sm:$0xf]
        %v8035 = vld [vmem:[#allocation3 + $0x1e4] sm:$0xf]
        %v8036 = vld [vmem:[#allocation3 + $0x1e8] sm:$0xf]
        %v8037 = vld [vmem:[#allocation3 + $0x1ec] sm:$0xf]
        %v8038 = vld [vmem:[#allocation3 + $0x1f0] sm:$0xf]
        %v8039 = vld [vmem:[#allocation3 + $0x1f4] sm:$0xf]
        %v8040 = vld [vmem:[#allocation3 + $0x1f8] sm:$0xf]
        %v8041 = vld [vmem:[#allocation3 + $0x1fc] sm:$0xf]
        %v8042 = vld [vmem:[#allocation3 + $0x200] sm:$0xf]
        %v8043 = vld [vmem:[#allocation3 + $0x204] sm:$0xf]
        %v8044 = vld [vmem:[#allocation3 + $0x208] sm:$0xf]
        %v8045 = vld [vmem:[#allocation3 + $0x20c] sm:$0xf]
        %v8046 = vld [vmem:[#allocation3 + $0x210] sm:$0xf]
        %v8047 = vld [vmem:[#allocation3 + $0x214] sm:$0xf]
        %v8048 = vld [vmem:[#allocation3 + $0x218] sm:$0xf]
        %v8049 = vld [vmem:[#allocation3 + $0x21c] sm:$0xf]
        %v8050 = vld [vmem:[#allocation3 + $0x220] sm:$0xf]
        %v8051 = vld [vmem:[#allocation3 + $0x224] sm:$0xf]
        %v8052 = vld [vmem:[#allocation3 + $0x228] sm:$0xf]
        %v8053 = vld [vmem:[#allocation3 + $0x22c] sm:$0xf]
        %v8054 = vld [vmem:[#allocation3 + $0x230] sm:$0xf]
        %v8055 = vld [vmem:[#allocation3 + $0x234] sm:$0xf]
        %v8056 = vld [vmem:[#allocation3 + $0x238] sm:$0xf]
        %v8057 = vld [vmem:[#allocation3 + $0x23c] sm:$0xf]
        %v8058 = vld [vmem:[%s4] sm:$0x1]
        %v8060 = vlaneseq
        %v8061 = vshrl.u32 %v8060, 7
        %v8062 = vsub.s32 0, %v8061
        %v8063 = vrot.slane %v8058, %v8062
        %v8209 = vunpack.c.l.b16 %v7914
        %v8210 = vunpack.c.l.b16 %v7915
        %v8211 = vunpack.c.l.b16 %v7916
        %v8212 = vunpack.c.l.b16 %v7917
        %v8213 = vunpack.c.l.b16 %v7918
        %v8214 = vunpack.c.l.b16 %v7919
        %v8215 = vunpack.c.l.b16 %v7920
        %v8216 = vunpack.c.l.b16 %v7921
        %v8217 = vunpack.c.l.b16 %v7922
        %v8218 = vunpack.c.l.b16 %v7923
        %v8219 = vunpack.c.l.b16 %v7924
        %v8220 = vunpack.c.l.b16 %v7925
        %v8221 = vunpack.c.l.b16 %v7926
        %v8222 = vunpack.c.l.b16 %v7927
        %v8223 = vunpack.c.l.b16 %v7928
        %v8224 = vunpack.c.l.b16 %v7929
        %v8225 = vunpack.c.l.b16 %v7930
        %v8226 = vunpack.c.l.b16 %v7931
        %v8227 = vunpack.c.l.b16 %v7932
        %v8228 = vunpack.c.l.b16 %v7933
        %v8229 = vunpack.c.l.b16 %v7934
        %v8230 = vunpack.c.l.b16 %v7935
        %v8231 = vunpack.c.l.b16 %v7936
        %v8232 = vunpack.c.l.b16 %v7937
        %v8233 = vunpack.c.l.b16 %v7938
        %v8234 = vunpack.c.l.b16 %v7939
        %v8235 = vunpack.c.l.b16 %v7940
        %v8236 = vunpack.c.l.b16 %v7941
        %v8237 = vunpack.c.l.b16 %v7942
        %v8238 = vunpack.c.l.b16 %v7943
        %v8239 = vunpack.c.l.b16 %v7944
        %v8240 = vunpack.c.l.b16 %v7945
        %v8241 = vunpack.c.l.b16 %v7946
        %v8242 = vunpack.c.l.b16 %v7947
        %v8243 = vunpack.c.l.b16 %v7948
        %v8244 = vunpack.c.l.b16 %v7949
        %v8245 = vunpack.c.l.b16 %v7950
        %v8246 = vunpack.c.l.b16 %v7951
        %v8247 = vunpack.c.l.b16 %v7952
        %v8248 = vunpack.c.l.b16 %v7953
        %v8249 = vunpack.c.l.b16 %v7954
        %v8250 = vunpack.c.l.b16 %v7955
        %v8251 = vunpack.c.l.b16 %v7956
        %v8252 = vunpack.c.l.b16 %v7957
        %v8253 = vunpack.c.l.b16 %v7958
        %v8254 = vunpack.c.l.b16 %v7959
        %v8255 = vunpack.c.l.b16 %v7960
        %v8256 = vunpack.c.l.b16 %v7961
        %v8257 = vunpack.c.l.b16 %v7962
        %v8258 = vunpack.c.l.b16 %v7963
        %v8259 = vunpack.c.l.b16 %v7964
        %v8260 = vunpack.c.l.b16 %v7965
        %v8261 = vunpack.c.l.b16 %v7966
        %v8262 = vunpack.c.l.b16 %v7967
        %v8263 = vunpack.c.l.b16 %v7968
        %v8264 = vunpack.c.l.b16 %v7969
        %v8265 = vunpack.c.l.b16 %v7970
        %v8266 = vunpack.c.l.b16 %v7971
        %v8267 = vunpack.c.l.b16 %v7972
        %v8268 = vunpack.c.l.b16 %v7973
        %v8269 = vunpack.c.l.b16 %v7974
        %v8270 = vunpack.c.l.b16 %v7975
        %v8271 = vunpack.c.l.b16 %v7976
        %v8272 = vunpack.c.l.b16 %v7977
        %v8273 = vunpack.c.l.b16 %v7978
        %v8274 = vunpack.c.l.b16 %v7979
        %v8275 = vunpack.c.l.b16 %v7980
        %v8276 = vunpack.c.l.b16 %v7981
        %v8277 = vunpack.c.l.b16 %v7982
        %v8278 = vunpack.c.l.b16 %v7983
        %v8279 = vunpack.c.l.b16 %v7984
        %v8280 = vunpack.c.l.b16 %v7985
        %v8281 = vunpack.c.l.b16 %v7986
        %v8282 = vunpack.c.l.b16 %v7987
        %v8283 = vunpack.c.l.b16 %v7988
        %v8284 = vunpack.c.l.b16 %v7989
        %v8285 = vunpack.c.l.b16 %v7990
        %v8286 = vunpack.c.l.b16 %v7991
        %v8287 = vunpack.c.l.b16 %v7992
        %v8288 = vunpack.c.l.b16 %v7993
        %v8289 = vunpack.c.l.b16 %v7994
        %v8290 = vunpack.c.l.b16 %v7995
        %v8291 = vunpack.c.l.b16 %v7996
        %v8292 = vunpack.c.l.b16 %v7997
        %v8293 = vunpack.c.l.b16 %v7998
        %v8294 = vunpack.c.l.b16 %v7999
        %v8295 = vunpack.c.l.b16 %v8000
        %v8296 = vunpack.c.l.b16 %v8001
        %v8297 = vunpack.c.l.b16 %v8002
        %v8298 = vunpack.c.l.b16 %v8003
        %v8299 = vunpack.c.l.b16 %v8004
        %v8300 = vunpack.c.l.b16 %v8005
        %v8301 = vunpack.c.l.b16 %v8006
        %v8302 = vunpack.c.l.b16 %v8007
        %v8303 = vunpack.c.l.b16 %v8008
        %v8304 = vunpack.c.l.b16 %v8009
        %v8305 = vunpack.c.l.b16 %v8010
        %v8306 = vunpack.c.l.b16 %v8011
        %v8307 = vunpack.c.l.b16 %v8012
        %v8308 = vunpack.c.l.b16 %v8013
        %v8309 = vunpack.c.l.b16 %v8014
        %v8310 = vunpack.c.l.b16 %v8015
        %v8311 = vunpack.c.l.b16 %v8016
        %v8312 = vunpack.c.l.b16 %v8017
        %v8313 = vunpack.c.l.b16 %v8018
        %v8314 = vunpack.c.l.b16 %v8019
        %v8315 = vunpack.c.l.b16 %v8020
        %v8316 = vunpack.c.l.b16 %v8021
        %v8317 = vunpack.c.l.b16 %v8022
        %v8318 = vunpack.c.l.b16 %v8023
        %v8319 = vunpack.c.l.b16 %v8024
        %v8320 = vunpack.c.l.b16 %v8025
        %v8321 = vunpack.c.l.b16 %v8026
        %v8322 = vunpack.c.l.b16 %v8027
        %v8323 = vunpack.c.l.b16 %v8028
        %v8324 = vunpack.c.l.b16 %v8029
        %v8325 = vunpack.c.l.b16 %v8030
        %v8326 = vunpack.c.l.b16 %v8031
        %v8327 = vunpack.c.l.b16 %v8032
        %v8328 = vunpack.c.l.b16 %v8033
        %v8329 = vunpack.c.l.b16 %v8034
        %v8330 = vunpack.c.l.b16 %v8035
        %v8331 = vunpack.c.l.b16 %v8036
        %v8332 = vunpack.c.l.b16 %v8037
        %v8333 = vunpack.c.l.b16 %v8038
        %v8334 = vunpack.c.l.b16 %v8039
        %v8335 = vunpack.c.l.b16 %v8040
        %v8336 = vunpack.c.l.b16 %v8041
        %v8337 = vunpack.c.l.b16 %v8042
        %v8338 = vunpack.c.l.b16 %v8043
        %v8339 = vunpack.c.l.b16 %v8044
        %v8340 = vunpack.c.l.b16 %v8045
        %v8341 = vunpack.c.l.b16 %v8046
        %v8342 = vunpack.c.l.b16 %v8047
        %v8343 = vunpack.c.l.b16 %v8048
        %v8344 = vunpack.c.l.b16 %v8049
        %v8345 = vunpack.c.l.b16 %v8050
        %v8346 = vunpack.c.l.b16 %v8051
        %v8347 = vunpack.c.l.b16 %v8052
        %v8348 = vunpack.c.l.b16 %v8053
        %v8349 = vunpack.c.l.b16 %v8054
        %v8350 = vunpack.c.l.b16 %v8055
        %v8351 = vunpack.c.l.b16 %v8056
        %v8352 = vunpack.c.l.b16 %v8057
        %v8353 = vpack.c.b16 %v8210, %v8209
        %v8354 = vpack.c.b16 %v8212, %v8211
        %v8355 = vpack.c.b16 %v8214, %v8213
        %v8356 = vpack.c.b16 %v8216, %v8215
        %v8357 = vpack.c.b16 %v8218, %v8217
        %v8358 = vpack.c.b16 %v8220, %v8219
        %v8359 = vpack.c.b16 %v8222, %v8221
        %v8360 = vpack.c.b16 %v8224, %v8223
        %v8361 = vpack.c.b16 %v8226, %v8225
        %v8362 = vpack.c.b16 %v8228, %v8227
        %v8363 = vpack.c.b16 %v8230, %v8229
        %v8364 = vpack.c.b16 %v8232, %v8231
        %v8365 = vpack.c.b16 %v8234, %v8233
        %v8366 = vpack.c.b16 %v8236, %v8235
        %v8367 = vpack.c.b16 %v8238, %v8237
        %v8368 = vpack.c.b16 %v8240, %v8239
        %v8369 = vpack.c.b16 %v8242, %v8241
        %v8370 = vpack.c.b16 %v8244, %v8243
        %v8371 = vpack.c.b16 %v8246, %v8245
        %v8372 = vpack.c.b16 %v8248, %v8247
        %v8373 = vpack.c.b16 %v8250, %v8249
        %v8374 = vpack.c.b16 %v8252, %v8251
        %v8375 = vpack.c.b16 %v8254, %v8253
        %v8376 = vpack.c.b16 %v8256, %v8255
        %v8377 = vpack.c.b16 %v8258, %v8257
        %v8378 = vpack.c.b16 %v8260, %v8259
        %v8379 = vpack.c.b16 %v8262, %v8261
        %v8380 = vpack.c.b16 %v8264, %v8263
        %v8381 = vpack.c.b16 %v8266, %v8265
        %v8382 = vpack.c.b16 %v8268, %v8267
        %v8383 = vpack.c.b16 %v8270, %v8269
        %v8384 = vpack.c.b16 %v8272, %v8271
        %v8385 = vpack.c.b16 %v8274, %v8273
        %v8386 = vpack.c.b16 %v8276, %v8275
        %v8387 = vpack.c.b16 %v8278, %v8277
        %v8388 = vpack.c.b16 %v8280, %v8279
        %v8389 = vpack.c.b16 %v8282, %v8281
        %v8390 = vpack.c.b16 %v8284, %v8283
        %v8391 = vpack.c.b16 %v8286, %v8285
        %v8392 = vpack.c.b16 %v8288, %v8287
        %v8393 = vpack.c.b16 %v8290, %v8289
        %v8394 = vpack.c.b16 %v8292, %v8291
        %v8395 = vpack.c.b16 %v8294, %v8293
        %v8396 = vpack.c.b16 %v8296, %v8295
        %v8397 = vpack.c.b16 %v8298, %v8297
        %v8398 = vpack.c.b16 %v8300, %v8299
        %v8399 = vpack.c.b16 %v8302, %v8301
        %v8400 = vpack.c.b16 %v8304, %v8303
        %v8401 = vpack.c.b16 %v8306, %v8305
        %v8402 = vpack.c.b16 %v8308, %v8307
        %v8403 = vpack.c.b16 %v8310, %v8309
        %v8404 = vpack.c.b16 %v8312, %v8311
        %v8405 = vpack.c.b16 %v8314, %v8313
        %v8406 = vpack.c.b16 %v8316, %v8315
        %v8407 = vpack.c.b16 %v8318, %v8317
        %v8408 = vpack.c.b16 %v8320, %v8319
        %v8409 = vpack.c.b16 %v8322, %v8321
        %v8410 = vpack.c.b16 %v8324, %v8323
        %v8411 = vpack.c.b16 %v8326, %v8325
        %v8412 = vpack.c.b16 %v8328, %v8327
        %v8413 = vpack.c.b16 %v8330, %v8329
        %v8414 = vpack.c.b16 %v8332, %v8331
        %v8415 = vpack.c.b16 %v8334, %v8333
        %v8416 = vpack.c.b16 %v8336, %v8335
        %v8417 = vpack.c.b16 %v8338, %v8337
        %v8418 = vpack.c.b16 %v8340, %v8339
        %v8419 = vpack.c.b16 %v8342, %v8341
        %v8420 = vpack.c.b16 %v8344, %v8343
        %v8421 = vpack.c.b16 %v8346, %v8345
        %v8422 = vpack.c.b16 %v8348, %v8347
        %v8423 = vpack.c.b16 %v8350, %v8349
        %v8424 = vpack.c.b16 %v8352, %v8351
        %8497 = vmatprep.subr.bf16.mxu0 0
        %8498 = vmatpush1.bf16.msra.mxu0 %v8353
        %8499 = vmatprep.subr.bf16.mxu0 0
        %8500 = vmatpush1.bf16.msra.mxu0 %v8354
        %8501 = vmatprep.subr.bf16.mxu0 0
        %8502 = vmatpush1.bf16.msra.mxu0 %v8355
        %8503 = vmatprep.subr.bf16.mxu0 0
        %8504 = vmatpush1.bf16.msra.mxu0 %v8356
        %8505 = vmatprep.subr.bf16.mxu0 0
        %8506 = vmatpush1.bf16.msra.mxu0 %v8357
        %8507 = vmatprep.subr.bf16.mxu0 0
        %8508 = vmatpush1.bf16.msra.mxu0 %v8358
        %8509 = vmatprep.subr.bf16.mxu0 0
        %8510 = vmatpush1.bf16.msra.mxu0 %v8359
        %8511 = vmatprep.subr.bf16.mxu0 0
        %8512 = vmatpush1.bf16.msra.mxu0 %v8360
        %8513 = vmatprep.subr.bf16.mxu0 0
        %8514 = vmatpush1.bf16.msra.mxu0 %v8361
        %8515 = vmatprep.subr.bf16.mxu0 0
        %8516 = vmatpush1.bf16.msra.mxu0 %v8362
        %8517 = vmatprep.subr.bf16.mxu0 0
        %8518 = vmatpush1.bf16.msra.mxu0 %v8363
        %8519 = vmatprep.subr.bf16.mxu0 0
        %8520 = vmatpush1.bf16.msra.mxu0 %v8364
        %8521 = vmatprep.subr.bf16.mxu0 0
        %8522 = vmatpush1.bf16.msra.mxu0 %v8365
        %8523 = vmatprep.subr.bf16.mxu0 0
        %8524 = vmatpush1.bf16.msra.mxu0 %v8366
        %8525 = vmatprep.subr.bf16.mxu0 0
        %8526 = vmatpush1.bf16.msra.mxu0 %v8367
        %8527 = vmatprep.subr.bf16.mxu0 0
        %8528 = vmatpush1.bf16.msra.mxu0 %v8368
        %8529 = vmatprep.mubr.bf16.mxu0 %v6677
        %8530 = vmatmul.mubr.bf16.gmra.mrb[0].mxu0 %v6586
        %v8531 = vpop.f32.mrb[0].mxu0
        %v8532 = vadd.f32 %v8063, %v8531
        %v8533 = vpop.f32.mrb[0].mxu0
        %v8534 = vpop.f32.mrb[0].mxu0
        %v8535 = vadd.f32 %v8063, %v8534
        %v8536 = vpop.f32.mrb[0].mxu0
        %8537 = vmatprep.mubr.bf16.mxu0 %v6689
        %8538 = vmatmul.mubr.bf16.gmra.mrb[0].mxu0 %v6587
        %v8539 = vpop.f32.mrb[0].mxu0
        %v8540 = vadd.f32 %v8063, %v8539
        %v8541 = vpop.f32.mrb[0].mxu0
        %v8542 = vpop.f32.mrb[0].mxu0
        %v8543 = vadd.f32 %v8063, %v8542
        %v8544 = vpop.f32.mrb[0].mxu0
        %8545 = vmatprep.mubr.bf16.mxu0 %v6701
        %8546 = vmatmul.mubr.bf16.gmra.mrb[0].mxu0 %v6588
        %v8547 = vpop.f32.mrb[0].mxu0
        %v8548 = vadd.f32 %v8063, %v8547
        %v8549 = vpop.f32.mrb[0].mxu0
        %v8550 = vpop.f32.mrb[0].mxu0
        %v8551 = vadd.f32 %v8063, %v8550
        %v8552 = vpop.f32.mrb[0].mxu0
        %8553 = vmatprep.mubr.bf16.mxu0 %v6713
        %8554 = vmatmul.mubr.bf16.gmra.mrb[0].mxu0 %v6589
        %v8555 = vpop.f32.mrb[0].mxu0
        %v8556 = vadd.f32 %v8063, %v8555
        %v8557 = vpop.f32.mrb[0].mxu0
        %v8558 = vpop.f32.mrb[0].mxu0
        %v8559 = vadd.f32 %v8063, %v8558
        %v8560 = vpop.f32.mrb[0].mxu0
        %8561 = vmatprep.mubr.bf16.mxu0 %v6725
        %8562 = vmatmul.mubr.bf16.gmra.mrb[0].mxu0 %v6590
        %v8563 = vpop.f32.mrb[0].mxu0
        %v8564 = vadd.f32 %v8063, %v8563
        %v8565 = vpop.f32.mrb[0].mxu0
        %v8566 = vpop.f32.mrb[0].mxu0
        %v8567 = vadd.f32 %v8063, %v8566
        %v8568 = vpop.f32.mrb[0].mxu0
        %8569 = vmatprep.mubr.bf16.mxu0 %v6737
        %8570 = vmatmul.mubr.bf16.gmra.mrb[0].mxu0 %v6591
        %v8571 = vpop.f32.mrb[0].mxu0
        %v8572 = vadd.f32 %v8063, %v8571
        %v8573 = vpop.f32.mrb[0].mxu0
        %v8574 = vpop.f32.mrb[0].mxu0
        %v8575 = vadd.f32 %v8063, %v8574
        %v8576 = vpop.f32.mrb[0].mxu0
        %8577 = vmatprep.mubr.bf16.mxu0 %v6749
        %8578 = vmatmul.mubr.bf16.gmra.mrb[0].mxu0 %v6592
        %v8579 = vpop.f32.mrb[0].mxu0
        %v8580 = vadd.f32 %v8063, %v8579
        %v8581 = vpop.f32.mrb[0].mxu0
        %v8582 = vpop.f32.mrb[0].mxu0
        %v8583 = vadd.f32 %v8063, %v8582
        %v8584 = vpop.f32.mrb[0].mxu0
        %8585 = vmatprep.mubr.bf16.mxu0 %v6761
        %8586 = vmatmul.mubr.bf16.gmra.mrb[0].mxu0 %v6593
        %v8587 = vpop.f32.mrb[0].mxu0
        %v8588 = vadd.f32 %v8063, %v8587
        %v8589 = vpop.f32.mrb[0].mxu0
        %v8590 = vpop.f32.mrb[0].mxu0
        %v8591 = vadd.f32 %v8063, %v8590
        %v8592 = vpop.f32.mrb[0].mxu0
        %8593 = vmatprep.mubr.bf16.mxu0 %v6773
        %8594 = vmatmul.mubr.bf16.gmra.mrb[0].mxu0 %v6594
        %v8595 = vpop.f32.mrb[0].mxu0
        %v8596 = vadd.f32 %v8063, %v8595
        %v8597 = vpop.f32.mrb[0].mxu0
        %v8598 = vpop.f32.mrb[0].mxu0
        %v8599 = vadd.f32 %v8063, %v8598
        %v8600 = vpop.f32.mrb[0].mxu0
        %8601 = vmatprep.mubr.bf16.mxu0 %v6785
        %8602 = vmatmul.mubr.bf16.gmra.mrb[0].mxu0 %v6595
        %v8603 = vpop.f32.mrb[0].mxu0
        %v8604 = vadd.f32 %v8063, %v8603
        %v8605 = vpop.f32.mrb[0].mxu0
        %v8606 = vpop.f32.mrb[0].mxu0
        %v8607 = vadd.f32 %v8063, %v8606
        %v8608 = vpop.f32.mrb[0].mxu0
        %8609 = vmatprep.mubr.bf16.mxu0 %v6797
        %8610 = vmatmul.mubr.bf16.gmra.mrb[0].mxu0 %v6596
        %v8611 = vpop.f32.mrb[0].mxu0
        %v8612 = vadd.f32 %v8063, %v8611
        %v8613 = vpop.f32.mrb[0].mxu0
        %v8614 = vpop.f32.mrb[0].mxu0
        %v8615 = vadd.f32 %v8063, %v8614
        %v8616 = vpop.f32.mrb[0].mxu0
        %8617 = vmatprep.mubr.bf16.mxu0 %v6809
        %8618 = vmatmul.mubr.bf16.gmra.mrb[0].mxu0 %v6597
        %v8619 = vpop.f32.mrb[0].mxu0
        %v8620 = vadd.f32 %v8063, %v8619
        %v8621 = vpop.f32.mrb[0].mxu0
        %v8622 = vpop.f32.mrb[0].mxu0
        %v8623 = vadd.f32 %v8063, %v8622
        %v8624 = vpop.f32.mrb[0].mxu0
        %8625 = vmatprep.mubr.bf16.mxu0 %v6821
        %8626 = vmatmul.mubr.bf16.gmra.mrb[0].mxu0 %v6598
        %v8627 = vpop.f32.mrb[0].mxu0
        %v8628 = vadd.f32 %v8063, %v8627
        %v8629 = vpop.f32.mrb[0].mxu0
        %v8630 = vpop.f32.mrb[0].mxu0
        %v8631 = vadd.f32 %v8063, %v8630
        %v8632 = vpop.f32.mrb[0].mxu0
        %8633 = vmatprep.mubr.bf16.mxu0 %v6833
        %8634 = vmatmul.mubr.bf16.gmra.mrb[0].mxu0 %v6599
        %v8635 = vpop.f32.mrb[0].mxu0
        %v8636 = vadd.f32 %v8063, %v8635
        %v8637 = vpop.f32.mrb[0].mxu0
        %v8638 = vpop.f32.mrb[0].mxu0
        %v8639 = vadd.f32 %v8063, %v8638
        %v8640 = vpop.f32.mrb[0].mxu0
        %8641 = vmatprep.mubr.bf16.mxu0 %v6845
        %8642 = vmatmul.mubr.bf16.gmra.mrb[0].mxu0 %v6600
        %v8643 = vpop.f32.mrb[0].mxu0
        %v8644 = vadd.f32 %v8063, %v8643
        %v8645 = vpop.f32.mrb[0].mxu0
        %v8646 = vpop.f32.mrb[0].mxu0
        %v8647 = vadd.f32 %v8063, %v8646
        %v8648 = vpop.f32.mrb[0].mxu0
        %8649 = vmatprep.mubr.bf16.mxu0 %v6857
        %8650 = vmatmul.mubr.bf16.gmra.mrb[0].mxu0 %v6601
        %v8651 = vpop.f32.mrb[0].mxu0
        %v8652 = vadd.f32 %v8063, %v8651
        %v8653 = vpop.f32.mrb[0].mxu0
        %v8654 = vpop.f32.mrb[0].mxu0
        %v8655 = vadd.f32 %v8063, %v8654
        %v8656 = vpop.f32.mrb[0].mxu0
        %8657 = vdwg.mxu0
        %8658 = vmatprep.subr.bf16.mxu0 0
        %8659 = vmatpush1.bf16.msra.mxu0 %v8369
        %8660 = vmatprep.subr.bf16.mxu0 0
        %8661 = vmatpush1.bf16.msra.mxu0 %v8370
        %8662 = vmatprep.subr.bf16.mxu0 0
        %8663 = vmatpush1.bf16.msra.mxu0 %v8371
        %8664 = vmatprep.subr.bf16.mxu0 0
        %8665 = vmatpush1.bf16.msra.mxu0 %v8372
        %8666 = vmatprep.subr.bf16.mxu0 0
        %8667 = vmatpush1.bf16.msra.mxu0 %v8373
        %8668 = vmatprep.subr.bf16.mxu0 0
        %8669 = vmatpush1.bf16.msra.mxu0 %v8374
        %8670 = vmatprep.subr.bf16.mxu0 0
        %8671 = vmatpush1.bf16.msra.mxu0 %v8375
        %8672 = vmatprep.subr.bf16.mxu0 0
        %8673 = vmatpush1.bf16.msra.mxu0 %v8376
        %8674 = vmatprep.subr.bf16.mxu0 0
        %8675 = vmatpush1.bf16.msra.mxu0 %v8377
        %8676 = vmatprep.subr.bf16.mxu0 0
        %8677 = vmatpush1.bf16.msra.mxu0 %v8378
        %8678 = vmatprep.subr.bf16.mxu0 0
        %8679 = vmatpush1.bf16.msra.mxu0 %v8379
        %8680 = vmatprep.subr.bf16.mxu0 0
        %8681 = vmatpush1.bf16.msra.mxu0 %v8380
        %8682 = vmatprep.subr.bf16.mxu0 0
        %8683 = vmatpush1.bf16.msra.mxu0 %v8381
        %8684 = vmatprep.subr.bf16.mxu0 0
        %8685 = vmatpush1.bf16.msra.mxu0 %v8382
        %8686 = vmatprep.subr.bf16.mxu0 0
        %8687 = vmatpush1.bf16.msra.mxu0 %v8383
        %8688 = vmatprep.subr.bf16.mxu0 0
        %8689 = vmatpush1.bf16.msra.mxu0 %v8384
        %8690 = vmatprep.mubr.bf16.mxu0 %v7050
        %8691 = vmatmul.mubr.bf16.gmra.mrb[0].mxu0 %v6924
        %v8692 = vpop.f32.mrb[0].mxu0
        %v8693 = vadd.f32 %v8532, %v8692
        %v8694 = vpop.f32.mrb[0].mxu0
        %v8695 = vpop.f32.mrb[0].mxu0
        %v8696 = vadd.f32 %v8535, %v8695
        %v8697 = vpop.f32.mrb[0].mxu0
        %8698 = vmatprep.mubr.bf16.mxu0 %v7051
        %8699 = vmatmul.mubr.bf16.gmra.mrb[0].mxu0 %v6927
        %v8700 = vpop.f32.mrb[0].mxu0
        %v8701 = vadd.f32 %v8540, %v8700
        %v8702 = vpop.f32.mrb[0].mxu0
        %v8703 = vpop.f32.mrb[0].mxu0
        %v8704 = vadd.f32 %v8543, %v8703
        %v8705 = vpop.f32.mrb[0].mxu0
        %8706 = vmatprep.mubr.bf16.mxu0 %v7052
        %8707 = vmatmul.mubr.bf16.gmra.mrb[0].mxu0 %v6930
        %v8708 = vpop.f32.mrb[0].mxu0
        %v8709 = vadd.f32 %v8548, %v8708
        %v8710 = vpop.f32.mrb[0].mxu0
        %v8711 = vpop.f32.mrb[0].mxu0
        %v8712 = vadd.f32 %v8551, %v8711
        %v8713 = vpop.f32.mrb[0].mxu0
        %8714 = vmatprep.mubr.bf16.mxu0 %v7053
        %8715 = vmatmul.mubr.bf16.gmra.mrb[0].mxu0 %v6933
        %v8716 = vpop.f32.mrb[0].mxu0
        %v8717 = vadd.f32 %v8556, %v8716
        %v8718 = vpop.f32.mrb[0].mxu0
        %v8719 = vpop.f32.mrb[0].mxu0
        %v8720 = vadd.f32 %v8559, %v8719
        %v8721 = vpop.f32.mrb[0].mxu0
        %8722 = vmatprep.mubr.bf16.mxu0 %v7054
        %8723 = vmatmul.mubr.bf16.gmra.mrb[0].mxu0 %v6936
        %v8724 = vpop.f32.mrb[0].mxu0
        %v8725 = vadd.f32 %v8564, %v8724
        %v8726 = vpop.f32.mrb[0].mxu0
        %v8727 = vpop.f32.mrb[0].mxu0
        %v8728 = vadd.f32 %v8567, %v8727
        %v8729 = vpop.f32.mrb[0].mxu0
        %8730 = vmatprep.mubr.bf16.mxu0 %v7055
        %8731 = vmatmul.mubr.bf16.gmra.mrb[0].mxu0 %v6939
        %v8732 = vpop.f32.mrb[0].mxu0
        %v8733 = vadd.f32 %v8572, %v8732
        %v8734 = vpop.f32.mrb[0].mxu0
        %v8735 = vpop.f32.mrb[0].mxu0
        %v8736 = vadd.f32 %v8575, %v8735
        %v8737 = vpop.f32.mrb[0].mxu0
        %8738 = vmatprep.mubr.bf16.mxu0 %v7056
        %8739 = vmatmul.mubr.bf16.gmra.mrb[0].mxu0 %v6942
        %v8740 = vpop.f32.mrb[0].mxu0
        %v8741 = vadd.f32 %v8580, %v8740
        %v8742 = vpop.f32.mrb[0].mxu0
        %v8743 = vpop.f32.mrb[0].mxu0
        %v8744 = vadd.f32 %v8583, %v8743
        %v8745 = vpop.f32.mrb[0].mxu0
        %8746 = vmatprep.mubr.bf16.mxu0 %v7057
        %8747 = vmatmul.mubr.bf16.gmra.mrb[0].mxu0 %v6945
        %v8748 = vpop.f32.mrb[0].mxu0
        %v8749 = vadd.f32 %v8588, %v8748
        %v8750 = vpop.f32.mrb[0].mxu0
        %v8751 = vpop.f32.mrb[0].mxu0
        %v8752 = vadd.f32 %v8591, %v8751
        %v8753 = vpop.f32.mrb[0].mxu0
        %8754 = vmatprep.mubr.bf16.mxu0 %v7058
        %8755 = vmatmul.mubr.bf16.gmra.mrb[0].mxu0 %v6948
        %v8756 = vpop.f32.mrb[0].mxu0
        %v8757 = vadd.f32 %v8596, %v8756
        %v8758 = vpop.f32.mrb[0].mxu0
        %v8759 = vpop.f32.mrb[0].mxu0
        %v8760 = vadd.f32 %v8599, %v8759
        %v8761 = vpop.f32.mrb[0].mxu0
        %8762 = vmatprep.mubr.bf16.mxu0 %v7059
        %8763 = vmatmul.mubr.bf16.gmra.mrb[0].mxu0 %v6951
        %v8764 = vpop.f32.mrb[0].mxu0
        %v8765 = vadd.f32 %v8604, %v8764
        %v8766 = vpop.f32.mrb[0].mxu0
        %v8767 = vpop.f32.mrb[0].mxu0
        %v8768 = vadd.f32 %v8607, %v8767
        %v8769 = vpop.f32.mrb[0].mxu0
        %8770 = vmatprep.mubr.bf16.mxu0 %v7060
        %8771 = vmatmul.mubr.bf16.gmra.mrb[0].mxu0 %v6954
        %v8772 = vpop.f32.mrb[0].mxu0
        %v8773 = vadd.f32 %v8612, %v8772
        %v8774 = vpop.f32.mrb[0].mxu0
        %v8775 = vpop.f32.mrb[0].mxu0
        %v8776 = vadd.f32 %v8615, %v8775
        %v8777 = vpop.f32.mrb[0].mxu0
        %8778 = vmatprep.mubr.bf16.mxu0 %v7061
        %8779 = vmatmul.mubr.bf16.gmra.mrb[0].mxu0 %v6957
        %v8780 = vpop.f32.mrb[0].mxu0
        %v8781 = vadd.f32 %v8620, %v8780
        %v8782 = vpop.f32.mrb[0].mxu0
        %v8783 = vpop.f32.mrb[0].mxu0
        %v8784 = vadd.f32 %v8623, %v8783
        %v8785 = vpop.f32.mrb[0].mxu0
        %8786 = vmatprep.mubr.bf16.mxu0 %v7062
        %8787 = vmatmul.mubr.bf16.gmra.mrb[0].mxu0 %v6960
        %v8788 = vpop.f32.mrb[0].mxu0
        %v8789 = vadd.f32 %v8628, %v8788
        %v8790 = vpop.f32.mrb[0].mxu0
        %v8791 = vpop.f32.mrb[0].mxu0
        %v8792 = vadd.f32 %v8631, %v8791
        %v8793 = vpop.f32.mrb[0].mxu0
        %8794 = vmatprep.mubr.bf16.mxu0 %v7063
        %8795 = vmatmul.mubr.bf16.gmra.mrb[0].mxu0 %v6963
        %v8796 = vpop.f32.mrb[0].mxu0
        %v8797 = vadd.f32 %v8636, %v8796
        %v8798 = vpop.f32.mrb[0].mxu0
        %v8799 = vpop.f32.mrb[0].mxu0
        %v8800 = vadd.f32 %v8639, %v8799
        %v8801 = vpop.f32.mrb[0].mxu0
        %8802 = vmatprep.mubr.bf16.mxu0 %v7064
        %8803 = vmatmul.mubr.bf16.gmra.mrb[0].mxu0 %v6966
        %v8804 = vpop.f32.mrb[0].mxu0
        %v8805 = vadd.f32 %v8644, %v8804
        %v8806 = vpop.f32.mrb[0].mxu0
        %v8807 = vpop.f32.mrb[0].mxu0
        %v8808 = vadd.f32 %v8647, %v8807
        %v8809 = vpop.f32.mrb[0].mxu0
        %8810 = vmatprep.mubr.bf16.mxu0 %v7065
        %8811 = vmatmul.mubr.bf16.gmra.mrb[0].mxu0 %v6969
        %v8812 = vpop.f32.mrb[0].mxu0
        %v8813 = vadd.f32 %v8652, %v8812
        %v8814 = vpop.f32.mrb[0].mxu0
        %v8815 = vpop.f32.mrb[0].mxu0
        %v8816 = vadd.f32 %v8655, %v8815
        %v8817 = vpop.f32.mrb[0].mxu0
        %8818 = vdwg.mxu0
        %8819 = vmatprep.subr.bf16.mxu0 0
        %8820 = vmatpush1.bf16.msra.mxu0 %v8385
        %8821 = vmatprep.subr.bf16.mxu0 0
        %8822 = vmatpush1.bf16.msra.mxu0 %v8386
        %8823 = vmatprep.subr.bf16.mxu0 0
        %8824 = vmatpush1.bf16.msra.mxu0 %v8387
        %8825 = vmatprep.subr.bf16.mxu0 0
        %8826 = vmatpush1.bf16.msra.mxu0 %v8388
        %8827 = vmatprep.subr.bf16.mxu0 0
        %8828 = vmatpush1.bf16.msra.mxu0 %v8389
        %8829 = vmatprep.subr.bf16.mxu0 0
        %8830 = vmatpush1.bf16.msra.mxu0 %v8390
        %8831 = vmatprep.subr.bf16.mxu0 0
        %8832 = vmatpush1.bf16.msra.mxu0 %v8391
        %8833 = vmatprep.subr.bf16.mxu0 0
        %8834 = vmatpush1.bf16.msra.mxu0 %v8392
        %8835 = vmatprep.subr.bf16.mxu0 0
        %8836 = vmatpush1.bf16.msra.mxu0 %v8393
        %8837 = vmatprep.subr.bf16.mxu0 0
        %8838 = vmatpush1.bf16.msra.mxu0 %v8394
        %8839 = vmatprep.subr.bf16.mxu0 0
        %8840 = vmatpush1.bf16.msra.mxu0 %v8395
        %8841 = vmatprep.subr.bf16.mxu0 0
        %8842 = vmatpush1.bf16.msra.mxu0 %v8396
        %8843 = vmatprep.subr.bf16.mxu0 0
        %8844 = vmatpush1.bf16.msra.mxu0 %v8397
        %8845 = vmatprep.subr.bf16.mxu0 0
        %8846 = vmatpush1.bf16.msra.mxu0 %v8398
        %8847 = vmatprep.subr.bf16.mxu0 0
        %8848 = vmatpush1.bf16.msra.mxu0 %v8399
        %8849 = vmatprep.subr.bf16.mxu0 0
        %8850 = vmatpush1.bf16.msra.mxu0 %v8400
        %8851 = vmatprep.mubr.bf16.mxu0 %v7388
        %8852 = vmatmul.mubr.bf16.gmra.mrb[0].mxu0 %v7141
        %v8853 = vpop.f32.mrb[0].mxu0
        %v8854 = vadd.f32 %v8693, %v8853
        %v8855 = vpop.f32.mrb[0].mxu0
        %v8856 = vpop.f32.mrb[0].mxu0
        %v8857 = vadd.f32 %v8696, %v8856
        %v8858 = vpop.f32.mrb[0].mxu0
        %8859 = vmatprep.mubr.bf16.mxu0 %v7391
        %8860 = vmatmul.mubr.bf16.gmra.mrb[0].mxu0 %v7153
        %v8861 = vpop.f32.mrb[0].mxu0
        %v8862 = vadd.f32 %v8701, %v8861
        %v8863 = vpop.f32.mrb[0].mxu0
        %v8864 = vpop.f32.mrb[0].mxu0
        %v8865 = vadd.f32 %v8704, %v8864
        %v8866 = vpop.f32.mrb[0].mxu0
        %8867 = vmatprep.mubr.bf16.mxu0 %v7394
        %8868 = vmatmul.mubr.bf16.gmra.mrb[0].mxu0 %v7165
        %v8869 = vpop.f32.mrb[0].mxu0
        %v8870 = vadd.f32 %v8709, %v8869
        %v8871 = vpop.f32.mrb[0].mxu0
        %v8872 = vpop.f32.mrb[0].mxu0
        %v8873 = vadd.f32 %v8712, %v8872
        %v8874 = vpop.f32.mrb[0].mxu0
        %8875 = vmatprep.mubr.bf16.mxu0 %v7397
        %8876 = vmatmul.mubr.bf16.gmra.mrb[0].mxu0 %v7177
        %v8877 = vpop.f32.mrb[0].mxu0
        %v8878 = vadd.f32 %v8717, %v8877
        %v8879 = vpop.f32.mrb[0].mxu0
        %v8880 = vpop.f32.mrb[0].mxu0
        %v8881 = vadd.f32 %v8720, %v8880
        %v8882 = vpop.f32.mrb[0].mxu0
        %8883 = vmatprep.mubr.bf16.mxu0 %v7400
        %8884 = vmatmul.mubr.bf16.gmra.mrb[0].mxu0 %v7189
        %v8885 = vpop.f32.mrb[0].mxu0
        %v8886 = vadd.f32 %v8725, %v8885
        %v8887 = vpop.f32.mrb[0].mxu0
        %v8888 = vpop.f32.mrb[0].mxu0
        %v8889 = vadd.f32 %v8728, %v8888
        %v8890 = vpop.f32.mrb[0].mxu0
        %8891 = vmatprep.mubr.bf16.mxu0 %v7403
        %8892 = vmatmul.mubr.bf16.gmra.mrb[0].mxu0 %v7201
        %v8893 = vpop.f32.mrb[0].mxu0
        %v8894 = vadd.f32 %v8733, %v8893
        %v8895 = vpop.f32.mrb[0].mxu0
        %v8896 = vpop.f32.mrb[0].mxu0
        %v8897 = vadd.f32 %v8736, %v8896
        %v8898 = vpop.f32.mrb[0].mxu0
        %8899 = vmatprep.mubr.bf16.mxu0 %v7406
        %8900 = vmatmul.mubr.bf16.gmra.mrb[0].mxu0 %v7213
        %v8901 = vpop.f32.mrb[0].mxu0
        %v8902 = vadd.f32 %v8741, %v8901
        %v8903 = vpop.f32.mrb[0].mxu0
        %v8904 = vpop.f32.mrb[0].mxu0
        %v8905 = vadd.f32 %v8744, %v8904
        %v8906 = vpop.f32.mrb[0].mxu0
        %8907 = vmatprep.mubr.bf16.mxu0 %v7409
        %8908 = vmatmul.mubr.bf16.gmra.mrb[0].mxu0 %v7225
        %v8909 = vpop.f32.mrb[0].mxu0
        %v8910 = vadd.f32 %v8749, %v8909
        %v8911 = vpop.f32.mrb[0].mxu0
        %v8912 = vpop.f32.mrb[0].mxu0
        %v8913 = vadd.f32 %v8752, %v8912
        %v8914 = vpop.f32.mrb[0].mxu0
        %8915 = vmatprep.mubr.bf16.mxu0 %v7412
        %8916 = vmatmul.mubr.bf16.gmra.mrb[0].mxu0 %v7237
        %v8917 = vpop.f32.mrb[0].mxu0
        %v8918 = vadd.f32 %v8757, %v8917
        %v8919 = vpop.f32.mrb[0].mxu0
        %v8920 = vpop.f32.mrb[0].mxu0
        %v8921 = vadd.f32 %v8760, %v8920
        %v8922 = vpop.f32.mrb[0].mxu0
        %8923 = vmatprep.mubr.bf16.mxu0 %v7415
        %8924 = vmatmul.mubr.bf16.gmra.mrb[0].mxu0 %v7249
        %v8925 = vpop.f32.mrb[0].mxu0
        %v8926 = vadd.f32 %v8765, %v8925
        %v8927 = vpop.f32.mrb[0].mxu0
        %v8928 = vpop.f32.mrb[0].mxu0
        %v8929 = vadd.f32 %v8768, %v8928
        %v8930 = vpop.f32.mrb[0].mxu0
        %8931 = vmatprep.mubr.bf16.mxu0 %v7418
        %8932 = vmatmul.mubr.bf16.gmra.mrb[0].mxu0 %v7261
        %v8933 = vpop.f32.mrb[0].mxu0
        %v8934 = vadd.f32 %v8773, %v8933
        %v8935 = vpop.f32.mrb[0].mxu0
        %v8936 = vpop.f32.mrb[0].mxu0
        %v8937 = vadd.f32 %v8776, %v8936
        %v8938 = vpop.f32.mrb[0].mxu0
        %8939 = vmatprep.mubr.bf16.mxu0 %v7421
        %8940 = vmatmul.mubr.bf16.gmra.mrb[0].mxu0 %v7273
        %v8941 = vpop.f32.mrb[0].mxu0
        %v8942 = vadd.f32 %v8781, %v8941
        %v8943 = vpop.f32.mrb[0].mxu0
        %v8944 = vpop.f32.mrb[0].mxu0
        %v8945 = vadd.f32 %v8784, %v8944
        %v8946 = vpop.f32.mrb[0].mxu0
        %8947 = vmatprep.mubr.bf16.mxu0 %v7424
        %8948 = vmatmul.mubr.bf16.gmra.mrb[0].mxu0 %v7285
        %v8949 = vpop.f32.mrb[0].mxu0
        %v8950 = vadd.f32 %v8789, %v8949
        %v8951 = vpop.f32.mrb[0].mxu0
        %v8952 = vpop.f32.mrb[0].mxu0
        %v8953 = vadd.f32 %v8792, %v8952
        %v8954 = vpop.f32.mrb[0].mxu0
        %8955 = vmatprep.mubr.bf16.mxu0 %v7427
        %8956 = vmatmul.mubr.bf16.gmra.mrb[0].mxu0 %v7297
        %v8957 = vpop.f32.mrb[0].mxu0
        %v8958 = vadd.f32 %v8797, %v8957
        %v8959 = vpop.f32.mrb[0].mxu0
        %v8960 = vpop.f32.mrb[0].mxu0
        %v8961 = vadd.f32 %v8800, %v8960
        %v8962 = vpop.f32.mrb[0].mxu0
        %8963 = vmatprep.mubr.bf16.mxu0 %v7430
        %8964 = vmatmul.mubr.bf16.gmra.mrb[0].mxu0 %v7309
        %v8965 = vpop.f32.mrb[0].mxu0
        %v8966 = vadd.f32 %v8805, %v8965
        %v8967 = vpop.f32.mrb[0].mxu0
        %v8968 = vpop.f32.mrb[0].mxu0
        %v8969 = vadd.f32 %v8808, %v8968
        %v8970 = vpop.f32.mrb[0].mxu0
        %8971 = vmatprep.mubr.bf16.mxu0 %v7433
        %8972 = vmatmul.mubr.bf16.gmra.mrb[0].mxu0 %v7321
        %v8973 = vpop.f32.mrb[0].mxu0
        %v8974 = vadd.f32 %v8813, %v8973
        %v8975 = vpop.f32.mrb[0].mxu0
        %v8976 = vpop.f32.mrb[0].mxu0
        %v8977 = vadd.f32 %v8816, %v8976
        %v8978 = vpop.f32.mrb[0].mxu0
        %8979 = vdwg.mxu0
        %8980 = vmatprep.subr.bf16.mxu0 0
        %8981 = vmatpush1.bf16.msra.mxu0 %v8401
        %8982 = vmatprep.subr.bf16.mxu0 0
        %8983 = vmatpush1.bf16.msra.mxu0 %v8402
        %8984 = vmatprep.subr.bf16.mxu0 0
        %8985 = vmatpush1.bf16.msra.mxu0 %v8403
        %8986 = vmatprep.subr.bf16.mxu0 0
        %8987 = vmatpush1.bf16.msra.mxu0 %v8404
        %8988 = vmatprep.subr.bf16.mxu0 0
        %8989 = vmatpush1.bf16.msra.mxu0 %v8405
        %8990 = vmatprep.subr.bf16.mxu0 0
        %8991 = vmatpush1.bf16.msra.mxu0 %v8406
        %8992 = vmatprep.subr.bf16.mxu0 0
        %8993 = vmatpush1.bf16.msra.mxu0 %v8407
        %8994 = vmatprep.subr.bf16.mxu0 0
        %8995 = vmatpush1.bf16.msra.mxu0 %v8408
        %8996 = vmatprep.subr.bf16.mxu0 0
        %8997 = vmatpush1.bf16.msra.mxu0 %v8409
        %8998 = vmatprep.subr.bf16.mxu0 0
        %8999 = vmatpush1.bf16.msra.mxu0 %v8410
        %9000 = vmatprep.subr.bf16.mxu0 0
        %9001 = vmatpush1.bf16.msra.mxu0 %v8411
        %9002 = vmatprep.subr.bf16.mxu0 0
        %9003 = vmatpush1.bf16.msra.mxu0 %v8412
        %9004 = vmatprep.subr.bf16.mxu0 0
        %9005 = vmatpush1.bf16.msra.mxu0 %v8413
        %9006 = vmatprep.subr.bf16.mxu0 0
        %9007 = vmatpush1.bf16.msra.mxu0 %v8414
        %9008 = vmatprep.subr.bf16.mxu0 0
        %9009 = vmatpush1.bf16.msra.mxu0 %v8415
        %9010 = vmatprep.subr.bf16.mxu0 0
        %9011 = vmatpush1.bf16.msra.mxu0 %v8416
        %9012 = vmatprep.mubr.bf16.mxu0 %v7605
        %9013 = vmatmul.mubr.bf16.gmra.mrb[0].mxu0 %v7514
        %v9014 = vpop.f32.mrb[0].mxu0
        %v9015 = vadd.f32 %v8854, %v9014
        %v9016 = vpop.f32.mrb[0].mxu0
        %v9017 = vpop.f32.mrb[0].mxu0
        %v9018 = vadd.f32 %v8857, %v9017
        %v9019 = vpop.f32.mrb[0].mxu0
        %9020 = vmatprep.mubr.bf16.mxu0 %v7617
        %9021 = vmatmul.mubr.bf16.gmra.mrb[0].mxu0 %v7515
        %v9022 = vpop.f32.mrb[0].mxu0
        %v9023 = vadd.f32 %v8862, %v9022
        %v9024 = vpop.f32.mrb[0].mxu0
        %v9025 = vpop.f32.mrb[0].mxu0
        %v9026 = vadd.f32 %v8865, %v9025
        %v9027 = vpop.f32.mrb[0].mxu0
        %9028 = vmatprep.mubr.bf16.mxu0 %v7629
        %9029 = vmatmul.mubr.bf16.gmra.mrb[0].mxu0 %v7516
        %v9030 = vpop.f32.mrb[0].mxu0
        %v9031 = vadd.f32 %v8870, %v9030
        %v9032 = vpop.f32.mrb[0].mxu0
        %v9033 = vpop.f32.mrb[0].mxu0
        %v9034 = vadd.f32 %v8873, %v9033
        %v9035 = vpop.f32.mrb[0].mxu0
        %9036 = vmatprep.mubr.bf16.mxu0 %v7641
        %9037 = vmatmul.mubr.bf16.gmra.mrb[0].mxu0 %v7517
        %v9038 = vpop.f32.mrb[0].mxu0
        %v9039 = vadd.f32 %v8878, %v9038
        %v9040 = vpop.f32.mrb[0].mxu0
        %v9041 = vpop.f32.mrb[0].mxu0
        %v9042 = vadd.f32 %v8881, %v9041
        %v9043 = vpop.f32.mrb[0].mxu0
        %9044 = vmatprep.mubr.bf16.mxu0 %v7653
        %9045 = vmatmul.mubr.bf16.gmra.mrb[0].mxu0 %v7518
        %v9046 = vpop.f32.mrb[0].mxu0
        %v9047 = vadd.f32 %v8886, %v9046
        %v9048 = vpop.f32.mrb[0].mxu0
        %v9049 = vpop.f32.mrb[0].mxu0
        %v9050 = vadd.f32 %v8889, %v9049
        %v9051 = vpop.f32.mrb[0].mxu0
        %9052 = vmatprep.mubr.bf16.mxu0 %v7665
        %9053 = vmatmul.mubr.bf16.gmra.mrb[0].mxu0 %v7519
        %v9054 = vpop.f32.mrb[0].mxu0
        %v9055 = vadd.f32 %v8894, %v9054
        %v9056 = vpop.f32.mrb[0].mxu0
        %v9057 = vpop.f32.mrb[0].mxu0
        %v9058 = vadd.f32 %v8897, %v9057
        %v9059 = vpop.f32.mrb[0].mxu0
        %9060 = vmatprep.mubr.bf16.mxu0 %v7677
        %9061 = vmatmul.mubr.bf16.gmra.mrb[0].mxu0 %v7520
        %v9062 = vpop.f32.mrb[0].mxu0
        %v9063 = vadd.f32 %v8902, %v9062
        %v9064 = vpop.f32.mrb[0].mxu0
        %v9065 = vpop.f32.mrb[0].mxu0
        %v9066 = vadd.f32 %v8905, %v9065
        %v9067 = vpop.f32.mrb[0].mxu0
        %9068 = vmatprep.mubr.bf16.mxu0 %v7689
        %9069 = vmatmul.mubr.bf16.gmra.mrb[0].mxu0 %v7521
        %v9070 = vpop.f32.mrb[0].mxu0
        %v9071 = vadd.f32 %v8910, %v9070
        %v9072 = vpop.f32.mrb[0].mxu0
        %v9073 = vpop.f32.mrb[0].mxu0
        %v9074 = vadd.f32 %v8913, %v9073
        %v9075 = vpop.f32.mrb[0].mxu0
        %9076 = vmatprep.mubr.bf16.mxu0 %v7701
        %9077 = vmatmul.mubr.bf16.gmra.mrb[0].mxu0 %v7522
        %v9078 = vpop.f32.mrb[0].mxu0
        %v9079 = vadd.f32 %v8918, %v9078
        %v9080 = vpop.f32.mrb[0].mxu0
        %v9081 = vpop.f32.mrb[0].mxu0
        %v9082 = vadd.f32 %v8921, %v9081
        %v9083 = vpop.f32.mrb[0].mxu0
        %9084 = vmatprep.mubr.bf16.mxu0 %v7713
        %9085 = vmatmul.mubr.bf16.gmra.mrb[0].mxu0 %v7523
        %v9086 = vpop.f32.mrb[0].mxu0
        %v9087 = vadd.f32 %v8926, %v9086
        %v9088 = vpop.f32.mrb[0].mxu0
        %v9089 = vpop.f32.mrb[0].mxu0
        %v9090 = vadd.f32 %v8929, %v9089
        %v9091 = vpop.f32.mrb[0].mxu0
        %9092 = vmatprep.mubr.bf16.mxu0 %v7725
        %9093 = vmatmul.mubr.bf16.gmra.mrb[0].mxu0 %v7524
        %v9094 = vpop.f32.mrb[0].mxu0
        %v9095 = vadd.f32 %v8934, %v9094
        %v9096 = vpop.f32.mrb[0].mxu0
        %v9097 = vpop.f32.mrb[0].mxu0
        %v9098 = vadd.f32 %v8937, %v9097
        %v9099 = vpop.f32.mrb[0].mxu0
        %9100 = vmatprep.mubr.bf16.mxu0 %v7737
        %9101 = vmatmul.mubr.bf16.gmra.mrb[0].mxu0 %v7525
        %v9102 = vpop.f32.mrb[0].mxu0
        %v9103 = vadd.f32 %v8942, %v9102
        %v9104 = vpop.f32.mrb[0].mxu0
        %v9105 = vpop.f32.mrb[0].mxu0
        %v9106 = vadd.f32 %v8945, %v9105
        %v9107 = vpop.f32.mrb[0].mxu0
        %9108 = vmatprep.mubr.bf16.mxu0 %v7749
        %9109 = vmatmul.mubr.bf16.gmra.mrb[0].mxu0 %v7526
        %v9110 = vpop.f32.mrb[0].mxu0
        %v9111 = vadd.f32 %v8950, %v9110
        %v9112 = vpop.f32.mrb[0].mxu0
        %v9113 = vpop.f32.mrb[0].mxu0
        %v9114 = vadd.f32 %v8953, %v9113
        %v9115 = vpop.f32.mrb[0].mxu0
        %9116 = vmatprep.mubr.bf16.mxu0 %v7761
        %9117 = vmatmul.mubr.bf16.gmra.mrb[0].mxu0 %v7527
        %v9118 = vpop.f32.mrb[0].mxu0
        %v9119 = vadd.f32 %v8958, %v9118
        %v9120 = vpop.f32.mrb[0].mxu0
        %v9121 = vpop.f32.mrb[0].mxu0
        %v9122 = vadd.f32 %v8961, %v9121
        %v9123 = vpop.f32.mrb[0].mxu0
        %9124 = vmatprep.mubr.bf16.mxu0 %v7773
        %9125 = vmatmul.mubr.bf16.gmra.mrb[0].mxu0 %v7528
        %v9126 = vpop.f32.mrb[0].mxu0
        %v9127 = vadd.f32 %v8966, %v9126
        %v9128 = vpop.f32.mrb[0].mxu0
        %v9129 = vpop.f32.mrb[0].mxu0
        %v9130 = vadd.f32 %v8969, %v9129
        %v9131 = vpop.f32.mrb[0].mxu0
        %9132 = vmatprep.mubr.bf16.mxu0 %v7785
        %9133 = vmatmul.mubr.bf16.gmra.mrb[0].mxu0 %v7529
        %v9134 = vpop.f32.mrb[0].mxu0
        %v9135 = vadd.f32 %v8974, %v9134
        %v9136 = vpop.f32.mrb[0].mxu0
        %v9137 = vpop.f32.mrb[0].mxu0
        %v9138 = vadd.f32 %v8977, %v9137
        %v9139 = vpop.f32.mrb[0].mxu0
        %9140 = vdwg.mxu0
        %9141 = vmatprep.subr.bf16.mxu0 0
        %9142 = vmatpush1.bf16.msra.mxu0 %v8417
        %9143 = vmatprep.subr.bf16.mxu0 0
        %9144 = vmatpush1.bf16.msra.mxu0 %v8418
        %9145 = vmatprep.subr.bf16.mxu0 0
        %9146 = vmatpush1.bf16.msra.mxu0 %v8419
        %9147 = vmatprep.subr.bf16.mxu0 0
        %9148 = vmatpush1.bf16.msra.mxu0 %v8420
        %9149 = vmatprep.subr.bf16.mxu0 0
        %9150 = vmatpush1.bf16.msra.mxu0 %v8421
        %9151 = vmatprep.subr.bf16.mxu0 0
        %9152 = vmatpush1.bf16.msra.mxu0 %v8422
        %9153 = vmatprep.subr.bf16.mxu0 0
        %9154 = vmatpush1.bf16.msra.mxu0 %v8423
        %9155 = vmatprep.subr.bf16.mxu0 0
        %9156 = vmatpush1.bf16.msra.mxu0 %v8424
        %9157 = vmatprep.subr.bf16.mxu0 0
        %9158 = vmatpush1.bf16.msra.mxu0 0
        %9159 = vmatprep.subr.bf16.mxu0 0
        %9160 = vmatpush1.bf16.msra.mxu0 0
        %9161 = vmatprep.subr.bf16.mxu0 0
        %9162 = vmatpush1.bf16.msra.mxu0 0
        %9163 = vmatprep.subr.bf16.mxu0 0
        %9164 = vmatpush1.bf16.msra.mxu0 0
        %9165 = vmatprep.subr.bf16.mxu0 0
        %9166 = vmatpush1.bf16.msra.mxu0 0
        %9167 = vmatprep.subr.bf16.mxu0 0
        %9168 = vmatpush1.bf16.msra.mxu0 0
        %9169 = vmatprep.subr.bf16.mxu0 0
        %9170 = vmatpush1.bf16.msra.mxu0 0
        %9171 = vmatprep.subr.bf16.mxu0 0
        %9172 = vmatpush1.bf16.msra.mxu0 0
        %9173 = vmatprep.mubr.bf16.mxu0 0
        %9174 = vmatmul.mubr.bf16.gmra.mrb[0].mxu0 %v7852
        %v9175 = vpop.f32.mrb[0].mxu0
        %v9176 = vadd.f32 %v9015, %v9175
        %v9177 = vpop.f32.mrb[0].mxu0
        %v9178 = vpop.f32.mrb[0].mxu0
        %v9179 = vadd.f32 %v9018, %v9178
        %v9180 = vpop.f32.mrb[0].mxu0
        %9181 = vmatprep.mubr.bf16.mxu0 0
        %9182 = vmatmul.mubr.bf16.gmra.mrb[0].mxu0 %v7855
        %v9183 = vpop.f32.mrb[0].mxu0
        %v9184 = vadd.f32 %v9023, %v9183
        %v9185 = vpop.f32.mrb[0].mxu0
        %v9186 = vpop.f32.mrb[0].mxu0
        %v9187 = vadd.f32 %v9026, %v9186
        %v9188 = vpop.f32.mrb[0].mxu0
        %9189 = vmatprep.mubr.bf16.mxu0 0
        %9190 = vmatmul.mubr.bf16.gmra.mrb[0].mxu0 %v7858
        %v9191 = vpop.f32.mrb[0].mxu0
        %v9192 = vadd.f32 %v9031, %v9191
        %v9193 = vpop.f32.mrb[0].mxu0
        %v9194 = vpop.f32.mrb[0].mxu0
        %v9195 = vadd.f32 %v9034, %v9194
        %v9196 = vpop.f32.mrb[0].mxu0
        %9197 = vmatprep.mubr.bf16.mxu0 0
        %9198 = vmatmul.mubr.bf16.gmra.mrb[0].mxu0 %v7861
        %v9199 = vpop.f32.mrb[0].mxu0
        %v9200 = vadd.f32 %v9039, %v9199
        %v9201 = vpop.f32.mrb[0].mxu0
        %v9202 = vpop.f32.mrb[0].mxu0
        %v9203 = vadd.f32 %v9042, %v9202
        %v9204 = vpop.f32.mrb[0].mxu0
        %9205 = vmatprep.mubr.bf16.mxu0 0
        %9206 = vmatmul.mubr.bf16.gmra.mrb[0].mxu0 %v7864
        %v9207 = vpop.f32.mrb[0].mxu0
        %v9208 = vadd.f32 %v9047, %v9207
        %v9209 = vpop.f32.mrb[0].mxu0
        %v9210 = vpop.f32.mrb[0].mxu0
        %v9211 = vadd.f32 %v9050, %v9210
        %v9212 = vpop.f32.mrb[0].mxu0
        %9213 = vmatprep.mubr.bf16.mxu0 0
        %9214 = vmatmul.mubr.bf16.gmra.mrb[0].mxu0 %v7867
        %v9215 = vpop.f32.mrb[0].mxu0
        %v9216 = vadd.f32 %v9055, %v9215
        %v9217 = vpop.f32.mrb[0].mxu0
        %v9218 = vpop.f32.mrb[0].mxu0
        %v9219 = vadd.f32 %v9058, %v9218
        %v9220 = vpop.f32.mrb[0].mxu0
        %9221 = vmatprep.mubr.bf16.mxu0 0
        %9222 = vmatmul.mubr.bf16.gmra.mrb[0].mxu0 %v7870
        %v9223 = vpop.f32.mrb[0].mxu0
        %v9224 = vadd.f32 %v9063, %v9223
        %v9225 = vpop.f32.mrb[0].mxu0
        %v9226 = vpop.f32.mrb[0].mxu0
        %v9227 = vadd.f32 %v9066, %v9226
        %v9228 = vpop.f32.mrb[0].mxu0
        %9229 = vmatprep.mubr.bf16.mxu0 0
        %9230 = vmatmul.mubr.bf16.gmra.mrb[0].mxu0 %v7873
        %v9231 = vpop.f32.mrb[0].mxu0
        %v9232 = vadd.f32 %v9071, %v9231
        %v9233 = vpop.f32.mrb[0].mxu0
        %v9234 = vpop.f32.mrb[0].mxu0
        %v9235 = vadd.f32 %v9074, %v9234
        %v9236 = vpop.f32.mrb[0].mxu0
        %9237 = vmatprep.mubr.bf16.mxu0 0
        %9238 = vmatmul.mubr.bf16.gmra.mrb[0].mxu0 %v7876
        %v9239 = vpop.f32.mrb[0].mxu0
        %v9240 = vadd.f32 %v9079, %v9239
        %v9241 = vpop.f32.mrb[0].mxu0
        %v9242 = vpop.f32.mrb[0].mxu0
        %v9243 = vadd.f32 %v9082, %v9242
        %v9244 = vpop.f32.mrb[0].mxu0
        %9245 = vmatprep.mubr.bf16.mxu0 0
        %9246 = vmatmul.mubr.bf16.gmra.mrb[0].mxu0 %v7879
        %v9247 = vpop.f32.mrb[0].mxu0
        %v9248 = vadd.f32 %v9087, %v9247
        %v9249 = vpop.f32.mrb[0].mxu0
        %v9250 = vpop.f32.mrb[0].mxu0
        %v9251 = vadd.f32 %v9090, %v9250
        %v9252 = vpop.f32.mrb[0].mxu0
        %9253 = vmatprep.mubr.bf16.mxu0 0
        %9254 = vmatmul.mubr.bf16.gmra.mrb[0].mxu0 %v7882
        %v9255 = vpop.f32.mrb[0].mxu0
        %v9256 = vadd.f32 %v9095, %v9255
        %v9257 = vpop.f32.mrb[0].mxu0
        %v9258 = vpop.f32.mrb[0].mxu0
        %v9259 = vadd.f32 %v9098, %v9258
        %v9260 = vpop.f32.mrb[0].mxu0
        %9261 = vmatprep.mubr.bf16.mxu0 0
        %9262 = vmatmul.mubr.bf16.gmra.mrb[0].mxu0 %v7885
        %v9263 = vpop.f32.mrb[0].mxu0
        %v9264 = vadd.f32 %v9103, %v9263
        %v9265 = vpop.f32.mrb[0].mxu0
        %v9266 = vpop.f32.mrb[0].mxu0
        %v9267 = vadd.f32 %v9106, %v9266
        %v9268 = vpop.f32.mrb[0].mxu0
        %9269 = vmatprep.mubr.bf16.mxu0 0
        %9270 = vmatmul.mubr.bf16.gmra.mrb[0].mxu0 %v7888
        %v9271 = vpop.f32.mrb[0].mxu0
        %v9272 = vadd.f32 %v9111, %v9271
        %v9273 = vpop.f32.mrb[0].mxu0
        %v9274 = vpop.f32.mrb[0].mxu0
        %v9275 = vadd.f32 %v9114, %v9274
        %v9276 = vpop.f32.mrb[0].mxu0
        %9277 = vmatprep.mubr.bf16.mxu0 0
        %9278 = vmatmul.mubr.bf16.gmra.mrb[0].mxu0 %v7891
        %v9279 = vpop.f32.mrb[0].mxu0
        %v9280 = vadd.f32 %v9119, %v9279
        %v9281 = vpop.f32.mrb[0].mxu0
        %v9282 = vpop.f32.mrb[0].mxu0
        %v9283 = vadd.f32 %v9122, %v9282
        %v9284 = vpop.f32.mrb[0].mxu0
        %9285 = vmatprep.mubr.bf16.mxu0 0
        %9286 = vmatmul.mubr.bf16.gmra.mrb[0].mxu0 %v7894
        %v9287 = vpop.f32.mrb[0].mxu0
        %v9288 = vadd.f32 %v9127, %v9287
        %v9289 = vpop.f32.mrb[0].mxu0
        %v9290 = vpop.f32.mrb[0].mxu0
        %v9291 = vadd.f32 %v9130, %v9290
        %v9292 = vpop.f32.mrb[0].mxu0
        %9293 = vmatprep.mubr.bf16.mxu0 0
        %9294 = vmatmul.mubr.bf16.gmra.mrb[0].mxu0 %v7897
        %v9295 = vpop.f32.mrb[0].mxu0
        %v9296 = vadd.f32 %v9135, %v9295
        %v9297 = vpop.f32.mrb[0].mxu0
        %v9298 = vpop.f32.mrb[0].mxu0
        %v9299 = vadd.f32 %v9138, %v9298
        %v9300 = vpop.f32.mrb[0].mxu0
        %9301 = vdwg.mxu0
        %v9302 = vld [vmem:[%s445] sm:$0xe]
        %v9303 = vld [vmem:[%s445 + $0x4] sm:$0xf]
        %v9304 = vld [vmem:[%s445 + $0x8] sm:$0x1]
        %v9305 = vld [vmem:[%s445 + $0xc] sm:$0xe]
        %v9306 = vld [vmem:[%s445 + $0x10] sm:$0xf]
        %v9307 = vld [vmem:[%s445 + $0x14] sm:$0x1]
        %v9308 = vld [vmem:[%s445 + $0x18] sm:$0xe]
        %v9309 = vld [vmem:[%s445 + $0x1c] sm:$0xf]
        %v9310 = vld [vmem:[%s445 + $0x20] sm:$0x1]
        %v9311 = vld [vmem:[%s445 + $0x24] sm:$0xe]
        %v9312 = vld [vmem:[%s445 + $0x28] sm:$0xf]
        %v9313 = vld [vmem:[%s445 + $0x2c] sm:$0x1]
        %v9314 = vld [vmem:[%s445 + $0x30] sm:$0xe]
        %v9315 = vld [vmem:[%s445 + $0x34] sm:$0xf]
        %v9316 = vld [vmem:[%s445 + $0x38] sm:$0x1]
        %v9317 = vld [vmem:[%s445 + $0x3c] sm:$0xe]
        %v9318 = vld [vmem:[%s445 + $0x40] sm:$0xf]
        %v9319 = vld [vmem:[%s445 + $0x44] sm:$0x1]
        %v9320 = vld [vmem:[%s445 + $0x48] sm:$0xe]
        %v9321 = vld [vmem:[%s445 + $0x4c] sm:$0xf]
        %v9322 = vld [vmem:[%s445 + $0x50] sm:$0x1]
        %v9323 = vld [vmem:[%s445 + $0x54] sm:$0xe]
        %v9324 = vld [vmem:[%s445 + $0x58] sm:$0xf]
        %v9325 = vld [vmem:[%s445 + $0x5c] sm:$0x1]
        %v9326 = vld [vmem:[%s445 + $0x60] sm:$0xe]
        %v9327 = vld [vmem:[%s445 + $0x64] sm:$0xf]
        %v9328 = vld [vmem:[%s445 + $0x68] sm:$0x1]
        %v9329 = vld [vmem:[%s445 + $0x6c] sm:$0xe]
        %v9330 = vld [vmem:[%s445 + $0x70] sm:$0xf]
        %v9331 = vld [vmem:[%s445 + $0x74] sm:$0x1]
        %v9332 = vld [vmem:[%s445 + $0x78] sm:$0xe]
        %v9333 = vld [vmem:[%s445 + $0x7c] sm:$0xf]
        %v9334 = vld [vmem:[%s445 + $0x80] sm:$0x1]
        %v9335 = vld [vmem:[%s445 + $0x84] sm:$0xe]
        %v9336 = vld [vmem:[%s445 + $0x88] sm:$0xf]
        %v9337 = vld [vmem:[%s445 + $0x8c] sm:$0x1]
        %v9338 = vld [vmem:[%s445 + $0x90] sm:$0xe]
        %v9339 = vld [vmem:[%s445 + $0x94] sm:$0xf]
        %v9340 = vld [vmem:[%s445 + $0x98] sm:$0x1]
        %v9341 = vld [vmem:[%s445 + $0x9c] sm:$0xe]
        %v9342 = vld [vmem:[%s445 + $0xa0] sm:$0xf]
        %v9343 = vld [vmem:[%s445 + $0xa4] sm:$0x1]
        %v9344 = vld [vmem:[%s445 + $0xa8] sm:$0xe]
        %v9345 = vld [vmem:[%s445 + $0xac] sm:$0xf]
        %v9346 = vld [vmem:[%s445 + $0xb0] sm:$0x1]
        %v9347 = vld [vmem:[%s445 + $0xb4] sm:$0xe]
        %v9348 = vld [vmem:[%s445 + $0xb8] sm:$0xf]
        %v9349 = vld [vmem:[%s445 + $0xbc] sm:$0x1]
        %vm9398 = vcmask 1042432
        %vm9399 = vcmask 1046532
        %vm9400 = vmor %vm9398, %vm9399
        %v9401 = vrot.slane %v9302, 5
        %v9402 = vrot.slane %v9401, 4
        %v9403 = vrot.slane %v9303, 5
        %v9404 = vsel %vm9400, %v9402, %v9403
        %v9405 = vrot.slane %v9403, 4
        %v9406 = vrot.slane %v9304, 5
        %v9407 = vsel %vm9400, %v9405, %v9406
        %v9408 = vrot.slane %v9305, 5
        %v9409 = vrot.slane %v9408, 4
        %v9410 = vrot.slane %v9306, 5
        %v9411 = vsel %vm9400, %v9409, %v9410
        %v9412 = vrot.slane %v9410, 4
        %v9413 = vrot.slane %v9307, 5
        %v9414 = vsel %vm9400, %v9412, %v9413
        %v9415 = vrot.slane %v9308, 5
        %v9416 = vrot.slane %v9415, 4
        %v9417 = vrot.slane %v9309, 5
        %v9418 = vsel %vm9400, %v9416, %v9417
        %v9419 = vrot.slane %v9417, 4
        %v9420 = vrot.slane %v9310, 5
        %v9421 = vsel %vm9400, %v9419, %v9420
        %v9422 = vrot.slane %v9311, 5
        %v9423 = vrot.slane %v9422, 4
        %v9424 = vrot.slane %v9312, 5
        %v9425 = vsel %vm9400, %v9423, %v9424
        %v9426 = vrot.slane %v9424, 4
        %v9427 = vrot.slane %v9313, 5
        %v9428 = vsel %vm9400, %v9426, %v9427
        %v9429 = vrot.slane %v9314, 5
        %v9430 = vrot.slane %v9429, 4
        %v9431 = vrot.slane %v9315, 5
        %v9432 = vsel %vm9400, %v9430, %v9431
        %v9433 = vrot.slane %v9431, 4
        %v9434 = vrot.slane %v9316, 5
        %v9435 = vsel %vm9400, %v9433, %v9434
        %v9436 = vrot.slane %v9317, 5
        %v9437 = vrot.slane %v9436, 4
        %v9438 = vrot.slane %v9318, 5
        %v9439 = vsel %vm9400, %v9437, %v9438
        %v9440 = vrot.slane %v9438, 4
        %v9441 = vrot.slane %v9319, 5
        %v9442 = vsel %vm9400, %v9440, %v9441
        %v9443 = vrot.slane %v9320, 5
        %v9444 = vrot.slane %v9443, 4
        %v9445 = vrot.slane %v9321, 5
        %v9446 = vsel %vm9400, %v9444, %v9445
        %v9447 = vrot.slane %v9445, 4
        %v9448 = vrot.slane %v9322, 5
        %v9449 = vsel %vm9400, %v9447, %v9448
        %v9450 = vrot.slane %v9323, 5
        %v9451 = vrot.slane %v9450, 4
        %v9452 = vrot.slane %v9324, 5
        %v9453 = vsel %vm9400, %v9451, %v9452
        %v9454 = vrot.slane %v9452, 4
        %v9455 = vrot.slane %v9325, 5
        %v9456 = vsel %vm9400, %v9454, %v9455
        %v9457 = vrot.slane %v9326, 5
        %v9458 = vrot.slane %v9457, 4
        %v9459 = vrot.slane %v9327, 5
        %v9460 = vsel %vm9400, %v9458, %v9459
        %v9461 = vrot.slane %v9459, 4
        %v9462 = vrot.slane %v9328, 5
        %v9463 = vsel %vm9400, %v9461, %v9462
        %v9464 = vrot.slane %v9329, 5
        %v9465 = vrot.slane %v9464, 4
        %v9466 = vrot.slane %v9330, 5
        %v9467 = vsel %vm9400, %v9465, %v9466
        %v9468 = vrot.slane %v9466, 4
        %v9469 = vrot.slane %v9331, 5
        %v9470 = vsel %vm9400, %v9468, %v9469
        %v9471 = vrot.slane %v9332, 5
        %v9472 = vrot.slane %v9471, 4
        %v9473 = vrot.slane %v9333, 5
        %v9474 = vsel %vm9400, %v9472, %v9473
        %v9475 = vrot.slane %v9473, 4
        %v9476 = vrot.slane %v9334, 5
        %v9477 = vsel %vm9400, %v9475, %v9476
        %v9478 = vrot.slane %v9335, 5
        %v9479 = vrot.slane %v9478, 4
        %v9480 = vrot.slane %v9336, 5
        %v9481 = vsel %vm9400, %v9479, %v9480
        %v9482 = vrot.slane %v9480, 4
        %v9483 = vrot.slane %v9337, 5
        %v9484 = vsel %vm9400, %v9482, %v9483
        %v9485 = vrot.slane %v9338, 5
        %v9486 = vrot.slane %v9485, 4
        %v9487 = vrot.slane %v9339, 5
        %v9488 = vsel %vm9400, %v9486, %v9487
        %v9489 = vrot.slane %v9487, 4
        %v9490 = vrot.slane %v9340, 5
        %v9491 = vsel %vm9400, %v9489, %v9490
        %v9492 = vrot.slane %v9341, 5
        %v9493 = vrot.slane %v9492, 4
        %v9494 = vrot.slane %v9342, 5
        %v9495 = vsel %vm9400, %v9493, %v9494
        %v9496 = vrot.slane %v9494, 4
        %v9497 = vrot.slane %v9343, 5
        %v9498 = vsel %vm9400, %v9496, %v9497
        %v9499 = vrot.slane %v9344, 5
        %v9500 = vrot.slane %v9499, 4
        %v9501 = vrot.slane %v9345, 5
        %v9502 = vsel %vm9400, %v9500, %v9501
        %v9503 = vrot.slane %v9501, 4
        %v9504 = vrot.slane %v9346, 5
        %v9505 = vsel %vm9400, %v9503, %v9504
        %v9506 = vrot.slane %v9347, 5
        %v9507 = vrot.slane %v9506, 4
        %v9508 = vrot.slane %v9348, 5
        %v9509 = vsel %vm9400, %v9507, %v9508
        %v9510 = vrot.slane %v9508, 4
        %v9511 = vrot.slane %v9349, 5
        %v9512 = vsel %vm9400, %v9510, %v9511
        %v9545 = vunpack.c.l.bf16 %v9404
        %v9546 = vunpack.c.l.bf16 %v9407
        %v9547 = vunpack.c.l.bf16 %v9411
        %v9548 = vunpack.c.l.bf16 %v9414
        %v9549 = vunpack.c.l.bf16 %v9418
        %v9550 = vunpack.c.l.bf16 %v9421
        %v9551 = vunpack.c.l.bf16 %v9425
        %v9552 = vunpack.c.l.bf16 %v9428
        %v9553 = vunpack.c.l.bf16 %v9432
        %v9554 = vunpack.c.l.bf16 %v9435
        %v9555 = vunpack.c.l.bf16 %v9439
        %v9556 = vunpack.c.l.bf16 %v9442
        %v9557 = vunpack.c.l.bf16 %v9446
        %v9558 = vunpack.c.l.bf16 %v9449
        %v9559 = vunpack.c.l.bf16 %v9453
        %v9560 = vunpack.c.l.bf16 %v9456
        %v9561 = vunpack.c.l.bf16 %v9460
        %v9562 = vunpack.c.l.bf16 %v9463
        %v9563 = vunpack.c.l.bf16 %v9467
        %v9564 = vunpack.c.l.bf16 %v9470
        %v9565 = vunpack.c.l.bf16 %v9474
        %v9566 = vunpack.c.l.bf16 %v9477
        %v9567 = vunpack.c.l.bf16 %v9481
        %v9568 = vunpack.c.l.bf16 %v9484
        %v9569 = vunpack.c.l.bf16 %v9488
        %v9570 = vunpack.c.l.bf16 %v9491
        %v9571 = vunpack.c.l.bf16 %v9495
        %v9572 = vunpack.c.l.bf16 %v9498
        %v9573 = vunpack.c.l.bf16 %v9502
        %v9574 = vunpack.c.l.bf16 %v9505
        %v9575 = vunpack.c.l.bf16 %v9509
        %v9576 = vunpack.c.l.bf16 %v9512
        %v9577 = vadd.f32 %v9176, %v9545
        %v9578 = vadd.f32 %v9179, %v9546
        %v9579 = vadd.f32 %v9184, %v9547
        %v9580 = vadd.f32 %v9187, %v9548
        %v9581 = vadd.f32 %v9192, %v9549
        %v9582 = vadd.f32 %v9195, %v9550
        %v9583 = vadd.f32 %v9200, %v9551
        %v9584 = vadd.f32 %v9203, %v9552
        %v9585 = vadd.f32 %v9208, %v9553
        %v9586 = vadd.f32 %v9211, %v9554
        %v9587 = vadd.f32 %v9216, %v9555
        %v9588 = vadd.f32 %v9219, %v9556
        %v9589 = vadd.f32 %v9224, %v9557
        %v9590 = vadd.f32 %v9227, %v9558
        %v9591 = vadd.f32 %v9232, %v9559
        %v9592 = vadd.f32 %v9235, %v9560
        %v9593 = vadd.f32 %v9240, %v9561
        %v9594 = vadd.f32 %v9243, %v9562
        %v9595 = vadd.f32 %v9248, %v9563
        %v9596 = vadd.f32 %v9251, %v9564
        %v9597 = vadd.f32 %v9256, %v9565
        %v9598 = vadd.f32 %v9259, %v9566
        %v9599 = vadd.f32 %v9264, %v9567
        %v9600 = vadd.f32 %v9267, %v9568
        %v9601 = vadd.f32 %v9272, %v9569
        %v9602 = vadd.f32 %v9275, %v9570
        %v9603 = vadd.f32 %v9280, %v9571
        %v9604 = vadd.f32 %v9283, %v9572
        %v9605 = vadd.f32 %v9288, %v9573
        %v9606 = vadd.f32 %v9291, %v9574
        %v9607 = vadd.f32 %v9296, %v9575
        %v9608 = vadd.f32 %v9299, %v9576
        %v9609 = vmax.f32 %v9577, 0.0
        %v9610 = vmax.f32 %v9578, 0.0
        %v9611 = vmax.f32 %v9579, 0.0
        %v9612 = vmax.f32 %v9580, 0.0
        %v9613 = vmax.f32 %v9581, 0.0
        %v9614 = vmax.f32 %v9582, 0.0
        %v9615 = vmax.f32 %v9583, 0.0
        %v9616 = vmax.f32 %v9584, 0.0
        %v9617 = vmax.f32 %v9585, 0.0
        %v9618 = vmax.f32 %v9586, 0.0
        %v9619 = vmax.f32 %v9587, 0.0
        %v9620 = vmax.f32 %v9588, 0.0
        %v9621 = vmax.f32 %v9589, 0.0
        %v9622 = vmax.f32 %v9590, 0.0
        %v9623 = vmax.f32 %v9591, 0.0
        %v9624 = vmax.f32 %v9592, 0.0
        %v9625 = vmax.f32 %v9593, 0.0
        %v9626 = vmax.f32 %v9594, 0.0
        %v9627 = vmax.f32 %v9595, 0.0
        %v9628 = vmax.f32 %v9596, 0.0
        %v9629 = vmax.f32 %v9597, 0.0
        %v9630 = vmax.f32 %v9598, 0.0
        %v9631 = vmax.f32 %v9599, 0.0
        %v9632 = vmax.f32 %v9600, 0.0
        %v9633 = vmax.f32 %v9601, 0.0
        %v9634 = vmax.f32 %v9602, 0.0
        %v9635 = vmax.f32 %v9603, 0.0
        %v9636 = vmax.f32 %v9604, 0.0
        %v9637 = vmax.f32 %v9605, 0.0
        %v9638 = vmax.f32 %v9606, 0.0
        %v9639 = vmax.f32 %v9607, 0.0
        %v9640 = vmax.f32 %v9608, 0.0
        %9641 = vst [vmem:[%s246] sm:$0xff] %v9609
        %9642 = vst [vmem:[%s246 + $0x8] sm:$0xff] %v9610
        %9643 = vst [vmem:[%s246 + $0x10] sm:$0xff] %v9611
        %9644 = vst [vmem:[%s246 + $0x18] sm:$0xff] %v9612
        %9645 = vst [vmem:[%s246 + $0x20] sm:$0xff] %v9613
        %9646 = vst [vmem:[%s246 + $0x28] sm:$0xff] %v9614
        %9647 = vst [vmem:[%s246 + $0x30] sm:$0xff] %v9615
        %9648 = vst [vmem:[%s246 + $0x38] sm:$0xff] %v9616
        %9649 = vst [vmem:[%s246 + $0x40] sm:$0xff] %v9617
        %9650 = vst [vmem:[%s246 + $0x48] sm:$0xff] %v9618
        %9651 = vst [vmem:[%s246 + $0x50] sm:$0xff] %v9619
        %9652 = vst [vmem:[%s246 + $0x58] sm:$0xff] %v9620
        %9653 = vst [vmem:[%s246 + $0x60] sm:$0xff] %v9621
        %9654 = vst [vmem:[%s246 + $0x68] sm:$0xff] %v9622
        %9655 = vst [vmem:[%s246 + $0x70] sm:$0xff] %v9623
        %9656 = vst [vmem:[%s246 + $0x78] sm:$0xff] %v9624
        %9657 = vst [vmem:[%s246 + $0x80] sm:$0xff] %v9625
        %9658 = vst [vmem:[%s246 + $0x88] sm:$0xff] %v9626
        %9659 = vst [vmem:[%s246 + $0x90] sm:$0xff] %v9627
        %9660 = vst [vmem:[%s246 + $0x98] sm:$0xff] %v9628
        %9661 = vst [vmem:[%s246 + $0xa0] sm:$0xff] %v9629
        %9662 = vst [vmem:[%s246 + $0xa8] sm:$0xff] %v9630
        %9663 = vst [vmem:[%s246 + $0xb0] sm:$0xff] %v9631
        %9664 = vst [vmem:[%s246 + $0xb8] sm:$0xff] %v9632
        %9665 = vst [vmem:[%s246 + $0xc0] sm:$0xff] %v9633
        %9666 = vst [vmem:[%s246 + $0xc8] sm:$0xff] %v9634
        %9667 = vst [vmem:[%s246 + $0xd0] sm:$0xff] %v9635
        %9668 = vst [vmem:[%s246 + $0xd8] sm:$0xff] %v9636
        %9669 = vst [vmem:[%s246 + $0xe0] sm:$0xff] %v9637
        %9670 = vst [vmem:[%s246 + $0xe8] sm:$0xff] %v9638
        %9671 = vst [vmem:[%s246 + $0xf0] sm:$0xff] %v9639
        %9672 = vst [vmem:[%s246 + $0xf8] sm:$0xff] %v9640
        %s9673 = sand.u32 %s152, 1
        %s9674 = scalar_lea.sflag [#allocation5], %s9673
        %s9675 = sand.u32 %s152, 1
        %s9676 = smul.addr %s9675, 256
        %s9677 = scalar_lea.vmem [#allocation6], %s9676
        // Predicated region
        $region49: #{tpu_custom_call.1} parent=39 // pred_check
          %p9678 = pneg %p162
        $region50: #{tpu_custom_call.1} parent=39 // pred_check_branch
          %9680 = sbr.rel (%p9678) target = $region52
        $region51: #{tpu_custom_call.1} parent=39 // pred_region
          %s9681 = smul.u32 16, %s25
          %s9683 = ssub.s32 4096, 4096
          %9684 = vsyncadd %s9674, %s9683
          %s9685 = smul.addr %s9681, 2
          %s9686 = smul.addr %s24, 32
          %s9687 = sadd.s32 %s9685, %s9686
          %s9688 = smul.addr %s9687, 128
          %s9689 = scalar_lea.hbm %s5, %s9688
          %s9690 = sshll.u32 %s9677, 4
          %s9691 = int_to_ptr.vmem [resolvable:$true] %s9690
          %9696 = dma.vmem_to_hbm [thread:$0]  %s9691, 4096, %s9689, %s9674, 128, 128, 8
        $region52: #{tpu_custom_call.1} parent=39 // pred_fallthru
          _
      $region40: #{tpu_custom_call.1} parent=5 // pred_fallthru
        _
      %p9697 = scmp.le.s32.totalorder 2, %s15
      // Predicated region
      $region53: #{tpu_custom_call.1} parent=5 // pred_check
        %p9698 = pneg %p9697
      $region54: #{tpu_custom_call.1} parent=5 // pred_check_branch
        %9700 = sbr.rel (%p9698) target = $region56
      $region55: #{tpu_custom_call.1} parent=5 // pred_region
        %s9701 = ssub.s32 %s15, 2
        // Predicated region
        $region57: #{tpu_custom_call.1} parent=55 // pred_check
          %p9702 = pneg %p168
        $region58: #{tpu_custom_call.1} parent=55 // pred_check_branch
          %9704 = sbr.rel (%p9702) target = $region60
        $region59: #{tpu_custom_call.1} parent=55 // pred_region
          %s9705 = sand.u32 %s153, 1
          %s9706 = scalar_lea.sflag [#allocation5], %s9705
          %s9707 = sand.u32 %s153, 1
          %s9708 = smul.addr %s9707, 256
          %s9709 = scalar_lea.vmem [#allocation6], %s9708
          %9710 = dma.done %s9706, 4096
        $region60: #{tpu_custom_call.1} parent=55 // pred_fallthru
          _
      $region56: #{tpu_custom_call.1} parent=5 // pred_fallthru
        _
    $region6: #{tpu_custom_call.1} parent=1 // loop_footer
      %s19 = sadd.s32 1, %s15
    $region7: #{tpu_custom_call.1} parent=1 // loop_footer_branch
      %14 = sbr.rel target = $region3
    $region8: #{tpu_custom_call.1} parent=1 // loop_exit
      _
    %9711 = vsyncpa [#allocation4], 1
    %s9712 = scalar_lea.sflag [#allocation4], 1
    %9713 = vsyncpa %s9712, 1
    %9714 = vsyncpa [#allocation5], 1
    %s9715 = scalar_lea.sflag [#allocation5], 1
    %9716 = vsyncpa %s9715, 1

</llo_original>
